<compile_context>
chip_gen: v7x
topology: tpu7x:2x2x1
jax: 0.10.0
libtpu: 0.0.40
codegen_flags: <defaults>
</compile_context>

<pallas_src>
import jax
import jax.numpy as jnp
from jax.experimental import pallas as pl
from jax.experimental.pallas import tpu as pltpu

# ---------------- small synthetic CLIPTextConfig (lane-dense hidden dim) ----
VOCAB = 64          # vocab_size
MAX_POS = 32        # max_position_embeddings
D = 128             # hidden_size  (128 lanes -> lane-dense stores)
D_FF = 256          # intermediate_size
H = 4               # num_attention_heads
DH = D // H         # head_dim = 32
LAYERS = 2          # num_hidden_layers
EPS = 1e-5          # layer_norm_eps
NEG_INF = float(jnp.finfo(jnp.float32).min)


# ---------------- shared LayerNorm helper (kernel + reference) --------------
def _ln(x, w, b):
    # x: (..., D) f32; w, b: (1, D) f32
    mu = jnp.mean(x, axis=-1, keepdims=True)
    var = jnp.mean((x - mu) ** 2, axis=-1, keepdims=True)
    return (x - mu) * jax.lax.rsqrt(var + EPS) * w + b


# ---------------- fused encoder kernel --------------------------------------
def _make_encoder_kernel(num_heads):
    def kernel(x_ref, kmask_ref,
               ln1w_ref, ln1b_ref, wqkv_ref, bqkv_ref, wo_ref, bo_ref,
               ln2w_ref, ln2b_ref, wfc1_ref, bfc1_ref, wfc2_ref, bfc2_ref,
               flnw_ref, flnb_ref,
               o_ref, mask_sc):
        l = pl.program_id(1)
        n_layers = pl.num_programs(1)
        BT, S = kmask_ref.shape            # sequences per block, seq length
        M, Dm = x_ref.shape                # M = BT*S rows, Dm = hidden size
        nh = num_heads
        dh = Dm // nh

        # -------- once per batch block (layer-invariant work) --------
        @pl.when(l == 0)
        def _():
            # hidden accumulator lives in the resident output block (f32)
            o_ref[...] = x_ref[...]
            # causal + key-padding mask, select-based combine (no -inf + -inf)
            row = jax.lax.broadcasted_iota(jnp.int32, (S, S), 0)
            col = jax.lax.broadcasted_iota(jnp.int32, (S, S), 1)
            km = kmask_ref[...]                               # (BT, S) 0 / NEG_INF
            mask_sc[...] = jnp.where((col > row)[None, :, :], NEG_INF,
                                     km[:, None, :])          # (BT, S, S)

        x = o_ref[...]                     # (M, Dm) f32 resident hidden state
        mask = mask_sc[...]                # (BT, S, S) f32, reused every layer

        # -------- per-layer weights (resident stack, dynamic index) --------
        ln1w = ln1w_ref[l]; ln1b = ln1b_ref[l]                # (1, Dm)
        wqkv = wqkv_ref[l]; bqkv = bqkv_ref[l]                # (Dm, 3Dm), (1, 3Dm)
        wo = wo_ref[l];     bo = bo_ref[l]                    # (Dm, Dm),  (1, Dm)
        ln2w = ln2w_ref[l]; ln2b = ln2b_ref[l]
        wfc1 = wfc1_ref[l]; bfc1 = bfc1_ref[l]                # (Dm, D_FF)
        wfc2 = wfc2_ref[l]; bfc2 = bfc2_ref[l]                # (D_FF, Dm)

        # -------- self-attention --------
        xn = _ln(x, ln1w, ln1b)
        # merged QKV: one lane-dense (M,128)x(128,384) matmul
        # (1/sqrt(head_dim) is already folded into the Q columns of wqkv)
        qkv = jnp.dot(xn.astype(jnp.bfloat16), wqkv,
                      preferred_element_type=jnp.float32) + bqkv      # (M, 3Dm)
        q = qkv[:, 0 * Dm:1 * Dm]          # 128-lane-aligned slices
        k = qkv[:, 1 * Dm:2 * Dm]
        v = qkv[:, 2 * Dm:3 * Dm]

        # per-head attention, batched over the BT sequences of the block
        # (head_dim = 32 < 128 lanes, so the per-head split is inherently a
        #  sub-lane slice; scores/ctx are only ~4% of layer FLOPs)
        ctx_heads = []
        for h in range(nh):
            qh = q[:, h * dh:(h + 1) * dh].reshape(BT, S, dh).astype(jnp.bfloat16)
            kh = k[:, h * dh:(h + 1) * dh].reshape(BT, S, dh).astype(jnp.bfloat16)
            vh = v[:, h * dh:(h + 1) * dh].reshape(BT, S, dh).astype(jnp.bfloat16)
            s = jax.lax.dot_general(qh, kh, (((2,), (2,)), ((0,), (0,))),
                                    preferred_element_type=jnp.float32)  # (BT,S,S)
            s = s + mask
            s = s - jnp.max(s, axis=-1, keepdims=True)
            p = jnp.exp(s)
            p = p * pl.reciprocal(jnp.sum(p, axis=-1, keepdims=True), approx=True)
            ctx_heads.append(
                jax.lax.dot_general(p.astype(jnp.bfloat16), vh,
                                    (((2,), (1,)), ((0,), (0,))),
                                    preferred_element_type=jnp.float32))  # (BT,S,dh)
        ctx = jnp.concatenate(ctx_heads, axis=-1).reshape(M, Dm)     # (M, 128)

        # merged out-projection: one (M,128)x(128,128) matmul (cross-head sum
        # folded into the contraction)
        attn = jnp.dot(ctx.astype(jnp.bfloat16), wo,
                       preferred_element_type=jnp.float32) + bo
        x = x + attn                                                  # residual

        # -------- MLP (quick_gelu) --------
        xn2 = _ln(x, ln2w, ln2b)
        h1 = jnp.dot(xn2.astype(jnp.bfloat16), wfc1,
                     preferred_element_type=jnp.float32) + bfc1
        h1 = h1 * jax.nn.sigmoid(1.702 * h1)
        h2 = jnp.dot(h1.astype(jnp.bfloat16), wfc2,
                     preferred_element_type=jnp.float32) + bfc2
        x = x + h2                                                    # residual

        @pl.when(l < n_layers - 1)
        def _():
            o_ref[...] = x

        # final LayerNorm fused into the last layer iteration
        @pl.when(l == n_layers - 1)
        def _():
            o_ref[...] = _ln(x, flnw_ref[...], flnb_ref[...])

    return kernel


# ---------------- pallas_call wrapper ----------------------------------------
_LAYER_PARAMS = ("ln1_w", "ln1_b", "wqkv", "bqkv", "wo", "bo",
                 "ln2_w", "ln2_b", "wfc1", "bfc1", "wfc2", "bfc2")


def run_encoder(hidden, key_mask, params, *, block_batch=8):
    """hidden: (B, S, D) f32 embeddings; key_mask: (B, S) additive 0/NEG_INF."""
    B, S, Dm = hidden.shape
    L = params["wqkv"].shape[0]

    # fold a batch tile into the block so M = BT*S fills the MXU rows
    # (BT=8, S=16 -> 128 rows; on v6e/v7x a 256-row slab would fill the 256x256
    #  MXU — use BT=16 there when the real batch is large enough).
    BT = block_batch
    nb = -(-B // BT)                       # ceil(B / BT)
    B_pad = nb * BT
    if B_pad != B:
        hidden = jnp.pad(hidden, ((0, B_pad - B), (0, 0), (0, 0)))
        key_mask = jnp.pad(key_mask, ((0, B_pad - B), (0, 0)))
    hidden = hidden.astype(jnp.float32).reshape(B_pad * S, Dm)   # (nb*M, D) rows
    key_mask = key_mask.astype(jnp.float32)

    w_arrays = [params[n] for n in _LAYER_PARAMS]

    def full_spec(a):
        # whole stacked array resident in VMEM (constant block index => DMA'd
        # once, never re-fetched across the (batch, layer) grid).
        n = a.ndim
        return pl.BlockSpec(a.shape, lambda b, l: (0,) * n)

    M = BT * S
    in_specs = ([pl.BlockSpec((M, Dm), lambda b, l: (b, 0)),      # hidden rows
                 pl.BlockSpec((BT, S), lambda b, l: (b, 0))]      # key-padding mask
                + [full_spec(a) for a in w_arrays]
                + [full_spec(params["final_ln_w"]),
                   full_spec(params["final_ln_b"])])

    out2 = pl.pallas_call(
        _make_encoder_kernel(H),
        out_shape=jax.ShapeDtypeStruct((B_pad * S, Dm), jnp.float32),
        grid_spec=pltpu.PrefetchScalarGridSpec(
            num_scalar_prefetch=0,
            grid=(nb, L),                   # batch blocks outer, layers inner
            in_specs=in_specs,
            out_specs=pl.BlockSpec((M, Dm), lambda b, l: (b, 0)),
            scratch_shapes=[pltpu.VMEM((BT, S, S), jnp.float32)],  # cached mask
        ),
        compiler_params=pltpu.CompilerParams(
            # batch blocks shard across TensorCores (v7x has 2 TCs — needs
            # nb >= 2 real batch tiles to use both); layer axis is a carry.
            dimension_semantics=("parallel", "arbitrary"),
            vmem_limit_bytes=48 * 1024 * 1024,   # re-derive for real CLIP-L on v7x (64 MiB/TC)
        ),
    )(hidden, key_mask, *w_arrays, params["final_ln_w"], params["final_ln_b"])

    return out2.reshape(B_pad, S, Dm)[:B]


# ---------------- embeddings / masks (glue, plain JAX) ----------------------
def context_clip_embeddings(params, input_ids, ctx_embeddings, ctx_begin_pos):
    """Token embed, splice ctx_embeddings at ctx_begin_pos, add position embed."""
    tok = params["token_embedding"][input_ids]                 # (B, S_in, D)
    B, S_in, Dm = tok.shape
    C = ctx_embeddings.shape[1]
    S = S_in + C

    j = jnp.arange(S)[None, :]                                 # (1, S)
    cbp = ctx_begin_pos[:, None].astype(jnp.int32)             # (B, 1)
    in_ctx = (j >= cbp) & (j < cbp + C)                        # (B, S)
    tok_idx = jnp.where(j < cbp, j, jnp.clip(j - C, 0, S_in - 1))
    ctx_idx = jnp.clip(j - cbp, 0, C - 1)

    tok_gather = jnp.take_along_axis(tok, tok_idx[:, :, None], axis=1)
    ctx_gather = jnp.take_along_axis(ctx_embeddings, ctx_idx[:, :, None], axis=1)
    inputs_embeds = jnp.where(in_ctx[:, :, None], ctx_gather, tok_gather)

    pos_emb = params["position_embedding"][:S][None, :, :]
    return inputs_embeds + pos_emb


def build_key_mask(attention_mask, bsz, seq_len, dtype=jnp.float32):
    """Additive (B, S) key-padding mask (0 attended, NEG_INF masked).

    NOTE: attention_mask (if given) must cover the FULL spliced sequence
    (input length + ctx length), mirroring what the PyTorch encoder would need.
    """
    if attention_mask is None:
        return jnp.zeros((bsz, seq_len), dtype)
    if attention_mask.shape != (bsz, seq_len):
        raise ValueError(
            f"attention_mask must have shape {(bsz, seq_len)} (spliced length), "
            f"got {attention_mask.shape}")
    m = attention_mask.astype(dtype)
    return jnp.where(m > 0, 0.0, NEG_INF).astype(dtype)


# ---------------- full forward ------------------------------------------------
def context_clip_text_transformer(params, input_ids, ctx_embeddings, ctx_begin_pos,
                                  attention_mask=None):
    B, _ = input_ids.shape
    hidden = context_clip_embeddings(params, input_ids, ctx_embeddings, ctx_begin_pos)
    S = hidden.shape[1]

    key_mask = build_key_mask(attention_mask, B, S, jnp.float32)
    last_hidden_state = run_encoder(hidden, key_mask, params)

    # pooled_output = last_hidden_state[arange(B), input_ids.argmax(-1)]
    # (same index quirk as the PyTorch code: argmax over the ORIGINAL input_ids,
    #  not shifted by the spliced ctx tokens)
    eos_idx = jnp.argmax(input_ids.astype(jnp.int32), axis=-1)
    pooled_output = last_hidden_state[jnp.arange(B), eos_idx]
    return last_hidden_state, pooled_output


# ---------------- pure-JAX reference (f32) for correctness check -------------
def encoder_reference(hidden, key_mask, params):
    x = hidden.astype(jnp.float32)
    B, S, Dm = x.shape
    row = jnp.arange(S)[:, None]
    col = jnp.arange(S)[None, :]
    mask = jnp.where((col > row)[None, :, :], NEG_INF, key_mask[:, None, :])
    L = params["wqkv"].shape[0]
    for l in range(L):
        xn = _ln(x, params["ln1_w"][l], params["ln1_b"][l])
        qkv = xn @ params["wqkv"][l].astype(jnp.float32) + params["bqkv"][l]
        q, k, v = qkv[..., :Dm], qkv[..., Dm:2 * Dm], qkv[..., 2 * Dm:]
        qh = q.reshape(B, S, H, DH)
        kh = k.reshape(B, S, H, DH)
        vh = v.reshape(B, S, H, DH)
        s = jnp.einsum("bqhd,bkhd->bhqk", qh, kh) + mask[:, None, :, :]
        p = jax.nn.softmax(s, axis=-1)
        ctx = jnp.einsum("bhqk,bkhd->bqhd", p, vh).reshape(B, S, Dm)
        x = x + ctx @ params["wo"][l].astype(jnp.float32) + params["bo"][l]
        xn2 = _ln(x, params["ln2_w"][l], params["ln2_b"][l])
        h1 = xn2 @ params["wfc1"][l].astype(jnp.float32) + params["bfc1"][l]
        h1 = h1 * jax.nn.sigmoid(1.702 * h1)
        x = x + h1 @ params["wfc2"][l].astype(jnp.float32) + params["bfc2"][l]
    return _ln(x, params["final_ln_w"], params["final_ln_b"])


# ---------------- deterministic parameter init --------------------------------
def init_params(key):
    def normal(k, shape, scale=0.02):
        return scale * jax.random.normal(k, shape, jnp.float32)

    keys = iter(jax.random.split(key, 8))

    # merged-head QKV weight: (L, D, 3D) with columns [Q(128) | K(128) | V(128)];
    # fold the 1/sqrt(head_dim) attention scale into the Q columns at init.
    wqkv = normal(next(keys), (LAYERS, D, 3 * D))
    wqkv = wqkv.at[:, :, :D].multiply(1.0 / (DH ** 0.5))

    params = {
        "token_embedding": normal(next(keys), (VOCAB, D)),
        "position_embedding": normal(next(keys), (MAX_POS, D)),
        "ln1_w": jnp.ones((LAYERS, 1, D), jnp.float32),
        "ln1_b": jnp.zeros((LAYERS, 1, D), jnp.float32),
        "wqkv": wqkv.astype(jnp.bfloat16),
        "bqkv": jnp.zeros((LAYERS, 1, 3 * D), jnp.float32),   # Q part pre-scaled too
        "wo":   normal(next(keys), (LAYERS, D, D)).astype(jnp.bfloat16),
        "bo":   jnp.zeros((LAYERS, 1, D), jnp.float32),
        "ln2_w": jnp.ones((LAYERS, 1, D), jnp.float32),
        "ln2_b": jnp.zeros((LAYERS, 1, D), jnp.float32),
        "wfc1": normal(next(keys), (LAYERS, D, D_FF)).astype(jnp.bfloat16),
        "bfc1": jnp.zeros((LAYERS, 1, D_FF), jnp.float32),
        "wfc2": normal(next(keys), (LAYERS, D_FF, D)).astype(jnp.bfloat16),
        "bfc2": jnp.zeros((LAYERS, 1, D), jnp.float32),
        "final_ln_w": jnp.ones((1, D), jnp.float32),
        "final_ln_b": jnp.zeros((1, D), jnp.float32),
    }
    return params


if __name__ == "__main__":
    key = jax.random.PRNGKey(0)
    k_params, k_ids, k_ctx = jax.random.split(key, 3)

    B, S_IN, CTX = 2, 8, 8      # total encoder sequence length = 16
    params = init_params(k_params)
    input_ids = jax.random.randint(k_ids, (B, S_IN), 0, VOCAB, dtype=jnp.int32)
    ctx_embeddings = 0.02 * jax.random.normal(k_ctx, (B, CTX, D), jnp.float32)
    ctx_begin_pos = jnp.array([2, 3], dtype=jnp.int32)

    # TODO(synk): custom position_ids argument of the PyTorch module is not exposed
    # (default arange path only), matching typical BLIP-Diffusion usage.
    last_hidden_state, pooled_output = context_clip_text_transformer(
        params, input_ids, ctx_embeddings, ctx_begin_pos, attention_mask=None)
    jax.block_until_ready((last_hidden_state, pooled_output))

    assert last_hidden_state.shape == (B, S_IN + CTX, D)
    assert pooled_output.shape == (B, D)
    assert bool(jnp.all(jnp.isfinite(last_hidden_state)))

    # tolerance check vs. the pure-JAX f32 reference (bf16 MXU + approx
    # reciprocal introduce only small relative error on unit-scale outputs)
    hidden = context_clip_embeddings(params, input_ids, ctx_embeddings, ctx_begin_pos)
    km = build_key_mask(None, B, hidden.shape[1])
    ref = encoder_reference(hidden, km, params)
    max_err = float(jnp.max(jnp.abs(last_hidden_state - ref)))
    assert max_err < 0.15, f"kernel/reference mismatch: max abs err {max_err}"

    print("KERNEL_OK")
</pallas_src>

<mosaic_0001>
module attributes {stable_mosaic.version = 11 : i64} {
  func.func @kernel(%arg0: i32, %arg1: i32, %arg2: memref<128x128xf32, #tpu.memory_space<vmem>>, %arg3: memref<8x16xf32, #tpu.memory_space<vmem>>, %arg4: memref<2x1x128xf32, #tpu.memory_space<vmem>>, %arg5: memref<2x1x128xf32, #tpu.memory_space<vmem>>, %arg6: memref<2x128x384xbf16, #tpu.memory_space<vmem>>, %arg7: memref<2x1x384xf32, #tpu.memory_space<vmem>>, %arg8: memref<2x128x128xbf16, #tpu.memory_space<vmem>>, %arg9: memref<2x1x128xf32, #tpu.memory_space<vmem>>, %arg10: memref<2x1x128xf32, #tpu.memory_space<vmem>>, %arg11: memref<2x1x128xf32, #tpu.memory_space<vmem>>, %arg12: memref<2x128x256xbf16, #tpu.memory_space<vmem>>, %arg13: memref<2x1x256xf32, #tpu.memory_space<vmem>>, %arg14: memref<2x256x128xbf16, #tpu.memory_space<vmem>>, %arg15: memref<2x1x128xf32, #tpu.memory_space<vmem>>, %arg16: memref<1x128xf32, #tpu.memory_space<vmem>>, %arg17: memref<1x128xf32, #tpu.memory_space<vmem>>, %arg18: memref<128x128xf32, #tpu.memory_space<vmem>>, %arg19: memref<8x16x16xf32, #tpu.memory_space<vmem>>) attributes {dimension_semantics = [#tpu.dimension_semantics<parallel>, #tpu.dimension_semantics<arbitrary>], iteration_bounds = array<i64: 1, 2>, scalar_prefetch = 0 : i64, scratch_operands = 1 : i64, tpu.core_type = #tpu.core_type<tc>, window_params = [{transform_indices = @transform_0, window_bounds = array<i64: 128, 128>}, {transform_indices = @transform_1, window_bounds = array<i64: 8, 16>}, {pipeline_mode = #tpu.pipeline_mode<synchronous>, transform_indices = @transform_2, window_bounds = array<i64: 2, 1, 128>}, {pipeline_mode = #tpu.pipeline_mode<synchronous>, transform_indices = @transform_3, window_bounds = array<i64: 2, 1, 128>}, {pipeline_mode = #tpu.pipeline_mode<synchronous>, transform_indices = @transform_4, window_bounds = array<i64: 2, 128, 384>}, {pipeline_mode = #tpu.pipeline_mode<synchronous>, transform_indices = @transform_5, window_bounds = array<i64: 2, 1, 384>}, {pipeline_mode = #tpu.pipeline_mode<synchronous>, transform_indices = @transform_6, window_bounds = array<i64: 2, 128, 128>}, {pipeline_mode = #tpu.pipeline_mode<synchronous>, transform_indices = @transform_7, window_bounds = array<i64: 2, 1, 128>}, {pipeline_mode = #tpu.pipeline_mode<synchronous>, transform_indices = @transform_8, window_bounds = array<i64: 2, 1, 128>}, {pipeline_mode = #tpu.pipeline_mode<synchronous>, transform_indices = @transform_9, window_bounds = array<i64: 2, 1, 128>}, {pipeline_mode = #tpu.pipeline_mode<synchronous>, transform_indices = @transform_10, window_bounds = array<i64: 2, 128, 256>}, {pipeline_mode = #tpu.pipeline_mode<synchronous>, transform_indices = @transform_11, window_bounds = array<i64: 2, 1, 256>}, {pipeline_mode = #tpu.pipeline_mode<synchronous>, transform_indices = @transform_12, window_bounds = array<i64: 2, 256, 128>}, {pipeline_mode = #tpu.pipeline_mode<synchronous>, transform_indices = @transform_13, window_bounds = array<i64: 2, 1, 128>}, {pipeline_mode = #tpu.pipeline_mode<synchronous>, transform_indices = @transform_14, window_bounds = array<i64: 1, 128>}, {pipeline_mode = #tpu.pipeline_mode<synchronous>, transform_indices = @transform_15, window_bounds = array<i64: 1, 128>}, {transform_indices = @transform_16, window_bounds = array<i64: 128, 128>}]} {
    %c0_i32 = arith.constant 0 : i32
    %0 = arith.cmpi eq, %arg1, %c0_i32 : i32
    %1 = arith.extui %0 : i1 to i32
    %c0_i32_0 = arith.constant 0 : i32
    %2 = arith.cmpi ne, %1, %c0_i32_0 : i32
    scf.if %2 {
      %c0_63 = arith.constant 0 : index
      %c0_64 = arith.constant 0 : index
      %214 = vector.load %arg2[%c0_63, %c0_64] : memref<128x128xf32, #tpu.memory_space<vmem>>, vector<128x128xf32>
      %c0_65 = arith.constant 0 : index
      %c0_66 = arith.constant 0 : index
      %215 = vector.load %arg18[%c0_65, %c0_66] : memref<128x128xf32, #tpu.memory_space<vmem>>, vector<128x128xf32>
      tpu.vector_store %arg18[%c0_65, %c0_66], %214 {strides = array<i32>} : memref<128x128xf32, #tpu.memory_space<vmem>>, vector<128x128xf32>,
      %216 = tpu.iota {dimensions = array<i32: 0>} : vector<16x16xi32>
      %217 = tpu.iota {dimensions = array<i32: 1>} : vector<16x16xi32>
      %c0_67 = arith.constant 0 : index
      %c0_68 = arith.constant 0 : index
      %218 = vector.load %arg3[%c0_67, %c0_68] : memref<8x16xf32, #tpu.memory_space<vmem>>, vector<8x16xf32>
      %219 = arith.cmpi sgt, %217, %216 : vector<16x16xi32>
      %220 = vector.shape_cast %219 : vector<16x16xi1> to vector<1x16x16xi1>
      %221 = vector.shape_cast %218 : vector<8x16xf32> to vector<8x1x16xf32>
      %cst_69 = arith.constant -3.40282347E+38 : f32
      %222 = vector.shape_cast %220 : vector<1x16x16xi1> to vector<1x16x16xi1>
      %223 = vector.broadcast %222 : vector<1x16x16xi1> to vector<8x16x16xi1>
      %224 = vector.broadcast %cst_69 : f32 to vector<8x16x16xf32>
      %225 = vector.shape_cast %221 : vector<8x1x16xf32> to vector<8x1x16xf32>
      %226 = vector.broadcast %225 : vector<8x1x16xf32> to vector<8x16x16xf32>
      %227 = arith.select %223, %224, %226 : vector<8x16x16xi1>, vector<8x16x16xf32>
      %c0_70 = arith.constant 0 : index
      %c0_71 = arith.constant 0 : index
      %c0_72 = arith.constant 0 : index
      %228 = vector.load %arg19[%c0_70, %c0_71, %c0_72] : memref<8x16x16xf32, #tpu.memory_space<vmem>>, vector<8x16x16xf32>
      tpu.vector_store %arg19[%c0_70, %c0_71, %c0_72], %227 {strides = array<i32>} : memref<8x16x16xf32, #tpu.memory_space<vmem>>, vector<8x16x16xf32>,
    } else {
    }
    %c0 = arith.constant 0 : index
    %c0_1 = arith.constant 0 : index
    %3 = vector.load %arg18[%c0, %c0_1] : memref<128x128xf32, #tpu.memory_space<vmem>>, vector<128x128xf32>
    %c0_2 = arith.constant 0 : index
    %c0_3 = arith.constant 0 : index
    %c0_4 = arith.constant 0 : index
    %4 = vector.load %arg19[%c0_2, %c0_3, %c0_4] : memref<8x16x16xf32, #tpu.memory_space<vmem>>, vector<8x16x16xf32>
    %5 = arith.index_cast %arg1 : i32 to index
    %c0_5 = arith.constant 0 : index
    %c0_6 = arith.constant 0 : index
    %6 = vector.load %arg4[%5, %c0_5, %c0_6] : memref<2x1x128xf32, #tpu.memory_space<vmem>>, vector<1x1x128xf32>
    %7 = vector.shape_cast %6 : vector<1x1x128xf32> to vector<1x128xf32>
    %8 = arith.index_cast %arg1 : i32 to index
    %c0_7 = arith.constant 0 : index
    %c0_8 = arith.constant 0 : index
    %9 = vector.load %arg5[%8, %c0_7, %c0_8] : memref<2x1x128xf32, #tpu.memory_space<vmem>>, vector<1x1x128xf32>
    %10 = vector.shape_cast %9 : vector<1x1x128xf32> to vector<1x128xf32>
    %11 = arith.index_cast %arg1 : i32 to index
    %c0_9 = arith.constant 0 : index
    %c0_10 = arith.constant 0 : index
    %12 = vector.load %arg6[%11, %c0_9, %c0_10] : memref<2x128x384xbf16, #tpu.memory_space<vmem>>, vector<1x128x384xbf16>
    %13 = vector.shape_cast %12 : vector<1x128x384xbf16> to vector<128x384xbf16>
    %14 = arith.index_cast %arg1 : i32 to index
    %c0_11 = arith.constant 0 : index
    %c0_12 = arith.constant 0 : index
    %15 = vector.load %arg7[%14, %c0_11, %c0_12] : memref<2x1x384xf32, #tpu.memory_space<vmem>>, vector<1x1x384xf32>
    %16 = vector.shape_cast %15 : vector<1x1x384xf32> to vector<1x384xf32>
    %17 = arith.index_cast %arg1 : i32 to index
    %c0_13 = arith.constant 0 : index
    %c0_14 = arith.constant 0 : index
    %18 = vector.load %arg8[%17, %c0_13, %c0_14] : memref<2x128x128xbf16, #tpu.memory_space<vmem>>, vector<1x128x128xbf16>
    %19 = vector.shape_cast %18 : vector<1x128x128xbf16> to vector<128x128xbf16>
    %20 = arith.index_cast %arg1 : i32 to index
    %c0_15 = arith.constant 0 : index
    %c0_16 = arith.constant 0 : index
    %21 = vector.load %arg9[%20, %c0_15, %c0_16] : memref<2x1x128xf32, #tpu.memory_space<vmem>>, vector<1x1x128xf32>
    %22 = vector.shape_cast %21 : vector<1x1x128xf32> to vector<1x128xf32>
    %23 = arith.index_cast %arg1 : i32 to index
    %c0_17 = arith.constant 0 : index
    %c0_18 = arith.constant 0 : index
    %24 = vector.load %arg10[%23, %c0_17, %c0_18] : memref<2x1x128xf32, #tpu.memory_space<vmem>>, vector<1x1x128xf32>
    %25 = vector.shape_cast %24 : vector<1x1x128xf32> to vector<1x128xf32>
    %26 = arith.index_cast %arg1 : i32 to index
    %c0_19 = arith.constant 0 : index
    %c0_20 = arith.constant 0 : index
    %27 = vector.load %arg11[%26, %c0_19, %c0_20] : memref<2x1x128xf32, #tpu.memory_space<vmem>>, vector<1x1x128xf32>
    %28 = vector.shape_cast %27 : vector<1x1x128xf32> to vector<1x128xf32>
    %29 = arith.index_cast %arg1 : i32 to index
    %c0_21 = arith.constant 0 : index
    %c0_22 = arith.constant 0 : index
    %30 = vector.load %arg12[%29, %c0_21, %c0_22] : memref<2x128x256xbf16, #tpu.memory_space<vmem>>, vector<1x128x256xbf16>
    %31 = vector.shape_cast %30 : vector<1x128x256xbf16> to vector<128x256xbf16>
    %32 = arith.index_cast %arg1 : i32 to index
    %c0_23 = arith.constant 0 : index
    %c0_24 = arith.constant 0 : index
    %33 = vector.load %arg13[%32, %c0_23, %c0_24] : memref<2x1x256xf32, #tpu.memory_space<vmem>>, vector<1x1x256xf32>
    %34 = vector.shape_cast %33 : vector<1x1x256xf32> to vector<1x256xf32>
    %35 = arith.index_cast %arg1 : i32 to index
    %c0_25 = arith.constant 0 : index
    %c0_26 = arith.constant 0 : index
    %36 = vector.load %arg14[%35, %c0_25, %c0_26] : memref<2x256x128xbf16, #tpu.memory_space<vmem>>, vector<1x256x128xbf16>
    %37 = vector.shape_cast %36 : vector<1x256x128xbf16> to vector<256x128xbf16>
    %38 = arith.index_cast %arg1 : i32 to index
    %c0_27 = arith.constant 0 : index
    %c0_28 = arith.constant 0 : index
    %39 = vector.load %arg15[%38, %c0_27, %c0_28] : memref<2x1x128xf32, #tpu.memory_space<vmem>>, vector<1x1x128xf32>
    %40 = vector.shape_cast %39 : vector<1x1x128xf32> to vector<1x128xf32>
    %cst = arith.constant dense<0.000000e+00> : vector<128xf32>
    %41 = vector.multi_reduction <add>, %3, %cst [1] : vector<128x128xf32> to vector<128xf32>
    %42 = vector.shape_cast %41 : vector<128xf32> to vector<128x1xf32>
    %cst_29 = arith.constant 1.280000e+02 : f32
    %43 = vector.broadcast %cst_29 : f32 to vector<128x1xf32>
    %44 = arith.divf %42, %43 : vector<128x1xf32>
    %45 = vector.broadcast %44 : vector<128x1xf32> to vector<128x128xf32>
    %46 = arith.subf %3, %45 : vector<128x128xf32>
    %47 = arith.mulf %46, %46 : vector<128x128xf32>
    %cst_30 = arith.constant dense<0.000000e+00> : vector<128xf32>
    %48 = vector.multi_reduction <add>, %47, %cst_30 [1] : vector<128x128xf32> to vector<128xf32>
    %49 = vector.shape_cast %48 : vector<128xf32> to vector<128x1xf32>
    %cst_31 = arith.constant 1.280000e+02 : f32
    %50 = vector.broadcast %cst_31 : f32 to vector<128x1xf32>
    %51 = arith.divf %49, %50 : vector<128x1xf32>
    %52 = vector.broadcast %44 : vector<128x1xf32> to vector<128x128xf32>
    %53 = arith.subf %3, %52 : vector<128x128xf32>
    %cst_32 = arith.constant 9.99999974E-6 : f32
    %54 = vector.broadcast %cst_32 : f32 to vector<128x1xf32>
    %55 = arith.addf %51, %54 : vector<128x1xf32>
    %56 = math.rsqrt %55 : vector<128x1xf32>
    %57 = vector.broadcast %56 : vector<128x1xf32> to vector<128x128xf32>
    %58 = arith.mulf %53, %57 : vector<128x128xf32>
    %59 = vector.broadcast %7 : vector<1x128xf32> to vector<128x128xf32>
    %60 = arith.mulf %58, %59 : vector<128x128xf32>
    %61 = vector.broadcast %10 : vector<1x128xf32> to vector<128x128xf32>
    %62 = arith.addf %60, %61 : vector<128x128xf32>
    %63 = arith.truncf %62 : vector<128x128xf32> to vector<128x128xbf16>
    %cst_33 = arith.constant dense<0.000000e+00> : vector<128x384xf32>
    %64 = tpu.matmul %63, %13, %cst_33 {dimension_numbers = #tpu.dot_dimension_numbers<[1], [0], [0], [1], [0, 0, 1, 1], [], []>} : vector<128x128xbf16>, vector<128x384xbf16>, vector<128x384xf32> -> vector<128x384xf32>
    %65 = vector.broadcast %16 : vector<1x384xf32> to vector<128x384xf32>
    %66 = arith.addf %64, %65 : vector<128x384xf32>
    %67 = vector.extract_strided_slice %66 {offsets = [0, 0], sizes = [128, 128], strides = [1, 1]} : vector<128x384xf32> to vector<128x128xf32>
    %68 = vector.extract_strided_slice %66 {offsets = [0, 128], sizes = [128, 128], strides = [1, 1]} : vector<128x384xf32> to vector<128x128xf32>
    %69 = vector.extract_strided_slice %66 {offsets = [0, 256], sizes = [128, 128], strides = [1, 1]} : vector<128x384xf32> to vector<128x128xf32>
    %70 = vector.extract_strided_slice %67 {offsets = [0, 0], sizes = [128, 32], strides = [1, 1]} : vector<128x128xf32> to vector<128x32xf32>
    %71 = vector.shape_cast %70 : vector<128x32xf32> to vector<8x16x32xf32>
    %72 = arith.truncf %71 : vector<8x16x32xf32> to vector<8x16x32xbf16>
    %73 = vector.extract_strided_slice %68 {offsets = [0, 0], sizes = [128, 32], strides = [1, 1]} : vector<128x128xf32> to vector<128x32xf32>
    %74 = vector.shape_cast %73 : vector<128x32xf32> to vector<8x16x32xf32>
    %75 = arith.truncf %74 : vector<8x16x32xf32> to vector<8x16x32xbf16>
    %76 = vector.extract_strided_slice %69 {offsets = [0, 0], sizes = [128, 32], strides = [1, 1]} : vector<128x128xf32> to vector<128x32xf32>
    %77 = vector.shape_cast %76 : vector<128x32xf32> to vector<8x16x32xf32>
    %78 = arith.truncf %77 : vector<8x16x32xf32> to vector<8x16x32xbf16>
    %cst_34 = arith.constant dense<0.000000e+00> : vector<8x16x16xf32>
    %79 = tpu.matmul %72, %75, %cst_34 {dimension_numbers = #tpu.dot_dimension_numbers<[2], [2], [1], [1], [0, 0, 0, 1, 1, 1], [0], [0]>} : vector<8x16x32xbf16>, vector<8x16x32xbf16>, vector<8x16x16xf32> -> vector<8x16x16xf32>
    %80 = arith.addf %79, %4 : vector<8x16x16xf32>
    %cst_35 = arith.constant dense<0xFF800000> : vector<8x16xf32>
    %81 = vector.multi_reduction <maximumf>, %80, %cst_35 [2] : vector<8x16x16xf32> to vector<8x16xf32>
    %82 = vector.shape_cast %81 : vector<8x16xf32> to vector<8x16x1xf32>
    %83 = vector.broadcast %82 : vector<8x16x1xf32> to vector<8x16x16xf32>
    %84 = arith.subf %80, %83 : vector<8x16x16xf32>
    %85 = math.exp %84 : vector<8x16x16xf32>
    %cst_36 = arith.constant dense<0.000000e+00> : vector<8x16xf32>
    %86 = vector.multi_reduction <add>, %85, %cst_36 [2] : vector<8x16x16xf32> to vector<8x16xf32>
    %87 = vector.shape_cast %86 : vector<8x16xf32> to vector<8x16x1xf32>
    %88 = tpu.reciprocal %87 {approx = true} : vector<8x16x1xf32> -> vector<8x16x1xf32>
    %89 = vector.broadcast %88 : vector<8x16x1xf32> to vector<8x16x16xf32>
    %90 = arith.mulf %85, %89 : vector<8x16x16xf32>
    %91 = arith.truncf %90 : vector<8x16x16xf32> to vector<8x16x16xbf16>
    %cst_37 = arith.constant dense<0.000000e+00> : vector<8x16x32xf32>
    %92 = tpu.matmul %91, %78, %cst_37 {dimension_numbers = #tpu.dot_dimension_numbers<[2], [1], [1], [2], [0, 0, 0, 1, 1, 2], [0], [0]>} : vector<8x16x16xbf16>, vector<8x16x32xbf16>, vector<8x16x32xf32> -> vector<8x16x32xf32>
    %93 = vector.extract_strided_slice %67 {offsets = [0, 32], sizes = [128, 32], strides = [1, 1]} : vector<128x128xf32> to vector<128x32xf32>
    %94 = vector.shape_cast %93 : vector<128x32xf32> to vector<8x16x32xf32>
    %95 = arith.truncf %94 : vector<8x16x32xf32> to vector<8x16x32xbf16>
    %96 = vector.extract_strided_slice %68 {offsets = [0, 32], sizes = [128, 32], strides = [1, 1]} : vector<128x128xf32> to vector<128x32xf32>
    %97 = vector.shape_cast %96 : vector<128x32xf32> to vector<8x16x32xf32>
    %98 = arith.truncf %97 : vector<8x16x32xf32> to vector<8x16x32xbf16>
    %99 = vector.extract_strided_slice %69 {offsets = [0, 32], sizes = [128, 32], strides = [1, 1]} : vector<128x128xf32> to vector<128x32xf32>
    %100 = vector.shape_cast %99 : vector<128x32xf32> to vector<8x16x32xf32>
    %101 = arith.truncf %100 : vector<8x16x32xf32> to vector<8x16x32xbf16>
    %cst_38 = arith.constant dense<0.000000e+00> : vector<8x16x16xf32>
    %102 = tpu.matmul %95, %98, %cst_38 {dimension_numbers = #tpu.dot_dimension_numbers<[2], [2], [1], [1], [0, 0, 0, 1, 1, 1], [0], [0]>} : vector<8x16x32xbf16>, vector<8x16x32xbf16>, vector<8x16x16xf32> -> vector<8x16x16xf32>
    %103 = arith.addf %102, %4 : vector<8x16x16xf32>
    %cst_39 = arith.constant dense<0xFF800000> : vector<8x16xf32>
    %104 = vector.multi_reduction <maximumf>, %103, %cst_39 [2] : vector<8x16x16xf32> to vector<8x16xf32>
    %105 = vector.shape_cast %104 : vector<8x16xf32> to vector<8x16x1xf32>
    %106 = vector.broadcast %105 : vector<8x16x1xf32> to vector<8x16x16xf32>
    %107 = arith.subf %103, %106 : vector<8x16x16xf32>
    %108 = math.exp %107 : vector<8x16x16xf32>
    %cst_40 = arith.constant dense<0.000000e+00> : vector<8x16xf32>
    %109 = vector.multi_reduction <add>, %108, %cst_40 [2] : vector<8x16x16xf32> to vector<8x16xf32>
    %110 = vector.shape_cast %109 : vector<8x16xf32> to vector<8x16x1xf32>
    %111 = tpu.reciprocal %110 {approx = true} : vector<8x16x1xf32> -> vector<8x16x1xf32>
    %112 = vector.broadcast %111 : vector<8x16x1xf32> to vector<8x16x16xf32>
    %113 = arith.mulf %108, %112 : vector<8x16x16xf32>
    %114 = arith.truncf %113 : vector<8x16x16xf32> to vector<8x16x16xbf16>
    %cst_41 = arith.constant dense<0.000000e+00> : vector<8x16x32xf32>
    %115 = tpu.matmul %114, %101, %cst_41 {dimension_numbers = #tpu.dot_dimension_numbers<[2], [1], [1], [2], [0, 0, 0, 1, 1, 2], [0], [0]>} : vector<8x16x16xbf16>, vector<8x16x32xbf16>, vector<8x16x32xf32> -> vector<8x16x32xf32>
    %116 = vector.extract_strided_slice %67 {offsets = [0, 64], sizes = [128, 32], strides = [1, 1]} : vector<128x128xf32> to vector<128x32xf32>
    %117 = vector.shape_cast %116 : vector<128x32xf32> to vector<8x16x32xf32>
    %118 = arith.truncf %117 : vector<8x16x32xf32> to vector<8x16x32xbf16>
    %119 = vector.extract_strided_slice %68 {offsets = [0, 64], sizes = [128, 32], strides = [1, 1]} : vector<128x128xf32> to vector<128x32xf32>
    %120 = vector.shape_cast %119 : vector<128x32xf32> to vector<8x16x32xf32>
    %121 = arith.truncf %120 : vector<8x16x32xf32> to vector<8x16x32xbf16>
    %122 = vector.extract_strided_slice %69 {offsets = [0, 64], sizes = [128, 32], strides = [1, 1]} : vector<128x128xf32> to vector<128x32xf32>
    %123 = vector.shape_cast %122 : vector<128x32xf32> to vector<8x16x32xf32>
    %124 = arith.truncf %123 : vector<8x16x32xf32> to vector<8x16x32xbf16>
    %cst_42 = arith.constant dense<0.000000e+00> : vector<8x16x16xf32>
    %125 = tpu.matmul %118, %121, %cst_42 {dimension_numbers = #tpu.dot_dimension_numbers<[2], [2], [1], [1], [0, 0, 0, 1, 1, 1], [0], [0]>} : vector<8x16x32xbf16>, vector<8x16x32xbf16>, vector<8x16x16xf32> -> vector<8x16x16xf32>
    %126 = arith.addf %125, %4 : vector<8x16x16xf32>
    %cst_43 = arith.constant dense<0xFF800000> : vector<8x16xf32>
    %127 = vector.multi_reduction <maximumf>, %126, %cst_43 [2] : vector<8x16x16xf32> to vector<8x16xf32>
    %128 = vector.shape_cast %127 : vector<8x16xf32> to vector<8x16x1xf32>
    %129 = vector.broadcast %128 : vector<8x16x1xf32> to vector<8x16x16xf32>
    %130 = arith.subf %126, %129 : vector<8x16x16xf32>
    %131 = math.exp %130 : vector<8x16x16xf32>
    %cst_44 = arith.constant dense<0.000000e+00> : vector<8x16xf32>
    %132 = vector.multi_reduction <add>, %131, %cst_44 [2] : vector<8x16x16xf32> to vector<8x16xf32>
    %133 = vector.shape_cast %132 : vector<8x16xf32> to vector<8x16x1xf32>
    %134 = tpu.reciprocal %133 {approx = true} : vector<8x16x1xf32> -> vector<8x16x1xf32>
    %135 = vector.broadcast %134 : vector<8x16x1xf32> to vector<8x16x16xf32>
    %136 = arith.mulf %131, %135 : vector<8x16x16xf32>
    %137 = arith.truncf %136 : vector<8x16x16xf32> to vector<8x16x16xbf16>
    %cst_45 = arith.constant dense<0.000000e+00> : vector<8x16x32xf32>
    %138 = tpu.matmul %137, %124, %cst_45 {dimension_numbers = #tpu.dot_dimension_numbers<[2], [1], [1], [2], [0, 0, 0, 1, 1, 2], [0], [0]>} : vector<8x16x16xbf16>, vector<8x16x32xbf16>, vector<8x16x32xf32> -> vector<8x16x32xf32>
    %139 = vector.extract_strided_slice %67 {offsets = [0, 96], sizes = [128, 32], strides = [1, 1]} : vector<128x128xf32> to vector<128x32xf32>
    %140 = vector.shape_cast %139 : vector<128x32xf32> to vector<8x16x32xf32>
    %141 = arith.truncf %140 : vector<8x16x32xf32> to vector<8x16x32xbf16>
    %142 = vector.extract_strided_slice %68 {offsets = [0, 96], sizes = [128, 32], strides = [1, 1]} : vector<128x128xf32> to vector<128x32xf32>
    %143 = vector.shape_cast %142 : vector<128x32xf32> to vector<8x16x32xf32>
    %144 = arith.truncf %143 : vector<8x16x32xf32> to vector<8x16x32xbf16>
    %145 = vector.extract_strided_slice %69 {offsets = [0, 96], sizes = [128, 32], strides = [1, 1]} : vector<128x128xf32> to vector<128x32xf32>
    %146 = vector.shape_cast %145 : vector<128x32xf32> to vector<8x16x32xf32>
    %147 = arith.truncf %146 : vector<8x16x32xf32> to vector<8x16x32xbf16>
    %cst_46 = arith.constant dense<0.000000e+00> : vector<8x16x16xf32>
    %148 = tpu.matmul %141, %144, %cst_46 {dimension_numbers = #tpu.dot_dimension_numbers<[2], [2], [1], [1], [0, 0, 0, 1, 1, 1], [0], [0]>} : vector<8x16x32xbf16>, vector<8x16x32xbf16>, vector<8x16x16xf32> -> vector<8x16x16xf32>
    %149 = arith.addf %148, %4 : vector<8x16x16xf32>
    %cst_47 = arith.constant dense<0xFF800000> : vector<8x16xf32>
    %150 = vector.multi_reduction <maximumf>, %149, %cst_47 [2] : vector<8x16x16xf32> to vector<8x16xf32>
    %151 = vector.shape_cast %150 : vector<8x16xf32> to vector<8x16x1xf32>
    %152 = vector.broadcast %151 : vector<8x16x1xf32> to vector<8x16x16xf32>
    %153 = arith.subf %149, %152 : vector<8x16x16xf32>
    %154 = math.exp %153 : vector<8x16x16xf32>
    %cst_48 = arith.constant dense<0.000000e+00> : vector<8x16xf32>
    %155 = vector.multi_reduction <add>, %154, %cst_48 [2] : vector<8x16x16xf32> to vector<8x16xf32>
    %156 = vector.shape_cast %155 : vector<8x16xf32> to vector<8x16x1xf32>
    %157 = tpu.reciprocal %156 {approx = true} : vector<8x16x1xf32> -> vector<8x16x1xf32>
    %158 = vector.broadcast %157 : vector<8x16x1xf32> to vector<8x16x16xf32>
    %159 = arith.mulf %154, %158 : vector<8x16x16xf32>
    %160 = arith.truncf %159 : vector<8x16x16xf32> to vector<8x16x16xbf16>
    %cst_49 = arith.constant dense<0.000000e+00> : vector<8x16x32xf32>
    %161 = tpu.matmul %160, %147, %cst_49 {dimension_numbers = #tpu.dot_dimension_numbers<[2], [1], [1], [2], [0, 0, 0, 1, 1, 2], [0], [0]>} : vector<8x16x16xbf16>, vector<8x16x32xbf16>, vector<8x16x32xf32> -> vector<8x16x32xf32>
    %162 = tpu.concatenate %92, %115, %138, %161 in 2 : vector<8x16x32xf32>, vector<8x16x32xf32>, vector<8x16x32xf32>, vector<8x16x32xf32> -> vector<8x16x128xf32>
    %163 = vector.shape_cast %162 : vector<8x16x128xf32> to vector<128x128xf32>
    %164 = arith.truncf %163 : vector<128x128xf32> to vector<128x128xbf16>
    %cst_50 = arith.constant dense<0.000000e+00> : vector<128x128xf32>
    %165 = tpu.matmul %164, %19, %cst_50 {dimension_numbers = #tpu.dot_dimension_numbers<[1], [0], [0], [1], [0, 0, 1, 1], [], []>} : vector<128x128xbf16>, vector<128x128xbf16>, vector<128x128xf32> -> vector<128x128xf32>
    %166 = vector.broadcast %22 : vector<1x128xf32> to vector<128x128xf32>
    %167 = arith.addf %165, %166 : vector<128x128xf32>
    %168 = arith.addf %3, %167 : vector<128x128xf32>
    %cst_51 = arith.constant dense<0.000000e+00> : vector<128xf32>
    %169 = vector.multi_reduction <add>, %168, %cst_51 [1] : vector<128x128xf32> to vector<128xf32>
    %170 = vector.shape_cast %169 : vector<128xf32> to vector<128x1xf32>
    %cst_52 = arith.constant 1.280000e+02 : f32
    %171 = vector.broadcast %cst_52 : f32 to vector<128x1xf32>
    %172 = arith.divf %170, %171 : vector<128x1xf32>
    %173 = vector.broadcast %172 : vector<128x1xf32> to vector<128x128xf32>
    %174 = arith.subf %168, %173 : vector<128x128xf32>
    %175 = arith.mulf %174, %174 : vector<128x128xf32>
    %cst_53 = arith.constant dense<0.000000e+00> : vector<128xf32>
    %176 = vector.multi_reduction <add>, %175, %cst_53 [1] : vector<128x128xf32> to vector<128xf32>
    %177 = vector.shape_cast %176 : vector<128xf32> to vector<128x1xf32>
    %cst_54 = arith.constant 1.280000e+02 : f32
    %178 = vector.broadcast %cst_54 : f32 to vector<128x1xf32>
    %179 = arith.divf %177, %178 : vector<128x1xf32>
    %180 = vector.broadcast %172 : vector<128x1xf32> to vector<128x128xf32>
    %181 = arith.subf %168, %180 : vector<128x128xf32>
    %cst_55 = arith.constant 9.99999974E-6 : f32
    %182 = vector.broadcast %cst_55 : f32 to vector<128x1xf32>
    %183 = arith.addf %179, %182 : vector<128x1xf32>
    %184 = math.rsqrt %183 : vector<128x1xf32>
    %185 = vector.broadcast %184 : vector<128x1xf32> to vector<128x128xf32>
    %186 = arith.mulf %181, %185 : vector<128x128xf32>
    %187 = vector.broadcast %25 : vector<1x128xf32> to vector<128x128xf32>
    %188 = arith.mulf %186, %187 : vector<128x128xf32>
    %189 = vector.broadcast %28 : vector<1x128xf32> to vector<128x128xf32>
    %190 = arith.addf %188, %189 : vector<128x128xf32>
    %191 = arith.truncf %190 : vector<128x128xf32> to vector<128x128xbf16>
    %cst_56 = arith.constant dense<0.000000e+00> : vector<128x256xf32>
    %192 = tpu.matmul %191, %31, %cst_56 {dimension_numbers = #tpu.dot_dimension_numbers<[1], [0], [0], [1], [0, 0, 1, 1], [], []>} : vector<128x128xbf16>, vector<128x256xbf16>, vector<128x256xf32> -> vector<128x256xf32>
    %193 = vector.broadcast %34 : vector<1x256xf32> to vector<128x256xf32>
    %194 = arith.addf %192, %193 : vector<128x256xf32>
    %cst_57 = arith.constant 1.702000e+00 : f32
    %195 = vector.broadcast %cst_57 : f32 to vector<128x256xf32>
    %196 = arith.mulf %195, %194 : vector<128x256xf32>
    %197 = arith.negf %196 : vector<128x256xf32>
    %198 = math.exp %197 : vector<128x256xf32>
    %cst_58 = arith.constant 1.000000e+00 : f32
    %199 = vector.broadcast %cst_58 : f32 to vector<128x256xf32>
    %200 = arith.addf %199, %198 : vector<128x256xf32>
    %201 = arith.divf %199, %200 : vector<128x256xf32>
    %202 = arith.mulf %194, %201 : vector<128x256xf32>
    %203 = arith.truncf %202 : vector<128x256xf32> to vector<128x256xbf16>
    %cst_59 = arith.constant dense<0.000000e+00> : vector<128x128xf32>
    %204 = tpu.matmul %203, %37, %cst_59 {dimension_numbers = #tpu.dot_dimension_numbers<[1], [0], [0], [1], [0, 0, 1, 1], [], []>} : vector<128x256xbf16>, vector<256x128xbf16>, vector<128x128xf32> -> vector<128x128xf32>
    %205 = vector.broadcast %40 : vector<1x128xf32> to vector<128x128xf32>
    %206 = arith.addf %204, %205 : vector<128x128xf32>
    %207 = arith.addf %168, %206 : vector<128x128xf32>
    %c1_i32 = arith.constant 1 : i32
    %208 = arith.cmpi slt, %arg1, %c1_i32 : i32
    %209 = arith.extui %208 : i1 to i32
    %c0_i32_60 = arith.constant 0 : i32
    %210 = arith.cmpi ne, %209, %c0_i32_60 : i32
    scf.if %210 {
      %c0_63 = arith.constant 0 : index
      %c0_64 = arith.constant 0 : index
      %214 = vector.load %arg18[%c0_63, %c0_64] : memref<128x128xf32, #tpu.memory_space<vmem>>, vector<128x128xf32>
      tpu.vector_store %arg18[%c0_63, %c0_64], %207 {strides = array<i32>} : memref<128x128xf32, #tpu.memory_space<vmem>>, vector<128x128xf32>,
    } else {
    }
    %c1_i32_61 = arith.constant 1 : i32
    %211 = arith.cmpi eq, %arg1, %c1_i32_61 : i32
    %212 = arith.extui %211 : i1 to i32
    %c0_i32_62 = arith.constant 0 : i32
    %213 = arith.cmpi ne, %212, %c0_i32_62 : i32
    scf.if %213 {
      %c0_63 = arith.constant 0 : index
      %c0_64 = arith.constant 0 : index
      %214 = vector.load %arg16[%c0_63, %c0_64] : memref<1x128xf32, #tpu.memory_space<vmem>>, vector<1x128xf32>
      %c0_65 = arith.constant 0 : index
      %c0_66 = arith.constant 0 : index
      %215 = vector.load %arg17[%c0_65, %c0_66] : memref<1x128xf32, #tpu.memory_space<vmem>>, vector<1x128xf32>
      %cst_67 = arith.constant dense<0.000000e+00> : vector<128xf32>
      %216 = vector.multi_reduction <add>, %207, %cst_67 [1] : vector<128x128xf32> to vector<128xf32>
      %217 = vector.shape_cast %216 : vector<128xf32> to vector<128x1xf32>
      %cst_68 = arith.constant 1.280000e+02 : f32
      %218 = vector.broadcast %cst_68 : f32 to vector<128x1xf32>
      %219 = arith.divf %217, %218 : vector<128x1xf32>
      %220 = vector.broadcast %219 : vector<128x1xf32> to vector<128x128xf32>
      %221 = arith.subf %207, %220 : vector<128x128xf32>
      %222 = arith.mulf %221, %221 : vector<128x128xf32>
      %cst_69 = arith.constant dense<0.000000e+00> : vector<128xf32>
      %223 = vector.multi_reduction <add>, %222, %cst_69 [1] : vector<128x128xf32> to vector<128xf32>
      %224 = vector.shape_cast %223 : vector<128xf32> to vector<128x1xf32>
      %cst_70 = arith.constant 1.280000e+02 : f32
      %225 = vector.broadcast %cst_70 : f32 to vector<128x1xf32>
      %226 = arith.divf %224, %225 : vector<128x1xf32>
      %227 = vector.broadcast %219 : vector<128x1xf32> to vector<128x128xf32>
      %228 = arith.subf %207, %227 : vector<128x128xf32>
      %cst_71 = arith.constant 9.99999974E-6 : f32
      %229 = vector.broadcast %cst_71 : f32 to vector<128x1xf32>
      %230 = arith.addf %226, %229 : vector<128x1xf32>
      %231 = math.rsqrt %230 : vector<128x1xf32>
      %232 = vector.broadcast %231 : vector<128x1xf32> to vector<128x128xf32>
      %233 = arith.mulf %228, %232 : vector<128x128xf32>
      %234 = vector.broadcast %214 : vector<1x128xf32> to vector<128x128xf32>
      %235 = arith.mulf %233, %234 : vector<128x128xf32>
      %236 = vector.broadcast %215 : vector<1x128xf32> to vector<128x128xf32>
      %237 = arith.addf %235, %236 : vector<128x128xf32>
      %c0_72 = arith.constant 0 : index
      %c0_73 = arith.constant 0 : index
      %238 = vector.load %arg18[%c0_72, %c0_73] : memref<128x128xf32, #tpu.memory_space<vmem>>, vector<128x128xf32>
      tpu.vector_store %arg18[%c0_72, %c0_73], %237 {strides = array<i32>} : memref<128x128xf32, #tpu.memory_space<vmem>>, vector<128x128xf32>,
    } else {
    }
    return
  }
  func.func @transform_0(%arg0: i32, %arg1: i32) -> (i32, i32) {
    %c0_i32 = arith.constant 0 : i32
    %c0_i32_0 = arith.constant 0 : i32
    return %arg0, %c0_i32 : i32, i32
  }
  func.func @transform_1(%arg0: i32, %arg1: i32) -> (i32, i32) {
    %c0_i32 = arith.constant 0 : i32
    %c0_i32_0 = arith.constant 0 : i32
    return %arg0, %c0_i32 : i32, i32
  }
  func.func @transform_2(%arg0: i32, %arg1: i32) -> (i32, i32, i32) {
    %c0_i32 = arith.constant 0 : i32
    %c0_i32_0 = arith.constant 0 : i32
    %c0_i32_1 = arith.constant 0 : i32
    %c0_i32_2 = arith.constant 0 : i32
    return %c0_i32, %c0_i32_0, %c0_i32_1 : i32, i32, i32
  }
  func.func @transform_3(%arg0: i32, %arg1: i32) -> (i32, i32, i32) {
    %c0_i32 = arith.constant 0 : i32
    %c0_i32_0 = arith.constant 0 : i32
    %c0_i32_1 = arith.constant 0 : i32
    %c0_i32_2 = arith.constant 0 : i32
    return %c0_i32, %c0_i32_0, %c0_i32_1 : i32, i32, i32
  }
  func.func @transform_4(%arg0: i32, %arg1: i32) -> (i32, i32, i32) {
    %c0_i32 = arith.constant 0 : i32
    %c0_i32_0 = arith.constant 0 : i32
    %c0_i32_1 = arith.constant 0 : i32
    %c0_i32_2 = arith.constant 0 : i32
    return %c0_i32, %c0_i32_0, %c0_i32_1 : i32, i32, i32
  }
  func.func @transform_5(%arg0: i32, %arg1: i32) -> (i32, i32, i32) {
    %c0_i32 = arith.constant 0 : i32
    %c0_i32_0 = arith.constant 0 : i32
    %c0_i32_1 = arith.constant 0 : i32
    %c0_i32_2 = arith.constant 0 : i32
    return %c0_i32, %c0_i32_0, %c0_i32_1 : i32, i32, i32
  }
  func.func @transform_6(%arg0: i32, %arg1: i32) -> (i32, i32, i32) {
    %c0_i32 = arith.constant 0 : i32
    %c0_i32_0 = arith.constant 0 : i32
    %c0_i32_1 = arith.constant 0 : i32
    %c0_i32_2 = arith.constant 0 : i32
    return %c0_i32, %c0_i32_0, %c0_i32_1 : i32, i32, i32
  }
  func.func @transform_7(%arg0: i32, %arg1: i32) -> (i32, i32, i32) {
    %c0_i32 = arith.constant 0 : i32
    %c0_i32_0 = arith.constant 0 : i32
    %c0_i32_1 = arith.constant 0 : i32
    %c0_i32_2 = arith.constant 0 : i32
    return %c0_i32, %c0_i32_0, %c0_i32_1 : i32, i32, i32
  }
  func.func @transform_8(%arg0: i32, %arg1: i32) -> (i32, i32, i32) {
    %c0_i32 = arith.constant 0 : i32
    %c0_i32_0 = arith.constant 0 : i32
    %c0_i32_1 = arith.constant 0 : i32
    %c0_i32_2 = arith.constant 0 : i32
    return %c0_i32, %c0_i32_0, %c0_i32_1 : i32, i32, i32
  }
  func.func @transform_9(%arg0: i32, %arg1: i32) -> (i32, i32, i32) {
    %c0_i32 = arith.constant 0 : i32
    %c0_i32_0 = arith.constant 0 : i32
    %c0_i32_1 = arith.constant 0 : i32
    %c0_i32_2 = arith.constant 0 : i32
    return %c0_i32, %c0_i32_0, %c0_i32_1 : i32, i32, i32
  }
  func.func @transform_10(%arg0: i32, %arg1: i32) -> (i32, i32, i32) {
    %c0_i32 = arith.constant 0 : i32
    %c0_i32_0 = arith.constant 0 : i32
    %c0_i32_1 = arith.constant 0 : i32
    %c0_i32_2 = arith.constant 0 : i32
    return %c0_i32, %c0_i32_0, %c0_i32_1 : i32, i32, i32
  }
  func.func @transform_11(%arg0: i32, %arg1: i32) -> (i32, i32, i32) {
    %c0_i32 = arith.constant 0 : i32
    %c0_i32_0 = arith.constant 0 : i32
    %c0_i32_1 = arith.constant 0 : i32
    %c0_i32_2 = arith.constant 0 : i32
    return %c0_i32, %c0_i32_0, %c0_i32_1 : i32, i32, i32
  }
  func.func @transform_12(%arg0: i32, %arg1: i32) -> (i32, i32, i32) {
    %c0_i32 = arith.constant 0 : i32
    %c0_i32_0 = arith.constant 0 : i32
    %c0_i32_1 = arith.constant 0 : i32
    %c0_i32_2 = arith.constant 0 : i32
    return %c0_i32, %c0_i32_0, %c0_i32_1 : i32, i32, i32
  }
  func.func @transform_13(%arg0: i32, %arg1: i32) -> (i32, i32, i32) {
    %c0_i32 = arith.constant 0 : i32
    %c0_i32_0 = arith.constant 0 : i32
    %c0_i32_1 = arith.constant 0 : i32
    %c0_i32_2 = arith.constant 0 : i32
    return %c0_i32, %c0_i32_0, %c0_i32_1 : i32, i32, i32
  }
  func.func @transform_14(%arg0: i32, %arg1: i32) -> (i32, i32) {
    %c0_i32 = arith.constant 0 : i32
    %c0_i32_0 = arith.constant 0 : i32
    %c0_i32_1 = arith.constant 0 : i32
    return %c0_i32, %c0_i32_0 : i32, i32
  }
  func.func @transform_15(%arg0: i32, %arg1: i32) -> (i32, i32) {
    %c0_i32 = arith.constant 0 : i32
    %c0_i32_0 = arith.constant 0 : i32
    %c0_i32_1 = arith.constant 0 : i32
    return %c0_i32, %c0_i32_0 : i32, i32
  }
  func.func @transform_16(%arg0: i32, %arg1: i32) -> (i32, i32) {
    %c0_i32 = arith.constant 0 : i32
    %c0_i32_0 = arith.constant 0 : i32
    return %arg0, %c0_i32 : i32, i32
  }
}

</mosaic_0001>

<llo_original>
// kernel: tpu_custom_call.1
$region0: #{tpu_custom_call.1}
  #allocation0 [shape = 'u32[]', space=smem, size = 0x4, offset = 0x4, fixed_abs, tag = 'smem constant byte address 0x4 - core index']
  #allocation1 [shape = 'u32[144,128]{1,0:T(1,128)}', space=vmem, size = 0x12000, scoped, tag = 'internal scratch']
  #allocation2 [shape = 'f32[8,16,16]{2,1,0:T(8,128)}', space=vmem, size = 0x10000, scoped, tag = 'scratch operand']
  %s0 = inlined_call_operand.hbm [shape: f32[128,128], index: 0, kind: input, shape index: {}]
  %s1 = inlined_call_operand.hbm [shape: f32[8,16], index: 1, kind: input, shape index: {}]
  %s2 = inlined_call_operand.hbm [shape: f32[2,1,128], index: 2, kind: input, shape index: {}]
  %s3 = inlined_call_operand.hbm [shape: f32[2,1,128], index: 3, kind: input, shape index: {}]
  %s4 = inlined_call_operand.hbm [shape: bf16[2,128,384], index: 4, kind: input, shape index: {}]
  %s5 = inlined_call_operand.vmem [shape: f32[2,1,384], index: 5, kind: input, shape index: {}]
  %s6 = inlined_call_operand.hbm [shape: bf16[2,128,128], index: 6, kind: input, shape index: {}]
  %s7 = inlined_call_operand.vmem [shape: f32[2,1,128], index: 7, kind: input, shape index: {}]
  %s8 = inlined_call_operand.vmem [shape: f32[2,1,128], index: 8, kind: input, shape index: {}]
  %s9 = inlined_call_operand.vmem [shape: f32[2,1,128], index: 9, kind: input, shape index: {}]
  %s10 = inlined_call_operand.hbm [shape: bf16[2,128,256], index: 10, kind: input, shape index: {}]
  %s11 = inlined_call_operand.vmem [shape: f32[2,1,256], index: 11, kind: input, shape index: {}]
  %s12 = inlined_call_operand.hbm [shape: bf16[2,256,128], index: 12, kind: input, shape index: {}]
  %s13 = inlined_call_operand.vmem [shape: f32[2,1,128], index: 13, kind: input, shape index: {}]
  %s14 = inlined_call_operand.vmem [shape: f32[1,128], index: 14, kind: input, shape index: {}]
  %s15 = inlined_call_operand.vmem [shape: f32[1,128], index: 15, kind: input, shape index: {}]
  %s16 = inlined_call_operand.hbm [shape: f32[128,128], index: 16, kind: output, shape index: {}]
  %s17 = sld [smem:[#allocation0]]
  $region141: #{tpu_custom_call.1} parent=0
    _
  %s19 = ssub.s32 1, %s17
  %s20 = scalar_select 0, %s19, %s17
  $region1: #{tpu_custom_call.1} parent=0
    #allocation3 [shape = 'u8[65536]{0}', space=vmem, size = 0x10000, scoped, tag = 'input window, operand 0, single buffered']
    #allocation4 [shape = 's32[2]{0}', space=sflag, size = 0x8, scoped, tag = 'scoped memory for tpu_custom_call.1']
    #allocation5 [shape = 's32[2]{0}', space=sflag, size = 0x8, scoped, tag = 'scoped memory for tpu_custom_call.1']
    #allocation6 [shape = 'u8[4096]{0}', space=vmem, size = 0x1000, scoped, tag = 'input window, operand 1, single buffered']
    #allocation7 [shape = 's32[1]{0}', space=sflag, size = 0x4, scoped, tag = 'scoped memory for tpu_custom_call.1']
    #allocation8 [shape = 'u8[1024]{0}', space=vmem, size = 0x400, scoped, tag = 'input window, operand 2, single buffered']
    #allocation9 [shape = 'u8[1024]{0}', space=vmem, size = 0x400, scoped, tag = 'input window, operand 3, single buffered']
    #allocation10 [shape = 's32[1]{0}', space=sflag, size = 0x4, scoped, tag = 'scoped memory for tpu_custom_call.1']
    #allocation11 [shape = 'u8[196608]{0}', space=vmem, size = 0x30000, scoped, tag = 'input window, operand 4, single buffered']
    #allocation12 [shape = 'u8[65536]{0}', space=vmem, size = 0x10000, scoped, tag = 'input window, operand 6, single buffered']
    #allocation13 [shape = 's32[1]{0}', space=sflag, size = 0x4, scoped, tag = 'scoped memory for tpu_custom_call.1']
    #allocation14 [shape = 'u8[131072]{0}', space=vmem, size = 0x20000, scoped, tag = 'input window, operand 10, single buffered']
    #allocation15 [shape = 'u8[131072]{0}', space=vmem, size = 0x20000, scoped, tag = 'input window, operand 12, single buffered']
    #allocation16 [shape = 's32[1]{0}', space=sflag, size = 0x4, scoped, tag = 'scoped memory for tpu_custom_call.1']
    #allocation17 [shape = 'u8[65536]{0}', space=vmem, size = 0x10000, scoped, tag = 'output window, operand 0, single buffered']
    %21 = vsyncpa [#allocation4], 0
    %22 = vsyncpa [#allocation7], 0
    %23 = vsyncpa [#allocation10], 0
    %24 = vsyncpa [#allocation13], 0
    %25 = vsyncpa [#allocation16], 0
    %26 = vsyncpa [#allocation5], 0
    loop: start=0, step=1, limit=4
    $region2: #{tpu_custom_call.1} parent=1 // loop_pre_header
      _
    $region3: #{tpu_custom_call.1} parent=1 // loop_header
      %s28 = sphi 0, %s32
      %p29 = scmp.ge.s32.totalorder %s28, 4
      %s35 = sphi 0, %s47
      %s36 = sphi 0, %s43
      %s37 = sphi 0, %s35
      %s38 = sphi 0, %s36
      %s39 = sphi 0, %s37
      %s40 = sphi 0, %s38
      %s50 = sphi 0, %s52
      %s53 = sphi 0, %s50
      %s54 = sphi 0, %s53
      %s70 = sphi 0, %s54
      %s76 = sphi 0, %s78
      %s79 = sphi 0, %s76
      %s80 = sphi 0, %s79
      %s96 = sphi 0, %s80
      %s100 = sphi 0, %s100
      %s102 = sphi 0, %s100
      %s103 = sphi 0, %s102
      %s117 = sphi 0, %s103
      %s121 = sphi 0, %s121
      %s123 = sphi 0, %s121
      %s124 = sphi 0, %s123
      %s138 = sphi 0, %s124
      %s142 = sphi 0, %s142
      %s144 = sphi 0, %s142
      %s145 = sphi 0, %s144
      %s159 = sphi 0, %s145
      %s163 = sphi 0, %s163
      %s165 = sphi 0, %s163
      %s166 = sphi 0, %s165
      %s180 = sphi 0, %s166
      %s184 = sphi 0, %s184
      %s186 = sphi 0, %s184
      %s187 = sphi 0, %s186
      %s201 = sphi 0, %s187
      %s205 = sphi 0, %s205
      %s207 = sphi 0, %s205
      %s208 = sphi 0, %s207
      %s222 = sphi 0, %s208
      %s226 = sphi 0, %s226
      %s228 = sphi 0, %s226
      %s229 = sphi 0, %s228
      %s243 = sphi 0, %s229
      %s247 = sphi 0, %s247
      %s249 = sphi 0, %s247
      %s250 = sphi 0, %s249
      %s264 = sphi 0, %s250
      %s268 = sphi 0, %s268
      %s270 = sphi 0, %s268
      %s271 = sphi 0, %s270
      %s285 = sphi 0, %s271
      %s289 = sphi 0, %s289
      %s291 = sphi 0, %s289
      %s292 = sphi 0, %s291
      %s306 = sphi 0, %s292
      %s310 = sphi 0, %s310
      %s312 = sphi 0, %s310
      %s313 = sphi 0, %s312
      %s327 = sphi 0, %s313
      %s331 = sphi 0, %s331
      %s333 = sphi 0, %s331
      %s334 = sphi 0, %s333
      %s348 = sphi 0, %s334
      %s352 = sphi 0, %s352
      %s354 = sphi 0, %s352
      %s355 = sphi 0, %s354
      %s369 = sphi 0, %s355
      %s373 = sphi 0, %s373
      %s375 = sphi 0, %s373
      %s376 = sphi 0, %s375
      %s390 = sphi 0, %s376
      %s396 = sphi 0, %s398
      %s399 = sphi 0, %s396
      %s400 = sphi 0, %s399
      %s416 = sphi 0, %s400
    $region4: #{tpu_custom_call.1} parent=1 // loop_header_branch
      %31 = sbr.rel (%p29) target = $region8
    $region5: #{tpu_custom_call.1} parent=1 // loop_body
      %s33 = ssub.s32 %s28, 1
      %s34 = ssub.s32 %s28, 2
      %s41 = sadd.s32 1, %s36
      %p42 = scmp.ge.s32.totalorder %s41, 2
      %s43 = scalar_select %p42, 0, %s41
      %s44 = sadd.s32 1, %s35
      %s45 = scalar_select %p42, %s44, %s35
      %p46 = scmp.ge.s32.totalorder %s45, 1
      %s47 = scalar_select %p46, 0, %s45
      %s48 = ssub.s32 %s35, %s47
      %p49 = scmp.eq.s32.totalorder %s48, 0
      %s51 = sadd.s32 %s50, 1
      %s52 = scalar_select %p49, %s50, %s51
      %p55 = pneg %p49
      %p56 = scmp.eq.s32.totalorder %s28, 1
      %p57 = por %p55, %p56
      %p58 = scmp.ne.s32.totalorder %s50, %s53
      %p59 = scmp.eq.s32.totalorder %s28, 0
      %p60 = por %p58, %p59
      %p61 = scmp.ne.s32.totalorder %s50, %s53
      %p62 = scmp.eq.s32.totalorder %s33, 1
      %p63 = por %p61, %p62
      %p64 = scmp.ne.s32.totalorder %s53, %s54
      %p65 = scmp.eq.s32.totalorder %s33, 0
      %p66 = por %p64, %p65
      %p67 = scmp.ne.s32.totalorder %s53, %s54
      %p68 = scmp.eq.s32.totalorder %s34, 1
      %p69 = por %p67, %p68
      %p71 = scmp.ne.s32.totalorder %s54, %s70
      %p72 = scmp.eq.s32.totalorder %s34, 0
      %p73 = por %p71, %p72
      %s74 = ssub.s32 %s35, %s47
      %p75 = scmp.eq.s32.totalorder %s74, 0
      %s77 = sadd.s32 %s76, 1
      %s78 = scalar_select %p75, %s76, %s77
      %p81 = pneg %p75
      %p82 = scmp.eq.s32.totalorder %s28, 1
      %p83 = por %p81, %p82
      %p84 = scmp.ne.s32.totalorder %s76, %s79
      %p85 = scmp.eq.s32.totalorder %s28, 0
      %p86 = por %p84, %p85
      %p87 = scmp.ne.s32.totalorder %s76, %s79
      %p88 = scmp.eq.s32.totalorder %s33, 1
      %p89 = por %p87, %p88
      %p90 = scmp.ne.s32.totalorder %s79, %s80
      %p91 = scmp.eq.s32.totalorder %s33, 0
      %p92 = por %p90, %p91
      %p93 = scmp.ne.s32.totalorder %s79, %s80
      %p94 = scmp.eq.s32.totalorder %s34, 1
      %p95 = por %p93, %p94
      %p97 = scmp.ne.s32.totalorder %s80, %s96
      %p98 = scmp.eq.s32.totalorder %s34, 0
      %p99 = por %p97, %p98
      %s101 = sadd.s32 %s100, 1
      %p104 = scmp.eq.s32.totalorder %s28, 1
      %p105 = scmp.ne.s32.totalorder %s100, %s102
      %p106 = scmp.eq.s32.totalorder %s28, 0
      %p107 = por %p105, %p106
      %p108 = scmp.ne.s32.totalorder %s100, %s102
      %p109 = scmp.eq.s32.totalorder %s33, 1
      %p110 = por %p108, %p109
      %p111 = scmp.ne.s32.totalorder %s102, %s103
      %p112 = scmp.eq.s32.totalorder %s33, 0
      %p113 = por %p111, %p112
      %p114 = scmp.ne.s32.totalorder %s102, %s103
      %p115 = scmp.eq.s32.totalorder %s34, 1
      %p116 = por %p114, %p115
      %p118 = scmp.ne.s32.totalorder %s103, %s117
      %p119 = scmp.eq.s32.totalorder %s34, 0
      %p120 = por %p118, %p119
      %s122 = sadd.s32 %s121, 1
      %p125 = scmp.eq.s32.totalorder %s28, 1
      %p126 = scmp.ne.s32.totalorder %s121, %s123
      %p127 = scmp.eq.s32.totalorder %s28, 0
      %p128 = por %p126, %p127
      %p129 = scmp.ne.s32.totalorder %s121, %s123
      %p130 = scmp.eq.s32.totalorder %s33, 1
      %p131 = por %p129, %p130
      %p132 = scmp.ne.s32.totalorder %s123, %s124
      %p133 = scmp.eq.s32.totalorder %s33, 0
      %p134 = por %p132, %p133
      %p135 = scmp.ne.s32.totalorder %s123, %s124
      %p136 = scmp.eq.s32.totalorder %s34, 1
      %p137 = por %p135, %p136
      %p139 = scmp.ne.s32.totalorder %s124, %s138
      %p140 = scmp.eq.s32.totalorder %s34, 0
      %p141 = por %p139, %p140
      %s143 = sadd.s32 %s142, 1
      %p146 = scmp.eq.s32.totalorder %s28, 1
      %p147 = scmp.ne.s32.totalorder %s142, %s144
      %p148 = scmp.eq.s32.totalorder %s28, 0
      %p149 = por %p147, %p148
      %p150 = scmp.ne.s32.totalorder %s142, %s144
      %p151 = scmp.eq.s32.totalorder %s33, 1
      %p152 = por %p150, %p151
      %p153 = scmp.ne.s32.totalorder %s144, %s145
      %p154 = scmp.eq.s32.totalorder %s33, 0
      %p155 = por %p153, %p154
      %p156 = scmp.ne.s32.totalorder %s144, %s145
      %p157 = scmp.eq.s32.totalorder %s34, 1
      %p158 = por %p156, %p157
      %p160 = scmp.ne.s32.totalorder %s145, %s159
      %p161 = scmp.eq.s32.totalorder %s34, 0
      %p162 = por %p160, %p161
      %s164 = sadd.s32 %s163, 1
      %p167 = scmp.eq.s32.totalorder %s28, 1
      %p168 = scmp.ne.s32.totalorder %s163, %s165
      %p169 = scmp.eq.s32.totalorder %s28, 0
      %p170 = por %p168, %p169
      %p171 = scmp.ne.s32.totalorder %s163, %s165
      %p172 = scmp.eq.s32.totalorder %s33, 1
      %p173 = por %p171, %p172
      %p174 = scmp.ne.s32.totalorder %s165, %s166
      %p175 = scmp.eq.s32.totalorder %s33, 0
      %p176 = por %p174, %p175
      %p177 = scmp.ne.s32.totalorder %s165, %s166
      %p178 = scmp.eq.s32.totalorder %s34, 1
      %p179 = por %p177, %p178
      %p181 = scmp.ne.s32.totalorder %s166, %s180
      %p182 = scmp.eq.s32.totalorder %s34, 0
      %p183 = por %p181, %p182
      %s185 = sadd.s32 %s184, 1
      %p188 = scmp.eq.s32.totalorder %s28, 1
      %p189 = scmp.ne.s32.totalorder %s184, %s186
      %p190 = scmp.eq.s32.totalorder %s28, 0
      %p191 = por %p189, %p190
      %p192 = scmp.ne.s32.totalorder %s184, %s186
      %p193 = scmp.eq.s32.totalorder %s33, 1
      %p194 = por %p192, %p193
      %p195 = scmp.ne.s32.totalorder %s186, %s187
      %p196 = scmp.eq.s32.totalorder %s33, 0
      %p197 = por %p195, %p196
      %p198 = scmp.ne.s32.totalorder %s186, %s187
      %p199 = scmp.eq.s32.totalorder %s34, 1
      %p200 = por %p198, %p199
      %p202 = scmp.ne.s32.totalorder %s187, %s201
      %p203 = scmp.eq.s32.totalorder %s34, 0
      %p204 = por %p202, %p203
      %s206 = sadd.s32 %s205, 1
      %p209 = scmp.eq.s32.totalorder %s28, 1
      %p210 = scmp.ne.s32.totalorder %s205, %s207
      %p211 = scmp.eq.s32.totalorder %s28, 0
      %p212 = por %p210, %p211
      %p213 = scmp.ne.s32.totalorder %s205, %s207
      %p214 = scmp.eq.s32.totalorder %s33, 1
      %p215 = por %p213, %p214
      %p216 = scmp.ne.s32.totalorder %s207, %s208
      %p217 = scmp.eq.s32.totalorder %s33, 0
      %p218 = por %p216, %p217
      %p219 = scmp.ne.s32.totalorder %s207, %s208
      %p220 = scmp.eq.s32.totalorder %s34, 1
      %p221 = por %p219, %p220
      %p223 = scmp.ne.s32.totalorder %s208, %s222
      %p224 = scmp.eq.s32.totalorder %s34, 0
      %p225 = por %p223, %p224
      %s227 = sadd.s32 %s226, 1
      %p230 = scmp.eq.s32.totalorder %s28, 1
      %p231 = scmp.ne.s32.totalorder %s226, %s228
      %p232 = scmp.eq.s32.totalorder %s28, 0
      %p233 = por %p231, %p232
      %p234 = scmp.ne.s32.totalorder %s226, %s228
      %p235 = scmp.eq.s32.totalorder %s33, 1
      %p236 = por %p234, %p235
      %p237 = scmp.ne.s32.totalorder %s228, %s229
      %p238 = scmp.eq.s32.totalorder %s33, 0
      %p239 = por %p237, %p238
      %p240 = scmp.ne.s32.totalorder %s228, %s229
      %p241 = scmp.eq.s32.totalorder %s34, 1
      %p242 = por %p240, %p241
      %p244 = scmp.ne.s32.totalorder %s229, %s243
      %p245 = scmp.eq.s32.totalorder %s34, 0
      %p246 = por %p244, %p245
      %s248 = sadd.s32 %s247, 1
      %p251 = scmp.eq.s32.totalorder %s28, 1
      %p252 = scmp.ne.s32.totalorder %s247, %s249
      %p253 = scmp.eq.s32.totalorder %s28, 0
      %p254 = por %p252, %p253
      %p255 = scmp.ne.s32.totalorder %s247, %s249
      %p256 = scmp.eq.s32.totalorder %s33, 1
      %p257 = por %p255, %p256
      %p258 = scmp.ne.s32.totalorder %s249, %s250
      %p259 = scmp.eq.s32.totalorder %s33, 0
      %p260 = por %p258, %p259
      %p261 = scmp.ne.s32.totalorder %s249, %s250
      %p262 = scmp.eq.s32.totalorder %s34, 1
      %p263 = por %p261, %p262
      %p265 = scmp.ne.s32.totalorder %s250, %s264
      %p266 = scmp.eq.s32.totalorder %s34, 0
      %p267 = por %p265, %p266
      %s269 = sadd.s32 %s268, 1
      %p272 = scmp.eq.s32.totalorder %s28, 1
      %p273 = scmp.ne.s32.totalorder %s268, %s270
      %p274 = scmp.eq.s32.totalorder %s28, 0
      %p275 = por %p273, %p274
      %p276 = scmp.ne.s32.totalorder %s268, %s270
      %p277 = scmp.eq.s32.totalorder %s33, 1
      %p278 = por %p276, %p277
      %p279 = scmp.ne.s32.totalorder %s270, %s271
      %p280 = scmp.eq.s32.totalorder %s33, 0
      %p281 = por %p279, %p280
      %p282 = scmp.ne.s32.totalorder %s270, %s271
      %p283 = scmp.eq.s32.totalorder %s34, 1
      %p284 = por %p282, %p283
      %p286 = scmp.ne.s32.totalorder %s271, %s285
      %p287 = scmp.eq.s32.totalorder %s34, 0
      %p288 = por %p286, %p287
      %s290 = sadd.s32 %s289, 1
      %p293 = scmp.eq.s32.totalorder %s28, 1
      %p294 = scmp.ne.s32.totalorder %s289, %s291
      %p295 = scmp.eq.s32.totalorder %s28, 0
      %p296 = por %p294, %p295
      %p297 = scmp.ne.s32.totalorder %s289, %s291
      %p298 = scmp.eq.s32.totalorder %s33, 1
      %p299 = por %p297, %p298
      %p300 = scmp.ne.s32.totalorder %s291, %s292
      %p301 = scmp.eq.s32.totalorder %s33, 0
      %p302 = por %p300, %p301
      %p303 = scmp.ne.s32.totalorder %s291, %s292
      %p304 = scmp.eq.s32.totalorder %s34, 1
      %p305 = por %p303, %p304
      %p307 = scmp.ne.s32.totalorder %s292, %s306
      %p308 = scmp.eq.s32.totalorder %s34, 0
      %p309 = por %p307, %p308
      %s311 = sadd.s32 %s310, 1
      %p314 = scmp.eq.s32.totalorder %s28, 1
      %p315 = scmp.ne.s32.totalorder %s310, %s312
      %p316 = scmp.eq.s32.totalorder %s28, 0
      %p317 = por %p315, %p316
      %p318 = scmp.ne.s32.totalorder %s310, %s312
      %p319 = scmp.eq.s32.totalorder %s33, 1
      %p320 = por %p318, %p319
      %p321 = scmp.ne.s32.totalorder %s312, %s313
      %p322 = scmp.eq.s32.totalorder %s33, 0
      %p323 = por %p321, %p322
      %p324 = scmp.ne.s32.totalorder %s312, %s313
      %p325 = scmp.eq.s32.totalorder %s34, 1
      %p326 = por %p324, %p325
      %p328 = scmp.ne.s32.totalorder %s313, %s327
      %p329 = scmp.eq.s32.totalorder %s34, 0
      %p330 = por %p328, %p329
      %s332 = sadd.s32 %s331, 1
      %p335 = scmp.eq.s32.totalorder %s28, 1
      %p336 = scmp.ne.s32.totalorder %s331, %s333
      %p337 = scmp.eq.s32.totalorder %s28, 0
      %p338 = por %p336, %p337
      %p339 = scmp.ne.s32.totalorder %s331, %s333
      %p340 = scmp.eq.s32.totalorder %s33, 1
      %p341 = por %p339, %p340
      %p342 = scmp.ne.s32.totalorder %s333, %s334
      %p343 = scmp.eq.s32.totalorder %s33, 0
      %p344 = por %p342, %p343
      %p345 = scmp.ne.s32.totalorder %s333, %s334
      %p346 = scmp.eq.s32.totalorder %s34, 1
      %p347 = por %p345, %p346
      %p349 = scmp.ne.s32.totalorder %s334, %s348
      %p350 = scmp.eq.s32.totalorder %s34, 0
      %p351 = por %p349, %p350
      %s353 = sadd.s32 %s352, 1
      %p356 = scmp.eq.s32.totalorder %s28, 1
      %p357 = scmp.ne.s32.totalorder %s352, %s354
      %p358 = scmp.eq.s32.totalorder %s28, 0
      %p359 = por %p357, %p358
      %p360 = scmp.ne.s32.totalorder %s352, %s354
      %p361 = scmp.eq.s32.totalorder %s33, 1
      %p362 = por %p360, %p361
      %p363 = scmp.ne.s32.totalorder %s354, %s355
      %p364 = scmp.eq.s32.totalorder %s33, 0
      %p365 = por %p363, %p364
      %p366 = scmp.ne.s32.totalorder %s354, %s355
      %p367 = scmp.eq.s32.totalorder %s34, 1
      %p368 = por %p366, %p367
      %p370 = scmp.ne.s32.totalorder %s355, %s369
      %p371 = scmp.eq.s32.totalorder %s34, 0
      %p372 = por %p370, %p371
      %s374 = sadd.s32 %s373, 1
      %p377 = scmp.eq.s32.totalorder %s28, 1
      %p378 = scmp.ne.s32.totalorder %s373, %s375
      %p379 = scmp.eq.s32.totalorder %s28, 0
      %p380 = por %p378, %p379
      %p381 = scmp.ne.s32.totalorder %s373, %s375
      %p382 = scmp.eq.s32.totalorder %s33, 1
      %p383 = por %p381, %p382
      %p384 = scmp.ne.s32.totalorder %s375, %s376
      %p385 = scmp.eq.s32.totalorder %s33, 0
      %p386 = por %p384, %p385
      %p387 = scmp.ne.s32.totalorder %s375, %s376
      %p388 = scmp.eq.s32.totalorder %s34, 1
      %p389 = por %p387, %p388
      %p391 = scmp.ne.s32.totalorder %s376, %s390
      %p392 = scmp.eq.s32.totalorder %s34, 0
      %p393 = por %p391, %p392
      %s394 = ssub.s32 %s35, %s47
      %p395 = scmp.eq.s32.totalorder %s394, 0
      %s397 = sadd.s32 %s396, 1
      %s398 = scalar_select %p395, %s396, %s397
      %p401 = pneg %p395
      %p402 = scmp.eq.s32.totalorder %s28, 1
      %p403 = por %p401, %p402
      %p404 = scmp.ne.s32.totalorder %s396, %s399
      %p405 = scmp.eq.s32.totalorder %s28, 0
      %p406 = por %p404, %p405
      %p407 = scmp.ne.s32.totalorder %s396, %s399
      %p408 = scmp.eq.s32.totalorder %s33, 1
      %p409 = por %p407, %p408
      %p410 = scmp.ne.s32.totalorder %s399, %s400
      %p411 = scmp.eq.s32.totalorder %s33, 0
      %p412 = por %p410, %p411
      %p413 = scmp.ne.s32.totalorder %s399, %s400
      %p414 = scmp.eq.s32.totalorder %s34, 1
      %p415 = por %p413, %p414
      %p417 = scmp.ne.s32.totalorder %s400, %s416
      %p418 = scmp.eq.s32.totalorder %s34, 0
      %p419 = por %p417, %p418
      %p420 = scmp.le.s32.totalorder 1, %s28
      %p421 = scmp.lt.s32.totalorder %s28, 3
      %p422 = pnand %p420, %p421
      %p423 = pneg %p422
      // Predicated region
      $region9: #{tpu_custom_call.1} parent=5 // pred_check
        _
      $region10: #{tpu_custom_call.1} parent=5 // pred_check_branch
        %425 = sbr.rel (%p422) target = $region12
      $region11: #{tpu_custom_call.1} parent=5 // pred_region
        %s426 = ssub.s32 %s28, 1
        // Predicated region
        $region13: #{tpu_custom_call.1} parent=11 // pred_check
          %p427 = pneg %p66
        $region14: #{tpu_custom_call.1} parent=11 // pred_check_branch
          %429 = sbr.rel (%p427) target = $region16
        $region15: #{tpu_custom_call.1} parent=11 // pred_region
          %s430 = smul.u32 16, %s37
          %s432 = ssub.s32 2048, 2048
          %433 = vsyncadd [#allocation4], %s432
          %s434 = smul.addr %s430, 128
          %s435 = scalar_lea.hbm %s0, %s434
          %s436 = sshll.u32 [#allocation3], 4
          %s437 = int_to_ptr.vmem [resolvable:$true] %s436
          %442 = dma.hbm_to_vmem [thread:$0]  %s435, 2048, %s437, [#allocation4], 128, 128, 8
        $region16: #{tpu_custom_call.1} parent=11 // pred_fallthru
          _
        // Predicated region
        $region17: #{tpu_custom_call.1} parent=11 // pred_check
          %p443 = pneg %p92
        $region18: #{tpu_custom_call.1} parent=11 // pred_check_branch
          %445 = sbr.rel (%p443) target = $region20
        $region19: #{tpu_custom_call.1} parent=11 // pred_region
          %s447 = ssub.s32 128, 128
          %448 = vsyncadd [#allocation7], %s447
          %s449 = smul.addr %s37, 128
          %s450 = scalar_lea.hbm %s1, %s449
          %s452 = sshll.u32 [#allocation6], 4
          %s453 = int_to_ptr.vmem [resolvable:$true] %s452
          %455 = dma.hbm_to_vmem [thread:$0]  %s450, 128, %s453, [#allocation7]
        $region20: #{tpu_custom_call.1} parent=11 // pred_fallthru
          _
        // Predicated region
        $region21: #{tpu_custom_call.1} parent=11 // pred_check
          %p456 = pneg %p113
        $region22: #{tpu_custom_call.1} parent=11 // pred_check_branch
          %458 = sbr.rel (%p456) target = $region24
        $region23: #{tpu_custom_call.1} parent=11 // pred_region
          %s460 = ssub.s32 32, 32
          %461 = vsyncadd [#allocation7], %s460
          %s462 = sshll.u32 [#allocation8], 4
          %s463 = int_to_ptr.vmem [resolvable:$true] %s462
          %468 = dma.hbm_to_vmem [thread:$0]  %s2, 32, %s463, [#allocation7], 16, 16, 1
        $region24: #{tpu_custom_call.1} parent=11 // pred_fallthru
          _
        // Predicated region
        $region25: #{tpu_custom_call.1} parent=11 // pred_check
          %p469 = pneg %p134
        $region26: #{tpu_custom_call.1} parent=11 // pred_check_branch
          %471 = sbr.rel (%p469) target = $region28
        $region27: #{tpu_custom_call.1} parent=11 // pred_region
          %s473 = ssub.s32 32, 32
          %474 = vsyncadd [#allocation10], %s473
          %s475 = sshll.u32 [#allocation9], 4
          %s476 = int_to_ptr.vmem [resolvable:$true] %s475
          %481 = dma.hbm_to_vmem [thread:$0]  %s3, 32, %s476, [#allocation10], 16, 16, 1
        $region28: #{tpu_custom_call.1} parent=11 // pred_fallthru
          _
        // Predicated region
        $region29: #{tpu_custom_call.1} parent=11 // pred_check
          %p482 = pneg %p155
        $region30: #{tpu_custom_call.1} parent=11 // pred_check_branch
          %484 = sbr.rel (%p482) target = $region32
        $region31: #{tpu_custom_call.1} parent=11 // pred_region
          %s486 = ssub.s32 6144, 6144
          %487 = vsyncadd [#allocation10], %s486
          %s488 = sshll.u32 [#allocation11], 4
          %s489 = int_to_ptr.vmem [resolvable:$true] %s488
          %494 = dma.hbm_to_vmem [thread:$0]  %s4, 6144, %s489, [#allocation10], 192, 192, 12
        $region32: #{tpu_custom_call.1} parent=11 // pred_fallthru
          _
        // Predicated region
        $region33: #{tpu_custom_call.1} parent=11 // pred_check
          %p495 = pneg %p176
        $region34: #{tpu_custom_call.1} parent=11 // pred_check_branch
          %497 = sbr.rel (%p495) target = $region36
        $region35: #{tpu_custom_call.1} parent=11 // pred_region
          _
        $region36: #{tpu_custom_call.1} parent=11 // pred_fallthru
          _
        // Predicated region
        $region37: #{tpu_custom_call.1} parent=11 // pred_check
          %p498 = pneg %p197
        $region38: #{tpu_custom_call.1} parent=11 // pred_check_branch
          %500 = sbr.rel (%p498) target = $region40
        $region39: #{tpu_custom_call.1} parent=11 // pred_region
          %s502 = ssub.s32 2048, 2048
          %503 = vsyncadd [#allocation13], %s502
          %s504 = sshll.u32 [#allocation12], 4
          %s505 = int_to_ptr.vmem [resolvable:$true] %s504
          %510 = dma.hbm_to_vmem [thread:$0]  %s6, 2048, %s505, [#allocation13], 64, 64, 4
        $region40: #{tpu_custom_call.1} parent=11 // pred_fallthru
          _
        // Predicated region
        $region41: #{tpu_custom_call.1} parent=11 // pred_check
          %p511 = pneg %p218
        $region42: #{tpu_custom_call.1} parent=11 // pred_check_branch
          %513 = sbr.rel (%p511) target = $region44
        $region43: #{tpu_custom_call.1} parent=11 // pred_region
          _
        $region44: #{tpu_custom_call.1} parent=11 // pred_fallthru
          _
        // Predicated region
        $region45: #{tpu_custom_call.1} parent=11 // pred_check
          %p514 = pneg %p239
        $region46: #{tpu_custom_call.1} parent=11 // pred_check_branch
          %516 = sbr.rel (%p514) target = $region48
        $region47: #{tpu_custom_call.1} parent=11 // pred_region
          _
        $region48: #{tpu_custom_call.1} parent=11 // pred_fallthru
          _
        // Predicated region
        $region49: #{tpu_custom_call.1} parent=11 // pred_check
          %p517 = pneg %p260
        $region50: #{tpu_custom_call.1} parent=11 // pred_check_branch
          %519 = sbr.rel (%p517) target = $region52
        $region51: #{tpu_custom_call.1} parent=11 // pred_region
          _
        $region52: #{tpu_custom_call.1} parent=11 // pred_fallthru
          _
        // Predicated region
        $region53: #{tpu_custom_call.1} parent=11 // pred_check
          %p520 = pneg %p281
        $region54: #{tpu_custom_call.1} parent=11 // pred_check_branch
          %522 = sbr.rel (%p520) target = $region56
        $region55: #{tpu_custom_call.1} parent=11 // pred_region
          %s524 = ssub.s32 4096, 4096
          %525 = vsyncadd [#allocation13], %s524
          %s526 = sshll.u32 [#allocation14], 4
          %s527 = int_to_ptr.vmem [resolvable:$true] %s526
          %532 = dma.hbm_to_vmem [thread:$0]  %s10, 4096, %s527, [#allocation13], 128, 128, 8
        $region56: #{tpu_custom_call.1} parent=11 // pred_fallthru
          _
        // Predicated region
        $region57: #{tpu_custom_call.1} parent=11 // pred_check
          %p533 = pneg %p302
        $region58: #{tpu_custom_call.1} parent=11 // pred_check_branch
          %535 = sbr.rel (%p533) target = $region60
        $region59: #{tpu_custom_call.1} parent=11 // pred_region
          _
        $region60: #{tpu_custom_call.1} parent=11 // pred_fallthru
          _
        // Predicated region
        $region61: #{tpu_custom_call.1} parent=11 // pred_check
          %p536 = pneg %p323
        $region62: #{tpu_custom_call.1} parent=11 // pred_check_branch
          %538 = sbr.rel (%p536) target = $region64
        $region63: #{tpu_custom_call.1} parent=11 // pred_region
          %s540 = ssub.s32 4096, 4096
          %541 = vsyncadd [#allocation16], %s540
          %s542 = sshll.u32 [#allocation15], 4
          %s543 = int_to_ptr.vmem [resolvable:$true] %s542
          %548 = dma.hbm_to_vmem [thread:$0]  %s12, 4096, %s543, [#allocation16], 64, 64, 4
        $region64: #{tpu_custom_call.1} parent=11 // pred_fallthru
          _
        // Predicated region
        $region65: #{tpu_custom_call.1} parent=11 // pred_check
          %p549 = pneg %p344
        $region66: #{tpu_custom_call.1} parent=11 // pred_check_branch
          %551 = sbr.rel (%p549) target = $region68
        $region67: #{tpu_custom_call.1} parent=11 // pred_region
          _
        $region68: #{tpu_custom_call.1} parent=11 // pred_fallthru
          _
        // Predicated region
        $region69: #{tpu_custom_call.1} parent=11 // pred_check
          %p552 = pneg %p365
        $region70: #{tpu_custom_call.1} parent=11 // pred_check_branch
          %554 = sbr.rel (%p552) target = $region72
        $region71: #{tpu_custom_call.1} parent=11 // pred_region
          _
        $region72: #{tpu_custom_call.1} parent=11 // pred_fallthru
          _
        // Predicated region
        $region73: #{tpu_custom_call.1} parent=11 // pred_check
          %p555 = pneg %p386
        $region74: #{tpu_custom_call.1} parent=11 // pred_check_branch
          %557 = sbr.rel (%p555) target = $region76
        $region75: #{tpu_custom_call.1} parent=11 // pred_region
          _
        $region76: #{tpu_custom_call.1} parent=11 // pred_fallthru
          _
      $region12: #{tpu_custom_call.1} parent=5 // pred_fallthru
        _
      %p558 = scmp.lt.s32.totalorder %s28, 2
      // Predicated region
      $region77: #{tpu_custom_call.1} parent=5 // pred_check
        %p559 = pneg %p558
      $region78: #{tpu_custom_call.1} parent=5 // pred_check_branch
        %561 = sbr.rel (%p559) target = $region80
      $region79: #{tpu_custom_call.1} parent=5 // pred_region
        _
      $region80: #{tpu_custom_call.1} parent=5 // pred_fallthru
        _
      %p562 = scmp.le.s32.totalorder 1, %s28
      %p563 = scmp.lt.s32.totalorder %s28, 3
      %p564 = pnand %p562, %p563
      %p565 = pneg %p564
      // Predicated region
      $region81: #{tpu_custom_call.1} parent=5 // pred_check
        _
      $region82: #{tpu_custom_call.1} parent=5 // pred_check_branch
        %567 = sbr.rel (%p564) target = $region84
      $region83: #{tpu_custom_call.1} parent=5 // pred_region
        %s568 = ssub.s32 %s28, 1
        // Predicated region
        $region85: #{tpu_custom_call.1} parent=83 // pred_check
          %p569 = pneg %p66
        $region86: #{tpu_custom_call.1} parent=83 // pred_check_branch
          %571 = sbr.rel (%p569) target = $region88
        $region87: #{tpu_custom_call.1} parent=83 // pred_region
          %572 = dma.done [#allocation4], 2048
        $region88: #{tpu_custom_call.1} parent=83 // pred_fallthru
          _
        // Predicated region
        $region89: #{tpu_custom_call.1} parent=83 // pred_check
          %p573 = pneg %p92
        $region90: #{tpu_custom_call.1} parent=83 // pred_check_branch
          %575 = sbr.rel (%p573) target = $region92
        $region91: #{tpu_custom_call.1} parent=83 // pred_region
          %576 = dma.done [#allocation7], 128
        $region92: #{tpu_custom_call.1} parent=83 // pred_fallthru
          _
        // Predicated region
        $region93: #{tpu_custom_call.1} parent=83 // pred_check
          %p577 = pneg %p113
        $region94: #{tpu_custom_call.1} parent=83 // pred_check_branch
          %579 = sbr.rel (%p577) target = $region96
        $region95: #{tpu_custom_call.1} parent=83 // pred_region
          %580 = dma.done [#allocation7], 32
        $region96: #{tpu_custom_call.1} parent=83 // pred_fallthru
          _
        // Predicated region
        $region97: #{tpu_custom_call.1} parent=83 // pred_check
          %p581 = pneg %p134
        $region98: #{tpu_custom_call.1} parent=83 // pred_check_branch
          %583 = sbr.rel (%p581) target = $region100
        $region99: #{tpu_custom_call.1} parent=83 // pred_region
          %584 = dma.done [#allocation10], 32
        $region100: #{tpu_custom_call.1} parent=83 // pred_fallthru
          _
        // Predicated region
        $region101: #{tpu_custom_call.1} parent=83 // pred_check
          %p585 = pneg %p155
        $region102: #{tpu_custom_call.1} parent=83 // pred_check_branch
          %587 = sbr.rel (%p585) target = $region104
        $region103: #{tpu_custom_call.1} parent=83 // pred_region
          %588 = dma.done [#allocation10], 6144
        $region104: #{tpu_custom_call.1} parent=83 // pred_fallthru
          _
        // Predicated region
        $region105: #{tpu_custom_call.1} parent=83 // pred_check
          %p589 = pneg %p197
        $region106: #{tpu_custom_call.1} parent=83 // pred_check_branch
          %591 = sbr.rel (%p589) target = $region108
        $region107: #{tpu_custom_call.1} parent=83 // pred_region
          %592 = dma.done [#allocation13], 2048
        $region108: #{tpu_custom_call.1} parent=83 // pred_fallthru
          _
        // Predicated region
        $region109: #{tpu_custom_call.1} parent=83 // pred_check
          %p593 = pneg %p281
        $region110: #{tpu_custom_call.1} parent=83 // pred_check_branch
          %595 = sbr.rel (%p593) target = $region112
        $region111: #{tpu_custom_call.1} parent=83 // pred_region
          %596 = dma.done [#allocation13], 4096
        $region112: #{tpu_custom_call.1} parent=83 // pred_fallthru
          _
        // Predicated region
        $region113: #{tpu_custom_call.1} parent=83 // pred_check
          %p597 = pneg %p323
        $region114: #{tpu_custom_call.1} parent=83 // pred_check_branch
          %599 = sbr.rel (%p597) target = $region116
        $region115: #{tpu_custom_call.1} parent=83 // pred_region
          %600 = dma.done [#allocation16], 4096
        $region116: #{tpu_custom_call.1} parent=83 // pred_fallthru
          _
        %p601 = pneg %p66
        %p602 = pneg %p63
        %p603 = pneg %p92
        %p604 = pneg %p89
        %p605 = pneg %p113
        %p606 = pneg %p110
        %p607 = pneg %p134
        %p608 = pneg %p131
        %p609 = pneg %p155
        %p610 = pneg %p152
        %p611 = pneg %p176
        %p612 = pneg %p173
        %p613 = pneg %p197
        %p614 = pneg %p194
        %p615 = pneg %p218
        %p616 = pneg %p215
        %p617 = pneg %p239
        %p618 = pneg %p236
        %p619 = pneg %p260
        %p620 = pneg %p257
        %p621 = pneg %p281
        %p622 = pneg %p278
        %p623 = pneg %p302
        %p624 = pneg %p299
        %p625 = pneg %p323
        %p626 = pneg %p320
        %p627 = pneg %p344
        %p628 = pneg %p341
        %p629 = pneg %p365
        %p630 = pneg %p362
        %p631 = pneg %p386
        %p632 = pneg %p383
        %p633 = pneg %p412
        %p634 = pneg %p409
        %s635 = smul.u32 16, %s37
        %s636 = smul.u32 16, %s37
        %p638 = scmp.eq.s32.totalorder %s38, 0
        // Predicated region
        $region117: #{tpu_custom_call.1} parent=83 // pred_check
          %p639 = pneg %p638
        $region118: #{tpu_custom_call.1} parent=83 // pred_check_branch
          %641 = sbr.rel (%p639) target = $region120
        $region119: #{tpu_custom_call.1} parent=83 // pred_region
          %v642 = vld [vmem:[#allocation3] sm:$0xff]
          %v643 = vld [vmem:[#allocation3 + $0x8] sm:$0xff]
          %v644 = vld [vmem:[#allocation3 + $0x10] sm:$0xff]
          %v645 = vld [vmem:[#allocation3 + $0x18] sm:$0xff]
          %v646 = vld [vmem:[#allocation3 + $0x20] sm:$0xff]
          %v647 = vld [vmem:[#allocation3 + $0x28] sm:$0xff]
          %v648 = vld [vmem:[#allocation3 + $0x30] sm:$0xff]
          %v649 = vld [vmem:[#allocation3 + $0x38] sm:$0xff]
          %v650 = vld [vmem:[#allocation3 + $0x40] sm:$0xff]
          %v651 = vld [vmem:[#allocation3 + $0x48] sm:$0xff]
          %v652 = vld [vmem:[#allocation3 + $0x50] sm:$0xff]
          %v653 = vld [vmem:[#allocation3 + $0x58] sm:$0xff]
          %v654 = vld [vmem:[#allocation3 + $0x60] sm:$0xff]
          %v655 = vld [vmem:[#allocation3 + $0x68] sm:$0xff]
          %v656 = vld [vmem:[#allocation3 + $0x70] sm:$0xff]
          %v657 = vld [vmem:[#allocation3 + $0x78] sm:$0xff]
          %658 = vst [vmem:[#allocation17] sm:$0xff] %v642
          %659 = vst [vmem:[#allocation17 + $0x8] sm:$0xff] %v643
          %660 = vst [vmem:[#allocation17 + $0x10] sm:$0xff] %v644
          %661 = vst [vmem:[#allocation17 + $0x18] sm:$0xff] %v645
          %662 = vst [vmem:[#allocation17 + $0x20] sm:$0xff] %v646
          %663 = vst [vmem:[#allocation17 + $0x28] sm:$0xff] %v647
          %664 = vst [vmem:[#allocation17 + $0x30] sm:$0xff] %v648
          %665 = vst [vmem:[#allocation17 + $0x38] sm:$0xff] %v649
          %666 = vst [vmem:[#allocation17 + $0x40] sm:$0xff] %v650
          %667 = vst [vmem:[#allocation17 + $0x48] sm:$0xff] %v651
          %668 = vst [vmem:[#allocation17 + $0x50] sm:$0xff] %v652
          %669 = vst [vmem:[#allocation17 + $0x58] sm:$0xff] %v653
          %670 = vst [vmem:[#allocation17 + $0x60] sm:$0xff] %v654
          %671 = vst [vmem:[#allocation17 + $0x68] sm:$0xff] %v655
          %672 = vst [vmem:[#allocation17 + $0x70] sm:$0xff] %v656
          %673 = vst [vmem:[#allocation17 + $0x78] sm:$0xff] %v657
          %v674 = vlaneseq
          %v675 = vshrl.u32 %v674, 7
          %v676 = vadd.s32 %v675, 8
          %v677 = vlaneseq
          %v678 = vand.u32 %v677, 127
          %v679 = vld [vmem:[#allocation6] sm:$0xff]
          %vm680 = vcmp.gt.s32.totalorder %v678, %v675
          %vm681 = vcmp.gt.s32.totalorder %v678, %v676
          %v683 = vcombine.high %v679, %v679
          %v685 = vunpack.c.l.s4 1966171168
          %v686 = vunpack.c.0.s8 %v685
          %v687 = vlaneseq
          %v688 = vshrl.u32 %v687, 7
          %v689 = vsub.s32 %v686, %v688
          %v690 = vrot.slane %v679, %v689
          %v692 = vunpack.c.l.s4 1966171168
          %v693 = vunpack.c.0.s8 %v692
          %v694 = vlaneseq
          %v695 = vshrl.u32 %v694, 7
          %v696 = vsub.s32 %v693, %v695
          %v697 = vrot.slane %v683, %v696
          %v698 = vcombine.high %v690, %v690
          %v699 = vcombine.high %v697, %v697
          %v701 = vunpack.c.l.s4 1966171168
          %v702 = vunpack.c.0.s8 %v701
          %v703 = vlaneseq
          %v704 = vshrl.u32 %v703, 7
          %v705 = vsub.s32 %v702, %v704
          %v706 = vrot.slane %v690, %v705
          %v708 = vunpack.c.l.s4 1966171168
          %v709 = vunpack.c.0.s8 %v708
          %v710 = vlaneseq
          %v711 = vshrl.u32 %v710, 7
          %v712 = vsub.s32 %v709, %v711
          %v713 = vrot.slane %v697, %v712
          %v715 = vunpack.c.l.s4 1966171168
          %v716 = vunpack.c.0.s8 %v715
          %v717 = vlaneseq
          %v718 = vshrl.u32 %v717, 7
          %v719 = vsub.s32 %v716, %v718
          %v720 = vrot.slane %v698, %v719
          %v722 = vunpack.c.l.s4 1966171168
          %v723 = vunpack.c.0.s8 %v722
          %v724 = vlaneseq
          %v725 = vshrl.u32 %v724, 7
          %v726 = vsub.s32 %v723, %v725
          %v727 = vrot.slane %v699, %v726
          %v728 = vcombine.high %v706, %v706
          %v729 = vcombine.high %v713, %v713
          %v730 = vcombine.high %v720, %v720
          %v731 = vcombine.high %v727, %v727
          %v732 = vsel %vm680, 1, 0
          %v733 = vsel %vm681, 1, 0
          %vm734 = vcmp.eq.s32.totalorder %v732, 1
          %vm735 = vcmp.eq.s32.totalorder %v733, 1
          %v736 = vlaneseq
          %v737 = vshrl.u32 %v736, 7
          %v738 = vsub.s32 0, %v737
          %v739 = vrot.slane %v706, %v738
          %v740 = vlaneseq
          %v741 = vshrl.u32 %v740, 7
          %v742 = vsub.s32 0, %v741
          %v743 = vrot.slane %v720, %v742
          %v744 = vlaneseq
          %v745 = vshrl.u32 %v744, 7
          %v746 = vsub.s32 0, %v745
          %v747 = vrot.slane %v728, %v746
          %v748 = vlaneseq
          %v749 = vshrl.u32 %v748, 7
          %v750 = vsub.s32 0, %v749
          %v751 = vrot.slane %v730, %v750
          %v752 = vlaneseq
          %v753 = vshrl.u32 %v752, 7
          %v754 = vsub.s32 0, %v753
          %v755 = vrot.slane %v713, %v754
          %v756 = vlaneseq
          %v757 = vshrl.u32 %v756, 7
          %v758 = vsub.s32 0, %v757
          %v759 = vrot.slane %v727, %v758
          %v760 = vlaneseq
          %v761 = vshrl.u32 %v760, 7
          %v762 = vsub.s32 0, %v761
          %v763 = vrot.slane %v729, %v762
          %v764 = vlaneseq
          %v765 = vshrl.u32 %v764, 7
          %v766 = vsub.s32 0, %v765
          %v767 = vrot.slane %v731, %v766
          %v776 = vsel %vm734, -3.4028235e+38, %v739
          %v777 = vsel %vm735, -3.4028235e+38, %v739
          %v778 = vsel %vm734, -3.4028235e+38, %v743
          %v779 = vsel %vm735, -3.4028235e+38, %v743
          %v780 = vsel %vm734, -3.4028235e+38, %v747
          %v781 = vsel %vm735, -3.4028235e+38, %v747
          %v782 = vsel %vm734, -3.4028235e+38, %v751
          %v783 = vsel %vm735, -3.4028235e+38, %v751
          %v784 = vsel %vm734, -3.4028235e+38, %v755
          %v785 = vsel %vm735, -3.4028235e+38, %v755
          %v786 = vsel %vm734, -3.4028235e+38, %v759
          %v787 = vsel %vm735, -3.4028235e+38, %v759
          %v788 = vsel %vm734, -3.4028235e+38, %v763
          %v789 = vsel %vm735, -3.4028235e+38, %v763
          %v790 = vsel %vm734, -3.4028235e+38, %v767
          %v791 = vsel %vm735, -3.4028235e+38, %v767
          %vm792 = vcmask 130048
          %793 = vst.msk [vmem:[#allocation2] sm:$0xff] %vm792, %v776
          %794 = vst.msk [vmem:[#allocation2 + $0x8] sm:$0xff] %vm792, %v777
          %795 = vst.msk [vmem:[#allocation2 + $0x10] sm:$0xff] %vm792, %v778
          %796 = vst.msk [vmem:[#allocation2 + $0x18] sm:$0xff] %vm792, %v779
          %797 = vst.msk [vmem:[#allocation2 + $0x20] sm:$0xff] %vm792, %v780
          %798 = vst.msk [vmem:[#allocation2 + $0x28] sm:$0xff] %vm792, %v781
          %799 = vst.msk [vmem:[#allocation2 + $0x30] sm:$0xff] %vm792, %v782
          %800 = vst.msk [vmem:[#allocation2 + $0x38] sm:$0xff] %vm792, %v783
          %801 = vst.msk [vmem:[#allocation2 + $0x40] sm:$0xff] %vm792, %v784
          %802 = vst.msk [vmem:[#allocation2 + $0x48] sm:$0xff] %vm792, %v785
          %803 = vst.msk [vmem:[#allocation2 + $0x50] sm:$0xff] %vm792, %v786
          %804 = vst.msk [vmem:[#allocation2 + $0x58] sm:$0xff] %vm792, %v787
          %805 = vst.msk [vmem:[#allocation2 + $0x60] sm:$0xff] %vm792, %v788
          %806 = vst.msk [vmem:[#allocation2 + $0x68] sm:$0xff] %vm792, %v789
          %807 = vst.msk [vmem:[#allocation2 + $0x70] sm:$0xff] %vm792, %v790
          %808 = vst.msk [vmem:[#allocation2 + $0x78] sm:$0xff] %vm792, %v791
        $region120: #{tpu_custom_call.1} parent=83 // pred_fallthru
          _
        %v809 = vld [vmem:[#allocation17] sm:$0xff]
        %v810 = vld [vmem:[#allocation17 + $0x8] sm:$0xff]
        %v811 = vld [vmem:[#allocation17 + $0x10] sm:$0xff]
        %v812 = vld [vmem:[#allocation17 + $0x18] sm:$0xff]
        %v813 = vld [vmem:[#allocation17 + $0x20] sm:$0xff]
        %v814 = vld [vmem:[#allocation17 + $0x28] sm:$0xff]
        %v815 = vld [vmem:[#allocation17 + $0x30] sm:$0xff]
        %v816 = vld [vmem:[#allocation17 + $0x38] sm:$0xff]
        %v817 = vld [vmem:[#allocation17 + $0x40] sm:$0xff]
        %v818 = vld [vmem:[#allocation17 + $0x48] sm:$0xff]
        %v819 = vld [vmem:[#allocation17 + $0x50] sm:$0xff]
        %v820 = vld [vmem:[#allocation17 + $0x58] sm:$0xff]
        %v821 = vld [vmem:[#allocation17 + $0x60] sm:$0xff]
        %v822 = vld [vmem:[#allocation17 + $0x68] sm:$0xff]
        %v823 = vld [vmem:[#allocation17 + $0x70] sm:$0xff]
        %v824 = vld [vmem:[#allocation17 + $0x78] sm:$0xff]
        %v825 = vld [vmem:[#allocation2] sm:$0xff]
        %v826 = vld [vmem:[#allocation2 + $0x8] sm:$0xff]
        %v827 = vld [vmem:[#allocation2 + $0x10] sm:$0xff]
        %v828 = vld [vmem:[#allocation2 + $0x18] sm:$0xff]
        %v829 = vld [vmem:[#allocation2 + $0x20] sm:$0xff]
        %v830 = vld [vmem:[#allocation2 + $0x28] sm:$0xff]
        %v831 = vld [vmem:[#allocation2 + $0x30] sm:$0xff]
        %v832 = vld [vmem:[#allocation2 + $0x38] sm:$0xff]
        %v833 = vld [vmem:[#allocation2 + $0x40] sm:$0xff]
        %v834 = vld [vmem:[#allocation2 + $0x48] sm:$0xff]
        %v835 = vld [vmem:[#allocation2 + $0x50] sm:$0xff]
        %v836 = vld [vmem:[#allocation2 + $0x58] sm:$0xff]
        %v837 = vld [vmem:[#allocation2 + $0x60] sm:$0xff]
        %v838 = vld [vmem:[#allocation2 + $0x68] sm:$0xff]
        %v839 = vld [vmem:[#allocation2 + $0x70] sm:$0xff]
        %v840 = vld [vmem:[#allocation2 + $0x78] sm:$0xff]
        %s841 = scalar_lea.vmem [#allocation8], %s38
        %v842 = vld [vmem:[%s841] sm:$0x1]
        %s843 = scalar_lea.vmem [#allocation9], %s38
        %v844 = vld [vmem:[%s843] sm:$0x1]
        %s845 = smul.u32 %s38, 48
        %s846 = smul.addr %s845, 4
        %s847 = scalar_lea.vmem [#allocation11], %s846
        %v848 = vld [vmem:[%s847] sm:$0xff]
        %v849 = vld [vmem:[%s847 + $0x8] sm:$0xf]
        %v850 = vld [vmem:[%s847 + $0xc] sm:$0xff]
        %v851 = vld [vmem:[%s847 + $0x14] sm:$0xf]
        %v852 = vld [vmem:[%s847 + $0x18] sm:$0xff]
        %v853 = vld [vmem:[%s847 + $0x20] sm:$0xf]
        %v854 = vld [vmem:[%s847 + $0x24] sm:$0xff]
        %v855 = vld [vmem:[%s847 + $0x2c] sm:$0xf]
        %v856 = vld [vmem:[%s847 + $0x30] sm:$0xff]
        %v857 = vld [vmem:[%s847 + $0x38] sm:$0xf]
        %v858 = vld [vmem:[%s847 + $0x3c] sm:$0xff]
        %v859 = vld [vmem:[%s847 + $0x44] sm:$0xf]
        %v860 = vld [vmem:[%s847 + $0x48] sm:$0xff]
        %v861 = vld [vmem:[%s847 + $0x50] sm:$0xf]
        %v862 = vld [vmem:[%s847 + $0x54] sm:$0xff]
        %v863 = vld [vmem:[%s847 + $0x5c] sm:$0xf]
        %v864 = vld [vmem:[%s847 + $0x60] sm:$0xff]
        %v865 = vld [vmem:[%s847 + $0x68] sm:$0xf]
        %v866 = vld [vmem:[%s847 + $0x6c] sm:$0xff]
        %v867 = vld [vmem:[%s847 + $0x74] sm:$0xf]
        %v868 = vld [vmem:[%s847 + $0x78] sm:$0xff]
        %v869 = vld [vmem:[%s847 + $0x80] sm:$0xf]
        %v870 = vld [vmem:[%s847 + $0x84] sm:$0xff]
        %v871 = vld [vmem:[%s847 + $0x8c] sm:$0xf]
        %v872 = vld [vmem:[%s847 + $0x90] sm:$0xff]
        %v873 = vld [vmem:[%s847 + $0x98] sm:$0xf]
        %v874 = vld [vmem:[%s847 + $0x9c] sm:$0xff]
        %v875 = vld [vmem:[%s847 + $0xa4] sm:$0xf]
        %v876 = vld [vmem:[%s847 + $0xa8] sm:$0xff]
        %v877 = vld [vmem:[%s847 + $0xb0] sm:$0xf]
        %v878 = vld [vmem:[%s847 + $0xb4] sm:$0xff]
        %v879 = vld [vmem:[%s847 + $0xbc] sm:$0xf]
        %s880 = smul.u32 %s38, 3
        %s881 = scalar_lea.vmem %s5, %s880
        %v882 = vld [vmem:[%s881] sm:$0x7]
        %s883 = smul.u32 %s38, 16
        %s884 = smul.addr %s883, 4
        %s885 = scalar_lea.vmem [#allocation12], %s884
        %v886 = vld [vmem:[%s885] sm:$0xf]
        %v887 = vld [vmem:[%s885 + $0x4] sm:$0xf]
        %v888 = vld [vmem:[%s885 + $0x8] sm:$0xf]
        %v889 = vld [vmem:[%s885 + $0xc] sm:$0xf]
        %v890 = vld [vmem:[%s885 + $0x10] sm:$0xf]
        %v891 = vld [vmem:[%s885 + $0x14] sm:$0xf]
        %v892 = vld [vmem:[%s885 + $0x18] sm:$0xf]
        %v893 = vld [vmem:[%s885 + $0x1c] sm:$0xf]
        %v894 = vld [vmem:[%s885 + $0x20] sm:$0xf]
        %v895 = vld [vmem:[%s885 + $0x24] sm:$0xf]
        %v896 = vld [vmem:[%s885 + $0x28] sm:$0xf]
        %v897 = vld [vmem:[%s885 + $0x2c] sm:$0xf]
        %v898 = vld [vmem:[%s885 + $0x30] sm:$0xf]
        %v899 = vld [vmem:[%s885 + $0x34] sm:$0xf]
        %v900 = vld [vmem:[%s885 + $0x38] sm:$0xf]
        %v901 = vld [vmem:[%s885 + $0x3c] sm:$0xf]
        %s902 = scalar_lea.vmem %s7, %s38
        %v903 = vld [vmem:[%s902] sm:$0x1]
        %s904 = scalar_lea.vmem %s8, %s38
        %v905 = vld [vmem:[%s904] sm:$0x1]
        %s906 = scalar_lea.vmem %s9, %s38
        %v907 = vld [vmem:[%s906] sm:$0x1]
        %s908 = smul.u32 %s38, 32
        %s909 = smul.addr %s908, 4
        %s910 = scalar_lea.vmem [#allocation14], %s909
        %v911 = vld [vmem:[%s910] sm:$0xff]
        %v912 = vld [vmem:[%s910 + $0x8] sm:$0xff]
        %v913 = vld [vmem:[%s910 + $0x10] sm:$0xff]
        %v914 = vld [vmem:[%s910 + $0x18] sm:$0xff]
        %v915 = vld [vmem:[%s910 + $0x20] sm:$0xff]
        %v916 = vld [vmem:[%s910 + $0x28] sm:$0xff]
        %v917 = vld [vmem:[%s910 + $0x30] sm:$0xff]
        %v918 = vld [vmem:[%s910 + $0x38] sm:$0xff]
        %v919 = vld [vmem:[%s910 + $0x40] sm:$0xff]
        %v920 = vld [vmem:[%s910 + $0x48] sm:$0xff]
        %v921 = vld [vmem:[%s910 + $0x50] sm:$0xff]
        %v922 = vld [vmem:[%s910 + $0x58] sm:$0xff]
        %v923 = vld [vmem:[%s910 + $0x60] sm:$0xff]
        %v924 = vld [vmem:[%s910 + $0x68] sm:$0xff]
        %v925 = vld [vmem:[%s910 + $0x70] sm:$0xff]
        %v926 = vld [vmem:[%s910 + $0x78] sm:$0xff]
        %s927 = smul.u32 %s38, 2
        %s928 = scalar_lea.vmem %s11, %s927
        %v929 = vld [vmem:[%s928] sm:$0x3]
        %s930 = smul.addr %s908, 4
        %s931 = scalar_lea.vmem [#allocation15], %s930
        %v932 = vld [vmem:[%s931] sm:$0xf]
        %v933 = vld [vmem:[%s931 + $0x4] sm:$0xf]
        %v934 = vld [vmem:[%s931 + $0x8] sm:$0xf]
        %v935 = vld [vmem:[%s931 + $0xc] sm:$0xf]
        %v936 = vld [vmem:[%s931 + $0x10] sm:$0xf]
        %v937 = vld [vmem:[%s931 + $0x14] sm:$0xf]
        %v938 = vld [vmem:[%s931 + $0x18] sm:$0xf]
        %v939 = vld [vmem:[%s931 + $0x1c] sm:$0xf]
        %v940 = vld [vmem:[%s931 + $0x20] sm:$0xf]
        %v941 = vld [vmem:[%s931 + $0x24] sm:$0xf]
        %v942 = vld [vmem:[%s931 + $0x28] sm:$0xf]
        %v943 = vld [vmem:[%s931 + $0x2c] sm:$0xf]
        %v944 = vld [vmem:[%s931 + $0x30] sm:$0xf]
        %v945 = vld [vmem:[%s931 + $0x34] sm:$0xf]
        %v946 = vld [vmem:[%s931 + $0x38] sm:$0xf]
        %v947 = vld [vmem:[%s931 + $0x3c] sm:$0xf]
        %v948 = vld [vmem:[%s931 + $0x40] sm:$0xf]
        %v949 = vld [vmem:[%s931 + $0x44] sm:$0xf]
        %v950 = vld [vmem:[%s931 + $0x48] sm:$0xf]
        %v951 = vld [vmem:[%s931 + $0x4c] sm:$0xf]
        %v952 = vld [vmem:[%s931 + $0x50] sm:$0xf]
        %v953 = vld [vmem:[%s931 + $0x54] sm:$0xf]
        %v954 = vld [vmem:[%s931 + $0x58] sm:$0xf]
        %v955 = vld [vmem:[%s931 + $0x5c] sm:$0xf]
        %v956 = vld [vmem:[%s931 + $0x60] sm:$0xf]
        %v957 = vld [vmem:[%s931 + $0x64] sm:$0xf]
        %v958 = vld [vmem:[%s931 + $0x68] sm:$0xf]
        %v959 = vld [vmem:[%s931 + $0x6c] sm:$0xf]
        %v960 = vld [vmem:[%s931 + $0x70] sm:$0xf]
        %v961 = vld [vmem:[%s931 + $0x74] sm:$0xf]
        %v962 = vld [vmem:[%s931 + $0x78] sm:$0xf]
        %v963 = vld [vmem:[%s931 + $0x7c] sm:$0xf]
        %s964 = scalar_lea.vmem %s13, %s38
        %v965 = vld [vmem:[%s964] sm:$0x1]
        %966 = vadd.xlane.f32.xlu0 %v809
        %v967 = vpop.xlane.xlu0 %966
        %968 = vadd.xlane.f32.xlu0 %v810
        %v969 = vpop.xlane.xlu0 %968
        %970 = vadd.xlane.f32.xlu0 %v811
        %v971 = vpop.xlane.xlu0 %970
        %972 = vadd.xlane.f32.xlu0 %v812
        %v973 = vpop.xlane.xlu0 %972
        %974 = vadd.xlane.f32.xlu0 %v813
        %v975 = vpop.xlane.xlu0 %974
        %976 = vadd.xlane.f32.xlu0 %v814
        %v977 = vpop.xlane.xlu0 %976
        %978 = vadd.xlane.f32.xlu0 %v815
        %v979 = vpop.xlane.xlu0 %978
        %980 = vadd.xlane.f32.xlu0 %v816
        %v981 = vpop.xlane.xlu0 %980
        %982 = vadd.xlane.f32.xlu0 %v817
        %v983 = vpop.xlane.xlu0 %982
        %984 = vadd.xlane.f32.xlu0 %v818
        %v985 = vpop.xlane.xlu0 %984
        %986 = vadd.xlane.f32.xlu0 %v819
        %v987 = vpop.xlane.xlu0 %986
        %988 = vadd.xlane.f32.xlu0 %v820
        %v989 = vpop.xlane.xlu0 %988
        %990 = vadd.xlane.f32.xlu0 %v821
        %v991 = vpop.xlane.xlu0 %990
        %992 = vadd.xlane.f32.xlu0 %v822
        %v993 = vpop.xlane.xlu0 %992
        %994 = vadd.xlane.f32.xlu0 %v823
        %v995 = vpop.xlane.xlu0 %994
        %996 = vadd.xlane.f32.xlu0 %v824
        %v997 = vpop.xlane.xlu0 %996
        %v998 = vrcp.pop 128.0
        %v999 = vmul.f32 %v967, %v998
        %v1000 = vmul.f32 %v969, %v998
        %v1001 = vmul.f32 %v971, %v998
        %v1002 = vmul.f32 %v973, %v998
        %v1003 = vmul.f32 %v975, %v998
        %v1004 = vmul.f32 %v977, %v998
        %v1005 = vmul.f32 %v979, %v998
        %v1006 = vmul.f32 %v981, %v998
        %v1007 = vmul.f32 %v983, %v998
        %v1008 = vmul.f32 %v985, %v998
        %v1009 = vmul.f32 %v987, %v998
        %v1010 = vmul.f32 %v989, %v998
        %v1011 = vmul.f32 %v991, %v998
        %v1012 = vmul.f32 %v993, %v998
        %v1013 = vmul.f32 %v995, %v998
        %v1014 = vmul.f32 %v997, %v998
        %v1015 = vsub.f32 %v809, %v999
        %v1016 = vsub.f32 %v810, %v1000
        %v1017 = vsub.f32 %v811, %v1001
        %v1018 = vsub.f32 %v812, %v1002
        %v1019 = vsub.f32 %v813, %v1003
        %v1020 = vsub.f32 %v814, %v1004
        %v1021 = vsub.f32 %v815, %v1005
        %v1022 = vsub.f32 %v816, %v1006
        %v1023 = vsub.f32 %v817, %v1007
        %v1024 = vsub.f32 %v818, %v1008
        %v1025 = vsub.f32 %v819, %v1009
        %v1026 = vsub.f32 %v820, %v1010
        %v1027 = vsub.f32 %v821, %v1011
        %v1028 = vsub.f32 %v822, %v1012
        %v1029 = vsub.f32 %v823, %v1013
        %v1030 = vsub.f32 %v824, %v1014
        %v1031 = vmul.f32 %v1015, %v1015
        %v1032 = vmul.f32 %v1016, %v1016
        %v1033 = vmul.f32 %v1017, %v1017
        %v1034 = vmul.f32 %v1018, %v1018
        %v1035 = vmul.f32 %v1019, %v1019
        %v1036 = vmul.f32 %v1020, %v1020
        %v1037 = vmul.f32 %v1021, %v1021
        %v1038 = vmul.f32 %v1022, %v1022
        %v1039 = vmul.f32 %v1023, %v1023
        %v1040 = vmul.f32 %v1024, %v1024
        %v1041 = vmul.f32 %v1025, %v1025
        %v1042 = vmul.f32 %v1026, %v1026
        %v1043 = vmul.f32 %v1027, %v1027
        %v1044 = vmul.f32 %v1028, %v1028
        %v1045 = vmul.f32 %v1029, %v1029
        %v1046 = vmul.f32 %v1030, %v1030
        %1047 = vadd.xlane.f32.xlu0 %v1031
        %v1048 = vpop.xlane.xlu0 %1047
        %1049 = vadd.xlane.f32.xlu0 %v1032
        %v1050 = vpop.xlane.xlu0 %1049
        %1051 = vadd.xlane.f32.xlu0 %v1033
        %v1052 = vpop.xlane.xlu0 %1051
        %1053 = vadd.xlane.f32.xlu0 %v1034
        %v1054 = vpop.xlane.xlu0 %1053
        %1055 = vadd.xlane.f32.xlu0 %v1035
        %v1056 = vpop.xlane.xlu0 %1055
        %1057 = vadd.xlane.f32.xlu0 %v1036
        %v1058 = vpop.xlane.xlu0 %1057
        %1059 = vadd.xlane.f32.xlu0 %v1037
        %v1060 = vpop.xlane.xlu0 %1059
        %1061 = vadd.xlane.f32.xlu0 %v1038
        %v1062 = vpop.xlane.xlu0 %1061
        %1063 = vadd.xlane.f32.xlu0 %v1039
        %v1064 = vpop.xlane.xlu0 %1063
        %1065 = vadd.xlane.f32.xlu0 %v1040
        %v1066 = vpop.xlane.xlu0 %1065
        %1067 = vadd.xlane.f32.xlu0 %v1041
        %v1068 = vpop.xlane.xlu0 %1067
        %1069 = vadd.xlane.f32.xlu0 %v1042
        %v1070 = vpop.xlane.xlu0 %1069
        %1071 = vadd.xlane.f32.xlu0 %v1043
        %v1072 = vpop.xlane.xlu0 %1071
        %1073 = vadd.xlane.f32.xlu0 %v1044
        %v1074 = vpop.xlane.xlu0 %1073
        %1075 = vadd.xlane.f32.xlu0 %v1045
        %v1076 = vpop.xlane.xlu0 %1075
        %1077 = vadd.xlane.f32.xlu0 %v1046
        %v1078 = vpop.xlane.xlu0 %1077
        %v1079 = vmul.f32 %v1048, %v998
        %v1080 = vmul.f32 %v1050, %v998
        %v1081 = vmul.f32 %v1052, %v998
        %v1082 = vmul.f32 %v1054, %v998
        %v1083 = vmul.f32 %v1056, %v998
        %v1084 = vmul.f32 %v1058, %v998
        %v1085 = vmul.f32 %v1060, %v998
        %v1086 = vmul.f32 %v1062, %v998
        %v1087 = vmul.f32 %v1064, %v998
        %v1088 = vmul.f32 %v1066, %v998
        %v1089 = vmul.f32 %v1068, %v998
        %v1090 = vmul.f32 %v1070, %v998
        %v1091 = vmul.f32 %v1072, %v998
        %v1092 = vmul.f32 %v1074, %v998
        %v1093 = vmul.f32 %v1076, %v998
        %v1094 = vmul.f32 %v1078, %v998
        %v1095 = vadd.f32 %v1079, 1e-05
        %v1096 = vadd.f32 %v1080, 1e-05
        %v1097 = vadd.f32 %v1081, 1e-05
        %v1098 = vadd.f32 %v1082, 1e-05
        %v1099 = vadd.f32 %v1083, 1e-05
        %v1100 = vadd.f32 %v1084, 1e-05
        %v1101 = vadd.f32 %v1085, 1e-05
        %v1102 = vadd.f32 %v1086, 1e-05
        %v1103 = vadd.f32 %v1087, 1e-05
        %v1104 = vadd.f32 %v1088, 1e-05
        %v1105 = vadd.f32 %v1089, 1e-05
        %v1106 = vadd.f32 %v1090, 1e-05
        %v1107 = vadd.f32 %v1091, 1e-05
        %v1108 = vadd.f32 %v1092, 1e-05
        %v1109 = vadd.f32 %v1093, 1e-05
        %v1110 = vadd.f32 %v1094, 1e-05
        %v1111 = vrsqrt.pop %v1095
        %v1112 = vrsqrt.pop %v1096
        %v1113 = vrsqrt.pop %v1097
        %v1114 = vrsqrt.pop %v1098
        %v1115 = vrsqrt.pop %v1099
        %v1116 = vrsqrt.pop %v1100
        %v1117 = vrsqrt.pop %v1101
        %v1118 = vrsqrt.pop %v1102
        %v1119 = vrsqrt.pop %v1103
        %v1120 = vrsqrt.pop %v1104
        %v1121 = vrsqrt.pop %v1105
        %v1122 = vrsqrt.pop %v1106
        %v1123 = vrsqrt.pop %v1107
        %v1124 = vrsqrt.pop %v1108
        %v1125 = vrsqrt.pop %v1109
        %v1126 = vrsqrt.pop %v1110
        %v1127 = vmul.f32 %v1015, %v1111
        %v1128 = vmul.f32 %v1016, %v1112
        %v1129 = vmul.f32 %v1017, %v1113
        %v1130 = vmul.f32 %v1018, %v1114
        %v1131 = vmul.f32 %v1019, %v1115
        %v1132 = vmul.f32 %v1020, %v1116
        %v1133 = vmul.f32 %v1021, %v1117
        %v1134 = vmul.f32 %v1022, %v1118
        %v1135 = vmul.f32 %v1023, %v1119
        %v1136 = vmul.f32 %v1024, %v1120
        %v1137 = vmul.f32 %v1025, %v1121
        %v1138 = vmul.f32 %v1026, %v1122
        %v1139 = vmul.f32 %v1027, %v1123
        %v1140 = vmul.f32 %v1028, %v1124
        %v1141 = vmul.f32 %v1029, %v1125
        %v1142 = vmul.f32 %v1030, %v1126
        %v1144 = vlaneseq
        %v1145 = vshrl.u32 %v1144, 7
        %v1146 = vsub.s32 0, %v1145
        %v1147 = vrot.slane %v842, %v1146
        %v1149 = vmul.f32 %v1127, %v1147
        %v1150 = vmul.f32 %v1128, %v1147
        %v1151 = vmul.f32 %v1129, %v1147
        %v1152 = vmul.f32 %v1130, %v1147
        %v1153 = vmul.f32 %v1131, %v1147
        %v1154 = vmul.f32 %v1132, %v1147
        %v1155 = vmul.f32 %v1133, %v1147
        %v1156 = vmul.f32 %v1134, %v1147
        %v1157 = vmul.f32 %v1135, %v1147
        %v1158 = vmul.f32 %v1136, %v1147
        %v1159 = vmul.f32 %v1137, %v1147
        %v1160 = vmul.f32 %v1138, %v1147
        %v1161 = vmul.f32 %v1139, %v1147
        %v1162 = vmul.f32 %v1140, %v1147
        %v1163 = vmul.f32 %v1141, %v1147
        %v1164 = vmul.f32 %v1142, %v1147
        %v1166 = vlaneseq
        %v1167 = vshrl.u32 %v1166, 7
        %v1168 = vsub.s32 0, %v1167
        %v1169 = vrot.slane %v844, %v1168
        %v1171 = vadd.f32 %v1149, %v1169
        %v1172 = vadd.f32 %v1150, %v1169
        %v1173 = vadd.f32 %v1151, %v1169
        %v1174 = vadd.f32 %v1152, %v1169
        %v1175 = vadd.f32 %v1153, %v1169
        %v1176 = vadd.f32 %v1154, %v1169
        %v1177 = vadd.f32 %v1155, %v1169
        %v1178 = vadd.f32 %v1156, %v1169
        %v1179 = vadd.f32 %v1157, %v1169
        %v1180 = vadd.f32 %v1158, %v1169
        %v1181 = vadd.f32 %v1159, %v1169
        %v1182 = vadd.f32 %v1160, %v1169
        %v1183 = vadd.f32 %v1161, %v1169
        %v1184 = vadd.f32 %v1162, %v1169
        %v1185 = vadd.f32 %v1163, %v1169
        %v1186 = vadd.f32 %v1164, %v1169
        %v1187 = vpack.c.bf16 %v1172, %v1171
        %v1188 = vpack.c.bf16 %v1174, %v1173
        %v1189 = vpack.c.bf16 %v1176, %v1175
        %v1190 = vpack.c.bf16 %v1178, %v1177
        %v1191 = vpack.c.bf16 %v1180, %v1179
        %v1192 = vpack.c.bf16 %v1182, %v1181
        %v1193 = vpack.c.bf16 %v1184, %v1183
        %v1194 = vpack.c.bf16 %v1186, %v1185
        %v1196 = vlaneseq
        %v1197 = vshrl.u32 %v1196, 7
        %v1198 = vsub.s32 0, %v1197
        %v1199 = vrot.slane %v882, %v1198
        %v1200 = vlaneseq
        %v1201 = vshrl.u32 %v1200, 7
        %v1202 = vsub.s32 1, %v1201
        %v1203 = vrot.slane %v882, %v1202
        %v1204 = vlaneseq
        %v1205 = vshrl.u32 %v1204, 7
        %v1206 = vsub.s32 2, %v1205
        %v1207 = vrot.slane %v882, %v1206
        %v1243 = vunpack.c.l.b16 %v848
        %v1244 = vunpack.c.h.b16 %v848
        %v1245 = vunpack.c.l.b16 %v849
        %v1246 = vunpack.c.l.b16 %v850
        %v1247 = vunpack.c.h.b16 %v850
        %v1248 = vunpack.c.l.b16 %v851
        %v1249 = vunpack.c.l.b16 %v852
        %v1250 = vunpack.c.h.b16 %v852
        %v1251 = vunpack.c.l.b16 %v853
        %v1252 = vunpack.c.l.b16 %v854
        %v1253 = vunpack.c.h.b16 %v854
        %v1254 = vunpack.c.l.b16 %v855
        %v1255 = vunpack.c.l.b16 %v856
        %v1256 = vunpack.c.h.b16 %v856
        %v1257 = vunpack.c.l.b16 %v857
        %v1258 = vunpack.c.l.b16 %v858
        %v1259 = vunpack.c.h.b16 %v858
        %v1260 = vunpack.c.l.b16 %v859
        %v1261 = vunpack.c.l.b16 %v860
        %v1262 = vunpack.c.h.b16 %v860
        %v1263 = vunpack.c.l.b16 %v861
        %v1264 = vunpack.c.l.b16 %v862
        %v1265 = vunpack.c.h.b16 %v862
        %v1266 = vunpack.c.l.b16 %v863
        %v1267 = vunpack.c.l.b16 %v864
        %v1268 = vunpack.c.h.b16 %v864
        %v1269 = vunpack.c.l.b16 %v865
        %v1270 = vunpack.c.l.b16 %v866
        %v1271 = vunpack.c.h.b16 %v866
        %v1272 = vunpack.c.l.b16 %v867
        %v1273 = vunpack.c.l.b16 %v868
        %v1274 = vunpack.c.h.b16 %v868
        %v1275 = vunpack.c.l.b16 %v869
        %v1276 = vunpack.c.l.b16 %v870
        %v1277 = vunpack.c.h.b16 %v870
        %v1278 = vunpack.c.l.b16 %v871
        %v1279 = vunpack.c.l.b16 %v872
        %v1280 = vunpack.c.h.b16 %v872
        %v1281 = vunpack.c.l.b16 %v873
        %v1282 = vunpack.c.l.b16 %v874
        %v1283 = vunpack.c.h.b16 %v874
        %v1284 = vunpack.c.l.b16 %v875
        %v1285 = vunpack.c.l.b16 %v876
        %v1286 = vunpack.c.h.b16 %v876
        %v1287 = vunpack.c.l.b16 %v877
        %v1288 = vunpack.c.l.b16 %v878
        %v1289 = vunpack.c.h.b16 %v878
        %v1290 = vunpack.c.l.b16 %v879
        %v1291 = vpack.c.b16 %v1246, %v1243
        %v1292 = vpack.c.b16 %v1247, %v1244
        %v1293 = vpack.c.b16 %v1248, %v1245
        %v1294 = vpack.c.b16 %v1252, %v1249
        %v1295 = vpack.c.b16 %v1253, %v1250
        %v1296 = vpack.c.b16 %v1254, %v1251
        %v1297 = vpack.c.b16 %v1258, %v1255
        %v1298 = vpack.c.b16 %v1259, %v1256
        %v1299 = vpack.c.b16 %v1260, %v1257
        %v1300 = vpack.c.b16 %v1264, %v1261
        %v1301 = vpack.c.b16 %v1265, %v1262
        %v1302 = vpack.c.b16 %v1266, %v1263
        %v1303 = vpack.c.b16 %v1270, %v1267
        %v1304 = vpack.c.b16 %v1271, %v1268
        %v1305 = vpack.c.b16 %v1272, %v1269
        %v1306 = vpack.c.b16 %v1276, %v1273
        %v1307 = vpack.c.b16 %v1277, %v1274
        %v1308 = vpack.c.b16 %v1278, %v1275
        %v1309 = vpack.c.b16 %v1282, %v1279
        %v1310 = vpack.c.b16 %v1283, %v1280
        %v1311 = vpack.c.b16 %v1284, %v1281
        %v1312 = vpack.c.b16 %v1288, %v1285
        %v1313 = vpack.c.b16 %v1289, %v1286
        %v1314 = vpack.c.b16 %v1290, %v1287
        %1339 = vmatprep.subr.bf16.mxu0 %v1292
        %1340 = vmatpush1.bf16.msra.mxu0 %v1291
        %1341 = vmatprep.subr.bf16.mxu0 %v1295
        %1342 = vmatpush1.bf16.msra.mxu0 %v1294
        %1343 = vmatprep.subr.bf16.mxu0 %v1298
        %1344 = vmatpush1.bf16.msra.mxu0 %v1297
        %1345 = vmatprep.subr.bf16.mxu0 %v1301
        %1346 = vmatpush1.bf16.msra.mxu0 %v1300
        %1347 = vmatprep.subr.bf16.mxu0 %v1304
        %1348 = vmatpush1.bf16.msra.mxu0 %v1303
        %1349 = vmatprep.subr.bf16.mxu0 %v1307
        %1350 = vmatpush1.bf16.msra.mxu0 %v1306
        %1351 = vmatprep.subr.bf16.mxu0 %v1310
        %1352 = vmatpush1.bf16.msra.mxu0 %v1309
        %1353 = vmatprep.subr.bf16.mxu0 %v1313
        %1354 = vmatpush1.bf16.msra.mxu0 %v1312
        %1355 = vmatprep.subr.bf16.mxu0 0
        %1356 = vmatpush1.bf16.msra.mxu0 0
        %1357 = vmatprep.subr.bf16.mxu0 0
        %1358 = vmatpush1.bf16.msra.mxu0 0
        %1359 = vmatprep.subr.bf16.mxu0 0
        %1360 = vmatpush1.bf16.msra.mxu0 0
        %1361 = vmatprep.subr.bf16.mxu0 0
        %1362 = vmatpush1.bf16.msra.mxu0 0
        %1363 = vmatprep.subr.bf16.mxu0 0
        %1364 = vmatpush1.bf16.msra.mxu0 0
        %1365 = vmatprep.subr.bf16.mxu0 0
        %1366 = vmatpush1.bf16.msra.mxu0 0
        %1367 = vmatprep.subr.bf16.mxu0 0
        %1368 = vmatpush1.bf16.msra.mxu0 0
        %1369 = vmatprep.subr.bf16.mxu0 0
        %1370 = vmatpush1.bf16.msra.mxu0 0
        %1371 = vmatprep.mubr.bf16.mxu0 0
        %1372 = vmatmul.mubr.bf16.gmra.mrb[0].mxu0 %v1187
        %v1373 = vpop.f32.mrb[0].mxu0
        %v1374 = vadd.f32 %v1199, %v1373
        %v1375 = vpop.f32.mrb[0].mxu0
        %v1376 = vadd.f32 %v1203, %v1375
        %v1377 = vpop.f32.mrb[0].mxu0
        %v1378 = vadd.f32 %v1199, %v1377
        %v1379 = vpop.f32.mrb[0].mxu0
        %v1380 = vadd.f32 %v1203, %v1379
        %1381 = vmatprep.mubr.bf16.mxu0 0
        %1382 = vmatmul.mubr.bf16.gmra.mrb[0].mxu0 %v1188
        %v1383 = vpop.f32.mrb[0].mxu0
        %v1384 = vadd.f32 %v1199, %v1383
        %v1385 = vpop.f32.mrb[0].mxu0
        %v1386 = vadd.f32 %v1203, %v1385
        %v1387 = vpop.f32.mrb[0].mxu0
        %v1388 = vadd.f32 %v1199, %v1387
        %v1389 = vpop.f32.mrb[0].mxu0
        %v1390 = vadd.f32 %v1203, %v1389
        %1391 = vmatprep.mubr.bf16.mxu0 0
        %1392 = vmatmul.mubr.bf16.gmra.mrb[0].mxu0 %v1189
        %v1393 = vpop.f32.mrb[0].mxu0
        %v1394 = vadd.f32 %v1199, %v1393
        %v1395 = vpop.f32.mrb[0].mxu0
        %v1396 = vadd.f32 %v1203, %v1395
        %v1397 = vpop.f32.mrb[0].mxu0
        %v1398 = vadd.f32 %v1199, %v1397
        %v1399 = vpop.f32.mrb[0].mxu0
        %v1400 = vadd.f32 %v1203, %v1399
        %1401 = vmatprep.mubr.bf16.mxu0 0
        %1402 = vmatmul.mubr.bf16.gmra.mrb[0].mxu0 %v1190
        %v1403 = vpop.f32.mrb[0].mxu0
        %v1404 = vadd.f32 %v1199, %v1403
        %v1405 = vpop.f32.mrb[0].mxu0
        %v1406 = vadd.f32 %v1203, %v1405
        %v1407 = vpop.f32.mrb[0].mxu0
        %v1408 = vadd.f32 %v1199, %v1407
        %v1409 = vpop.f32.mrb[0].mxu0
        %v1410 = vadd.f32 %v1203, %v1409
        %1411 = vmatprep.mubr.bf16.mxu0 0
        %1412 = vmatmul.mubr.bf16.gmra.mrb[0].mxu0 %v1191
        %v1413 = vpop.f32.mrb[0].mxu0
        %v1414 = vadd.f32 %v1199, %v1413
        %v1415 = vpop.f32.mrb[0].mxu0
        %v1416 = vadd.f32 %v1203, %v1415
        %v1417 = vpop.f32.mrb[0].mxu0
        %v1418 = vadd.f32 %v1199, %v1417
        %v1419 = vpop.f32.mrb[0].mxu0
        %v1420 = vadd.f32 %v1203, %v1419
        %1421 = vmatprep.mubr.bf16.mxu0 0
        %1422 = vmatmul.mubr.bf16.gmra.mrb[0].mxu0 %v1192
        %v1423 = vpop.f32.mrb[0].mxu0
        %v1424 = vadd.f32 %v1199, %v1423
        %v1425 = vpop.f32.mrb[0].mxu0
        %v1426 = vadd.f32 %v1203, %v1425
        %v1427 = vpop.f32.mrb[0].mxu0
        %v1428 = vadd.f32 %v1199, %v1427
        %v1429 = vpop.f32.mrb[0].mxu0
        %v1430 = vadd.f32 %v1203, %v1429
        %1431 = vmatprep.mubr.bf16.mxu0 0
        %1432 = vmatmul.mubr.bf16.gmra.mrb[0].mxu0 %v1193
        %v1433 = vpop.f32.mrb[0].mxu0
        %v1434 = vadd.f32 %v1199, %v1433
        %v1435 = vpop.f32.mrb[0].mxu0
        %v1436 = vadd.f32 %v1203, %v1435
        %v1437 = vpop.f32.mrb[0].mxu0
        %v1438 = vadd.f32 %v1199, %v1437
        %v1439 = vpop.f32.mrb[0].mxu0
        %v1440 = vadd.f32 %v1203, %v1439
        %1441 = vmatprep.mubr.bf16.mxu0 0
        %1442 = vmatmul.mubr.bf16.gmra.mrb[0].mxu0 %v1194
        %v1443 = vpop.f32.mrb[0].mxu0
        %v1444 = vadd.f32 %v1199, %v1443
        %v1445 = vpop.f32.mrb[0].mxu0
        %v1446 = vadd.f32 %v1203, %v1445
        %v1447 = vpop.f32.mrb[0].mxu0
        %v1448 = vadd.f32 %v1199, %v1447
        %v1449 = vpop.f32.mrb[0].mxu0
        %v1450 = vadd.f32 %v1203, %v1449
        %1451 = vdwg.mxu0
        %1452 = vmatprep.subr.bf16.mxu0 0
        %1453 = vmatpush1.bf16.msra.mxu0 %v1293
        %1454 = vmatprep.subr.bf16.mxu0 0
        %1455 = vmatpush1.bf16.msra.mxu0 %v1296
        %1456 = vmatprep.subr.bf16.mxu0 0
        %1457 = vmatpush1.bf16.msra.mxu0 %v1299
        %1458 = vmatprep.subr.bf16.mxu0 0
        %1459 = vmatpush1.bf16.msra.mxu0 %v1302
        %1460 = vmatprep.subr.bf16.mxu0 0
        %1461 = vmatpush1.bf16.msra.mxu0 %v1305
        %1462 = vmatprep.subr.bf16.mxu0 0
        %1463 = vmatpush1.bf16.msra.mxu0 %v1308
        %1464 = vmatprep.subr.bf16.mxu0 0
        %1465 = vmatpush1.bf16.msra.mxu0 %v1311
        %1466 = vmatprep.subr.bf16.mxu0 0
        %1467 = vmatpush1.bf16.msra.mxu0 %v1314
        %1468 = vmatprep.subr.bf16.mxu0 0
        %1469 = vmatpush1.bf16.msra.mxu0 0
        %1470 = vmatprep.subr.bf16.mxu0 0
        %1471 = vmatpush1.bf16.msra.mxu0 0
        %1472 = vmatprep.subr.bf16.mxu0 0
        %1473 = vmatpush1.bf16.msra.mxu0 0
        %1474 = vmatprep.subr.bf16.mxu0 0
        %1475 = vmatpush1.bf16.msra.mxu0 0
        %1476 = vmatprep.subr.bf16.mxu0 0
        %1477 = vmatpush1.bf16.msra.mxu0 0
        %1478 = vmatprep.subr.bf16.mxu0 0
        %1479 = vmatpush1.bf16.msra.mxu0 0
        %1480 = vmatprep.subr.bf16.mxu0 0
        %1481 = vmatpush1.bf16.msra.mxu0 0
        %1482 = vmatprep.subr.bf16.mxu0 0
        %1483 = vmatpush1.bf16.msra.mxu0 0
        %1484 = vmatprep.mubr.bf16.mxu0 0
        %1485 = vmatmul.mubr.bf16.gmra.mrb[0].mxu0 %v1187
        %v1486 = vpop.f32.mrb[0].mxu0
        %v1487 = vadd.f32 %v1207, %v1486
        %v1488 = vpop.f32.mrb[0].mxu0
        %v1489 = vpop.f32.mrb[0].mxu0
        %v1490 = vadd.f32 %v1207, %v1489
        %v1491 = vpop.f32.mrb[0].mxu0
        %1492 = vmatprep.mubr.bf16.mxu0 0
        %1493 = vmatmul.mubr.bf16.gmra.mrb[0].mxu0 %v1188
        %v1494 = vpop.f32.mrb[0].mxu0
        %v1495 = vadd.f32 %v1207, %v1494
        %v1496 = vpop.f32.mrb[0].mxu0
        %v1497 = vpop.f32.mrb[0].mxu0
        %v1498 = vadd.f32 %v1207, %v1497
        %v1499 = vpop.f32.mrb[0].mxu0
        %1500 = vmatprep.mubr.bf16.mxu0 0
        %1501 = vmatmul.mubr.bf16.gmra.mrb[0].mxu0 %v1189
        %v1502 = vpop.f32.mrb[0].mxu0
        %v1503 = vadd.f32 %v1207, %v1502
        %v1504 = vpop.f32.mrb[0].mxu0
        %v1505 = vpop.f32.mrb[0].mxu0
        %v1506 = vadd.f32 %v1207, %v1505
        %v1507 = vpop.f32.mrb[0].mxu0
        %1508 = vmatprep.mubr.bf16.mxu0 0
        %1509 = vmatmul.mubr.bf16.gmra.mrb[0].mxu0 %v1190
        %v1510 = vpop.f32.mrb[0].mxu0
        %v1511 = vadd.f32 %v1207, %v1510
        %v1512 = vpop.f32.mrb[0].mxu0
        %v1513 = vpop.f32.mrb[0].mxu0
        %v1514 = vadd.f32 %v1207, %v1513
        %v1515 = vpop.f32.mrb[0].mxu0
        %1516 = vmatprep.mubr.bf16.mxu0 0
        %1517 = vmatmul.mubr.bf16.gmra.mrb[0].mxu0 %v1191
        %v1518 = vpop.f32.mrb[0].mxu0
        %v1519 = vadd.f32 %v1207, %v1518
        %v1520 = vpop.f32.mrb[0].mxu0
        %v1521 = vpop.f32.mrb[0].mxu0
        %v1522 = vadd.f32 %v1207, %v1521
        %v1523 = vpop.f32.mrb[0].mxu0
        %1524 = vmatprep.mubr.bf16.mxu0 0
        %1525 = vmatmul.mubr.bf16.gmra.mrb[0].mxu0 %v1192
        %v1526 = vpop.f32.mrb[0].mxu0
        %v1527 = vadd.f32 %v1207, %v1526
        %v1528 = vpop.f32.mrb[0].mxu0
        %v1529 = vpop.f32.mrb[0].mxu0
        %v1530 = vadd.f32 %v1207, %v1529
        %v1531 = vpop.f32.mrb[0].mxu0
        %1532 = vmatprep.mubr.bf16.mxu0 0
        %1533 = vmatmul.mubr.bf16.gmra.mrb[0].mxu0 %v1193
        %v1534 = vpop.f32.mrb[0].mxu0
        %v1535 = vadd.f32 %v1207, %v1534
        %v1536 = vpop.f32.mrb[0].mxu0
        %v1537 = vpop.f32.mrb[0].mxu0
        %v1538 = vadd.f32 %v1207, %v1537
        %v1539 = vpop.f32.mrb[0].mxu0
        %1540 = vmatprep.mubr.bf16.mxu0 0
        %1541 = vmatmul.mubr.bf16.gmra.mrb[0].mxu0 %v1194
        %v1542 = vpop.f32.mrb[0].mxu0
        %v1543 = vadd.f32 %v1207, %v1542
        %v1544 = vpop.f32.mrb[0].mxu0
        %v1545 = vpop.f32.mrb[0].mxu0
        %v1546 = vadd.f32 %v1207, %v1545
        %v1547 = vpop.f32.mrb[0].mxu0
        %1548 = vdwg.mxu0
        %v1549 = vpack.c.bf16 %v1378, %v1374
        %v1550 = vpack.c.bf16 %v1388, %v1384
        %v1551 = vpack.c.bf16 %v1398, %v1394
        %v1552 = vpack.c.bf16 %v1408, %v1404
        %v1553 = vpack.c.bf16 %v1418, %v1414
        %v1554 = vpack.c.bf16 %v1428, %v1424
        %v1555 = vpack.c.bf16 %v1438, %v1434
        %v1556 = vpack.c.bf16 %v1448, %v1444
        %v1557 = vpack.c.bf16 %v1380, %v1376
        %v1558 = vpack.c.bf16 %v1390, %v1386
        %v1559 = vpack.c.bf16 %v1400, %v1396
        %v1560 = vpack.c.bf16 %v1410, %v1406
        %v1561 = vpack.c.bf16 %v1420, %v1416
        %v1562 = vpack.c.bf16 %v1430, %v1426
        %v1563 = vpack.c.bf16 %v1440, %v1436
        %v1564 = vpack.c.bf16 %v1450, %v1446
        %v1565 = vpack.c.bf16 %v1490, %v1487
        %v1566 = vpack.c.bf16 %v1498, %v1495
        %v1567 = vpack.c.bf16 %v1506, %v1503
        %v1568 = vpack.c.bf16 %v1514, %v1511
        %v1569 = vpack.c.bf16 %v1522, %v1519
        %v1570 = vpack.c.bf16 %v1530, %v1527
        %v1571 = vpack.c.bf16 %v1538, %v1535
        %v1572 = vpack.c.bf16 %v1546, %v1543
        %vm1573 = vcmask 261120
        %v1575 = vsel %vm1573, %v1549, 0
        %v1578 = vsel %vm1573, %v1557, 0
        %1580 = vmatprep.subr.bf16.mxu0 0
        %1581 = vmatpush1.bf16.xpose.msra.mxu0 %v1578
        %1582 = vmatprep.subr.bf16.mxu0 0
        %1583 = vmatpush1.bf16.xpose.msra.mxu0 0
        %1584 = vmatprep.subr.bf16.mxu0 0
        %1585 = vmatpush1.bf16.xpose.msra.mxu0 0
        %1586 = vmatprep.subr.bf16.mxu0 0
        %1587 = vmatpush1.bf16.xpose.msra.mxu0 0
        %1588 = vmatprep.subr.bf16.mxu0 0
        %1589 = vmatpush1.bf16.xpose.msra.mxu0 0
        %1590 = vmatprep.subr.bf16.mxu0 0
        %1591 = vmatpush1.bf16.xpose.msra.mxu0 0
        %1592 = vmatprep.subr.bf16.mxu0 0
        %1593 = vmatpush1.bf16.xpose.msra.mxu0 0
        %1594 = vmatprep.subr.bf16.mxu0 0
        %1595 = vmatpush1.bf16.xpose.msra.mxu0 0
        %1596 = vmatprep.subr.bf16.mxu0 0
        %1597 = vmatpush1.bf16.xpose.msra.mxu0 0
        %1598 = vmatprep.subr.bf16.mxu0 0
        %1599 = vmatpush1.bf16.xpose.msra.mxu0 0
        %1600 = vmatprep.subr.bf16.mxu0 0
        %1601 = vmatpush1.bf16.xpose.msra.mxu0 0
        %1602 = vmatprep.subr.bf16.mxu0 0
        %1603 = vmatpush1.bf16.xpose.msra.mxu0 0
        %1604 = vmatprep.subr.bf16.mxu0 0
        %1605 = vmatpush1.bf16.xpose.msra.mxu0 0
        %1606 = vmatprep.subr.bf16.mxu0 0
        %1607 = vmatpush1.bf16.xpose.msra.mxu0 0
        %1608 = vmatprep.subr.bf16.mxu0 0
        %1609 = vmatpush1.bf16.xpose.msra.mxu0 0
        %1610 = vmatprep.subr.bf16.mxu0 0
        %1611 = vmatpush1.bf16.xpose.msra.mxu0 0
        %1612 = vmatprep.mubr.bf16.mxu0 0
        %1613 = vmatmul.mubr.bf16.gmra.mrb[0].mxu0 %v1575
        %v1614 = vpop.f32.mrb[0].mxu0
        %v1615 = vadd.f32 %v825, %v1614
        %v1616 = vpop.f32.mrb[0].mxu0
        %v1617 = vpop.f32.mrb[0].mxu0
        %v1618 = vadd.f32 %v826, %v1617
        %v1619 = vpop.f32.mrb[0].mxu0
        %1620 = vdwg.mxu0
        %v1622 = vsel %vm1573, %v1550, 0
        %v1625 = vsel %vm1573, %v1558, 0
        %1627 = vmatprep.subr.bf16.mxu0 0
        %1628 = vmatpush1.bf16.xpose.msra.mxu0 %v1625
        %1629 = vmatprep.subr.bf16.mxu0 0
        %1630 = vmatpush1.bf16.xpose.msra.mxu0 0
        %1631 = vmatprep.subr.bf16.mxu0 0
        %1632 = vmatpush1.bf16.xpose.msra.mxu0 0
        %1633 = vmatprep.subr.bf16.mxu0 0
        %1634 = vmatpush1.bf16.xpose.msra.mxu0 0
        %1635 = vmatprep.subr.bf16.mxu0 0
        %1636 = vmatpush1.bf16.xpose.msra.mxu0 0
        %1637 = vmatprep.subr.bf16.mxu0 0
        %1638 = vmatpush1.bf16.xpose.msra.mxu0 0
        %1639 = vmatprep.subr.bf16.mxu0 0
        %1640 = vmatpush1.bf16.xpose.msra.mxu0 0
        %1641 = vmatprep.subr.bf16.mxu0 0
        %1642 = vmatpush1.bf16.xpose.msra.mxu0 0
        %1643 = vmatprep.subr.bf16.mxu0 0
        %1644 = vmatpush1.bf16.xpose.msra.mxu0 0
        %1645 = vmatprep.subr.bf16.mxu0 0
        %1646 = vmatpush1.bf16.xpose.msra.mxu0 0
        %1647 = vmatprep.subr.bf16.mxu0 0
        %1648 = vmatpush1.bf16.xpose.msra.mxu0 0
        %1649 = vmatprep.subr.bf16.mxu0 0
        %1650 = vmatpush1.bf16.xpose.msra.mxu0 0
        %1651 = vmatprep.subr.bf16.mxu0 0
        %1652 = vmatpush1.bf16.xpose.msra.mxu0 0
        %1653 = vmatprep.subr.bf16.mxu0 0
        %1654 = vmatpush1.bf16.xpose.msra.mxu0 0
        %1655 = vmatprep.subr.bf16.mxu0 0
        %1656 = vmatpush1.bf16.xpose.msra.mxu0 0
        %1657 = vmatprep.subr.bf16.mxu0 0
        %1658 = vmatpush1.bf16.xpose.msra.mxu0 0
        %1659 = vmatprep.mubr.bf16.mxu0 0
        %1660 = vmatmul.mubr.bf16.gmra.mrb[0].mxu0 %v1622
        %v1661 = vpop.f32.mrb[0].mxu0
        %v1662 = vadd.f32 %v827, %v1661
        %v1663 = vpop.f32.mrb[0].mxu0
        %v1664 = vpop.f32.mrb[0].mxu0
        %v1665 = vadd.f32 %v828, %v1664
        %v1666 = vpop.f32.mrb[0].mxu0
        %1667 = vdwg.mxu0
        %v1669 = vsel %vm1573, %v1551, 0
        %v1672 = vsel %vm1573, %v1559, 0
        %1674 = vmatprep.subr.bf16.mxu0 0
        %1675 = vmatpush1.bf16.xpose.msra.mxu0 %v1672
        %1676 = vmatprep.subr.bf16.mxu0 0
        %1677 = vmatpush1.bf16.xpose.msra.mxu0 0
        %1678 = vmatprep.subr.bf16.mxu0 0
        %1679 = vmatpush1.bf16.xpose.msra.mxu0 0
        %1680 = vmatprep.subr.bf16.mxu0 0
        %1681 = vmatpush1.bf16.xpose.msra.mxu0 0
        %1682 = vmatprep.subr.bf16.mxu0 0
        %1683 = vmatpush1.bf16.xpose.msra.mxu0 0
        %1684 = vmatprep.subr.bf16.mxu0 0
        %1685 = vmatpush1.bf16.xpose.msra.mxu0 0
        %1686 = vmatprep.subr.bf16.mxu0 0
        %1687 = vmatpush1.bf16.xpose.msra.mxu0 0
        %1688 = vmatprep.subr.bf16.mxu0 0
        %1689 = vmatpush1.bf16.xpose.msra.mxu0 0
        %1690 = vmatprep.subr.bf16.mxu0 0
        %1691 = vmatpush1.bf16.xpose.msra.mxu0 0
        %1692 = vmatprep.subr.bf16.mxu0 0
        %1693 = vmatpush1.bf16.xpose.msra.mxu0 0
        %1694 = vmatprep.subr.bf16.mxu0 0
        %1695 = vmatpush1.bf16.xpose.msra.mxu0 0
        %1696 = vmatprep.subr.bf16.mxu0 0
        %1697 = vmatpush1.bf16.xpose.msra.mxu0 0
        %1698 = vmatprep.subr.bf16.mxu0 0
        %1699 = vmatpush1.bf16.xpose.msra.mxu0 0
        %1700 = vmatprep.subr.bf16.mxu0 0
        %1701 = vmatpush1.bf16.xpose.msra.mxu0 0
        %1702 = vmatprep.subr.bf16.mxu0 0
        %1703 = vmatpush1.bf16.xpose.msra.mxu0 0
        %1704 = vmatprep.subr.bf16.mxu0 0
        %1705 = vmatpush1.bf16.xpose.msra.mxu0 0
        %1706 = vmatprep.mubr.bf16.mxu0 0
        %1707 = vmatmul.mubr.bf16.gmra.mrb[0].mxu0 %v1669
        %v1708 = vpop.f32.mrb[0].mxu0
        %v1709 = vadd.f32 %v829, %v1708
        %v1710 = vpop.f32.mrb[0].mxu0
        %v1711 = vpop.f32.mrb[0].mxu0
        %v1712 = vadd.f32 %v830, %v1711
        %v1713 = vpop.f32.mrb[0].mxu0
        %1714 = vdwg.mxu0
        %v1716 = vsel %vm1573, %v1552, 0
        %v1719 = vsel %vm1573, %v1560, 0
        %1721 = vmatprep.subr.bf16.mxu0 0
        %1722 = vmatpush1.bf16.xpose.msra.mxu0 %v1719
        %1723 = vmatprep.subr.bf16.mxu0 0
        %1724 = vmatpush1.bf16.xpose.msra.mxu0 0
        %1725 = vmatprep.subr.bf16.mxu0 0
        %1726 = vmatpush1.bf16.xpose.msra.mxu0 0
        %1727 = vmatprep.subr.bf16.mxu0 0
        %1728 = vmatpush1.bf16.xpose.msra.mxu0 0
        %1729 = vmatprep.subr.bf16.mxu0 0
        %1730 = vmatpush1.bf16.xpose.msra.mxu0 0
        %1731 = vmatprep.subr.bf16.mxu0 0
        %1732 = vmatpush1.bf16.xpose.msra.mxu0 0
        %1733 = vmatprep.subr.bf16.mxu0 0
        %1734 = vmatpush1.bf16.xpose.msra.mxu0 0
        %1735 = vmatprep.subr.bf16.mxu0 0
        %1736 = vmatpush1.bf16.xpose.msra.mxu0 0
        %1737 = vmatprep.subr.bf16.mxu0 0
        %1738 = vmatpush1.bf16.xpose.msra.mxu0 0
        %1739 = vmatprep.subr.bf16.mxu0 0
        %1740 = vmatpush1.bf16.xpose.msra.mxu0 0
        %1741 = vmatprep.subr.bf16.mxu0 0
        %1742 = vmatpush1.bf16.xpose.msra.mxu0 0
        %1743 = vmatprep.subr.bf16.mxu0 0
        %1744 = vmatpush1.bf16.xpose.msra.mxu0 0
        %1745 = vmatprep.subr.bf16.mxu0 0
        %1746 = vmatpush1.bf16.xpose.msra.mxu0 0
        %1747 = vmatprep.subr.bf16.mxu0 0
        %1748 = vmatpush1.bf16.xpose.msra.mxu0 0
        %1749 = vmatprep.subr.bf16.mxu0 0
        %1750 = vmatpush1.bf16.xpose.msra.mxu0 0
        %1751 = vmatprep.subr.bf16.mxu0 0
        %1752 = vmatpush1.bf16.xpose.msra.mxu0 0
        %1753 = vmatprep.mubr.bf16.mxu0 0
        %1754 = vmatmul.mubr.bf16.gmra.mrb[0].mxu0 %v1716
        %v1755 = vpop.f32.mrb[0].mxu0
        %v1756 = vadd.f32 %v831, %v1755
        %v1757 = vpop.f32.mrb[0].mxu0
        %v1758 = vpop.f32.mrb[0].mxu0
        %v1759 = vadd.f32 %v832, %v1758
        %v1760 = vpop.f32.mrb[0].mxu0
        %1761 = vdwg.mxu0
        %v1763 = vsel %vm1573, %v1553, 0
        %v1766 = vsel %vm1573, %v1561, 0
        %1768 = vmatprep.subr.bf16.mxu0 0
        %1769 = vmatpush1.bf16.xpose.msra.mxu0 %v1766
        %1770 = vmatprep.subr.bf16.mxu0 0
        %1771 = vmatpush1.bf16.xpose.msra.mxu0 0
        %1772 = vmatprep.subr.bf16.mxu0 0
        %1773 = vmatpush1.bf16.xpose.msra.mxu0 0
        %1774 = vmatprep.subr.bf16.mxu0 0
        %1775 = vmatpush1.bf16.xpose.msra.mxu0 0
        %1776 = vmatprep.subr.bf16.mxu0 0
        %1777 = vmatpush1.bf16.xpose.msra.mxu0 0
        %1778 = vmatprep.subr.bf16.mxu0 0
        %1779 = vmatpush1.bf16.xpose.msra.mxu0 0
        %1780 = vmatprep.subr.bf16.mxu0 0
        %1781 = vmatpush1.bf16.xpose.msra.mxu0 0
        %1782 = vmatprep.subr.bf16.mxu0 0
        %1783 = vmatpush1.bf16.xpose.msra.mxu0 0
        %1784 = vmatprep.subr.bf16.mxu0 0
        %1785 = vmatpush1.bf16.xpose.msra.mxu0 0
        %1786 = vmatprep.subr.bf16.mxu0 0
        %1787 = vmatpush1.bf16.xpose.msra.mxu0 0
        %1788 = vmatprep.subr.bf16.mxu0 0
        %1789 = vmatpush1.bf16.xpose.msra.mxu0 0
        %1790 = vmatprep.subr.bf16.mxu0 0
        %1791 = vmatpush1.bf16.xpose.msra.mxu0 0
        %1792 = vmatprep.subr.bf16.mxu0 0
        %1793 = vmatpush1.bf16.xpose.msra.mxu0 0
        %1794 = vmatprep.subr.bf16.mxu0 0
        %1795 = vmatpush1.bf16.xpose.msra.mxu0 0
        %1796 = vmatprep.subr.bf16.mxu0 0
        %1797 = vmatpush1.bf16.xpose.msra.mxu0 0
        %1798 = vmatprep.subr.bf16.mxu0 0
        %1799 = vmatpush1.bf16.xpose.msra.mxu0 0
        %1800 = vmatprep.mubr.bf16.mxu0 0
        %1801 = vmatmul.mubr.bf16.gmra.mrb[0].mxu0 %v1763
        %v1802 = vpop.f32.mrb[0].mxu0
        %v1803 = vadd.f32 %v833, %v1802
        %v1804 = vpop.f32.mrb[0].mxu0
        %v1805 = vpop.f32.mrb[0].mxu0
        %v1806 = vadd.f32 %v834, %v1805
        %v1807 = vpop.f32.mrb[0].mxu0
        %1808 = vdwg.mxu0
        %v1810 = vsel %vm1573, %v1554, 0
        %v1813 = vsel %vm1573, %v1562, 0
        %1815 = vmatprep.subr.bf16.mxu0 0
        %1816 = vmatpush1.bf16.xpose.msra.mxu0 %v1813
        %1817 = vmatprep.subr.bf16.mxu0 0
        %1818 = vmatpush1.bf16.xpose.msra.mxu0 0
        %1819 = vmatprep.subr.bf16.mxu0 0
        %1820 = vmatpush1.bf16.xpose.msra.mxu0 0
        %1821 = vmatprep.subr.bf16.mxu0 0
        %1822 = vmatpush1.bf16.xpose.msra.mxu0 0
        %1823 = vmatprep.subr.bf16.mxu0 0
        %1824 = vmatpush1.bf16.xpose.msra.mxu0 0
        %1825 = vmatprep.subr.bf16.mxu0 0
        %1826 = vmatpush1.bf16.xpose.msra.mxu0 0
        %1827 = vmatprep.subr.bf16.mxu0 0
        %1828 = vmatpush1.bf16.xpose.msra.mxu0 0
        %1829 = vmatprep.subr.bf16.mxu0 0
        %1830 = vmatpush1.bf16.xpose.msra.mxu0 0
        %1831 = vmatprep.subr.bf16.mxu0 0
        %1832 = vmatpush1.bf16.xpose.msra.mxu0 0
        %1833 = vmatprep.subr.bf16.mxu0 0
        %1834 = vmatpush1.bf16.xpose.msra.mxu0 0
        %1835 = vmatprep.subr.bf16.mxu0 0
        %1836 = vmatpush1.bf16.xpose.msra.mxu0 0
        %1837 = vmatprep.subr.bf16.mxu0 0
        %1838 = vmatpush1.bf16.xpose.msra.mxu0 0
        %1839 = vmatprep.subr.bf16.mxu0 0
        %1840 = vmatpush1.bf16.xpose.msra.mxu0 0
        %1841 = vmatprep.subr.bf16.mxu0 0
        %1842 = vmatpush1.bf16.xpose.msra.mxu0 0
        %1843 = vmatprep.subr.bf16.mxu0 0
        %1844 = vmatpush1.bf16.xpose.msra.mxu0 0
        %1845 = vmatprep.subr.bf16.mxu0 0
        %1846 = vmatpush1.bf16.xpose.msra.mxu0 0
        %1847 = vmatprep.mubr.bf16.mxu0 0
        %1848 = vmatmul.mubr.bf16.gmra.mrb[0].mxu0 %v1810
        %v1849 = vpop.f32.mrb[0].mxu0
        %v1850 = vadd.f32 %v835, %v1849
        %v1851 = vpop.f32.mrb[0].mxu0
        %v1852 = vpop.f32.mrb[0].mxu0
        %v1853 = vadd.f32 %v836, %v1852
        %v1854 = vpop.f32.mrb[0].mxu0
        %1855 = vdwg.mxu0
        %v1857 = vsel %vm1573, %v1555, 0
        %v1860 = vsel %vm1573, %v1563, 0
        %1862 = vmatprep.subr.bf16.mxu0 0
        %1863 = vmatpush1.bf16.xpose.msra.mxu0 %v1860
        %1864 = vmatprep.subr.bf16.mxu0 0
        %1865 = vmatpush1.bf16.xpose.msra.mxu0 0
        %1866 = vmatprep.subr.bf16.mxu0 0
        %1867 = vmatpush1.bf16.xpose.msra.mxu0 0
        %1868 = vmatprep.subr.bf16.mxu0 0
        %1869 = vmatpush1.bf16.xpose.msra.mxu0 0
        %1870 = vmatprep.subr.bf16.mxu0 0
        %1871 = vmatpush1.bf16.xpose.msra.mxu0 0
        %1872 = vmatprep.subr.bf16.mxu0 0
        %1873 = vmatpush1.bf16.xpose.msra.mxu0 0
        %1874 = vmatprep.subr.bf16.mxu0 0
        %1875 = vmatpush1.bf16.xpose.msra.mxu0 0
        %1876 = vmatprep.subr.bf16.mxu0 0
        %1877 = vmatpush1.bf16.xpose.msra.mxu0 0
        %1878 = vmatprep.subr.bf16.mxu0 0
        %1879 = vmatpush1.bf16.xpose.msra.mxu0 0
        %1880 = vmatprep.subr.bf16.mxu0 0
        %1881 = vmatpush1.bf16.xpose.msra.mxu0 0
        %1882 = vmatprep.subr.bf16.mxu0 0
        %1883 = vmatpush1.bf16.xpose.msra.mxu0 0
        %1884 = vmatprep.subr.bf16.mxu0 0
        %1885 = vmatpush1.bf16.xpose.msra.mxu0 0
        %1886 = vmatprep.subr.bf16.mxu0 0
        %1887 = vmatpush1.bf16.xpose.msra.mxu0 0
        %1888 = vmatprep.subr.bf16.mxu0 0
        %1889 = vmatpush1.bf16.xpose.msra.mxu0 0
        %1890 = vmatprep.subr.bf16.mxu0 0
        %1891 = vmatpush1.bf16.xpose.msra.mxu0 0
        %1892 = vmatprep.subr.bf16.mxu0 0
        %1893 = vmatpush1.bf16.xpose.msra.mxu0 0
        %1894 = vmatprep.mubr.bf16.mxu0 0
        %1895 = vmatmul.mubr.bf16.gmra.mrb[0].mxu0 %v1857
        %v1896 = vpop.f32.mrb[0].mxu0
        %v1897 = vadd.f32 %v837, %v1896
        %v1898 = vpop.f32.mrb[0].mxu0
        %v1899 = vpop.f32.mrb[0].mxu0
        %v1900 = vadd.f32 %v838, %v1899
        %v1901 = vpop.f32.mrb[0].mxu0
        %1902 = vdwg.mxu0
        %v1904 = vsel %vm1573, %v1556, 0
        %v1907 = vsel %vm1573, %v1564, 0
        %1909 = vmatprep.subr.bf16.mxu0 0
        %1910 = vmatpush1.bf16.xpose.msra.mxu0 %v1907
        %1911 = vmatprep.subr.bf16.mxu0 0
        %1912 = vmatpush1.bf16.xpose.msra.mxu0 0
        %1913 = vmatprep.subr.bf16.mxu0 0
        %1914 = vmatpush1.bf16.xpose.msra.mxu0 0
        %1915 = vmatprep.subr.bf16.mxu0 0
        %1916 = vmatpush1.bf16.xpose.msra.mxu0 0
        %1917 = vmatprep.subr.bf16.mxu0 0
        %1918 = vmatpush1.bf16.xpose.msra.mxu0 0
        %1919 = vmatprep.subr.bf16.mxu0 0
        %1920 = vmatpush1.bf16.xpose.msra.mxu0 0
        %1921 = vmatprep.subr.bf16.mxu0 0
        %1922 = vmatpush1.bf16.xpose.msra.mxu0 0
        %1923 = vmatprep.subr.bf16.mxu0 0
        %1924 = vmatpush1.bf16.xpose.msra.mxu0 0
        %1925 = vmatprep.subr.bf16.mxu0 0
        %1926 = vmatpush1.bf16.xpose.msra.mxu0 0
        %1927 = vmatprep.subr.bf16.mxu0 0
        %1928 = vmatpush1.bf16.xpose.msra.mxu0 0
        %1929 = vmatprep.subr.bf16.mxu0 0
        %1930 = vmatpush1.bf16.xpose.msra.mxu0 0
        %1931 = vmatprep.subr.bf16.mxu0 0
        %1932 = vmatpush1.bf16.xpose.msra.mxu0 0
        %1933 = vmatprep.subr.bf16.mxu0 0
        %1934 = vmatpush1.bf16.xpose.msra.mxu0 0
        %1935 = vmatprep.subr.bf16.mxu0 0
        %1936 = vmatpush1.bf16.xpose.msra.mxu0 0
        %1937 = vmatprep.subr.bf16.mxu0 0
        %1938 = vmatpush1.bf16.xpose.msra.mxu0 0
        %1939 = vmatprep.subr.bf16.mxu0 0
        %1940 = vmatpush1.bf16.xpose.msra.mxu0 0
        %1941 = vmatprep.mubr.bf16.mxu0 0
        %1942 = vmatmul.mubr.bf16.gmra.mrb[0].mxu0 %v1904
        %v1943 = vpop.f32.mrb[0].mxu0
        %v1944 = vadd.f32 %v839, %v1943
        %v1945 = vpop.f32.mrb[0].mxu0
        %v1946 = vpop.f32.mrb[0].mxu0
        %v1947 = vadd.f32 %v840, %v1946
        %v1948 = vpop.f32.mrb[0].mxu0
        %1949 = vdwg.mxu0
        %vm1950 = vcmask 130048
        %v1951 = vsel %vm1950, %v1615, -inf
        %1952 = vmax.xlane.f32.xlu0 %v1951
        %v1953 = vpop.xlane.xlu0 %1952
        %v1954 = vsel %vm1950, %v1618, -inf
        %1955 = vmax.xlane.f32.xlu0 %v1954
        %v1956 = vpop.xlane.xlu0 %1955
        %v1957 = vsel %vm1950, %v1662, -inf
        %1958 = vmax.xlane.f32.xlu0 %v1957
        %v1959 = vpop.xlane.xlu0 %1958
        %v1960 = vsel %vm1950, %v1665, -inf
        %1961 = vmax.xlane.f32.xlu0 %v1960
        %v1962 = vpop.xlane.xlu0 %1961
        %v1963 = vsel %vm1950, %v1709, -inf
        %1964 = vmax.xlane.f32.xlu0 %v1963
        %v1965 = vpop.xlane.xlu0 %1964
        %v1966 = vsel %vm1950, %v1712, -inf
        %1967 = vmax.xlane.f32.xlu0 %v1966
        %v1968 = vpop.xlane.xlu0 %1967
        %v1969 = vsel %vm1950, %v1756, -inf
        %1970 = vmax.xlane.f32.xlu0 %v1969
        %v1971 = vpop.xlane.xlu0 %1970
        %v1972 = vsel %vm1950, %v1759, -inf
        %1973 = vmax.xlane.f32.xlu0 %v1972
        %v1974 = vpop.xlane.xlu0 %1973
        %v1975 = vsel %vm1950, %v1803, -inf
        %1976 = vmax.xlane.f32.xlu0 %v1975
        %v1977 = vpop.xlane.xlu0 %1976
        %v1978 = vsel %vm1950, %v1806, -inf
        %1979 = vmax.xlane.f32.xlu0 %v1978
        %v1980 = vpop.xlane.xlu0 %1979
        %v1981 = vsel %vm1950, %v1850, -inf
        %1982 = vmax.xlane.f32.xlu0 %v1981
        %v1983 = vpop.xlane.xlu0 %1982
        %v1984 = vsel %vm1950, %v1853, -inf
        %1985 = vmax.xlane.f32.xlu0 %v1984
        %v1986 = vpop.xlane.xlu0 %1985
        %v1987 = vsel %vm1950, %v1897, -inf
        %1988 = vmax.xlane.f32.xlu0 %v1987
        %v1989 = vpop.xlane.xlu0 %1988
        %v1990 = vsel %vm1950, %v1900, -inf
        %1991 = vmax.xlane.f32.xlu0 %v1990
        %v1992 = vpop.xlane.xlu0 %1991
        %v1993 = vsel %vm1950, %v1944, -inf
        %1994 = vmax.xlane.f32.xlu0 %v1993
        %v1995 = vpop.xlane.xlu0 %1994
        %v1996 = vsel %vm1950, %v1947, -inf
        %1997 = vmax.xlane.f32.xlu0 %v1996
        %v1998 = vpop.xlane.xlu0 %1997
        %v1999 = vsub.f32 %v1615, %v1953
        %v2000 = vsub.f32 %v1618, %v1956
        %v2001 = vsub.f32 %v1662, %v1959
        %v2002 = vsub.f32 %v1665, %v1962
        %v2003 = vsub.f32 %v1709, %v1965
        %v2004 = vsub.f32 %v1712, %v1968
        %v2005 = vsub.f32 %v1756, %v1971
        %v2006 = vsub.f32 %v1759, %v1974
        %v2007 = vsub.f32 %v1803, %v1977
        %v2008 = vsub.f32 %v1806, %v1980
        %v2009 = vsub.f32 %v1850, %v1983
        %v2010 = vsub.f32 %v1853, %v1986
        %v2011 = vsub.f32 %v1897, %v1989
        %v2012 = vsub.f32 %v1900, %v1992
        %v2013 = vsub.f32 %v1944, %v1995
        %v2014 = vsub.f32 %v1947, %v1998
        %v2015 = vmul.f32 %v1999, 1.442695
        %v2016 = vpow.pop %v2015
        %v2017 = vmul.f32 %v2000, 1.442695
        %v2018 = vpow.pop %v2017
        %v2019 = vmul.f32 %v2001, 1.442695
        %v2020 = vpow.pop %v2019
        %v2021 = vmul.f32 %v2002, 1.442695
        %v2022 = vpow.pop %v2021
        %v2023 = vmul.f32 %v2003, 1.442695
        %v2024 = vpow.pop %v2023
        %v2025 = vmul.f32 %v2004, 1.442695
        %v2026 = vpow.pop %v2025
        %v2027 = vmul.f32 %v2005, 1.442695
        %v2028 = vpow.pop %v2027
        %v2029 = vmul.f32 %v2006, 1.442695
        %v2030 = vpow.pop %v2029
        %v2031 = vmul.f32 %v2007, 1.442695
        %v2032 = vpow.pop %v2031
        %v2033 = vmul.f32 %v2008, 1.442695
        %v2034 = vpow.pop %v2033
        %v2035 = vmul.f32 %v2009, 1.442695
        %v2036 = vpow.pop %v2035
        %v2037 = vmul.f32 %v2010, 1.442695
        %v2038 = vpow.pop %v2037
        %v2039 = vmul.f32 %v2011, 1.442695
        %v2040 = vpow.pop %v2039
        %v2041 = vmul.f32 %v2012, 1.442695
        %v2042 = vpow.pop %v2041
        %v2043 = vmul.f32 %v2013, 1.442695
        %v2044 = vpow.pop %v2043
        %v2045 = vmul.f32 %v2014, 1.442695
        %v2046 = vpow.pop %v2045
        %v2047 = vsel %vm1950, %v2016, 0.0
        %2048 = vadd.xlane.f32.xlu0 %v2047
        %v2049 = vpop.xlane.xlu0 %2048
        %v2050 = vsel %vm1950, %v2018, 0.0
        %2051 = vadd.xlane.f32.xlu0 %v2050
        %v2052 = vpop.xlane.xlu0 %2051
        %v2053 = vsel %vm1950, %v2020, 0.0
        %2054 = vadd.xlane.f32.xlu0 %v2053
        %v2055 = vpop.xlane.xlu0 %2054
        %v2056 = vsel %vm1950, %v2022, 0.0
        %2057 = vadd.xlane.f32.xlu0 %v2056
        %v2058 = vpop.xlane.xlu0 %2057
        %v2059 = vsel %vm1950, %v2024, 0.0
        %2060 = vadd.xlane.f32.xlu0 %v2059
        %v2061 = vpop.xlane.xlu0 %2060
        %v2062 = vsel %vm1950, %v2026, 0.0
        %2063 = vadd.xlane.f32.xlu0 %v2062
        %v2064 = vpop.xlane.xlu0 %2063
        %v2065 = vsel %vm1950, %v2028, 0.0
        %2066 = vadd.xlane.f32.xlu0 %v2065
        %v2067 = vpop.xlane.xlu0 %2066
        %v2068 = vsel %vm1950, %v2030, 0.0
        %2069 = vadd.xlane.f32.xlu0 %v2068
        %v2070 = vpop.xlane.xlu0 %2069
        %v2071 = vsel %vm1950, %v2032, 0.0
        %2072 = vadd.xlane.f32.xlu0 %v2071
        %v2073 = vpop.xlane.xlu0 %2072
        %v2074 = vsel %vm1950, %v2034, 0.0
        %2075 = vadd.xlane.f32.xlu0 %v2074
        %v2076 = vpop.xlane.xlu0 %2075
        %v2077 = vsel %vm1950, %v2036, 0.0
        %2078 = vadd.xlane.f32.xlu0 %v2077
        %v2079 = vpop.xlane.xlu0 %2078
        %v2080 = vsel %vm1950, %v2038, 0.0
        %2081 = vadd.xlane.f32.xlu0 %v2080
        %v2082 = vpop.xlane.xlu0 %2081
        %v2083 = vsel %vm1950, %v2040, 0.0
        %2084 = vadd.xlane.f32.xlu0 %v2083
        %v2085 = vpop.xlane.xlu0 %2084
        %v2086 = vsel %vm1950, %v2042, 0.0
        %2087 = vadd.xlane.f32.xlu0 %v2086
        %v2088 = vpop.xlane.xlu0 %2087
        %v2089 = vsel %vm1950, %v2044, 0.0
        %2090 = vadd.xlane.f32.xlu0 %v2089
        %v2091 = vpop.xlane.xlu0 %2090
        %v2092 = vsel %vm1950, %v2046, 0.0
        %2093 = vadd.xlane.f32.xlu0 %v2092
        %v2094 = vpop.xlane.xlu0 %2093
        %v2095 = vrcp.pop %v2049
        %v2096 = vrcp.pop %v2052
        %v2097 = vrcp.pop %v2055
        %v2098 = vrcp.pop %v2058
        %v2099 = vrcp.pop %v2061
        %v2100 = vrcp.pop %v2064
        %v2101 = vrcp.pop %v2067
        %v2102 = vrcp.pop %v2070
        %v2103 = vrcp.pop %v2073
        %v2104 = vrcp.pop %v2076
        %v2105 = vrcp.pop %v2079
        %v2106 = vrcp.pop %v2082
        %v2107 = vrcp.pop %v2085
        %v2108 = vrcp.pop %v2088
        %v2109 = vrcp.pop %v2091
        %v2110 = vrcp.pop %v2094
        %v2111 = vmul.f32 %v2016, %v2095
        %v2112 = vmul.f32 %v2018, %v2096
        %v2113 = vmul.f32 %v2020, %v2097
        %v2114 = vmul.f32 %v2022, %v2098
        %v2115 = vmul.f32 %v2024, %v2099
        %v2116 = vmul.f32 %v2026, %v2100
        %v2117 = vmul.f32 %v2028, %v2101
        %v2118 = vmul.f32 %v2030, %v2102
        %v2119 = vmul.f32 %v2032, %v2103
        %v2120 = vmul.f32 %v2034, %v2104
        %v2121 = vmul.f32 %v2036, %v2105
        %v2122 = vmul.f32 %v2038, %v2106
        %v2123 = vmul.f32 %v2040, %v2107
        %v2124 = vmul.f32 %v2042, %v2108
        %v2125 = vmul.f32 %v2044, %v2109
        %v2126 = vmul.f32 %v2046, %v2110
        %v2127 = vpack.c.bf16 %v2112, %v2111
        %v2128 = vpack.c.bf16 %v2114, %v2113
        %v2129 = vpack.c.bf16 %v2116, %v2115
        %v2130 = vpack.c.bf16 %v2118, %v2117
        %v2131 = vpack.c.bf16 %v2120, %v2119
        %v2132 = vpack.c.bf16 %v2122, %v2121
        %v2133 = vpack.c.bf16 %v2124, %v2123
        %v2134 = vpack.c.bf16 %v2126, %v2125
        %v2136 = vsel %vm1950, %v2127, 0
        %2138 = vmatprep.subr.bf16.mxu0 0
        %2139 = vmatpush1.bf16.msra.mxu0 %v1565
        %2140 = vmatprep.subr.bf16.mxu0 0
        %2141 = vmatpush1.bf16.msra.mxu0 0
        %2142 = vmatprep.subr.bf16.mxu0 0
        %2143 = vmatpush1.bf16.msra.mxu0 0
        %2144 = vmatprep.subr.bf16.mxu0 0
        %2145 = vmatpush1.bf16.msra.mxu0 0
        %2146 = vmatprep.subr.bf16.mxu0 0
        %2147 = vmatpush1.bf16.msra.mxu0 0
        %2148 = vmatprep.subr.bf16.mxu0 0
        %2149 = vmatpush1.bf16.msra.mxu0 0
        %2150 = vmatprep.subr.bf16.mxu0 0
        %2151 = vmatpush1.bf16.msra.mxu0 0
        %2152 = vmatprep.subr.bf16.mxu0 0
        %2153 = vmatpush1.bf16.msra.mxu0 0
        %2154 = vmatprep.subr.bf16.mxu0 0
        %2155 = vmatpush1.bf16.msra.mxu0 0
        %2156 = vmatprep.subr.bf16.mxu0 0
        %2157 = vmatpush1.bf16.msra.mxu0 0
        %2158 = vmatprep.subr.bf16.mxu0 0
        %2159 = vmatpush1.bf16.msra.mxu0 0
        %2160 = vmatprep.subr.bf16.mxu0 0
        %2161 = vmatpush1.bf16.msra.mxu0 0
        %2162 = vmatprep.subr.bf16.mxu0 0
        %2163 = vmatpush1.bf16.msra.mxu0 0
        %2164 = vmatprep.subr.bf16.mxu0 0
        %2165 = vmatpush1.bf16.msra.mxu0 0
        %2166 = vmatprep.subr.bf16.mxu0 0
        %2167 = vmatpush1.bf16.msra.mxu0 0
        %2168 = vmatprep.subr.bf16.mxu0 0
        %2169 = vmatpush1.bf16.msra.mxu0 0
        %2170 = vmatprep.mubr.bf16.mxu0 0
        %2171 = vmatmul.mubr.bf16.gmra.mrb[0].mxu0 %v2136
        %v2172 = vpop.f32.mrb[0].mxu0
        %v2173 = vadd.f32 0.0, %v2172
        %v2174 = vpop.f32.mrb[0].mxu0
        %v2175 = vpop.f32.mrb[0].mxu0
        %v2176 = vadd.f32 0.0, %v2175
        %v2177 = vpop.f32.mrb[0].mxu0
        %2178 = vdwg.mxu0
        %v2180 = vsel %vm1950, %v2128, 0
        %2182 = vmatprep.subr.bf16.mxu0 0
        %2183 = vmatpush1.bf16.msra.mxu0 %v1566
        %2184 = vmatprep.subr.bf16.mxu0 0
        %2185 = vmatpush1.bf16.msra.mxu0 0
        %2186 = vmatprep.subr.bf16.mxu0 0
        %2187 = vmatpush1.bf16.msra.mxu0 0
        %2188 = vmatprep.subr.bf16.mxu0 0
        %2189 = vmatpush1.bf16.msra.mxu0 0
        %2190 = vmatprep.subr.bf16.mxu0 0
        %2191 = vmatpush1.bf16.msra.mxu0 0
        %2192 = vmatprep.subr.bf16.mxu0 0
        %2193 = vmatpush1.bf16.msra.mxu0 0
        %2194 = vmatprep.subr.bf16.mxu0 0
        %2195 = vmatpush1.bf16.msra.mxu0 0
        %2196 = vmatprep.subr.bf16.mxu0 0
        %2197 = vmatpush1.bf16.msra.mxu0 0
        %2198 = vmatprep.subr.bf16.mxu0 0
        %2199 = vmatpush1.bf16.msra.mxu0 0
        %2200 = vmatprep.subr.bf16.mxu0 0
        %2201 = vmatpush1.bf16.msra.mxu0 0
        %2202 = vmatprep.subr.bf16.mxu0 0
        %2203 = vmatpush1.bf16.msra.mxu0 0
        %2204 = vmatprep.subr.bf16.mxu0 0
        %2205 = vmatpush1.bf16.msra.mxu0 0
        %2206 = vmatprep.subr.bf16.mxu0 0
        %2207 = vmatpush1.bf16.msra.mxu0 0
        %2208 = vmatprep.subr.bf16.mxu0 0
        %2209 = vmatpush1.bf16.msra.mxu0 0
        %2210 = vmatprep.subr.bf16.mxu0 0
        %2211 = vmatpush1.bf16.msra.mxu0 0
        %2212 = vmatprep.subr.bf16.mxu0 0
        %2213 = vmatpush1.bf16.msra.mxu0 0
        %2214 = vmatprep.mubr.bf16.mxu0 0
        %2215 = vmatmul.mubr.bf16.gmra.mrb[0].mxu0 %v2180
        %v2216 = vpop.f32.mrb[0].mxu0
        %v2217 = vadd.f32 0.0, %v2216
        %v2218 = vpop.f32.mrb[0].mxu0
        %v2219 = vpop.f32.mrb[0].mxu0
        %v2220 = vadd.f32 0.0, %v2219
        %v2221 = vpop.f32.mrb[0].mxu0
        %2222 = vdwg.mxu0
        %v2224 = vsel %vm1950, %v2129, 0
        %2226 = vmatprep.subr.bf16.mxu0 0
        %2227 = vmatpush1.bf16.msra.mxu0 %v1567
        %2228 = vmatprep.subr.bf16.mxu0 0
        %2229 = vmatpush1.bf16.msra.mxu0 0
        %2230 = vmatprep.subr.bf16.mxu0 0
        %2231 = vmatpush1.bf16.msra.mxu0 0
        %2232 = vmatprep.subr.bf16.mxu0 0
        %2233 = vmatpush1.bf16.msra.mxu0 0
        %2234 = vmatprep.subr.bf16.mxu0 0
        %2235 = vmatpush1.bf16.msra.mxu0 0
        %2236 = vmatprep.subr.bf16.mxu0 0
        %2237 = vmatpush1.bf16.msra.mxu0 0
        %2238 = vmatprep.subr.bf16.mxu0 0
        %2239 = vmatpush1.bf16.msra.mxu0 0
        %2240 = vmatprep.subr.bf16.mxu0 0
        %2241 = vmatpush1.bf16.msra.mxu0 0
        %2242 = vmatprep.subr.bf16.mxu0 0
        %2243 = vmatpush1.bf16.msra.mxu0 0
        %2244 = vmatprep.subr.bf16.mxu0 0
        %2245 = vmatpush1.bf16.msra.mxu0 0
        %2246 = vmatprep.subr.bf16.mxu0 0
        %2247 = vmatpush1.bf16.msra.mxu0 0
        %2248 = vmatprep.subr.bf16.mxu0 0
        %2249 = vmatpush1.bf16.msra.mxu0 0
        %2250 = vmatprep.subr.bf16.mxu0 0
        %2251 = vmatpush1.bf16.msra.mxu0 0
        %2252 = vmatprep.subr.bf16.mxu0 0
        %2253 = vmatpush1.bf16.msra.mxu0 0
        %2254 = vmatprep.subr.bf16.mxu0 0
        %2255 = vmatpush1.bf16.msra.mxu0 0
        %2256 = vmatprep.subr.bf16.mxu0 0
        %2257 = vmatpush1.bf16.msra.mxu0 0
        %2258 = vmatprep.mubr.bf16.mxu0 0
        %2259 = vmatmul.mubr.bf16.gmra.mrb[0].mxu0 %v2224
        %v2260 = vpop.f32.mrb[0].mxu0
        %v2261 = vadd.f32 0.0, %v2260
        %v2262 = vpop.f32.mrb[0].mxu0
        %v2263 = vpop.f32.mrb[0].mxu0
        %v2264 = vadd.f32 0.0, %v2263
        %v2265 = vpop.f32.mrb[0].mxu0
        %2266 = vdwg.mxu0
        %v2268 = vsel %vm1950, %v2130, 0
        %2270 = vmatprep.subr.bf16.mxu0 0
        %2271 = vmatpush1.bf16.msra.mxu0 %v1568
        %2272 = vmatprep.subr.bf16.mxu0 0
        %2273 = vmatpush1.bf16.msra.mxu0 0
        %2274 = vmatprep.subr.bf16.mxu0 0
        %2275 = vmatpush1.bf16.msra.mxu0 0
        %2276 = vmatprep.subr.bf16.mxu0 0
        %2277 = vmatpush1.bf16.msra.mxu0 0
        %2278 = vmatprep.subr.bf16.mxu0 0
        %2279 = vmatpush1.bf16.msra.mxu0 0
        %2280 = vmatprep.subr.bf16.mxu0 0
        %2281 = vmatpush1.bf16.msra.mxu0 0
        %2282 = vmatprep.subr.bf16.mxu0 0
        %2283 = vmatpush1.bf16.msra.mxu0 0
        %2284 = vmatprep.subr.bf16.mxu0 0
        %2285 = vmatpush1.bf16.msra.mxu0 0
        %2286 = vmatprep.subr.bf16.mxu0 0
        %2287 = vmatpush1.bf16.msra.mxu0 0
        %2288 = vmatprep.subr.bf16.mxu0 0
        %2289 = vmatpush1.bf16.msra.mxu0 0
        %2290 = vmatprep.subr.bf16.mxu0 0
        %2291 = vmatpush1.bf16.msra.mxu0 0
        %2292 = vmatprep.subr.bf16.mxu0 0
        %2293 = vmatpush1.bf16.msra.mxu0 0
        %2294 = vmatprep.subr.bf16.mxu0 0
        %2295 = vmatpush1.bf16.msra.mxu0 0
        %2296 = vmatprep.subr.bf16.mxu0 0
        %2297 = vmatpush1.bf16.msra.mxu0 0
        %2298 = vmatprep.subr.bf16.mxu0 0
        %2299 = vmatpush1.bf16.msra.mxu0 0
        %2300 = vmatprep.subr.bf16.mxu0 0
        %2301 = vmatpush1.bf16.msra.mxu0 0
        %2302 = vmatprep.mubr.bf16.mxu0 0
        %2303 = vmatmul.mubr.bf16.gmra.mrb[0].mxu0 %v2268
        %v2304 = vpop.f32.mrb[0].mxu0
        %v2305 = vadd.f32 0.0, %v2304
        %v2306 = vpop.f32.mrb[0].mxu0
        %v2307 = vpop.f32.mrb[0].mxu0
        %v2308 = vadd.f32 0.0, %v2307
        %v2309 = vpop.f32.mrb[0].mxu0
        %2310 = vdwg.mxu0
        %v2312 = vsel %vm1950, %v2131, 0
        %2314 = vmatprep.subr.bf16.mxu0 0
        %2315 = vmatpush1.bf16.msra.mxu0 %v1569
        %2316 = vmatprep.subr.bf16.mxu0 0
        %2317 = vmatpush1.bf16.msra.mxu0 0
        %2318 = vmatprep.subr.bf16.mxu0 0
        %2319 = vmatpush1.bf16.msra.mxu0 0
        %2320 = vmatprep.subr.bf16.mxu0 0
        %2321 = vmatpush1.bf16.msra.mxu0 0
        %2322 = vmatprep.subr.bf16.mxu0 0
        %2323 = vmatpush1.bf16.msra.mxu0 0
        %2324 = vmatprep.subr.bf16.mxu0 0
        %2325 = vmatpush1.bf16.msra.mxu0 0
        %2326 = vmatprep.subr.bf16.mxu0 0
        %2327 = vmatpush1.bf16.msra.mxu0 0
        %2328 = vmatprep.subr.bf16.mxu0 0
        %2329 = vmatpush1.bf16.msra.mxu0 0
        %2330 = vmatprep.subr.bf16.mxu0 0
        %2331 = vmatpush1.bf16.msra.mxu0 0
        %2332 = vmatprep.subr.bf16.mxu0 0
        %2333 = vmatpush1.bf16.msra.mxu0 0
        %2334 = vmatprep.subr.bf16.mxu0 0
        %2335 = vmatpush1.bf16.msra.mxu0 0
        %2336 = vmatprep.subr.bf16.mxu0 0
        %2337 = vmatpush1.bf16.msra.mxu0 0
        %2338 = vmatprep.subr.bf16.mxu0 0
        %2339 = vmatpush1.bf16.msra.mxu0 0
        %2340 = vmatprep.subr.bf16.mxu0 0
        %2341 = vmatpush1.bf16.msra.mxu0 0
        %2342 = vmatprep.subr.bf16.mxu0 0
        %2343 = vmatpush1.bf16.msra.mxu0 0
        %2344 = vmatprep.subr.bf16.mxu0 0
        %2345 = vmatpush1.bf16.msra.mxu0 0
        %2346 = vmatprep.mubr.bf16.mxu0 0
        %2347 = vmatmul.mubr.bf16.gmra.mrb[0].mxu0 %v2312
        %v2348 = vpop.f32.mrb[0].mxu0
        %v2349 = vadd.f32 0.0, %v2348
        %v2350 = vpop.f32.mrb[0].mxu0
        %v2351 = vpop.f32.mrb[0].mxu0
        %v2352 = vadd.f32 0.0, %v2351
        %v2353 = vpop.f32.mrb[0].mxu0
        %2354 = vdwg.mxu0
        %v2356 = vsel %vm1950, %v2132, 0
        %2358 = vmatprep.subr.bf16.mxu0 0
        %2359 = vmatpush1.bf16.msra.mxu0 %v1570
        %2360 = vmatprep.subr.bf16.mxu0 0
        %2361 = vmatpush1.bf16.msra.mxu0 0
        %2362 = vmatprep.subr.bf16.mxu0 0
        %2363 = vmatpush1.bf16.msra.mxu0 0
        %2364 = vmatprep.subr.bf16.mxu0 0
        %2365 = vmatpush1.bf16.msra.mxu0 0
        %2366 = vmatprep.subr.bf16.mxu0 0
        %2367 = vmatpush1.bf16.msra.mxu0 0
        %2368 = vmatprep.subr.bf16.mxu0 0
        %2369 = vmatpush1.bf16.msra.mxu0 0
        %2370 = vmatprep.subr.bf16.mxu0 0
        %2371 = vmatpush1.bf16.msra.mxu0 0
        %2372 = vmatprep.subr.bf16.mxu0 0
        %2373 = vmatpush1.bf16.msra.mxu0 0
        %2374 = vmatprep.subr.bf16.mxu0 0
        %2375 = vmatpush1.bf16.msra.mxu0 0
        %2376 = vmatprep.subr.bf16.mxu0 0
        %2377 = vmatpush1.bf16.msra.mxu0 0
        %2378 = vmatprep.subr.bf16.mxu0 0
        %2379 = vmatpush1.bf16.msra.mxu0 0
        %2380 = vmatprep.subr.bf16.mxu0 0
        %2381 = vmatpush1.bf16.msra.mxu0 0
        %2382 = vmatprep.subr.bf16.mxu0 0
        %2383 = vmatpush1.bf16.msra.mxu0 0
        %2384 = vmatprep.subr.bf16.mxu0 0
        %2385 = vmatpush1.bf16.msra.mxu0 0
        %2386 = vmatprep.subr.bf16.mxu0 0
        %2387 = vmatpush1.bf16.msra.mxu0 0
        %2388 = vmatprep.subr.bf16.mxu0 0
        %2389 = vmatpush1.bf16.msra.mxu0 0
        %2390 = vmatprep.mubr.bf16.mxu0 0
        %2391 = vmatmul.mubr.bf16.gmra.mrb[0].mxu0 %v2356
        %v2392 = vpop.f32.mrb[0].mxu0
        %v2393 = vadd.f32 0.0, %v2392
        %v2394 = vpop.f32.mrb[0].mxu0
        %v2395 = vpop.f32.mrb[0].mxu0
        %v2396 = vadd.f32 0.0, %v2395
        %v2397 = vpop.f32.mrb[0].mxu0
        %2398 = vdwg.mxu0
        %v2400 = vsel %vm1950, %v2133, 0
        %2402 = vmatprep.subr.bf16.mxu0 0
        %2403 = vmatpush1.bf16.msra.mxu0 %v1571
        %2404 = vmatprep.subr.bf16.mxu0 0
        %2405 = vmatpush1.bf16.msra.mxu0 0
        %2406 = vmatprep.subr.bf16.mxu0 0
        %2407 = vmatpush1.bf16.msra.mxu0 0
        %2408 = vmatprep.subr.bf16.mxu0 0
        %2409 = vmatpush1.bf16.msra.mxu0 0
        %2410 = vmatprep.subr.bf16.mxu0 0
        %2411 = vmatpush1.bf16.msra.mxu0 0
        %2412 = vmatprep.subr.bf16.mxu0 0
        %2413 = vmatpush1.bf16.msra.mxu0 0
        %2414 = vmatprep.subr.bf16.mxu0 0
        %2415 = vmatpush1.bf16.msra.mxu0 0
        %2416 = vmatprep.subr.bf16.mxu0 0
        %2417 = vmatpush1.bf16.msra.mxu0 0
        %2418 = vmatprep.subr.bf16.mxu0 0
        %2419 = vmatpush1.bf16.msra.mxu0 0
        %2420 = vmatprep.subr.bf16.mxu0 0
        %2421 = vmatpush1.bf16.msra.mxu0 0
        %2422 = vmatprep.subr.bf16.mxu0 0
        %2423 = vmatpush1.bf16.msra.mxu0 0
        %2424 = vmatprep.subr.bf16.mxu0 0
        %2425 = vmatpush1.bf16.msra.mxu0 0
        %2426 = vmatprep.subr.bf16.mxu0 0
        %2427 = vmatpush1.bf16.msra.mxu0 0
        %2428 = vmatprep.subr.bf16.mxu0 0
        %2429 = vmatpush1.bf16.msra.mxu0 0
        %2430 = vmatprep.subr.bf16.mxu0 0
        %2431 = vmatpush1.bf16.msra.mxu0 0
        %2432 = vmatprep.subr.bf16.mxu0 0
        %2433 = vmatpush1.bf16.msra.mxu0 0
        %2434 = vmatprep.mubr.bf16.mxu0 0
        %2435 = vmatmul.mubr.bf16.gmra.mrb[0].mxu0 %v2400
        %v2436 = vpop.f32.mrb[0].mxu0
        %v2437 = vadd.f32 0.0, %v2436
        %v2438 = vpop.f32.mrb[0].mxu0
        %v2439 = vpop.f32.mrb[0].mxu0
        %v2440 = vadd.f32 0.0, %v2439
        %v2441 = vpop.f32.mrb[0].mxu0
        %2442 = vdwg.mxu0
        %v2444 = vsel %vm1950, %v2134, 0
        %2446 = vmatprep.subr.bf16.mxu0 0
        %2447 = vmatpush1.bf16.msra.mxu0 %v1572
        %2448 = vmatprep.subr.bf16.mxu0 0
        %2449 = vmatpush1.bf16.msra.mxu0 0
        %2450 = vmatprep.subr.bf16.mxu0 0
        %2451 = vmatpush1.bf16.msra.mxu0 0
        %2452 = vmatprep.subr.bf16.mxu0 0
        %2453 = vmatpush1.bf16.msra.mxu0 0
        %2454 = vmatprep.subr.bf16.mxu0 0
        %2455 = vmatpush1.bf16.msra.mxu0 0
        %2456 = vmatprep.subr.bf16.mxu0 0
        %2457 = vmatpush1.bf16.msra.mxu0 0
        %2458 = vmatprep.subr.bf16.mxu0 0
        %2459 = vmatpush1.bf16.msra.mxu0 0
        %2460 = vmatprep.subr.bf16.mxu0 0
        %2461 = vmatpush1.bf16.msra.mxu0 0
        %2462 = vmatprep.subr.bf16.mxu0 0
        %2463 = vmatpush1.bf16.msra.mxu0 0
        %2464 = vmatprep.subr.bf16.mxu0 0
        %2465 = vmatpush1.bf16.msra.mxu0 0
        %2466 = vmatprep.subr.bf16.mxu0 0
        %2467 = vmatpush1.bf16.msra.mxu0 0
        %2468 = vmatprep.subr.bf16.mxu0 0
        %2469 = vmatpush1.bf16.msra.mxu0 0
        %2470 = vmatprep.subr.bf16.mxu0 0
        %2471 = vmatpush1.bf16.msra.mxu0 0
        %2472 = vmatprep.subr.bf16.mxu0 0
        %2473 = vmatpush1.bf16.msra.mxu0 0
        %2474 = vmatprep.subr.bf16.mxu0 0
        %2475 = vmatpush1.bf16.msra.mxu0 0
        %2476 = vmatprep.subr.bf16.mxu0 0
        %2477 = vmatpush1.bf16.msra.mxu0 0
        %2478 = vmatprep.mubr.bf16.mxu0 0
        %2479 = vmatmul.mubr.bf16.gmra.mrb[0].mxu0 %v2444
        %v2480 = vpop.f32.mrb[0].mxu0
        %v2481 = vadd.f32 0.0, %v2480
        %v2482 = vpop.f32.mrb[0].mxu0
        %v2483 = vpop.f32.mrb[0].mxu0
        %v2484 = vadd.f32 0.0, %v2483
        %v2485 = vpop.f32.mrb[0].mxu0
        %2486 = vdwg.mxu0
        %2488 = vrot.lane.b32.xlu0 %v1549, 96
        %v2489 = vpop.permute.xlu0 %2488
        %2491 = vrot.lane.b32.xlu0 %v1557, 96
        %v2492 = vpop.permute.xlu0 %2491
        %v2494 = vsel %vm1573, %v2489, 0
        %v2497 = vsel %vm1573, %v2492, 0
        %2499 = vmatprep.subr.bf16.mxu0 0
        %2500 = vmatpush1.bf16.xpose.msra.mxu0 %v2497
        %2501 = vmatprep.subr.bf16.mxu0 0
        %2502 = vmatpush1.bf16.xpose.msra.mxu0 0
        %2503 = vmatprep.subr.bf16.mxu0 0
        %2504 = vmatpush1.bf16.xpose.msra.mxu0 0
        %2505 = vmatprep.subr.bf16.mxu0 0
        %2506 = vmatpush1.bf16.xpose.msra.mxu0 0
        %2507 = vmatprep.subr.bf16.mxu0 0
        %2508 = vmatpush1.bf16.xpose.msra.mxu0 0
        %2509 = vmatprep.subr.bf16.mxu0 0
        %2510 = vmatpush1.bf16.xpose.msra.mxu0 0
        %2511 = vmatprep.subr.bf16.mxu0 0
        %2512 = vmatpush1.bf16.xpose.msra.mxu0 0
        %2513 = vmatprep.subr.bf16.mxu0 0
        %2514 = vmatpush1.bf16.xpose.msra.mxu0 0
        %2515 = vmatprep.subr.bf16.mxu0 0
        %2516 = vmatpush1.bf16.xpose.msra.mxu0 0
        %2517 = vmatprep.subr.bf16.mxu0 0
        %2518 = vmatpush1.bf16.xpose.msra.mxu0 0
        %2519 = vmatprep.subr.bf16.mxu0 0
        %2520 = vmatpush1.bf16.xpose.msra.mxu0 0
        %2521 = vmatprep.subr.bf16.mxu0 0
        %2522 = vmatpush1.bf16.xpose.msra.mxu0 0
        %2523 = vmatprep.subr.bf16.mxu0 0
        %2524 = vmatpush1.bf16.xpose.msra.mxu0 0
        %2525 = vmatprep.subr.bf16.mxu0 0
        %2526 = vmatpush1.bf16.xpose.msra.mxu0 0
        %2527 = vmatprep.subr.bf16.mxu0 0
        %2528 = vmatpush1.bf16.xpose.msra.mxu0 0
        %2529 = vmatprep.subr.bf16.mxu0 0
        %2530 = vmatpush1.bf16.xpose.msra.mxu0 0
        %2531 = vmatprep.mubr.bf16.mxu0 0
        %2532 = vmatmul.mubr.bf16.gmra.mrb[0].mxu0 %v2494
        %v2533 = vpop.f32.mrb[0].mxu0
        %v2534 = vadd.f32 %v825, %v2533
        %v2535 = vpop.f32.mrb[0].mxu0
        %v2536 = vpop.f32.mrb[0].mxu0
        %v2537 = vadd.f32 %v826, %v2536
        %v2538 = vpop.f32.mrb[0].mxu0
        %2539 = vdwg.mxu0
        %2541 = vrot.lane.b32.xlu0 %v1550, 96
        %v2542 = vpop.permute.xlu0 %2541
        %2544 = vrot.lane.b32.xlu0 %v1558, 96
        %v2545 = vpop.permute.xlu0 %2544
        %v2547 = vsel %vm1573, %v2542, 0
        %v2550 = vsel %vm1573, %v2545, 0
        %2552 = vmatprep.subr.bf16.mxu0 0
        %2553 = vmatpush1.bf16.xpose.msra.mxu0 %v2550
        %2554 = vmatprep.subr.bf16.mxu0 0
        %2555 = vmatpush1.bf16.xpose.msra.mxu0 0
        %2556 = vmatprep.subr.bf16.mxu0 0
        %2557 = vmatpush1.bf16.xpose.msra.mxu0 0
        %2558 = vmatprep.subr.bf16.mxu0 0
        %2559 = vmatpush1.bf16.xpose.msra.mxu0 0
        %2560 = vmatprep.subr.bf16.mxu0 0
        %2561 = vmatpush1.bf16.xpose.msra.mxu0 0
        %2562 = vmatprep.subr.bf16.mxu0 0
        %2563 = vmatpush1.bf16.xpose.msra.mxu0 0
        %2564 = vmatprep.subr.bf16.mxu0 0
        %2565 = vmatpush1.bf16.xpose.msra.mxu0 0
        %2566 = vmatprep.subr.bf16.mxu0 0
        %2567 = vmatpush1.bf16.xpose.msra.mxu0 0
        %2568 = vmatprep.subr.bf16.mxu0 0
        %2569 = vmatpush1.bf16.xpose.msra.mxu0 0
        %2570 = vmatprep.subr.bf16.mxu0 0
        %2571 = vmatpush1.bf16.xpose.msra.mxu0 0
        %2572 = vmatprep.subr.bf16.mxu0 0
        %2573 = vmatpush1.bf16.xpose.msra.mxu0 0
        %2574 = vmatprep.subr.bf16.mxu0 0
        %2575 = vmatpush1.bf16.xpose.msra.mxu0 0
        %2576 = vmatprep.subr.bf16.mxu0 0
        %2577 = vmatpush1.bf16.xpose.msra.mxu0 0
        %2578 = vmatprep.subr.bf16.mxu0 0
        %2579 = vmatpush1.bf16.xpose.msra.mxu0 0
        %2580 = vmatprep.subr.bf16.mxu0 0
        %2581 = vmatpush1.bf16.xpose.msra.mxu0 0
        %2582 = vmatprep.subr.bf16.mxu0 0
        %2583 = vmatpush1.bf16.xpose.msra.mxu0 0
        %2584 = vmatprep.mubr.bf16.mxu0 0
        %2585 = vmatmul.mubr.bf16.gmra.mrb[0].mxu0 %v2547
        %v2586 = vpop.f32.mrb[0].mxu0
        %v2587 = vadd.f32 %v827, %v2586
        %v2588 = vpop.f32.mrb[0].mxu0
        %v2589 = vpop.f32.mrb[0].mxu0
        %v2590 = vadd.f32 %v828, %v2589
        %v2591 = vpop.f32.mrb[0].mxu0
        %2592 = vdwg.mxu0
        %2594 = vrot.lane.b32.xlu0 %v1551, 96
        %v2595 = vpop.permute.xlu0 %2594
        %2597 = vrot.lane.b32.xlu0 %v1559, 96
        %v2598 = vpop.permute.xlu0 %2597
        %v2600 = vsel %vm1573, %v2595, 0
        %v2603 = vsel %vm1573, %v2598, 0
        %2605 = vmatprep.subr.bf16.mxu0 0
        %2606 = vmatpush1.bf16.xpose.msra.mxu0 %v2603
        %2607 = vmatprep.subr.bf16.mxu0 0
        %2608 = vmatpush1.bf16.xpose.msra.mxu0 0
        %2609 = vmatprep.subr.bf16.mxu0 0
        %2610 = vmatpush1.bf16.xpose.msra.mxu0 0
        %2611 = vmatprep.subr.bf16.mxu0 0
        %2612 = vmatpush1.bf16.xpose.msra.mxu0 0
        %2613 = vmatprep.subr.bf16.mxu0 0
        %2614 = vmatpush1.bf16.xpose.msra.mxu0 0
        %2615 = vmatprep.subr.bf16.mxu0 0
        %2616 = vmatpush1.bf16.xpose.msra.mxu0 0
        %2617 = vmatprep.subr.bf16.mxu0 0
        %2618 = vmatpush1.bf16.xpose.msra.mxu0 0
        %2619 = vmatprep.subr.bf16.mxu0 0
        %2620 = vmatpush1.bf16.xpose.msra.mxu0 0
        %2621 = vmatprep.subr.bf16.mxu0 0
        %2622 = vmatpush1.bf16.xpose.msra.mxu0 0
        %2623 = vmatprep.subr.bf16.mxu0 0
        %2624 = vmatpush1.bf16.xpose.msra.mxu0 0
        %2625 = vmatprep.subr.bf16.mxu0 0
        %2626 = vmatpush1.bf16.xpose.msra.mxu0 0
        %2627 = vmatprep.subr.bf16.mxu0 0
        %2628 = vmatpush1.bf16.xpose.msra.mxu0 0
        %2629 = vmatprep.subr.bf16.mxu0 0
        %2630 = vmatpush1.bf16.xpose.msra.mxu0 0
        %2631 = vmatprep.subr.bf16.mxu0 0
        %2632 = vmatpush1.bf16.xpose.msra.mxu0 0
        %2633 = vmatprep.subr.bf16.mxu0 0
        %2634 = vmatpush1.bf16.xpose.msra.mxu0 0
        %2635 = vmatprep.subr.bf16.mxu0 0
        %2636 = vmatpush1.bf16.xpose.msra.mxu0 0
        %2637 = vmatprep.mubr.bf16.mxu0 0
        %2638 = vmatmul.mubr.bf16.gmra.mrb[0].mxu0 %v2600
        %v2639 = vpop.f32.mrb[0].mxu0
        %v2640 = vadd.f32 %v829, %v2639
        %v2641 = vpop.f32.mrb[0].mxu0
        %v2642 = vpop.f32.mrb[0].mxu0
        %v2643 = vadd.f32 %v830, %v2642
        %v2644 = vpop.f32.mrb[0].mxu0
        %2645 = vdwg.mxu0
        %2647 = vrot.lane.b32.xlu0 %v1552, 96
        %v2648 = vpop.permute.xlu0 %2647
        %2650 = vrot.lane.b32.xlu0 %v1560, 96
        %v2651 = vpop.permute.xlu0 %2650
        %v2653 = vsel %vm1573, %v2648, 0
        %v2656 = vsel %vm1573, %v2651, 0
        %2658 = vmatprep.subr.bf16.mxu0 0
        %2659 = vmatpush1.bf16.xpose.msra.mxu0 %v2656
        %2660 = vmatprep.subr.bf16.mxu0 0
        %2661 = vmatpush1.bf16.xpose.msra.mxu0 0
        %2662 = vmatprep.subr.bf16.mxu0 0
        %2663 = vmatpush1.bf16.xpose.msra.mxu0 0
        %2664 = vmatprep.subr.bf16.mxu0 0
        %2665 = vmatpush1.bf16.xpose.msra.mxu0 0
        %2666 = vmatprep.subr.bf16.mxu0 0
        %2667 = vmatpush1.bf16.xpose.msra.mxu0 0
        %2668 = vmatprep.subr.bf16.mxu0 0
        %2669 = vmatpush1.bf16.xpose.msra.mxu0 0
        %2670 = vmatprep.subr.bf16.mxu0 0
        %2671 = vmatpush1.bf16.xpose.msra.mxu0 0
        %2672 = vmatprep.subr.bf16.mxu0 0
        %2673 = vmatpush1.bf16.xpose.msra.mxu0 0
        %2674 = vmatprep.subr.bf16.mxu0 0
        %2675 = vmatpush1.bf16.xpose.msra.mxu0 0
        %2676 = vmatprep.subr.bf16.mxu0 0
        %2677 = vmatpush1.bf16.xpose.msra.mxu0 0
        %2678 = vmatprep.subr.bf16.mxu0 0
        %2679 = vmatpush1.bf16.xpose.msra.mxu0 0
        %2680 = vmatprep.subr.bf16.mxu0 0
        %2681 = vmatpush1.bf16.xpose.msra.mxu0 0
        %2682 = vmatprep.subr.bf16.mxu0 0
        %2683 = vmatpush1.bf16.xpose.msra.mxu0 0
        %2684 = vmatprep.subr.bf16.mxu0 0
        %2685 = vmatpush1.bf16.xpose.msra.mxu0 0
        %2686 = vmatprep.subr.bf16.mxu0 0
        %2687 = vmatpush1.bf16.xpose.msra.mxu0 0
        %2688 = vmatprep.subr.bf16.mxu0 0
        %2689 = vmatpush1.bf16.xpose.msra.mxu0 0
        %2690 = vmatprep.mubr.bf16.mxu0 0
        %2691 = vmatmul.mubr.bf16.gmra.mrb[0].mxu0 %v2653
        %v2692 = vpop.f32.mrb[0].mxu0
        %v2693 = vadd.f32 %v831, %v2692
        %v2694 = vpop.f32.mrb[0].mxu0
        %v2695 = vpop.f32.mrb[0].mxu0
        %v2696 = vadd.f32 %v832, %v2695
        %v2697 = vpop.f32.mrb[0].mxu0
        %2698 = vdwg.mxu0
        %2700 = vrot.lane.b32.xlu0 %v1553, 96
        %v2701 = vpop.permute.xlu0 %2700
        %2703 = vrot.lane.b32.xlu0 %v1561, 96
        %v2704 = vpop.permute.xlu0 %2703
        %v2706 = vsel %vm1573, %v2701, 0
        %v2709 = vsel %vm1573, %v2704, 0
        %2711 = vmatprep.subr.bf16.mxu0 0
        %2712 = vmatpush1.bf16.xpose.msra.mxu0 %v2709
        %2713 = vmatprep.subr.bf16.mxu0 0
        %2714 = vmatpush1.bf16.xpose.msra.mxu0 0
        %2715 = vmatprep.subr.bf16.mxu0 0
        %2716 = vmatpush1.bf16.xpose.msra.mxu0 0
        %2717 = vmatprep.subr.bf16.mxu0 0
        %2718 = vmatpush1.bf16.xpose.msra.mxu0 0
        %2719 = vmatprep.subr.bf16.mxu0 0
        %2720 = vmatpush1.bf16.xpose.msra.mxu0 0
        %2721 = vmatprep.subr.bf16.mxu0 0
        %2722 = vmatpush1.bf16.xpose.msra.mxu0 0
        %2723 = vmatprep.subr.bf16.mxu0 0
        %2724 = vmatpush1.bf16.xpose.msra.mxu0 0
        %2725 = vmatprep.subr.bf16.mxu0 0
        %2726 = vmatpush1.bf16.xpose.msra.mxu0 0
        %2727 = vmatprep.subr.bf16.mxu0 0
        %2728 = vmatpush1.bf16.xpose.msra.mxu0 0
        %2729 = vmatprep.subr.bf16.mxu0 0
        %2730 = vmatpush1.bf16.xpose.msra.mxu0 0
        %2731 = vmatprep.subr.bf16.mxu0 0
        %2732 = vmatpush1.bf16.xpose.msra.mxu0 0
        %2733 = vmatprep.subr.bf16.mxu0 0
        %2734 = vmatpush1.bf16.xpose.msra.mxu0 0
        %2735 = vmatprep.subr.bf16.mxu0 0
        %2736 = vmatpush1.bf16.xpose.msra.mxu0 0
        %2737 = vmatprep.subr.bf16.mxu0 0
        %2738 = vmatpush1.bf16.xpose.msra.mxu0 0
        %2739 = vmatprep.subr.bf16.mxu0 0
        %2740 = vmatpush1.bf16.xpose.msra.mxu0 0
        %2741 = vmatprep.subr.bf16.mxu0 0
        %2742 = vmatpush1.bf16.xpose.msra.mxu0 0
        %2743 = vmatprep.mubr.bf16.mxu0 0
        %2744 = vmatmul.mubr.bf16.gmra.mrb[0].mxu0 %v2706
        %v2745 = vpop.f32.mrb[0].mxu0
        %v2746 = vadd.f32 %v833, %v2745
        %v2747 = vpop.f32.mrb[0].mxu0
        %v2748 = vpop.f32.mrb[0].mxu0
        %v2749 = vadd.f32 %v834, %v2748
        %v2750 = vpop.f32.mrb[0].mxu0
        %2751 = vdwg.mxu0
        %2753 = vrot.lane.b32.xlu0 %v1554, 96
        %v2754 = vpop.permute.xlu0 %2753
        %2756 = vrot.lane.b32.xlu0 %v1562, 96
        %v2757 = vpop.permute.xlu0 %2756
        %v2759 = vsel %vm1573, %v2754, 0
        %v2762 = vsel %vm1573, %v2757, 0
        %2764 = vmatprep.subr.bf16.mxu0 0
        %2765 = vmatpush1.bf16.xpose.msra.mxu0 %v2762
        %2766 = vmatprep.subr.bf16.mxu0 0
        %2767 = vmatpush1.bf16.xpose.msra.mxu0 0
        %2768 = vmatprep.subr.bf16.mxu0 0
        %2769 = vmatpush1.bf16.xpose.msra.mxu0 0
        %2770 = vmatprep.subr.bf16.mxu0 0
        %2771 = vmatpush1.bf16.xpose.msra.mxu0 0
        %2772 = vmatprep.subr.bf16.mxu0 0
        %2773 = vmatpush1.bf16.xpose.msra.mxu0 0
        %2774 = vmatprep.subr.bf16.mxu0 0
        %2775 = vmatpush1.bf16.xpose.msra.mxu0 0
        %2776 = vmatprep.subr.bf16.mxu0 0
        %2777 = vmatpush1.bf16.xpose.msra.mxu0 0
        %2778 = vmatprep.subr.bf16.mxu0 0
        %2779 = vmatpush1.bf16.xpose.msra.mxu0 0
        %2780 = vmatprep.subr.bf16.mxu0 0
        %2781 = vmatpush1.bf16.xpose.msra.mxu0 0
        %2782 = vmatprep.subr.bf16.mxu0 0
        %2783 = vmatpush1.bf16.xpose.msra.mxu0 0
        %2784 = vmatprep.subr.bf16.mxu0 0
        %2785 = vmatpush1.bf16.xpose.msra.mxu0 0
        %2786 = vmatprep.subr.bf16.mxu0 0
        %2787 = vmatpush1.bf16.xpose.msra.mxu0 0
        %2788 = vmatprep.subr.bf16.mxu0 0
        %2789 = vmatpush1.bf16.xpose.msra.mxu0 0
        %2790 = vmatprep.subr.bf16.mxu0 0
        %2791 = vmatpush1.bf16.xpose.msra.mxu0 0
        %2792 = vmatprep.subr.bf16.mxu0 0
        %2793 = vmatpush1.bf16.xpose.msra.mxu0 0
        %2794 = vmatprep.subr.bf16.mxu0 0
        %2795 = vmatpush1.bf16.xpose.msra.mxu0 0
        %2796 = vmatprep.mubr.bf16.mxu0 0
        %2797 = vmatmul.mubr.bf16.gmra.mrb[0].mxu0 %v2759
        %v2798 = vpop.f32.mrb[0].mxu0
        %v2799 = vadd.f32 %v835, %v2798
        %v2800 = vpop.f32.mrb[0].mxu0
        %v2801 = vpop.f32.mrb[0].mxu0
        %v2802 = vadd.f32 %v836, %v2801
        %v2803 = vpop.f32.mrb[0].mxu0
        %2804 = vdwg.mxu0
        %2806 = vrot.lane.b32.xlu0 %v1555, 96
        %v2807 = vpop.permute.xlu0 %2806
        %2809 = vrot.lane.b32.xlu0 %v1563, 96
        %v2810 = vpop.permute.xlu0 %2809
        %v2812 = vsel %vm1573, %v2807, 0
        %v2815 = vsel %vm1573, %v2810, 0
        %2817 = vmatprep.subr.bf16.mxu0 0
        %2818 = vmatpush1.bf16.xpose.msra.mxu0 %v2815
        %2819 = vmatprep.subr.bf16.mxu0 0
        %2820 = vmatpush1.bf16.xpose.msra.mxu0 0
        %2821 = vmatprep.subr.bf16.mxu0 0
        %2822 = vmatpush1.bf16.xpose.msra.mxu0 0
        %2823 = vmatprep.subr.bf16.mxu0 0
        %2824 = vmatpush1.bf16.xpose.msra.mxu0 0
        %2825 = vmatprep.subr.bf16.mxu0 0
        %2826 = vmatpush1.bf16.xpose.msra.mxu0 0
        %2827 = vmatprep.subr.bf16.mxu0 0
        %2828 = vmatpush1.bf16.xpose.msra.mxu0 0
        %2829 = vmatprep.subr.bf16.mxu0 0
        %2830 = vmatpush1.bf16.xpose.msra.mxu0 0
        %2831 = vmatprep.subr.bf16.mxu0 0
        %2832 = vmatpush1.bf16.xpose.msra.mxu0 0
        %2833 = vmatprep.subr.bf16.mxu0 0
        %2834 = vmatpush1.bf16.xpose.msra.mxu0 0
        %2835 = vmatprep.subr.bf16.mxu0 0
        %2836 = vmatpush1.bf16.xpose.msra.mxu0 0
        %2837 = vmatprep.subr.bf16.mxu0 0
        %2838 = vmatpush1.bf16.xpose.msra.mxu0 0
        %2839 = vmatprep.subr.bf16.mxu0 0
        %2840 = vmatpush1.bf16.xpose.msra.mxu0 0
        %2841 = vmatprep.subr.bf16.mxu0 0
        %2842 = vmatpush1.bf16.xpose.msra.mxu0 0
        %2843 = vmatprep.subr.bf16.mxu0 0
        %2844 = vmatpush1.bf16.xpose.msra.mxu0 0
        %2845 = vmatprep.subr.bf16.mxu0 0
        %2846 = vmatpush1.bf16.xpose.msra.mxu0 0
        %2847 = vmatprep.subr.bf16.mxu0 0
        %2848 = vmatpush1.bf16.xpose.msra.mxu0 0
        %2849 = vmatprep.mubr.bf16.mxu0 0
        %2850 = vmatmul.mubr.bf16.gmra.mrb[0].mxu0 %v2812
        %v2851 = vpop.f32.mrb[0].mxu0
        %v2852 = vadd.f32 %v837, %v2851
        %v2853 = vpop.f32.mrb[0].mxu0
        %v2854 = vpop.f32.mrb[0].mxu0
        %v2855 = vadd.f32 %v838, %v2854
        %v2856 = vpop.f32.mrb[0].mxu0
        %2857 = vdwg.mxu0
        %2859 = vrot.lane.b32.xlu0 %v1556, 96
        %v2860 = vpop.permute.xlu0 %2859
        %2862 = vrot.lane.b32.xlu0 %v1564, 96
        %v2863 = vpop.permute.xlu0 %2862
        %v2865 = vsel %vm1573, %v2860, 0
        %v2868 = vsel %vm1573, %v2863, 0
        %2870 = vmatprep.subr.bf16.mxu0 0
        %2871 = vmatpush1.bf16.xpose.msra.mxu0 %v2868
        %2872 = vmatprep.subr.bf16.mxu0 0
        %2873 = vmatpush1.bf16.xpose.msra.mxu0 0
        %2874 = vmatprep.subr.bf16.mxu0 0
        %2875 = vmatpush1.bf16.xpose.msra.mxu0 0
        %2876 = vmatprep.subr.bf16.mxu0 0
        %2877 = vmatpush1.bf16.xpose.msra.mxu0 0
        %2878 = vmatprep.subr.bf16.mxu0 0
        %2879 = vmatpush1.bf16.xpose.msra.mxu0 0
        %2880 = vmatprep.subr.bf16.mxu0 0
        %2881 = vmatpush1.bf16.xpose.msra.mxu0 0
        %2882 = vmatprep.subr.bf16.mxu0 0
        %2883 = vmatpush1.bf16.xpose.msra.mxu0 0
        %2884 = vmatprep.subr.bf16.mxu0 0
        %2885 = vmatpush1.bf16.xpose.msra.mxu0 0
        %2886 = vmatprep.subr.bf16.mxu0 0
        %2887 = vmatpush1.bf16.xpose.msra.mxu0 0
        %2888 = vmatprep.subr.bf16.mxu0 0
        %2889 = vmatpush1.bf16.xpose.msra.mxu0 0
        %2890 = vmatprep.subr.bf16.mxu0 0
        %2891 = vmatpush1.bf16.xpose.msra.mxu0 0
        %2892 = vmatprep.subr.bf16.mxu0 0
        %2893 = vmatpush1.bf16.xpose.msra.mxu0 0
        %2894 = vmatprep.subr.bf16.mxu0 0
        %2895 = vmatpush1.bf16.xpose.msra.mxu0 0
        %2896 = vmatprep.subr.bf16.mxu0 0
        %2897 = vmatpush1.bf16.xpose.msra.mxu0 0
        %2898 = vmatprep.subr.bf16.mxu0 0
        %2899 = vmatpush1.bf16.xpose.msra.mxu0 0
        %2900 = vmatprep.subr.bf16.mxu0 0
        %2901 = vmatpush1.bf16.xpose.msra.mxu0 0
        %2902 = vmatprep.mubr.bf16.mxu0 0
        %2903 = vmatmul.mubr.bf16.gmra.mrb[0].mxu0 %v2865
        %v2904 = vpop.f32.mrb[0].mxu0
        %v2905 = vadd.f32 %v839, %v2904
        %v2906 = vpop.f32.mrb[0].mxu0
        %v2907 = vpop.f32.mrb[0].mxu0
        %v2908 = vadd.f32 %v840, %v2907
        %v2909 = vpop.f32.mrb[0].mxu0
        %2910 = vdwg.mxu0
        %v2911 = vsel %vm1950, %v2534, -inf
        %2912 = vmax.xlane.f32.xlu0 %v2911
        %v2913 = vpop.xlane.xlu0 %2912
        %v2914 = vsel %vm1950, %v2537, -inf
        %2915 = vmax.xlane.f32.xlu0 %v2914
        %v2916 = vpop.xlane.xlu0 %2915
        %v2917 = vsel %vm1950, %v2587, -inf
        %2918 = vmax.xlane.f32.xlu0 %v2917
        %v2919 = vpop.xlane.xlu0 %2918
        %v2920 = vsel %vm1950, %v2590, -inf
        %2921 = vmax.xlane.f32.xlu0 %v2920
        %v2922 = vpop.xlane.xlu0 %2921
        %v2923 = vsel %vm1950, %v2640, -inf
        %2924 = vmax.xlane.f32.xlu0 %v2923
        %v2925 = vpop.xlane.xlu0 %2924
        %v2926 = vsel %vm1950, %v2643, -inf
        %2927 = vmax.xlane.f32.xlu0 %v2926
        %v2928 = vpop.xlane.xlu0 %2927
        %v2929 = vsel %vm1950, %v2693, -inf
        %2930 = vmax.xlane.f32.xlu0 %v2929
        %v2931 = vpop.xlane.xlu0 %2930
        %v2932 = vsel %vm1950, %v2696, -inf
        %2933 = vmax.xlane.f32.xlu0 %v2932
        %v2934 = vpop.xlane.xlu0 %2933
        %v2935 = vsel %vm1950, %v2746, -inf
        %2936 = vmax.xlane.f32.xlu0 %v2935
        %v2937 = vpop.xlane.xlu0 %2936
        %v2938 = vsel %vm1950, %v2749, -inf
        %2939 = vmax.xlane.f32.xlu0 %v2938
        %v2940 = vpop.xlane.xlu0 %2939
        %v2941 = vsel %vm1950, %v2799, -inf
        %2942 = vmax.xlane.f32.xlu0 %v2941
        %v2943 = vpop.xlane.xlu0 %2942
        %v2944 = vsel %vm1950, %v2802, -inf
        %2945 = vmax.xlane.f32.xlu0 %v2944
        %v2946 = vpop.xlane.xlu0 %2945
        %v2947 = vsel %vm1950, %v2852, -inf
        %2948 = vmax.xlane.f32.xlu0 %v2947
        %v2949 = vpop.xlane.xlu0 %2948
        %v2950 = vsel %vm1950, %v2855, -inf
        %2951 = vmax.xlane.f32.xlu0 %v2950
        %v2952 = vpop.xlane.xlu0 %2951
        %v2953 = vsel %vm1950, %v2905, -inf
        %2954 = vmax.xlane.f32.xlu0 %v2953
        %v2955 = vpop.xlane.xlu0 %2954
        %v2956 = vsel %vm1950, %v2908, -inf
        %2957 = vmax.xlane.f32.xlu0 %v2956
        %v2958 = vpop.xlane.xlu0 %2957
        %v2959 = vsub.f32 %v2534, %v2913
        %v2960 = vsub.f32 %v2537, %v2916
        %v2961 = vsub.f32 %v2587, %v2919
        %v2962 = vsub.f32 %v2590, %v2922
        %v2963 = vsub.f32 %v2640, %v2925
        %v2964 = vsub.f32 %v2643, %v2928
        %v2965 = vsub.f32 %v2693, %v2931
        %v2966 = vsub.f32 %v2696, %v2934
        %v2967 = vsub.f32 %v2746, %v2937
        %v2968 = vsub.f32 %v2749, %v2940
        %v2969 = vsub.f32 %v2799, %v2943
        %v2970 = vsub.f32 %v2802, %v2946
        %v2971 = vsub.f32 %v2852, %v2949
        %v2972 = vsub.f32 %v2855, %v2952
        %v2973 = vsub.f32 %v2905, %v2955
        %v2974 = vsub.f32 %v2908, %v2958
        %v2975 = vmul.f32 %v2959, 1.442695
        %v2976 = vpow.pop %v2975
        %v2977 = vmul.f32 %v2960, 1.442695
        %v2978 = vpow.pop %v2977
        %v2979 = vmul.f32 %v2961, 1.442695
        %v2980 = vpow.pop %v2979
        %v2981 = vmul.f32 %v2962, 1.442695
        %v2982 = vpow.pop %v2981
        %v2983 = vmul.f32 %v2963, 1.442695
        %v2984 = vpow.pop %v2983
        %v2985 = vmul.f32 %v2964, 1.442695
        %v2986 = vpow.pop %v2985
        %v2987 = vmul.f32 %v2965, 1.442695
        %v2988 = vpow.pop %v2987
        %v2989 = vmul.f32 %v2966, 1.442695
        %v2990 = vpow.pop %v2989
        %v2991 = vmul.f32 %v2967, 1.442695
        %v2992 = vpow.pop %v2991
        %v2993 = vmul.f32 %v2968, 1.442695
        %v2994 = vpow.pop %v2993
        %v2995 = vmul.f32 %v2969, 1.442695
        %v2996 = vpow.pop %v2995
        %v2997 = vmul.f32 %v2970, 1.442695
        %v2998 = vpow.pop %v2997
        %v2999 = vmul.f32 %v2971, 1.442695
        %v3000 = vpow.pop %v2999
        %v3001 = vmul.f32 %v2972, 1.442695
        %v3002 = vpow.pop %v3001
        %v3003 = vmul.f32 %v2973, 1.442695
        %v3004 = vpow.pop %v3003
        %v3005 = vmul.f32 %v2974, 1.442695
        %v3006 = vpow.pop %v3005
        %v3007 = vsel %vm1950, %v2976, 0.0
        %3008 = vadd.xlane.f32.xlu0 %v3007
        %v3009 = vpop.xlane.xlu0 %3008
        %v3010 = vsel %vm1950, %v2978, 0.0
        %3011 = vadd.xlane.f32.xlu0 %v3010
        %v3012 = vpop.xlane.xlu0 %3011
        %v3013 = vsel %vm1950, %v2980, 0.0
        %3014 = vadd.xlane.f32.xlu0 %v3013
        %v3015 = vpop.xlane.xlu0 %3014
        %v3016 = vsel %vm1950, %v2982, 0.0
        %3017 = vadd.xlane.f32.xlu0 %v3016
        %v3018 = vpop.xlane.xlu0 %3017
        %v3019 = vsel %vm1950, %v2984, 0.0
        %3020 = vadd.xlane.f32.xlu0 %v3019
        %v3021 = vpop.xlane.xlu0 %3020
        %v3022 = vsel %vm1950, %v2986, 0.0
        %3023 = vadd.xlane.f32.xlu0 %v3022
        %v3024 = vpop.xlane.xlu0 %3023
        %v3025 = vsel %vm1950, %v2988, 0.0
        %3026 = vadd.xlane.f32.xlu0 %v3025
        %v3027 = vpop.xlane.xlu0 %3026
        %v3028 = vsel %vm1950, %v2990, 0.0
        %3029 = vadd.xlane.f32.xlu0 %v3028
        %v3030 = vpop.xlane.xlu0 %3029
        %v3031 = vsel %vm1950, %v2992, 0.0
        %3032 = vadd.xlane.f32.xlu0 %v3031
        %v3033 = vpop.xlane.xlu0 %3032
        %v3034 = vsel %vm1950, %v2994, 0.0
        %3035 = vadd.xlane.f32.xlu0 %v3034
        %v3036 = vpop.xlane.xlu0 %3035
        %v3037 = vsel %vm1950, %v2996, 0.0
        %3038 = vadd.xlane.f32.xlu0 %v3037
        %v3039 = vpop.xlane.xlu0 %3038
        %v3040 = vsel %vm1950, %v2998, 0.0
        %3041 = vadd.xlane.f32.xlu0 %v3040
        %v3042 = vpop.xlane.xlu0 %3041
        %v3043 = vsel %vm1950, %v3000, 0.0
        %3044 = vadd.xlane.f32.xlu0 %v3043
        %v3045 = vpop.xlane.xlu0 %3044
        %v3046 = vsel %vm1950, %v3002, 0.0
        %3047 = vadd.xlane.f32.xlu0 %v3046
        %v3048 = vpop.xlane.xlu0 %3047
        %v3049 = vsel %vm1950, %v3004, 0.0
        %3050 = vadd.xlane.f32.xlu0 %v3049
        %v3051 = vpop.xlane.xlu0 %3050
        %v3052 = vsel %vm1950, %v3006, 0.0
        %3053 = vadd.xlane.f32.xlu0 %v3052
        %v3054 = vpop.xlane.xlu0 %3053
        %v3055 = vrcp.pop %v3009
        %v3056 = vrcp.pop %v3012
        %v3057 = vrcp.pop %v3015
        %v3058 = vrcp.pop %v3018
        %v3059 = vrcp.pop %v3021
        %v3060 = vrcp.pop %v3024
        %v3061 = vrcp.pop %v3027
        %v3062 = vrcp.pop %v3030
        %v3063 = vrcp.pop %v3033
        %v3064 = vrcp.pop %v3036
        %v3065 = vrcp.pop %v3039
        %v3066 = vrcp.pop %v3042
        %v3067 = vrcp.pop %v3045
        %v3068 = vrcp.pop %v3048
        %v3069 = vrcp.pop %v3051
        %v3070 = vrcp.pop %v3054
        %v3071 = vmul.f32 %v2976, %v3055
        %v3072 = vmul.f32 %v2978, %v3056
        %v3073 = vmul.f32 %v2980, %v3057
        %v3074 = vmul.f32 %v2982, %v3058
        %v3075 = vmul.f32 %v2984, %v3059
        %v3076 = vmul.f32 %v2986, %v3060
        %v3077 = vmul.f32 %v2988, %v3061
        %v3078 = vmul.f32 %v2990, %v3062
        %v3079 = vmul.f32 %v2992, %v3063
        %v3080 = vmul.f32 %v2994, %v3064
        %v3081 = vmul.f32 %v2996, %v3065
        %v3082 = vmul.f32 %v2998, %v3066
        %v3083 = vmul.f32 %v3000, %v3067
        %v3084 = vmul.f32 %v3002, %v3068
        %v3085 = vmul.f32 %v3004, %v3069
        %v3086 = vmul.f32 %v3006, %v3070
        %v3087 = vpack.c.bf16 %v3072, %v3071
        %v3088 = vpack.c.bf16 %v3074, %v3073
        %v3089 = vpack.c.bf16 %v3076, %v3075
        %v3090 = vpack.c.bf16 %v3078, %v3077
        %v3091 = vpack.c.bf16 %v3080, %v3079
        %v3092 = vpack.c.bf16 %v3082, %v3081
        %v3093 = vpack.c.bf16 %v3084, %v3083
        %v3094 = vpack.c.bf16 %v3086, %v3085
        %3096 = vrot.lane.b32.xlu0 %v1565, 96
        %v3097 = vpop.permute.xlu0 %3096
        %v3100 = vsel %vm1950, %v3087, 0
        %3102 = vmatprep.subr.bf16.mxu0 0
        %3103 = vmatpush1.bf16.msra.mxu0 %v3097
        %3104 = vmatprep.subr.bf16.mxu0 0
        %3105 = vmatpush1.bf16.msra.mxu0 0
        %3106 = vmatprep.subr.bf16.mxu0 0
        %3107 = vmatpush1.bf16.msra.mxu0 0
        %3108 = vmatprep.subr.bf16.mxu0 0
        %3109 = vmatpush1.bf16.msra.mxu0 0
        %3110 = vmatprep.subr.bf16.mxu0 0
        %3111 = vmatpush1.bf16.msra.mxu0 0
        %3112 = vmatprep.subr.bf16.mxu0 0
        %3113 = vmatpush1.bf16.msra.mxu0 0
        %3114 = vmatprep.subr.bf16.mxu0 0
        %3115 = vmatpush1.bf16.msra.mxu0 0
        %3116 = vmatprep.subr.bf16.mxu0 0
        %3117 = vmatpush1.bf16.msra.mxu0 0
        %3118 = vmatprep.subr.bf16.mxu0 0
        %3119 = vmatpush1.bf16.msra.mxu0 0
        %3120 = vmatprep.subr.bf16.mxu0 0
        %3121 = vmatpush1.bf16.msra.mxu0 0
        %3122 = vmatprep.subr.bf16.mxu0 0
        %3123 = vmatpush1.bf16.msra.mxu0 0
        %3124 = vmatprep.subr.bf16.mxu0 0
        %3125 = vmatpush1.bf16.msra.mxu0 0
        %3126 = vmatprep.subr.bf16.mxu0 0
        %3127 = vmatpush1.bf16.msra.mxu0 0
        %3128 = vmatprep.subr.bf16.mxu0 0
        %3129 = vmatpush1.bf16.msra.mxu0 0
        %3130 = vmatprep.subr.bf16.mxu0 0
        %3131 = vmatpush1.bf16.msra.mxu0 0
        %3132 = vmatprep.subr.bf16.mxu0 0
        %3133 = vmatpush1.bf16.msra.mxu0 0
        %3134 = vmatprep.mubr.bf16.mxu0 0
        %3135 = vmatmul.mubr.bf16.gmra.mrb[0].mxu0 %v3100
        %v3136 = vpop.f32.mrb[0].mxu0
        %v3137 = vadd.f32 0.0, %v3136
        %v3138 = vpop.f32.mrb[0].mxu0
        %v3139 = vpop.f32.mrb[0].mxu0
        %v3140 = vadd.f32 0.0, %v3139
        %v3141 = vpop.f32.mrb[0].mxu0
        %3142 = vdwg.mxu0
        %3144 = vrot.lane.b32.xlu0 %v1566, 96
        %v3145 = vpop.permute.xlu0 %3144
        %v3148 = vsel %vm1950, %v3088, 0
        %3150 = vmatprep.subr.bf16.mxu0 0
        %3151 = vmatpush1.bf16.msra.mxu0 %v3145
        %3152 = vmatprep.subr.bf16.mxu0 0
        %3153 = vmatpush1.bf16.msra.mxu0 0
        %3154 = vmatprep.subr.bf16.mxu0 0
        %3155 = vmatpush1.bf16.msra.mxu0 0
        %3156 = vmatprep.subr.bf16.mxu0 0
        %3157 = vmatpush1.bf16.msra.mxu0 0
        %3158 = vmatprep.subr.bf16.mxu0 0
        %3159 = vmatpush1.bf16.msra.mxu0 0
        %3160 = vmatprep.subr.bf16.mxu0 0
        %3161 = vmatpush1.bf16.msra.mxu0 0
        %3162 = vmatprep.subr.bf16.mxu0 0
        %3163 = vmatpush1.bf16.msra.mxu0 0
        %3164 = vmatprep.subr.bf16.mxu0 0
        %3165 = vmatpush1.bf16.msra.mxu0 0
        %3166 = vmatprep.subr.bf16.mxu0 0
        %3167 = vmatpush1.bf16.msra.mxu0 0
        %3168 = vmatprep.subr.bf16.mxu0 0
        %3169 = vmatpush1.bf16.msra.mxu0 0
        %3170 = vmatprep.subr.bf16.mxu0 0
        %3171 = vmatpush1.bf16.msra.mxu0 0
        %3172 = vmatprep.subr.bf16.mxu0 0
        %3173 = vmatpush1.bf16.msra.mxu0 0
        %3174 = vmatprep.subr.bf16.mxu0 0
        %3175 = vmatpush1.bf16.msra.mxu0 0
        %3176 = vmatprep.subr.bf16.mxu0 0
        %3177 = vmatpush1.bf16.msra.mxu0 0
        %3178 = vmatprep.subr.bf16.mxu0 0
        %3179 = vmatpush1.bf16.msra.mxu0 0
        %3180 = vmatprep.subr.bf16.mxu0 0
        %3181 = vmatpush1.bf16.msra.mxu0 0
        %3182 = vmatprep.mubr.bf16.mxu0 0
        %3183 = vmatmul.mubr.bf16.gmra.mrb[0].mxu0 %v3148
        %v3184 = vpop.f32.mrb[0].mxu0
        %v3185 = vadd.f32 0.0, %v3184
        %v3186 = vpop.f32.mrb[0].mxu0
        %v3187 = vpop.f32.mrb[0].mxu0
        %v3188 = vadd.f32 0.0, %v3187
        %v3189 = vpop.f32.mrb[0].mxu0
        %3190 = vdwg.mxu0
        %3192 = vrot.lane.b32.xlu0 %v1567, 96
        %v3193 = vpop.permute.xlu0 %3192
        %v3196 = vsel %vm1950, %v3089, 0
        %3198 = vmatprep.subr.bf16.mxu0 0
        %3199 = vmatpush1.bf16.msra.mxu0 %v3193
        %3200 = vmatprep.subr.bf16.mxu0 0
        %3201 = vmatpush1.bf16.msra.mxu0 0
        %3202 = vmatprep.subr.bf16.mxu0 0
        %3203 = vmatpush1.bf16.msra.mxu0 0
        %3204 = vmatprep.subr.bf16.mxu0 0
        %3205 = vmatpush1.bf16.msra.mxu0 0
        %3206 = vmatprep.subr.bf16.mxu0 0
        %3207 = vmatpush1.bf16.msra.mxu0 0
        %3208 = vmatprep.subr.bf16.mxu0 0
        %3209 = vmatpush1.bf16.msra.mxu0 0
        %3210 = vmatprep.subr.bf16.mxu0 0
        %3211 = vmatpush1.bf16.msra.mxu0 0
        %3212 = vmatprep.subr.bf16.mxu0 0
        %3213 = vmatpush1.bf16.msra.mxu0 0
        %3214 = vmatprep.subr.bf16.mxu0 0
        %3215 = vmatpush1.bf16.msra.mxu0 0
        %3216 = vmatprep.subr.bf16.mxu0 0
        %3217 = vmatpush1.bf16.msra.mxu0 0
        %3218 = vmatprep.subr.bf16.mxu0 0
        %3219 = vmatpush1.bf16.msra.mxu0 0
        %3220 = vmatprep.subr.bf16.mxu0 0
        %3221 = vmatpush1.bf16.msra.mxu0 0
        %3222 = vmatprep.subr.bf16.mxu0 0
        %3223 = vmatpush1.bf16.msra.mxu0 0
        %3224 = vmatprep.subr.bf16.mxu0 0
        %3225 = vmatpush1.bf16.msra.mxu0 0
        %3226 = vmatprep.subr.bf16.mxu0 0
        %3227 = vmatpush1.bf16.msra.mxu0 0
        %3228 = vmatprep.subr.bf16.mxu0 0
        %3229 = vmatpush1.bf16.msra.mxu0 0
        %3230 = vmatprep.mubr.bf16.mxu0 0
        %3231 = vmatmul.mubr.bf16.gmra.mrb[0].mxu0 %v3196
        %v3232 = vpop.f32.mrb[0].mxu0
        %v3233 = vadd.f32 0.0, %v3232
        %v3234 = vpop.f32.mrb[0].mxu0
        %v3235 = vpop.f32.mrb[0].mxu0
        %v3236 = vadd.f32 0.0, %v3235
        %v3237 = vpop.f32.mrb[0].mxu0
        %3238 = vdwg.mxu0
        %3240 = vrot.lane.b32.xlu0 %v1568, 96
        %v3241 = vpop.permute.xlu0 %3240
        %v3244 = vsel %vm1950, %v3090, 0
        %3246 = vmatprep.subr.bf16.mxu0 0
        %3247 = vmatpush1.bf16.msra.mxu0 %v3241
        %3248 = vmatprep.subr.bf16.mxu0 0
        %3249 = vmatpush1.bf16.msra.mxu0 0
        %3250 = vmatprep.subr.bf16.mxu0 0
        %3251 = vmatpush1.bf16.msra.mxu0 0
        %3252 = vmatprep.subr.bf16.mxu0 0
        %3253 = vmatpush1.bf16.msra.mxu0 0
        %3254 = vmatprep.subr.bf16.mxu0 0
        %3255 = vmatpush1.bf16.msra.mxu0 0
        %3256 = vmatprep.subr.bf16.mxu0 0
        %3257 = vmatpush1.bf16.msra.mxu0 0
        %3258 = vmatprep.subr.bf16.mxu0 0
        %3259 = vmatpush1.bf16.msra.mxu0 0
        %3260 = vmatprep.subr.bf16.mxu0 0
        %3261 = vmatpush1.bf16.msra.mxu0 0
        %3262 = vmatprep.subr.bf16.mxu0 0
        %3263 = vmatpush1.bf16.msra.mxu0 0
        %3264 = vmatprep.subr.bf16.mxu0 0
        %3265 = vmatpush1.bf16.msra.mxu0 0
        %3266 = vmatprep.subr.bf16.mxu0 0
        %3267 = vmatpush1.bf16.msra.mxu0 0
        %3268 = vmatprep.subr.bf16.mxu0 0
        %3269 = vmatpush1.bf16.msra.mxu0 0
        %3270 = vmatprep.subr.bf16.mxu0 0
        %3271 = vmatpush1.bf16.msra.mxu0 0
        %3272 = vmatprep.subr.bf16.mxu0 0
        %3273 = vmatpush1.bf16.msra.mxu0 0
        %3274 = vmatprep.subr.bf16.mxu0 0
        %3275 = vmatpush1.bf16.msra.mxu0 0
        %3276 = vmatprep.subr.bf16.mxu0 0
        %3277 = vmatpush1.bf16.msra.mxu0 0
        %3278 = vmatprep.mubr.bf16.mxu0 0
        %3279 = vmatmul.mubr.bf16.gmra.mrb[0].mxu0 %v3244
        %v3280 = vpop.f32.mrb[0].mxu0
        %v3281 = vadd.f32 0.0, %v3280
        %v3282 = vpop.f32.mrb[0].mxu0
        %v3283 = vpop.f32.mrb[0].mxu0
        %v3284 = vadd.f32 0.0, %v3283
        %v3285 = vpop.f32.mrb[0].mxu0
        %3286 = vdwg.mxu0
        %3288 = vrot.lane.b32.xlu0 %v1569, 96
        %v3289 = vpop.permute.xlu0 %3288
        %v3292 = vsel %vm1950, %v3091, 0
        %3294 = vmatprep.subr.bf16.mxu0 0
        %3295 = vmatpush1.bf16.msra.mxu0 %v3289
        %3296 = vmatprep.subr.bf16.mxu0 0
        %3297 = vmatpush1.bf16.msra.mxu0 0
        %3298 = vmatprep.subr.bf16.mxu0 0
        %3299 = vmatpush1.bf16.msra.mxu0 0
        %3300 = vmatprep.subr.bf16.mxu0 0
        %3301 = vmatpush1.bf16.msra.mxu0 0
        %3302 = vmatprep.subr.bf16.mxu0 0
        %3303 = vmatpush1.bf16.msra.mxu0 0
        %3304 = vmatprep.subr.bf16.mxu0 0
        %3305 = vmatpush1.bf16.msra.mxu0 0
        %3306 = vmatprep.subr.bf16.mxu0 0
        %3307 = vmatpush1.bf16.msra.mxu0 0
        %3308 = vmatprep.subr.bf16.mxu0 0
        %3309 = vmatpush1.bf16.msra.mxu0 0
        %3310 = vmatprep.subr.bf16.mxu0 0
        %3311 = vmatpush1.bf16.msra.mxu0 0
        %3312 = vmatprep.subr.bf16.mxu0 0
        %3313 = vmatpush1.bf16.msra.mxu0 0
        %3314 = vmatprep.subr.bf16.mxu0 0
        %3315 = vmatpush1.bf16.msra.mxu0 0
        %3316 = vmatprep.subr.bf16.mxu0 0
        %3317 = vmatpush1.bf16.msra.mxu0 0
        %3318 = vmatprep.subr.bf16.mxu0 0
        %3319 = vmatpush1.bf16.msra.mxu0 0
        %3320 = vmatprep.subr.bf16.mxu0 0
        %3321 = vmatpush1.bf16.msra.mxu0 0
        %3322 = vmatprep.subr.bf16.mxu0 0
        %3323 = vmatpush1.bf16.msra.mxu0 0
        %3324 = vmatprep.subr.bf16.mxu0 0
        %3325 = vmatpush1.bf16.msra.mxu0 0
        %3326 = vmatprep.mubr.bf16.mxu0 0
        %3327 = vmatmul.mubr.bf16.gmra.mrb[0].mxu0 %v3292
        %v3328 = vpop.f32.mrb[0].mxu0
        %v3329 = vadd.f32 0.0, %v3328
        %v3330 = vpop.f32.mrb[0].mxu0
        %v3331 = vpop.f32.mrb[0].mxu0
        %v3332 = vadd.f32 0.0, %v3331
        %v3333 = vpop.f32.mrb[0].mxu0
        %3334 = vdwg.mxu0
        %3336 = vrot.lane.b32.xlu0 %v1570, 96
        %v3337 = vpop.permute.xlu0 %3336
        %v3340 = vsel %vm1950, %v3092, 0
        %3342 = vmatprep.subr.bf16.mxu0 0
        %3343 = vmatpush1.bf16.msra.mxu0 %v3337
        %3344 = vmatprep.subr.bf16.mxu0 0
        %3345 = vmatpush1.bf16.msra.mxu0 0
        %3346 = vmatprep.subr.bf16.mxu0 0
        %3347 = vmatpush1.bf16.msra.mxu0 0
        %3348 = vmatprep.subr.bf16.mxu0 0
        %3349 = vmatpush1.bf16.msra.mxu0 0
        %3350 = vmatprep.subr.bf16.mxu0 0
        %3351 = vmatpush1.bf16.msra.mxu0 0
        %3352 = vmatprep.subr.bf16.mxu0 0
        %3353 = vmatpush1.bf16.msra.mxu0 0
        %3354 = vmatprep.subr.bf16.mxu0 0
        %3355 = vmatpush1.bf16.msra.mxu0 0
        %3356 = vmatprep.subr.bf16.mxu0 0
        %3357 = vmatpush1.bf16.msra.mxu0 0
        %3358 = vmatprep.subr.bf16.mxu0 0
        %3359 = vmatpush1.bf16.msra.mxu0 0
        %3360 = vmatprep.subr.bf16.mxu0 0
        %3361 = vmatpush1.bf16.msra.mxu0 0
        %3362 = vmatprep.subr.bf16.mxu0 0
        %3363 = vmatpush1.bf16.msra.mxu0 0
        %3364 = vmatprep.subr.bf16.mxu0 0
        %3365 = vmatpush1.bf16.msra.mxu0 0
        %3366 = vmatprep.subr.bf16.mxu0 0
        %3367 = vmatpush1.bf16.msra.mxu0 0
        %3368 = vmatprep.subr.bf16.mxu0 0
        %3369 = vmatpush1.bf16.msra.mxu0 0
        %3370 = vmatprep.subr.bf16.mxu0 0
        %3371 = vmatpush1.bf16.msra.mxu0 0
        %3372 = vmatprep.subr.bf16.mxu0 0
        %3373 = vmatpush1.bf16.msra.mxu0 0
        %3374 = vmatprep.mubr.bf16.mxu0 0
        %3375 = vmatmul.mubr.bf16.gmra.mrb[0].mxu0 %v3340
        %v3376 = vpop.f32.mrb[0].mxu0
        %v3377 = vadd.f32 0.0, %v3376
        %v3378 = vpop.f32.mrb[0].mxu0
        %v3379 = vpop.f32.mrb[0].mxu0
        %v3380 = vadd.f32 0.0, %v3379
        %v3381 = vpop.f32.mrb[0].mxu0
        %3382 = vdwg.mxu0
        %3384 = vrot.lane.b32.xlu0 %v1571, 96
        %v3385 = vpop.permute.xlu0 %3384
        %v3388 = vsel %vm1950, %v3093, 0
        %3390 = vmatprep.subr.bf16.mxu0 0
        %3391 = vmatpush1.bf16.msra.mxu0 %v3385
        %3392 = vmatprep.subr.bf16.mxu0 0
        %3393 = vmatpush1.bf16.msra.mxu0 0
        %3394 = vmatprep.subr.bf16.mxu0 0
        %3395 = vmatpush1.bf16.msra.mxu0 0
        %3396 = vmatprep.subr.bf16.mxu0 0
        %3397 = vmatpush1.bf16.msra.mxu0 0
        %3398 = vmatprep.subr.bf16.mxu0 0
        %3399 = vmatpush1.bf16.msra.mxu0 0
        %3400 = vmatprep.subr.bf16.mxu0 0
        %3401 = vmatpush1.bf16.msra.mxu0 0
        %3402 = vmatprep.subr.bf16.mxu0 0
        %3403 = vmatpush1.bf16.msra.mxu0 0
        %3404 = vmatprep.subr.bf16.mxu0 0
        %3405 = vmatpush1.bf16.msra.mxu0 0
        %3406 = vmatprep.subr.bf16.mxu0 0
        %3407 = vmatpush1.bf16.msra.mxu0 0
        %3408 = vmatprep.subr.bf16.mxu0 0
        %3409 = vmatpush1.bf16.msra.mxu0 0
        %3410 = vmatprep.subr.bf16.mxu0 0
        %3411 = vmatpush1.bf16.msra.mxu0 0
        %3412 = vmatprep.subr.bf16.mxu0 0
        %3413 = vmatpush1.bf16.msra.mxu0 0
        %3414 = vmatprep.subr.bf16.mxu0 0
        %3415 = vmatpush1.bf16.msra.mxu0 0
        %3416 = vmatprep.subr.bf16.mxu0 0
        %3417 = vmatpush1.bf16.msra.mxu0 0
        %3418 = vmatprep.subr.bf16.mxu0 0
        %3419 = vmatpush1.bf16.msra.mxu0 0
        %3420 = vmatprep.subr.bf16.mxu0 0
        %3421 = vmatpush1.bf16.msra.mxu0 0
        %3422 = vmatprep.mubr.bf16.mxu0 0
        %3423 = vmatmul.mubr.bf16.gmra.mrb[0].mxu0 %v3388
        %v3424 = vpop.f32.mrb[0].mxu0
        %v3425 = vadd.f32 0.0, %v3424
        %v3426 = vpop.f32.mrb[0].mxu0
        %v3427 = vpop.f32.mrb[0].mxu0
        %v3428 = vadd.f32 0.0, %v3427
        %v3429 = vpop.f32.mrb[0].mxu0
        %3430 = vdwg.mxu0
        %3432 = vrot.lane.b32.xlu0 %v1572, 96
        %v3433 = vpop.permute.xlu0 %3432
        %v3436 = vsel %vm1950, %v3094, 0
        %3438 = vmatprep.subr.bf16.mxu0 0
        %3439 = vmatpush1.bf16.msra.mxu0 %v3433
        %3440 = vmatprep.subr.bf16.mxu0 0
        %3441 = vmatpush1.bf16.msra.mxu0 0
        %3442 = vmatprep.subr.bf16.mxu0 0
        %3443 = vmatpush1.bf16.msra.mxu0 0
        %3444 = vmatprep.subr.bf16.mxu0 0
        %3445 = vmatpush1.bf16.msra.mxu0 0
        %3446 = vmatprep.subr.bf16.mxu0 0
        %3447 = vmatpush1.bf16.msra.mxu0 0
        %3448 = vmatprep.subr.bf16.mxu0 0
        %3449 = vmatpush1.bf16.msra.mxu0 0
        %3450 = vmatprep.subr.bf16.mxu0 0
        %3451 = vmatpush1.bf16.msra.mxu0 0
        %3452 = vmatprep.subr.bf16.mxu0 0
        %3453 = vmatpush1.bf16.msra.mxu0 0
        %3454 = vmatprep.subr.bf16.mxu0 0
        %3455 = vmatpush1.bf16.msra.mxu0 0
        %3456 = vmatprep.subr.bf16.mxu0 0
        %3457 = vmatpush1.bf16.msra.mxu0 0
        %3458 = vmatprep.subr.bf16.mxu0 0
        %3459 = vmatpush1.bf16.msra.mxu0 0
        %3460 = vmatprep.subr.bf16.mxu0 0
        %3461 = vmatpush1.bf16.msra.mxu0 0
        %3462 = vmatprep.subr.bf16.mxu0 0
        %3463 = vmatpush1.bf16.msra.mxu0 0
        %3464 = vmatprep.subr.bf16.mxu0 0
        %3465 = vmatpush1.bf16.msra.mxu0 0
        %3466 = vmatprep.subr.bf16.mxu0 0
        %3467 = vmatpush1.bf16.msra.mxu0 0
        %3468 = vmatprep.subr.bf16.mxu0 0
        %3469 = vmatpush1.bf16.msra.mxu0 0
        %3470 = vmatprep.mubr.bf16.mxu0 0
        %3471 = vmatmul.mubr.bf16.gmra.mrb[0].mxu0 %v3436
        %v3472 = vpop.f32.mrb[0].mxu0
        %v3473 = vadd.f32 0.0, %v3472
        %v3474 = vpop.f32.mrb[0].mxu0
        %v3475 = vpop.f32.mrb[0].mxu0
        %v3476 = vadd.f32 0.0, %v3475
        %v3477 = vpop.f32.mrb[0].mxu0
        %3478 = vdwg.mxu0
        %3479 = vrot.lane.b32.xlu0 %v1549, 64
        %v3480 = vpop.permute.xlu0 %3479
        %3481 = vrot.lane.b32.xlu0 %v1557, 64
        %v3482 = vpop.permute.xlu0 %3481
        %v3484 = vsel %vm1573, %v3480, 0
        %v3487 = vsel %vm1573, %v3482, 0
        %3489 = vmatprep.subr.bf16.mxu0 0
        %3490 = vmatpush1.bf16.xpose.msra.mxu0 %v3487
        %3491 = vmatprep.subr.bf16.mxu0 0
        %3492 = vmatpush1.bf16.xpose.msra.mxu0 0
        %3493 = vmatprep.subr.bf16.mxu0 0
        %3494 = vmatpush1.bf16.xpose.msra.mxu0 0
        %3495 = vmatprep.subr.bf16.mxu0 0
        %3496 = vmatpush1.bf16.xpose.msra.mxu0 0
        %3497 = vmatprep.subr.bf16.mxu0 0
        %3498 = vmatpush1.bf16.xpose.msra.mxu0 0
        %3499 = vmatprep.subr.bf16.mxu0 0
        %3500 = vmatpush1.bf16.xpose.msra.mxu0 0
        %3501 = vmatprep.subr.bf16.mxu0 0
        %3502 = vmatpush1.bf16.xpose.msra.mxu0 0
        %3503 = vmatprep.subr.bf16.mxu0 0
        %3504 = vmatpush1.bf16.xpose.msra.mxu0 0
        %3505 = vmatprep.subr.bf16.mxu0 0
        %3506 = vmatpush1.bf16.xpose.msra.mxu0 0
        %3507 = vmatprep.subr.bf16.mxu0 0
        %3508 = vmatpush1.bf16.xpose.msra.mxu0 0
        %3509 = vmatprep.subr.bf16.mxu0 0
        %3510 = vmatpush1.bf16.xpose.msra.mxu0 0
        %3511 = vmatprep.subr.bf16.mxu0 0
        %3512 = vmatpush1.bf16.xpose.msra.mxu0 0
        %3513 = vmatprep.subr.bf16.mxu0 0
        %3514 = vmatpush1.bf16.xpose.msra.mxu0 0
        %3515 = vmatprep.subr.bf16.mxu0 0
        %3516 = vmatpush1.bf16.xpose.msra.mxu0 0
        %3517 = vmatprep.subr.bf16.mxu0 0
        %3518 = vmatpush1.bf16.xpose.msra.mxu0 0
        %3519 = vmatprep.subr.bf16.mxu0 0
        %3520 = vmatpush1.bf16.xpose.msra.mxu0 0
        %3521 = vmatprep.mubr.bf16.mxu0 0
        %3522 = vmatmul.mubr.bf16.gmra.mrb[0].mxu0 %v3484
        %v3523 = vpop.f32.mrb[0].mxu0
        %v3524 = vadd.f32 %v825, %v3523
        %v3525 = vpop.f32.mrb[0].mxu0
        %v3526 = vpop.f32.mrb[0].mxu0
        %v3527 = vadd.f32 %v826, %v3526
        %v3528 = vpop.f32.mrb[0].mxu0
        %3529 = vdwg.mxu0
        %3530 = vrot.lane.b32.xlu0 %v1550, 64
        %v3531 = vpop.permute.xlu0 %3530
        %3532 = vrot.lane.b32.xlu0 %v1558, 64
        %v3533 = vpop.permute.xlu0 %3532
        %v3535 = vsel %vm1573, %v3531, 0
        %v3538 = vsel %vm1573, %v3533, 0
        %3540 = vmatprep.subr.bf16.mxu0 0
        %3541 = vmatpush1.bf16.xpose.msra.mxu0 %v3538
        %3542 = vmatprep.subr.bf16.mxu0 0
        %3543 = vmatpush1.bf16.xpose.msra.mxu0 0
        %3544 = vmatprep.subr.bf16.mxu0 0
        %3545 = vmatpush1.bf16.xpose.msra.mxu0 0
        %3546 = vmatprep.subr.bf16.mxu0 0
        %3547 = vmatpush1.bf16.xpose.msra.mxu0 0
        %3548 = vmatprep.subr.bf16.mxu0 0
        %3549 = vmatpush1.bf16.xpose.msra.mxu0 0
        %3550 = vmatprep.subr.bf16.mxu0 0
        %3551 = vmatpush1.bf16.xpose.msra.mxu0 0
        %3552 = vmatprep.subr.bf16.mxu0 0
        %3553 = vmatpush1.bf16.xpose.msra.mxu0 0
        %3554 = vmatprep.subr.bf16.mxu0 0
        %3555 = vmatpush1.bf16.xpose.msra.mxu0 0
        %3556 = vmatprep.subr.bf16.mxu0 0
        %3557 = vmatpush1.bf16.xpose.msra.mxu0 0
        %3558 = vmatprep.subr.bf16.mxu0 0
        %3559 = vmatpush1.bf16.xpose.msra.mxu0 0
        %3560 = vmatprep.subr.bf16.mxu0 0
        %3561 = vmatpush1.bf16.xpose.msra.mxu0 0
        %3562 = vmatprep.subr.bf16.mxu0 0
        %3563 = vmatpush1.bf16.xpose.msra.mxu0 0
        %3564 = vmatprep.subr.bf16.mxu0 0
        %3565 = vmatpush1.bf16.xpose.msra.mxu0 0
        %3566 = vmatprep.subr.bf16.mxu0 0
        %3567 = vmatpush1.bf16.xpose.msra.mxu0 0
        %3568 = vmatprep.subr.bf16.mxu0 0
        %3569 = vmatpush1.bf16.xpose.msra.mxu0 0
        %3570 = vmatprep.subr.bf16.mxu0 0
        %3571 = vmatpush1.bf16.xpose.msra.mxu0 0
        %3572 = vmatprep.mubr.bf16.mxu0 0
        %3573 = vmatmul.mubr.bf16.gmra.mrb[0].mxu0 %v3535
        %v3574 = vpop.f32.mrb[0].mxu0
        %v3575 = vadd.f32 %v827, %v3574
        %v3576 = vpop.f32.mrb[0].mxu0
        %v3577 = vpop.f32.mrb[0].mxu0
        %v3578 = vadd.f32 %v828, %v3577
        %v3579 = vpop.f32.mrb[0].mxu0
        %3580 = vdwg.mxu0
        %3581 = vrot.lane.b32.xlu0 %v1551, 64
        %v3582 = vpop.permute.xlu0 %3581
        %3583 = vrot.lane.b32.xlu0 %v1559, 64
        %v3584 = vpop.permute.xlu0 %3583
        %v3586 = vsel %vm1573, %v3582, 0
        %v3589 = vsel %vm1573, %v3584, 0
        %3591 = vmatprep.subr.bf16.mxu0 0
        %3592 = vmatpush1.bf16.xpose.msra.mxu0 %v3589
        %3593 = vmatprep.subr.bf16.mxu0 0
        %3594 = vmatpush1.bf16.xpose.msra.mxu0 0
        %3595 = vmatprep.subr.bf16.mxu0 0
        %3596 = vmatpush1.bf16.xpose.msra.mxu0 0
        %3597 = vmatprep.subr.bf16.mxu0 0
        %3598 = vmatpush1.bf16.xpose.msra.mxu0 0
        %3599 = vmatprep.subr.bf16.mxu0 0
        %3600 = vmatpush1.bf16.xpose.msra.mxu0 0
        %3601 = vmatprep.subr.bf16.mxu0 0
        %3602 = vmatpush1.bf16.xpose.msra.mxu0 0
        %3603 = vmatprep.subr.bf16.mxu0 0
        %3604 = vmatpush1.bf16.xpose.msra.mxu0 0
        %3605 = vmatprep.subr.bf16.mxu0 0
        %3606 = vmatpush1.bf16.xpose.msra.mxu0 0
        %3607 = vmatprep.subr.bf16.mxu0 0
        %3608 = vmatpush1.bf16.xpose.msra.mxu0 0
        %3609 = vmatprep.subr.bf16.mxu0 0
        %3610 = vmatpush1.bf16.xpose.msra.mxu0 0
        %3611 = vmatprep.subr.bf16.mxu0 0
        %3612 = vmatpush1.bf16.xpose.msra.mxu0 0
        %3613 = vmatprep.subr.bf16.mxu0 0
        %3614 = vmatpush1.bf16.xpose.msra.mxu0 0
        %3615 = vmatprep.subr.bf16.mxu0 0
        %3616 = vmatpush1.bf16.xpose.msra.mxu0 0
        %3617 = vmatprep.subr.bf16.mxu0 0
        %3618 = vmatpush1.bf16.xpose.msra.mxu0 0
        %3619 = vmatprep.subr.bf16.mxu0 0
        %3620 = vmatpush1.bf16.xpose.msra.mxu0 0
        %3621 = vmatprep.subr.bf16.mxu0 0
        %3622 = vmatpush1.bf16.xpose.msra.mxu0 0
        %3623 = vmatprep.mubr.bf16.mxu0 0
        %3624 = vmatmul.mubr.bf16.gmra.mrb[0].mxu0 %v3586
        %v3625 = vpop.f32.mrb[0].mxu0
        %v3626 = vadd.f32 %v829, %v3625
        %v3627 = vpop.f32.mrb[0].mxu0
        %v3628 = vpop.f32.mrb[0].mxu0
        %v3629 = vadd.f32 %v830, %v3628
        %v3630 = vpop.f32.mrb[0].mxu0
        %3631 = vdwg.mxu0
        %3632 = vrot.lane.b32.xlu0 %v1552, 64
        %v3633 = vpop.permute.xlu0 %3632
        %3634 = vrot.lane.b32.xlu0 %v1560, 64
        %v3635 = vpop.permute.xlu0 %3634
        %v3637 = vsel %vm1573, %v3633, 0
        %v3640 = vsel %vm1573, %v3635, 0
        %3642 = vmatprep.subr.bf16.mxu0 0
        %3643 = vmatpush1.bf16.xpose.msra.mxu0 %v3640
        %3644 = vmatprep.subr.bf16.mxu0 0
        %3645 = vmatpush1.bf16.xpose.msra.mxu0 0
        %3646 = vmatprep.subr.bf16.mxu0 0
        %3647 = vmatpush1.bf16.xpose.msra.mxu0 0
        %3648 = vmatprep.subr.bf16.mxu0 0
        %3649 = vmatpush1.bf16.xpose.msra.mxu0 0
        %3650 = vmatprep.subr.bf16.mxu0 0
        %3651 = vmatpush1.bf16.xpose.msra.mxu0 0
        %3652 = vmatprep.subr.bf16.mxu0 0
        %3653 = vmatpush1.bf16.xpose.msra.mxu0 0
        %3654 = vmatprep.subr.bf16.mxu0 0
        %3655 = vmatpush1.bf16.xpose.msra.mxu0 0
        %3656 = vmatprep.subr.bf16.mxu0 0
        %3657 = vmatpush1.bf16.xpose.msra.mxu0 0
        %3658 = vmatprep.subr.bf16.mxu0 0
        %3659 = vmatpush1.bf16.xpose.msra.mxu0 0
        %3660 = vmatprep.subr.bf16.mxu0 0
        %3661 = vmatpush1.bf16.xpose.msra.mxu0 0
        %3662 = vmatprep.subr.bf16.mxu0 0
        %3663 = vmatpush1.bf16.xpose.msra.mxu0 0
        %3664 = vmatprep.subr.bf16.mxu0 0
        %3665 = vmatpush1.bf16.xpose.msra.mxu0 0
        %3666 = vmatprep.subr.bf16.mxu0 0
        %3667 = vmatpush1.bf16.xpose.msra.mxu0 0
        %3668 = vmatprep.subr.bf16.mxu0 0
        %3669 = vmatpush1.bf16.xpose.msra.mxu0 0
        %3670 = vmatprep.subr.bf16.mxu0 0
        %3671 = vmatpush1.bf16.xpose.msra.mxu0 0
        %3672 = vmatprep.subr.bf16.mxu0 0
        %3673 = vmatpush1.bf16.xpose.msra.mxu0 0
        %3674 = vmatprep.mubr.bf16.mxu0 0
        %3675 = vmatmul.mubr.bf16.gmra.mrb[0].mxu0 %v3637
        %v3676 = vpop.f32.mrb[0].mxu0
        %v3677 = vadd.f32 %v831, %v3676
        %v3678 = vpop.f32.mrb[0].mxu0
        %v3679 = vpop.f32.mrb[0].mxu0
        %v3680 = vadd.f32 %v832, %v3679
        %v3681 = vpop.f32.mrb[0].mxu0
        %3682 = vdwg.mxu0
        %3683 = vrot.lane.b32.xlu0 %v1553, 64
        %v3684 = vpop.permute.xlu0 %3683
        %3685 = vrot.lane.b32.xlu0 %v1561, 64
        %v3686 = vpop.permute.xlu0 %3685
        %v3688 = vsel %vm1573, %v3684, 0
        %v3691 = vsel %vm1573, %v3686, 0
        %3693 = vmatprep.subr.bf16.mxu0 0
        %3694 = vmatpush1.bf16.xpose.msra.mxu0 %v3691
        %3695 = vmatprep.subr.bf16.mxu0 0
        %3696 = vmatpush1.bf16.xpose.msra.mxu0 0
        %3697 = vmatprep.subr.bf16.mxu0 0
        %3698 = vmatpush1.bf16.xpose.msra.mxu0 0
        %3699 = vmatprep.subr.bf16.mxu0 0
        %3700 = vmatpush1.bf16.xpose.msra.mxu0 0
        %3701 = vmatprep.subr.bf16.mxu0 0
        %3702 = vmatpush1.bf16.xpose.msra.mxu0 0
        %3703 = vmatprep.subr.bf16.mxu0 0
        %3704 = vmatpush1.bf16.xpose.msra.mxu0 0
        %3705 = vmatprep.subr.bf16.mxu0 0
        %3706 = vmatpush1.bf16.xpose.msra.mxu0 0
        %3707 = vmatprep.subr.bf16.mxu0 0
        %3708 = vmatpush1.bf16.xpose.msra.mxu0 0
        %3709 = vmatprep.subr.bf16.mxu0 0
        %3710 = vmatpush1.bf16.xpose.msra.mxu0 0
        %3711 = vmatprep.subr.bf16.mxu0 0
        %3712 = vmatpush1.bf16.xpose.msra.mxu0 0
        %3713 = vmatprep.subr.bf16.mxu0 0
        %3714 = vmatpush1.bf16.xpose.msra.mxu0 0
        %3715 = vmatprep.subr.bf16.mxu0 0
        %3716 = vmatpush1.bf16.xpose.msra.mxu0 0
        %3717 = vmatprep.subr.bf16.mxu0 0
        %3718 = vmatpush1.bf16.xpose.msra.mxu0 0
        %3719 = vmatprep.subr.bf16.mxu0 0
        %3720 = vmatpush1.bf16.xpose.msra.mxu0 0
        %3721 = vmatprep.subr.bf16.mxu0 0
        %3722 = vmatpush1.bf16.xpose.msra.mxu0 0
        %3723 = vmatprep.subr.bf16.mxu0 0
        %3724 = vmatpush1.bf16.xpose.msra.mxu0 0
        %3725 = vmatprep.mubr.bf16.mxu0 0
        %3726 = vmatmul.mubr.bf16.gmra.mrb[0].mxu0 %v3688
        %v3727 = vpop.f32.mrb[0].mxu0
        %v3728 = vadd.f32 %v833, %v3727
        %v3729 = vpop.f32.mrb[0].mxu0
        %v3730 = vpop.f32.mrb[0].mxu0
        %v3731 = vadd.f32 %v834, %v3730
        %v3732 = vpop.f32.mrb[0].mxu0
        %3733 = vdwg.mxu0
        %3734 = vrot.lane.b32.xlu0 %v1554, 64
        %v3735 = vpop.permute.xlu0 %3734
        %3736 = vrot.lane.b32.xlu0 %v1562, 64
        %v3737 = vpop.permute.xlu0 %3736
        %v3739 = vsel %vm1573, %v3735, 0
        %v3742 = vsel %vm1573, %v3737, 0
        %3744 = vmatprep.subr.bf16.mxu0 0
        %3745 = vmatpush1.bf16.xpose.msra.mxu0 %v3742
        %3746 = vmatprep.subr.bf16.mxu0 0
        %3747 = vmatpush1.bf16.xpose.msra.mxu0 0
        %3748 = vmatprep.subr.bf16.mxu0 0
        %3749 = vmatpush1.bf16.xpose.msra.mxu0 0
        %3750 = vmatprep.subr.bf16.mxu0 0
        %3751 = vmatpush1.bf16.xpose.msra.mxu0 0
        %3752 = vmatprep.subr.bf16.mxu0 0
        %3753 = vmatpush1.bf16.xpose.msra.mxu0 0
        %3754 = vmatprep.subr.bf16.mxu0 0
        %3755 = vmatpush1.bf16.xpose.msra.mxu0 0
        %3756 = vmatprep.subr.bf16.mxu0 0
        %3757 = vmatpush1.bf16.xpose.msra.mxu0 0
        %3758 = vmatprep.subr.bf16.mxu0 0
        %3759 = vmatpush1.bf16.xpose.msra.mxu0 0
        %3760 = vmatprep.subr.bf16.mxu0 0
        %3761 = vmatpush1.bf16.xpose.msra.mxu0 0
        %3762 = vmatprep.subr.bf16.mxu0 0
        %3763 = vmatpush1.bf16.xpose.msra.mxu0 0
        %3764 = vmatprep.subr.bf16.mxu0 0
        %3765 = vmatpush1.bf16.xpose.msra.mxu0 0
        %3766 = vmatprep.subr.bf16.mxu0 0
        %3767 = vmatpush1.bf16.xpose.msra.mxu0 0
        %3768 = vmatprep.subr.bf16.mxu0 0
        %3769 = vmatpush1.bf16.xpose.msra.mxu0 0
        %3770 = vmatprep.subr.bf16.mxu0 0
        %3771 = vmatpush1.bf16.xpose.msra.mxu0 0
        %3772 = vmatprep.subr.bf16.mxu0 0
        %3773 = vmatpush1.bf16.xpose.msra.mxu0 0
        %3774 = vmatprep.subr.bf16.mxu0 0
        %3775 = vmatpush1.bf16.xpose.msra.mxu0 0
        %3776 = vmatprep.mubr.bf16.mxu0 0
        %3777 = vmatmul.mubr.bf16.gmra.mrb[0].mxu0 %v3739
        %v3778 = vpop.f32.mrb[0].mxu0
        %v3779 = vadd.f32 %v835, %v3778
        %v3780 = vpop.f32.mrb[0].mxu0
        %v3781 = vpop.f32.mrb[0].mxu0
        %v3782 = vadd.f32 %v836, %v3781
        %v3783 = vpop.f32.mrb[0].mxu0
        %3784 = vdwg.mxu0
        %3785 = vrot.lane.b32.xlu0 %v1555, 64
        %v3786 = vpop.permute.xlu0 %3785
        %3787 = vrot.lane.b32.xlu0 %v1563, 64
        %v3788 = vpop.permute.xlu0 %3787
        %v3790 = vsel %vm1573, %v3786, 0
        %v3793 = vsel %vm1573, %v3788, 0
        %3795 = vmatprep.subr.bf16.mxu0 0
        %3796 = vmatpush1.bf16.xpose.msra.mxu0 %v3793
        %3797 = vmatprep.subr.bf16.mxu0 0
        %3798 = vmatpush1.bf16.xpose.msra.mxu0 0
        %3799 = vmatprep.subr.bf16.mxu0 0
        %3800 = vmatpush1.bf16.xpose.msra.mxu0 0
        %3801 = vmatprep.subr.bf16.mxu0 0
        %3802 = vmatpush1.bf16.xpose.msra.mxu0 0
        %3803 = vmatprep.subr.bf16.mxu0 0
        %3804 = vmatpush1.bf16.xpose.msra.mxu0 0
        %3805 = vmatprep.subr.bf16.mxu0 0
        %3806 = vmatpush1.bf16.xpose.msra.mxu0 0
        %3807 = vmatprep.subr.bf16.mxu0 0
        %3808 = vmatpush1.bf16.xpose.msra.mxu0 0
        %3809 = vmatprep.subr.bf16.mxu0 0
        %3810 = vmatpush1.bf16.xpose.msra.mxu0 0
        %3811 = vmatprep.subr.bf16.mxu0 0
        %3812 = vmatpush1.bf16.xpose.msra.mxu0 0
        %3813 = vmatprep.subr.bf16.mxu0 0
        %3814 = vmatpush1.bf16.xpose.msra.mxu0 0
        %3815 = vmatprep.subr.bf16.mxu0 0
        %3816 = vmatpush1.bf16.xpose.msra.mxu0 0
        %3817 = vmatprep.subr.bf16.mxu0 0
        %3818 = vmatpush1.bf16.xpose.msra.mxu0 0
        %3819 = vmatprep.subr.bf16.mxu0 0
        %3820 = vmatpush1.bf16.xpose.msra.mxu0 0
        %3821 = vmatprep.subr.bf16.mxu0 0
        %3822 = vmatpush1.bf16.xpose.msra.mxu0 0
        %3823 = vmatprep.subr.bf16.mxu0 0
        %3824 = vmatpush1.bf16.xpose.msra.mxu0 0
        %3825 = vmatprep.subr.bf16.mxu0 0
        %3826 = vmatpush1.bf16.xpose.msra.mxu0 0
        %3827 = vmatprep.mubr.bf16.mxu0 0
        %3828 = vmatmul.mubr.bf16.gmra.mrb[0].mxu0 %v3790
        %v3829 = vpop.f32.mrb[0].mxu0
        %v3830 = vadd.f32 %v837, %v3829
        %v3831 = vpop.f32.mrb[0].mxu0
        %v3832 = vpop.f32.mrb[0].mxu0
        %v3833 = vadd.f32 %v838, %v3832
        %v3834 = vpop.f32.mrb[0].mxu0
        %3835 = vdwg.mxu0
        %3836 = vrot.lane.b32.xlu0 %v1556, 64
        %v3837 = vpop.permute.xlu0 %3836
        %3838 = vrot.lane.b32.xlu0 %v1564, 64
        %v3839 = vpop.permute.xlu0 %3838
        %v3841 = vsel %vm1573, %v3837, 0
        %v3844 = vsel %vm1573, %v3839, 0
        %3846 = vmatprep.subr.bf16.mxu0 0
        %3847 = vmatpush1.bf16.xpose.msra.mxu0 %v3844
        %3848 = vmatprep.subr.bf16.mxu0 0
        %3849 = vmatpush1.bf16.xpose.msra.mxu0 0
        %3850 = vmatprep.subr.bf16.mxu0 0
        %3851 = vmatpush1.bf16.xpose.msra.mxu0 0
        %3852 = vmatprep.subr.bf16.mxu0 0
        %3853 = vmatpush1.bf16.xpose.msra.mxu0 0
        %3854 = vmatprep.subr.bf16.mxu0 0
        %3855 = vmatpush1.bf16.xpose.msra.mxu0 0
        %3856 = vmatprep.subr.bf16.mxu0 0
        %3857 = vmatpush1.bf16.xpose.msra.mxu0 0
        %3858 = vmatprep.subr.bf16.mxu0 0
        %3859 = vmatpush1.bf16.xpose.msra.mxu0 0
        %3860 = vmatprep.subr.bf16.mxu0 0
        %3861 = vmatpush1.bf16.xpose.msra.mxu0 0
        %3862 = vmatprep.subr.bf16.mxu0 0
        %3863 = vmatpush1.bf16.xpose.msra.mxu0 0
        %3864 = vmatprep.subr.bf16.mxu0 0
        %3865 = vmatpush1.bf16.xpose.msra.mxu0 0
        %3866 = vmatprep.subr.bf16.mxu0 0
        %3867 = vmatpush1.bf16.xpose.msra.mxu0 0
        %3868 = vmatprep.subr.bf16.mxu0 0
        %3869 = vmatpush1.bf16.xpose.msra.mxu0 0
        %3870 = vmatprep.subr.bf16.mxu0 0
        %3871 = vmatpush1.bf16.xpose.msra.mxu0 0
        %3872 = vmatprep.subr.bf16.mxu0 0
        %3873 = vmatpush1.bf16.xpose.msra.mxu0 0
        %3874 = vmatprep.subr.bf16.mxu0 0
        %3875 = vmatpush1.bf16.xpose.msra.mxu0 0
        %3876 = vmatprep.subr.bf16.mxu0 0
        %3877 = vmatpush1.bf16.xpose.msra.mxu0 0
        %3878 = vmatprep.mubr.bf16.mxu0 0
        %3879 = vmatmul.mubr.bf16.gmra.mrb[0].mxu0 %v3841
        %v3880 = vpop.f32.mrb[0].mxu0
        %v3881 = vadd.f32 %v839, %v3880
        %v3882 = vpop.f32.mrb[0].mxu0
        %v3883 = vpop.f32.mrb[0].mxu0
        %v3884 = vadd.f32 %v840, %v3883
        %v3885 = vpop.f32.mrb[0].mxu0
        %3886 = vdwg.mxu0
        %v3887 = vsel %vm1950, %v3524, -inf
        %3888 = vmax.xlane.f32.xlu0 %v3887
        %v3889 = vpop.xlane.xlu0 %3888
        %v3890 = vsel %vm1950, %v3527, -inf
        %3891 = vmax.xlane.f32.xlu0 %v3890
        %v3892 = vpop.xlane.xlu0 %3891
        %v3893 = vsel %vm1950, %v3575, -inf
        %3894 = vmax.xlane.f32.xlu0 %v3893
        %v3895 = vpop.xlane.xlu0 %3894
        %v3896 = vsel %vm1950, %v3578, -inf
        %3897 = vmax.xlane.f32.xlu0 %v3896
        %v3898 = vpop.xlane.xlu0 %3897
        %v3899 = vsel %vm1950, %v3626, -inf
        %3900 = vmax.xlane.f32.xlu0 %v3899
        %v3901 = vpop.xlane.xlu0 %3900
        %v3902 = vsel %vm1950, %v3629, -inf
        %3903 = vmax.xlane.f32.xlu0 %v3902
        %v3904 = vpop.xlane.xlu0 %3903
        %v3905 = vsel %vm1950, %v3677, -inf
        %3906 = vmax.xlane.f32.xlu0 %v3905
        %v3907 = vpop.xlane.xlu0 %3906
        %v3908 = vsel %vm1950, %v3680, -inf
        %3909 = vmax.xlane.f32.xlu0 %v3908
        %v3910 = vpop.xlane.xlu0 %3909
        %v3911 = vsel %vm1950, %v3728, -inf
        %3912 = vmax.xlane.f32.xlu0 %v3911
        %v3913 = vpop.xlane.xlu0 %3912
        %v3914 = vsel %vm1950, %v3731, -inf
        %3915 = vmax.xlane.f32.xlu0 %v3914
        %v3916 = vpop.xlane.xlu0 %3915
        %v3917 = vsel %vm1950, %v3779, -inf
        %3918 = vmax.xlane.f32.xlu0 %v3917
        %v3919 = vpop.xlane.xlu0 %3918
        %v3920 = vsel %vm1950, %v3782, -inf
        %3921 = vmax.xlane.f32.xlu0 %v3920
        %v3922 = vpop.xlane.xlu0 %3921
        %v3923 = vsel %vm1950, %v3830, -inf
        %3924 = vmax.xlane.f32.xlu0 %v3923
        %v3925 = vpop.xlane.xlu0 %3924
        %v3926 = vsel %vm1950, %v3833, -inf
        %3927 = vmax.xlane.f32.xlu0 %v3926
        %v3928 = vpop.xlane.xlu0 %3927
        %v3929 = vsel %vm1950, %v3881, -inf
        %3930 = vmax.xlane.f32.xlu0 %v3929
        %v3931 = vpop.xlane.xlu0 %3930
        %v3932 = vsel %vm1950, %v3884, -inf
        %3933 = vmax.xlane.f32.xlu0 %v3932
        %v3934 = vpop.xlane.xlu0 %3933
        %v3935 = vsub.f32 %v3524, %v3889
        %v3936 = vsub.f32 %v3527, %v3892
        %v3937 = vsub.f32 %v3575, %v3895
        %v3938 = vsub.f32 %v3578, %v3898
        %v3939 = vsub.f32 %v3626, %v3901
        %v3940 = vsub.f32 %v3629, %v3904
        %v3941 = vsub.f32 %v3677, %v3907
        %v3942 = vsub.f32 %v3680, %v3910
        %v3943 = vsub.f32 %v3728, %v3913
        %v3944 = vsub.f32 %v3731, %v3916
        %v3945 = vsub.f32 %v3779, %v3919
        %v3946 = vsub.f32 %v3782, %v3922
        %v3947 = vsub.f32 %v3830, %v3925
        %v3948 = vsub.f32 %v3833, %v3928
        %v3949 = vsub.f32 %v3881, %v3931
        %v3950 = vsub.f32 %v3884, %v3934
        %v3951 = vmul.f32 %v3935, 1.442695
        %v3952 = vpow.pop %v3951
        %v3953 = vmul.f32 %v3936, 1.442695
        %v3954 = vpow.pop %v3953
        %v3955 = vmul.f32 %v3937, 1.442695
        %v3956 = vpow.pop %v3955
        %v3957 = vmul.f32 %v3938, 1.442695
        %v3958 = vpow.pop %v3957
        %v3959 = vmul.f32 %v3939, 1.442695
        %v3960 = vpow.pop %v3959
        %v3961 = vmul.f32 %v3940, 1.442695
        %v3962 = vpow.pop %v3961
        %v3963 = vmul.f32 %v3941, 1.442695
        %v3964 = vpow.pop %v3963
        %v3965 = vmul.f32 %v3942, 1.442695
        %v3966 = vpow.pop %v3965
        %v3967 = vmul.f32 %v3943, 1.442695
        %v3968 = vpow.pop %v3967
        %v3969 = vmul.f32 %v3944, 1.442695
        %v3970 = vpow.pop %v3969
        %v3971 = vmul.f32 %v3945, 1.442695
        %v3972 = vpow.pop %v3971
        %v3973 = vmul.f32 %v3946, 1.442695
        %v3974 = vpow.pop %v3973
        %v3975 = vmul.f32 %v3947, 1.442695
        %v3976 = vpow.pop %v3975
        %v3977 = vmul.f32 %v3948, 1.442695
        %v3978 = vpow.pop %v3977
        %v3979 = vmul.f32 %v3949, 1.442695
        %v3980 = vpow.pop %v3979
        %v3981 = vmul.f32 %v3950, 1.442695
        %v3982 = vpow.pop %v3981
        %v3983 = vsel %vm1950, %v3952, 0.0
        %3984 = vadd.xlane.f32.xlu0 %v3983
        %v3985 = vpop.xlane.xlu0 %3984
        %v3986 = vsel %vm1950, %v3954, 0.0
        %3987 = vadd.xlane.f32.xlu0 %v3986
        %v3988 = vpop.xlane.xlu0 %3987
        %v3989 = vsel %vm1950, %v3956, 0.0
        %3990 = vadd.xlane.f32.xlu0 %v3989
        %v3991 = vpop.xlane.xlu0 %3990
        %v3992 = vsel %vm1950, %v3958, 0.0
        %3993 = vadd.xlane.f32.xlu0 %v3992
        %v3994 = vpop.xlane.xlu0 %3993
        %v3995 = vsel %vm1950, %v3960, 0.0
        %3996 = vadd.xlane.f32.xlu0 %v3995
        %v3997 = vpop.xlane.xlu0 %3996
        %v3998 = vsel %vm1950, %v3962, 0.0
        %3999 = vadd.xlane.f32.xlu0 %v3998
        %v4000 = vpop.xlane.xlu0 %3999
        %v4001 = vsel %vm1950, %v3964, 0.0
        %4002 = vadd.xlane.f32.xlu0 %v4001
        %v4003 = vpop.xlane.xlu0 %4002
        %v4004 = vsel %vm1950, %v3966, 0.0
        %4005 = vadd.xlane.f32.xlu0 %v4004
        %v4006 = vpop.xlane.xlu0 %4005
        %v4007 = vsel %vm1950, %v3968, 0.0
        %4008 = vadd.xlane.f32.xlu0 %v4007
        %v4009 = vpop.xlane.xlu0 %4008
        %v4010 = vsel %vm1950, %v3970, 0.0
        %4011 = vadd.xlane.f32.xlu0 %v4010
        %v4012 = vpop.xlane.xlu0 %4011
        %v4013 = vsel %vm1950, %v3972, 0.0
        %4014 = vadd.xlane.f32.xlu0 %v4013
        %v4015 = vpop.xlane.xlu0 %4014
        %v4016 = vsel %vm1950, %v3974, 0.0
        %4017 = vadd.xlane.f32.xlu0 %v4016
        %v4018 = vpop.xlane.xlu0 %4017
        %v4019 = vsel %vm1950, %v3976, 0.0
        %4020 = vadd.xlane.f32.xlu0 %v4019
        %v4021 = vpop.xlane.xlu0 %4020
        %v4022 = vsel %vm1950, %v3978, 0.0
        %4023 = vadd.xlane.f32.xlu0 %v4022
        %v4024 = vpop.xlane.xlu0 %4023
        %v4025 = vsel %vm1950, %v3980, 0.0
        %4026 = vadd.xlane.f32.xlu0 %v4025
        %v4027 = vpop.xlane.xlu0 %4026
        %v4028 = vsel %vm1950, %v3982, 0.0
        %4029 = vadd.xlane.f32.xlu0 %v4028
        %v4030 = vpop.xlane.xlu0 %4029
        %v4031 = vrcp.pop %v3985
        %v4032 = vrcp.pop %v3988
        %v4033 = vrcp.pop %v3991
        %v4034 = vrcp.pop %v3994
        %v4035 = vrcp.pop %v3997
        %v4036 = vrcp.pop %v4000
        %v4037 = vrcp.pop %v4003
        %v4038 = vrcp.pop %v4006
        %v4039 = vrcp.pop %v4009
        %v4040 = vrcp.pop %v4012
        %v4041 = vrcp.pop %v4015
        %v4042 = vrcp.pop %v4018
        %v4043 = vrcp.pop %v4021
        %v4044 = vrcp.pop %v4024
        %v4045 = vrcp.pop %v4027
        %v4046 = vrcp.pop %v4030
        %v4047 = vmul.f32 %v3952, %v4031
        %v4048 = vmul.f32 %v3954, %v4032
        %v4049 = vmul.f32 %v3956, %v4033
        %v4050 = vmul.f32 %v3958, %v4034
        %v4051 = vmul.f32 %v3960, %v4035
        %v4052 = vmul.f32 %v3962, %v4036
        %v4053 = vmul.f32 %v3964, %v4037
        %v4054 = vmul.f32 %v3966, %v4038
        %v4055 = vmul.f32 %v3968, %v4039
        %v4056 = vmul.f32 %v3970, %v4040
        %v4057 = vmul.f32 %v3972, %v4041
        %v4058 = vmul.f32 %v3974, %v4042
        %v4059 = vmul.f32 %v3976, %v4043
        %v4060 = vmul.f32 %v3978, %v4044
        %v4061 = vmul.f32 %v3980, %v4045
        %v4062 = vmul.f32 %v3982, %v4046
        %v4063 = vpack.c.bf16 %v4048, %v4047
        %v4064 = vpack.c.bf16 %v4050, %v4049
        %v4065 = vpack.c.bf16 %v4052, %v4051
        %v4066 = vpack.c.bf16 %v4054, %v4053
        %v4067 = vpack.c.bf16 %v4056, %v4055
        %v4068 = vpack.c.bf16 %v4058, %v4057
        %v4069 = vpack.c.bf16 %v4060, %v4059
        %v4070 = vpack.c.bf16 %v4062, %v4061
        %4071 = vrot.lane.b32.xlu0 %v1565, 64
        %v4072 = vpop.permute.xlu0 %4071
        %v4075 = vsel %vm1950, %v4063, 0
        %4077 = vmatprep.subr.bf16.mxu0 0
        %4078 = vmatpush1.bf16.msra.mxu0 %v4072
        %4079 = vmatprep.subr.bf16.mxu0 0
        %4080 = vmatpush1.bf16.msra.mxu0 0
        %4081 = vmatprep.subr.bf16.mxu0 0
        %4082 = vmatpush1.bf16.msra.mxu0 0
        %4083 = vmatprep.subr.bf16.mxu0 0
        %4084 = vmatpush1.bf16.msra.mxu0 0
        %4085 = vmatprep.subr.bf16.mxu0 0
        %4086 = vmatpush1.bf16.msra.mxu0 0
        %4087 = vmatprep.subr.bf16.mxu0 0
        %4088 = vmatpush1.bf16.msra.mxu0 0
        %4089 = vmatprep.subr.bf16.mxu0 0
        %4090 = vmatpush1.bf16.msra.mxu0 0
        %4091 = vmatprep.subr.bf16.mxu0 0
        %4092 = vmatpush1.bf16.msra.mxu0 0
        %4093 = vmatprep.subr.bf16.mxu0 0
        %4094 = vmatpush1.bf16.msra.mxu0 0
        %4095 = vmatprep.subr.bf16.mxu0 0
        %4096 = vmatpush1.bf16.msra.mxu0 0
        %4097 = vmatprep.subr.bf16.mxu0 0
        %4098 = vmatpush1.bf16.msra.mxu0 0
        %4099 = vmatprep.subr.bf16.mxu0 0
        %4100 = vmatpush1.bf16.msra.mxu0 0
        %4101 = vmatprep.subr.bf16.mxu0 0
        %4102 = vmatpush1.bf16.msra.mxu0 0
        %4103 = vmatprep.subr.bf16.mxu0 0
        %4104 = vmatpush1.bf16.msra.mxu0 0
        %4105 = vmatprep.subr.bf16.mxu0 0
        %4106 = vmatpush1.bf16.msra.mxu0 0
        %4107 = vmatprep.subr.bf16.mxu0 0
        %4108 = vmatpush1.bf16.msra.mxu0 0
        %4109 = vmatprep.mubr.bf16.mxu0 0
        %4110 = vmatmul.mubr.bf16.gmra.mrb[0].mxu0 %v4075
        %v4111 = vpop.f32.mrb[0].mxu0
        %v4112 = vadd.f32 0.0, %v4111
        %v4113 = vpop.f32.mrb[0].mxu0
        %v4114 = vpop.f32.mrb[0].mxu0
        %v4115 = vadd.f32 0.0, %v4114
        %v4116 = vpop.f32.mrb[0].mxu0
        %4117 = vdwg.mxu0
        %4118 = vrot.lane.b32.xlu0 %v1566, 64
        %v4119 = vpop.permute.xlu0 %4118
        %v4122 = vsel %vm1950, %v4064, 0
        %4124 = vmatprep.subr.bf16.mxu0 0
        %4125 = vmatpush1.bf16.msra.mxu0 %v4119
        %4126 = vmatprep.subr.bf16.mxu0 0
        %4127 = vmatpush1.bf16.msra.mxu0 0
        %4128 = vmatprep.subr.bf16.mxu0 0
        %4129 = vmatpush1.bf16.msra.mxu0 0
        %4130 = vmatprep.subr.bf16.mxu0 0
        %4131 = vmatpush1.bf16.msra.mxu0 0
        %4132 = vmatprep.subr.bf16.mxu0 0
        %4133 = vmatpush1.bf16.msra.mxu0 0
        %4134 = vmatprep.subr.bf16.mxu0 0
        %4135 = vmatpush1.bf16.msra.mxu0 0
        %4136 = vmatprep.subr.bf16.mxu0 0
        %4137 = vmatpush1.bf16.msra.mxu0 0
        %4138 = vmatprep.subr.bf16.mxu0 0
        %4139 = vmatpush1.bf16.msra.mxu0 0
        %4140 = vmatprep.subr.bf16.mxu0 0
        %4141 = vmatpush1.bf16.msra.mxu0 0
        %4142 = vmatprep.subr.bf16.mxu0 0
        %4143 = vmatpush1.bf16.msra.mxu0 0
        %4144 = vmatprep.subr.bf16.mxu0 0
        %4145 = vmatpush1.bf16.msra.mxu0 0
        %4146 = vmatprep.subr.bf16.mxu0 0
        %4147 = vmatpush1.bf16.msra.mxu0 0
        %4148 = vmatprep.subr.bf16.mxu0 0
        %4149 = vmatpush1.bf16.msra.mxu0 0
        %4150 = vmatprep.subr.bf16.mxu0 0
        %4151 = vmatpush1.bf16.msra.mxu0 0
        %4152 = vmatprep.subr.bf16.mxu0 0
        %4153 = vmatpush1.bf16.msra.mxu0 0
        %4154 = vmatprep.subr.bf16.mxu0 0
        %4155 = vmatpush1.bf16.msra.mxu0 0
        %4156 = vmatprep.mubr.bf16.mxu0 0
        %4157 = vmatmul.mubr.bf16.gmra.mrb[0].mxu0 %v4122
        %v4158 = vpop.f32.mrb[0].mxu0
        %v4159 = vadd.f32 0.0, %v4158
        %v4160 = vpop.f32.mrb[0].mxu0
        %v4161 = vpop.f32.mrb[0].mxu0
        %v4162 = vadd.f32 0.0, %v4161
        %v4163 = vpop.f32.mrb[0].mxu0
        %4164 = vdwg.mxu0
        %4165 = vrot.lane.b32.xlu0 %v1567, 64
        %v4166 = vpop.permute.xlu0 %4165
        %v4169 = vsel %vm1950, %v4065, 0
        %4171 = vmatprep.subr.bf16.mxu0 0
        %4172 = vmatpush1.bf16.msra.mxu0 %v4166
        %4173 = vmatprep.subr.bf16.mxu0 0
        %4174 = vmatpush1.bf16.msra.mxu0 0
        %4175 = vmatprep.subr.bf16.mxu0 0
        %4176 = vmatpush1.bf16.msra.mxu0 0
        %4177 = vmatprep.subr.bf16.mxu0 0
        %4178 = vmatpush1.bf16.msra.mxu0 0
        %4179 = vmatprep.subr.bf16.mxu0 0
        %4180 = vmatpush1.bf16.msra.mxu0 0
        %4181 = vmatprep.subr.bf16.mxu0 0
        %4182 = vmatpush1.bf16.msra.mxu0 0
        %4183 = vmatprep.subr.bf16.mxu0 0
        %4184 = vmatpush1.bf16.msra.mxu0 0
        %4185 = vmatprep.subr.bf16.mxu0 0
        %4186 = vmatpush1.bf16.msra.mxu0 0
        %4187 = vmatprep.subr.bf16.mxu0 0
        %4188 = vmatpush1.bf16.msra.mxu0 0
        %4189 = vmatprep.subr.bf16.mxu0 0
        %4190 = vmatpush1.bf16.msra.mxu0 0
        %4191 = vmatprep.subr.bf16.mxu0 0
        %4192 = vmatpush1.bf16.msra.mxu0 0
        %4193 = vmatprep.subr.bf16.mxu0 0
        %4194 = vmatpush1.bf16.msra.mxu0 0
        %4195 = vmatprep.subr.bf16.mxu0 0
        %4196 = vmatpush1.bf16.msra.mxu0 0
        %4197 = vmatprep.subr.bf16.mxu0 0
        %4198 = vmatpush1.bf16.msra.mxu0 0
        %4199 = vmatprep.subr.bf16.mxu0 0
        %4200 = vmatpush1.bf16.msra.mxu0 0
        %4201 = vmatprep.subr.bf16.mxu0 0
        %4202 = vmatpush1.bf16.msra.mxu0 0
        %4203 = vmatprep.mubr.bf16.mxu0 0
        %4204 = vmatmul.mubr.bf16.gmra.mrb[0].mxu0 %v4169
        %v4205 = vpop.f32.mrb[0].mxu0
        %v4206 = vadd.f32 0.0, %v4205
        %v4207 = vpop.f32.mrb[0].mxu0
        %v4208 = vpop.f32.mrb[0].mxu0
        %v4209 = vadd.f32 0.0, %v4208
        %v4210 = vpop.f32.mrb[0].mxu0
        %4211 = vdwg.mxu0
        %4212 = vrot.lane.b32.xlu0 %v1568, 64
        %v4213 = vpop.permute.xlu0 %4212
        %v4216 = vsel %vm1950, %v4066, 0
        %4218 = vmatprep.subr.bf16.mxu0 0
        %4219 = vmatpush1.bf16.msra.mxu0 %v4213
        %4220 = vmatprep.subr.bf16.mxu0 0
        %4221 = vmatpush1.bf16.msra.mxu0 0
        %4222 = vmatprep.subr.bf16.mxu0 0
        %4223 = vmatpush1.bf16.msra.mxu0 0
        %4224 = vmatprep.subr.bf16.mxu0 0
        %4225 = vmatpush1.bf16.msra.mxu0 0
        %4226 = vmatprep.subr.bf16.mxu0 0
        %4227 = vmatpush1.bf16.msra.mxu0 0
        %4228 = vmatprep.subr.bf16.mxu0 0
        %4229 = vmatpush1.bf16.msra.mxu0 0
        %4230 = vmatprep.subr.bf16.mxu0 0
        %4231 = vmatpush1.bf16.msra.mxu0 0
        %4232 = vmatprep.subr.bf16.mxu0 0
        %4233 = vmatpush1.bf16.msra.mxu0 0
        %4234 = vmatprep.subr.bf16.mxu0 0
        %4235 = vmatpush1.bf16.msra.mxu0 0
        %4236 = vmatprep.subr.bf16.mxu0 0
        %4237 = vmatpush1.bf16.msra.mxu0 0
        %4238 = vmatprep.subr.bf16.mxu0 0
        %4239 = vmatpush1.bf16.msra.mxu0 0
        %4240 = vmatprep.subr.bf16.mxu0 0
        %4241 = vmatpush1.bf16.msra.mxu0 0
        %4242 = vmatprep.subr.bf16.mxu0 0
        %4243 = vmatpush1.bf16.msra.mxu0 0
        %4244 = vmatprep.subr.bf16.mxu0 0
        %4245 = vmatpush1.bf16.msra.mxu0 0
        %4246 = vmatprep.subr.bf16.mxu0 0
        %4247 = vmatpush1.bf16.msra.mxu0 0
        %4248 = vmatprep.subr.bf16.mxu0 0
        %4249 = vmatpush1.bf16.msra.mxu0 0
        %4250 = vmatprep.mubr.bf16.mxu0 0
        %4251 = vmatmul.mubr.bf16.gmra.mrb[0].mxu0 %v4216
        %v4252 = vpop.f32.mrb[0].mxu0
        %v4253 = vadd.f32 0.0, %v4252
        %v4254 = vpop.f32.mrb[0].mxu0
        %v4255 = vpop.f32.mrb[0].mxu0
        %v4256 = vadd.f32 0.0, %v4255
        %v4257 = vpop.f32.mrb[0].mxu0
        %4258 = vdwg.mxu0
        %4259 = vrot.lane.b32.xlu0 %v1569, 64
        %v4260 = vpop.permute.xlu0 %4259
        %v4263 = vsel %vm1950, %v4067, 0
        %4265 = vmatprep.subr.bf16.mxu0 0
        %4266 = vmatpush1.bf16.msra.mxu0 %v4260
        %4267 = vmatprep.subr.bf16.mxu0 0
        %4268 = vmatpush1.bf16.msra.mxu0 0
        %4269 = vmatprep.subr.bf16.mxu0 0
        %4270 = vmatpush1.bf16.msra.mxu0 0
        %4271 = vmatprep.subr.bf16.mxu0 0
        %4272 = vmatpush1.bf16.msra.mxu0 0
        %4273 = vmatprep.subr.bf16.mxu0 0
        %4274 = vmatpush1.bf16.msra.mxu0 0
        %4275 = vmatprep.subr.bf16.mxu0 0
        %4276 = vmatpush1.bf16.msra.mxu0 0
        %4277 = vmatprep.subr.bf16.mxu0 0
        %4278 = vmatpush1.bf16.msra.mxu0 0
        %4279 = vmatprep.subr.bf16.mxu0 0
        %4280 = vmatpush1.bf16.msra.mxu0 0
        %4281 = vmatprep.subr.bf16.mxu0 0
        %4282 = vmatpush1.bf16.msra.mxu0 0
        %4283 = vmatprep.subr.bf16.mxu0 0
        %4284 = vmatpush1.bf16.msra.mxu0 0
        %4285 = vmatprep.subr.bf16.mxu0 0
        %4286 = vmatpush1.bf16.msra.mxu0 0
        %4287 = vmatprep.subr.bf16.mxu0 0
        %4288 = vmatpush1.bf16.msra.mxu0 0
        %4289 = vmatprep.subr.bf16.mxu0 0
        %4290 = vmatpush1.bf16.msra.mxu0 0
        %4291 = vmatprep.subr.bf16.mxu0 0
        %4292 = vmatpush1.bf16.msra.mxu0 0
        %4293 = vmatprep.subr.bf16.mxu0 0
        %4294 = vmatpush1.bf16.msra.mxu0 0
        %4295 = vmatprep.subr.bf16.mxu0 0
        %4296 = vmatpush1.bf16.msra.mxu0 0
        %4297 = vmatprep.mubr.bf16.mxu0 0
        %4298 = vmatmul.mubr.bf16.gmra.mrb[0].mxu0 %v4263
        %v4299 = vpop.f32.mrb[0].mxu0
        %v4300 = vadd.f32 0.0, %v4299
        %v4301 = vpop.f32.mrb[0].mxu0
        %v4302 = vpop.f32.mrb[0].mxu0
        %v4303 = vadd.f32 0.0, %v4302
        %v4304 = vpop.f32.mrb[0].mxu0
        %4305 = vdwg.mxu0
        %4306 = vrot.lane.b32.xlu0 %v1570, 64
        %v4307 = vpop.permute.xlu0 %4306
        %v4310 = vsel %vm1950, %v4068, 0
        %4312 = vmatprep.subr.bf16.mxu0 0
        %4313 = vmatpush1.bf16.msra.mxu0 %v4307
        %4314 = vmatprep.subr.bf16.mxu0 0
        %4315 = vmatpush1.bf16.msra.mxu0 0
        %4316 = vmatprep.subr.bf16.mxu0 0
        %4317 = vmatpush1.bf16.msra.mxu0 0
        %4318 = vmatprep.subr.bf16.mxu0 0
        %4319 = vmatpush1.bf16.msra.mxu0 0
        %4320 = vmatprep.subr.bf16.mxu0 0
        %4321 = vmatpush1.bf16.msra.mxu0 0
        %4322 = vmatprep.subr.bf16.mxu0 0
        %4323 = vmatpush1.bf16.msra.mxu0 0
        %4324 = vmatprep.subr.bf16.mxu0 0
        %4325 = vmatpush1.bf16.msra.mxu0 0
        %4326 = vmatprep.subr.bf16.mxu0 0
        %4327 = vmatpush1.bf16.msra.mxu0 0
        %4328 = vmatprep.subr.bf16.mxu0 0
        %4329 = vmatpush1.bf16.msra.mxu0 0
        %4330 = vmatprep.subr.bf16.mxu0 0
        %4331 = vmatpush1.bf16.msra.mxu0 0
        %4332 = vmatprep.subr.bf16.mxu0 0
        %4333 = vmatpush1.bf16.msra.mxu0 0
        %4334 = vmatprep.subr.bf16.mxu0 0
        %4335 = vmatpush1.bf16.msra.mxu0 0
        %4336 = vmatprep.subr.bf16.mxu0 0
        %4337 = vmatpush1.bf16.msra.mxu0 0
        %4338 = vmatprep.subr.bf16.mxu0 0
        %4339 = vmatpush1.bf16.msra.mxu0 0
        %4340 = vmatprep.subr.bf16.mxu0 0
        %4341 = vmatpush1.bf16.msra.mxu0 0
        %4342 = vmatprep.subr.bf16.mxu0 0
        %4343 = vmatpush1.bf16.msra.mxu0 0
        %4344 = vmatprep.mubr.bf16.mxu0 0
        %4345 = vmatmul.mubr.bf16.gmra.mrb[0].mxu0 %v4310
        %v4346 = vpop.f32.mrb[0].mxu0
        %v4347 = vadd.f32 0.0, %v4346
        %v4348 = vpop.f32.mrb[0].mxu0
        %v4349 = vpop.f32.mrb[0].mxu0
        %v4350 = vadd.f32 0.0, %v4349
        %v4351 = vpop.f32.mrb[0].mxu0
        %4352 = vdwg.mxu0
        %4353 = vrot.lane.b32.xlu0 %v1571, 64
        %v4354 = vpop.permute.xlu0 %4353
        %v4357 = vsel %vm1950, %v4069, 0
        %4359 = vmatprep.subr.bf16.mxu0 0
        %4360 = vmatpush1.bf16.msra.mxu0 %v4354
        %4361 = vmatprep.subr.bf16.mxu0 0
        %4362 = vmatpush1.bf16.msra.mxu0 0
        %4363 = vmatprep.subr.bf16.mxu0 0
        %4364 = vmatpush1.bf16.msra.mxu0 0
        %4365 = vmatprep.subr.bf16.mxu0 0
        %4366 = vmatpush1.bf16.msra.mxu0 0
        %4367 = vmatprep.subr.bf16.mxu0 0
        %4368 = vmatpush1.bf16.msra.mxu0 0
        %4369 = vmatprep.subr.bf16.mxu0 0
        %4370 = vmatpush1.bf16.msra.mxu0 0
        %4371 = vmatprep.subr.bf16.mxu0 0
        %4372 = vmatpush1.bf16.msra.mxu0 0
        %4373 = vmatprep.subr.bf16.mxu0 0
        %4374 = vmatpush1.bf16.msra.mxu0 0
        %4375 = vmatprep.subr.bf16.mxu0 0
        %4376 = vmatpush1.bf16.msra.mxu0 0
        %4377 = vmatprep.subr.bf16.mxu0 0
        %4378 = vmatpush1.bf16.msra.mxu0 0
        %4379 = vmatprep.subr.bf16.mxu0 0
        %4380 = vmatpush1.bf16.msra.mxu0 0
        %4381 = vmatprep.subr.bf16.mxu0 0
        %4382 = vmatpush1.bf16.msra.mxu0 0
        %4383 = vmatprep.subr.bf16.mxu0 0
        %4384 = vmatpush1.bf16.msra.mxu0 0
        %4385 = vmatprep.subr.bf16.mxu0 0
        %4386 = vmatpush1.bf16.msra.mxu0 0
        %4387 = vmatprep.subr.bf16.mxu0 0
        %4388 = vmatpush1.bf16.msra.mxu0 0
        %4389 = vmatprep.subr.bf16.mxu0 0
        %4390 = vmatpush1.bf16.msra.mxu0 0
        %4391 = vmatprep.mubr.bf16.mxu0 0
        %4392 = vmatmul.mubr.bf16.gmra.mrb[0].mxu0 %v4357
        %v4393 = vpop.f32.mrb[0].mxu0
        %v4394 = vadd.f32 0.0, %v4393
        %v4395 = vpop.f32.mrb[0].mxu0
        %v4396 = vpop.f32.mrb[0].mxu0
        %v4397 = vadd.f32 0.0, %v4396
        %v4398 = vpop.f32.mrb[0].mxu0
        %4399 = vdwg.mxu0
        %4400 = vrot.lane.b32.xlu0 %v1572, 64
        %v4401 = vpop.permute.xlu0 %4400
        %v4404 = vsel %vm1950, %v4070, 0
        %4406 = vmatprep.subr.bf16.mxu0 0
        %4407 = vmatpush1.bf16.msra.mxu0 %v4401
        %4408 = vmatprep.subr.bf16.mxu0 0
        %4409 = vmatpush1.bf16.msra.mxu0 0
        %4410 = vmatprep.subr.bf16.mxu0 0
        %4411 = vmatpush1.bf16.msra.mxu0 0
        %4412 = vmatprep.subr.bf16.mxu0 0
        %4413 = vmatpush1.bf16.msra.mxu0 0
        %4414 = vmatprep.subr.bf16.mxu0 0
        %4415 = vmatpush1.bf16.msra.mxu0 0
        %4416 = vmatprep.subr.bf16.mxu0 0
        %4417 = vmatpush1.bf16.msra.mxu0 0
        %4418 = vmatprep.subr.bf16.mxu0 0
        %4419 = vmatpush1.bf16.msra.mxu0 0
        %4420 = vmatprep.subr.bf16.mxu0 0
        %4421 = vmatpush1.bf16.msra.mxu0 0
        %4422 = vmatprep.subr.bf16.mxu0 0
        %4423 = vmatpush1.bf16.msra.mxu0 0
        %4424 = vmatprep.subr.bf16.mxu0 0
        %4425 = vmatpush1.bf16.msra.mxu0 0
        %4426 = vmatprep.subr.bf16.mxu0 0
        %4427 = vmatpush1.bf16.msra.mxu0 0
        %4428 = vmatprep.subr.bf16.mxu0 0
        %4429 = vmatpush1.bf16.msra.mxu0 0
        %4430 = vmatprep.subr.bf16.mxu0 0
        %4431 = vmatpush1.bf16.msra.mxu0 0
        %4432 = vmatprep.subr.bf16.mxu0 0
        %4433 = vmatpush1.bf16.msra.mxu0 0
        %4434 = vmatprep.subr.bf16.mxu0 0
        %4435 = vmatpush1.bf16.msra.mxu0 0
        %4436 = vmatprep.subr.bf16.mxu0 0
        %4437 = vmatpush1.bf16.msra.mxu0 0
        %4438 = vmatprep.mubr.bf16.mxu0 0
        %4439 = vmatmul.mubr.bf16.gmra.mrb[0].mxu0 %v4404
        %v4440 = vpop.f32.mrb[0].mxu0
        %v4441 = vadd.f32 0.0, %v4440
        %v4442 = vpop.f32.mrb[0].mxu0
        %v4443 = vpop.f32.mrb[0].mxu0
        %v4444 = vadd.f32 0.0, %v4443
        %v4445 = vpop.f32.mrb[0].mxu0
        %4446 = vdwg.mxu0
        %4447 = vrot.lane.b32.xlu0 %v1549, 32
        %v4448 = vpop.permute.xlu0 %4447
        %4449 = vrot.lane.b32.xlu0 %v1557, 32
        %v4450 = vpop.permute.xlu0 %4449
        %v4452 = vsel %vm1573, %v4448, 0
        %v4455 = vsel %vm1573, %v4450, 0
        %4457 = vmatprep.subr.bf16.mxu0 0
        %4458 = vmatpush1.bf16.xpose.msra.mxu0 %v4455
        %4459 = vmatprep.subr.bf16.mxu0 0
        %4460 = vmatpush1.bf16.xpose.msra.mxu0 0
        %4461 = vmatprep.subr.bf16.mxu0 0
        %4462 = vmatpush1.bf16.xpose.msra.mxu0 0
        %4463 = vmatprep.subr.bf16.mxu0 0
        %4464 = vmatpush1.bf16.xpose.msra.mxu0 0
        %4465 = vmatprep.subr.bf16.mxu0 0
        %4466 = vmatpush1.bf16.xpose.msra.mxu0 0
        %4467 = vmatprep.subr.bf16.mxu0 0
        %4468 = vmatpush1.bf16.xpose.msra.mxu0 0
        %4469 = vmatprep.subr.bf16.mxu0 0
        %4470 = vmatpush1.bf16.xpose.msra.mxu0 0
        %4471 = vmatprep.subr.bf16.mxu0 0
        %4472 = vmatpush1.bf16.xpose.msra.mxu0 0
        %4473 = vmatprep.subr.bf16.mxu0 0
        %4474 = vmatpush1.bf16.xpose.msra.mxu0 0
        %4475 = vmatprep.subr.bf16.mxu0 0
        %4476 = vmatpush1.bf16.xpose.msra.mxu0 0
        %4477 = vmatprep.subr.bf16.mxu0 0
        %4478 = vmatpush1.bf16.xpose.msra.mxu0 0
        %4479 = vmatprep.subr.bf16.mxu0 0
        %4480 = vmatpush1.bf16.xpose.msra.mxu0 0
        %4481 = vmatprep.subr.bf16.mxu0 0
        %4482 = vmatpush1.bf16.xpose.msra.mxu0 0
        %4483 = vmatprep.subr.bf16.mxu0 0
        %4484 = vmatpush1.bf16.xpose.msra.mxu0 0
        %4485 = vmatprep.subr.bf16.mxu0 0
        %4486 = vmatpush1.bf16.xpose.msra.mxu0 0
        %4487 = vmatprep.subr.bf16.mxu0 0
        %4488 = vmatpush1.bf16.xpose.msra.mxu0 0
        %4489 = vmatprep.mubr.bf16.mxu0 0
        %4490 = vmatmul.mubr.bf16.gmra.mrb[0].mxu0 %v4452
        %v4491 = vpop.f32.mrb[0].mxu0
        %v4492 = vadd.f32 %v825, %v4491
        %v4493 = vpop.f32.mrb[0].mxu0
        %v4494 = vpop.f32.mrb[0].mxu0
        %v4495 = vadd.f32 %v826, %v4494
        %v4496 = vpop.f32.mrb[0].mxu0
        %4497 = vdwg.mxu0
        %4498 = vrot.lane.b32.xlu0 %v1550, 32
        %v4499 = vpop.permute.xlu0 %4498
        %4500 = vrot.lane.b32.xlu0 %v1558, 32
        %v4501 = vpop.permute.xlu0 %4500
        %v4503 = vsel %vm1573, %v4499, 0
        %v4506 = vsel %vm1573, %v4501, 0
        %4508 = vmatprep.subr.bf16.mxu0 0
        %4509 = vmatpush1.bf16.xpose.msra.mxu0 %v4506
        %4510 = vmatprep.subr.bf16.mxu0 0
        %4511 = vmatpush1.bf16.xpose.msra.mxu0 0
        %4512 = vmatprep.subr.bf16.mxu0 0
        %4513 = vmatpush1.bf16.xpose.msra.mxu0 0
        %4514 = vmatprep.subr.bf16.mxu0 0
        %4515 = vmatpush1.bf16.xpose.msra.mxu0 0
        %4516 = vmatprep.subr.bf16.mxu0 0
        %4517 = vmatpush1.bf16.xpose.msra.mxu0 0
        %4518 = vmatprep.subr.bf16.mxu0 0
        %4519 = vmatpush1.bf16.xpose.msra.mxu0 0
        %4520 = vmatprep.subr.bf16.mxu0 0
        %4521 = vmatpush1.bf16.xpose.msra.mxu0 0
        %4522 = vmatprep.subr.bf16.mxu0 0
        %4523 = vmatpush1.bf16.xpose.msra.mxu0 0
        %4524 = vmatprep.subr.bf16.mxu0 0
        %4525 = vmatpush1.bf16.xpose.msra.mxu0 0
        %4526 = vmatprep.subr.bf16.mxu0 0
        %4527 = vmatpush1.bf16.xpose.msra.mxu0 0
        %4528 = vmatprep.subr.bf16.mxu0 0
        %4529 = vmatpush1.bf16.xpose.msra.mxu0 0
        %4530 = vmatprep.subr.bf16.mxu0 0
        %4531 = vmatpush1.bf16.xpose.msra.mxu0 0
        %4532 = vmatprep.subr.bf16.mxu0 0
        %4533 = vmatpush1.bf16.xpose.msra.mxu0 0
        %4534 = vmatprep.subr.bf16.mxu0 0
        %4535 = vmatpush1.bf16.xpose.msra.mxu0 0
        %4536 = vmatprep.subr.bf16.mxu0 0
        %4537 = vmatpush1.bf16.xpose.msra.mxu0 0
        %4538 = vmatprep.subr.bf16.mxu0 0
        %4539 = vmatpush1.bf16.xpose.msra.mxu0 0
        %4540 = vmatprep.mubr.bf16.mxu0 0
        %4541 = vmatmul.mubr.bf16.gmra.mrb[0].mxu0 %v4503
        %v4542 = vpop.f32.mrb[0].mxu0
        %v4543 = vadd.f32 %v827, %v4542
        %v4544 = vpop.f32.mrb[0].mxu0
        %v4545 = vpop.f32.mrb[0].mxu0
        %v4546 = vadd.f32 %v828, %v4545
        %v4547 = vpop.f32.mrb[0].mxu0
        %4548 = vdwg.mxu0
        %4549 = vrot.lane.b32.xlu0 %v1551, 32
        %v4550 = vpop.permute.xlu0 %4549
        %4551 = vrot.lane.b32.xlu0 %v1559, 32
        %v4552 = vpop.permute.xlu0 %4551
        %v4554 = vsel %vm1573, %v4550, 0
        %v4557 = vsel %vm1573, %v4552, 0
        %4559 = vmatprep.subr.bf16.mxu0 0
        %4560 = vmatpush1.bf16.xpose.msra.mxu0 %v4557
        %4561 = vmatprep.subr.bf16.mxu0 0
        %4562 = vmatpush1.bf16.xpose.msra.mxu0 0
        %4563 = vmatprep.subr.bf16.mxu0 0
        %4564 = vmatpush1.bf16.xpose.msra.mxu0 0
        %4565 = vmatprep.subr.bf16.mxu0 0
        %4566 = vmatpush1.bf16.xpose.msra.mxu0 0
        %4567 = vmatprep.subr.bf16.mxu0 0
        %4568 = vmatpush1.bf16.xpose.msra.mxu0 0
        %4569 = vmatprep.subr.bf16.mxu0 0
        %4570 = vmatpush1.bf16.xpose.msra.mxu0 0
        %4571 = vmatprep.subr.bf16.mxu0 0
        %4572 = vmatpush1.bf16.xpose.msra.mxu0 0
        %4573 = vmatprep.subr.bf16.mxu0 0
        %4574 = vmatpush1.bf16.xpose.msra.mxu0 0
        %4575 = vmatprep.subr.bf16.mxu0 0
        %4576 = vmatpush1.bf16.xpose.msra.mxu0 0
        %4577 = vmatprep.subr.bf16.mxu0 0
        %4578 = vmatpush1.bf16.xpose.msra.mxu0 0
        %4579 = vmatprep.subr.bf16.mxu0 0
        %4580 = vmatpush1.bf16.xpose.msra.mxu0 0
        %4581 = vmatprep.subr.bf16.mxu0 0
        %4582 = vmatpush1.bf16.xpose.msra.mxu0 0
        %4583 = vmatprep.subr.bf16.mxu0 0
        %4584 = vmatpush1.bf16.xpose.msra.mxu0 0
        %4585 = vmatprep.subr.bf16.mxu0 0
        %4586 = vmatpush1.bf16.xpose.msra.mxu0 0
        %4587 = vmatprep.subr.bf16.mxu0 0
        %4588 = vmatpush1.bf16.xpose.msra.mxu0 0
        %4589 = vmatprep.subr.bf16.mxu0 0
        %4590 = vmatpush1.bf16.xpose.msra.mxu0 0
        %4591 = vmatprep.mubr.bf16.mxu0 0
        %4592 = vmatmul.mubr.bf16.gmra.mrb[0].mxu0 %v4554
        %v4593 = vpop.f32.mrb[0].mxu0
        %v4594 = vadd.f32 %v829, %v4593
        %v4595 = vpop.f32.mrb[0].mxu0
        %v4596 = vpop.f32.mrb[0].mxu0
        %v4597 = vadd.f32 %v830, %v4596
        %v4598 = vpop.f32.mrb[0].mxu0
        %4599 = vdwg.mxu0
        %4600 = vrot.lane.b32.xlu0 %v1552, 32
        %v4601 = vpop.permute.xlu0 %4600
        %4602 = vrot.lane.b32.xlu0 %v1560, 32
        %v4603 = vpop.permute.xlu0 %4602
        %v4605 = vsel %vm1573, %v4601, 0
        %v4608 = vsel %vm1573, %v4603, 0
        %4610 = vmatprep.subr.bf16.mxu0 0
        %4611 = vmatpush1.bf16.xpose.msra.mxu0 %v4608
        %4612 = vmatprep.subr.bf16.mxu0 0
        %4613 = vmatpush1.bf16.xpose.msra.mxu0 0
        %4614 = vmatprep.subr.bf16.mxu0 0
        %4615 = vmatpush1.bf16.xpose.msra.mxu0 0
        %4616 = vmatprep.subr.bf16.mxu0 0
        %4617 = vmatpush1.bf16.xpose.msra.mxu0 0
        %4618 = vmatprep.subr.bf16.mxu0 0
        %4619 = vmatpush1.bf16.xpose.msra.mxu0 0
        %4620 = vmatprep.subr.bf16.mxu0 0
        %4621 = vmatpush1.bf16.xpose.msra.mxu0 0
        %4622 = vmatprep.subr.bf16.mxu0 0
        %4623 = vmatpush1.bf16.xpose.msra.mxu0 0
        %4624 = vmatprep.subr.bf16.mxu0 0
        %4625 = vmatpush1.bf16.xpose.msra.mxu0 0
        %4626 = vmatprep.subr.bf16.mxu0 0
        %4627 = vmatpush1.bf16.xpose.msra.mxu0 0
        %4628 = vmatprep.subr.bf16.mxu0 0
        %4629 = vmatpush1.bf16.xpose.msra.mxu0 0
        %4630 = vmatprep.subr.bf16.mxu0 0
        %4631 = vmatpush1.bf16.xpose.msra.mxu0 0
        %4632 = vmatprep.subr.bf16.mxu0 0
        %4633 = vmatpush1.bf16.xpose.msra.mxu0 0
        %4634 = vmatprep.subr.bf16.mxu0 0
        %4635 = vmatpush1.bf16.xpose.msra.mxu0 0
        %4636 = vmatprep.subr.bf16.mxu0 0
        %4637 = vmatpush1.bf16.xpose.msra.mxu0 0
        %4638 = vmatprep.subr.bf16.mxu0 0
        %4639 = vmatpush1.bf16.xpose.msra.mxu0 0
        %4640 = vmatprep.subr.bf16.mxu0 0
        %4641 = vmatpush1.bf16.xpose.msra.mxu0 0
        %4642 = vmatprep.mubr.bf16.mxu0 0
        %4643 = vmatmul.mubr.bf16.gmra.mrb[0].mxu0 %v4605
        %v4644 = vpop.f32.mrb[0].mxu0
        %v4645 = vadd.f32 %v831, %v4644
        %v4646 = vpop.f32.mrb[0].mxu0
        %v4647 = vpop.f32.mrb[0].mxu0
        %v4648 = vadd.f32 %v832, %v4647
        %v4649 = vpop.f32.mrb[0].mxu0
        %4650 = vdwg.mxu0
        %4651 = vrot.lane.b32.xlu0 %v1553, 32
        %v4652 = vpop.permute.xlu0 %4651
        %4653 = vrot.lane.b32.xlu0 %v1561, 32
        %v4654 = vpop.permute.xlu0 %4653
        %v4656 = vsel %vm1573, %v4652, 0
        %v4659 = vsel %vm1573, %v4654, 0
        %4661 = vmatprep.subr.bf16.mxu0 0
        %4662 = vmatpush1.bf16.xpose.msra.mxu0 %v4659
        %4663 = vmatprep.subr.bf16.mxu0 0
        %4664 = vmatpush1.bf16.xpose.msra.mxu0 0
        %4665 = vmatprep.subr.bf16.mxu0 0
        %4666 = vmatpush1.bf16.xpose.msra.mxu0 0
        %4667 = vmatprep.subr.bf16.mxu0 0
        %4668 = vmatpush1.bf16.xpose.msra.mxu0 0
        %4669 = vmatprep.subr.bf16.mxu0 0
        %4670 = vmatpush1.bf16.xpose.msra.mxu0 0
        %4671 = vmatprep.subr.bf16.mxu0 0
        %4672 = vmatpush1.bf16.xpose.msra.mxu0 0
        %4673 = vmatprep.subr.bf16.mxu0 0
        %4674 = vmatpush1.bf16.xpose.msra.mxu0 0
        %4675 = vmatprep.subr.bf16.mxu0 0
        %4676 = vmatpush1.bf16.xpose.msra.mxu0 0
        %4677 = vmatprep.subr.bf16.mxu0 0
        %4678 = vmatpush1.bf16.xpose.msra.mxu0 0
        %4679 = vmatprep.subr.bf16.mxu0 0
        %4680 = vmatpush1.bf16.xpose.msra.mxu0 0
        %4681 = vmatprep.subr.bf16.mxu0 0
        %4682 = vmatpush1.bf16.xpose.msra.mxu0 0
        %4683 = vmatprep.subr.bf16.mxu0 0
        %4684 = vmatpush1.bf16.xpose.msra.mxu0 0
        %4685 = vmatprep.subr.bf16.mxu0 0
        %4686 = vmatpush1.bf16.xpose.msra.mxu0 0
        %4687 = vmatprep.subr.bf16.mxu0 0
        %4688 = vmatpush1.bf16.xpose.msra.mxu0 0
        %4689 = vmatprep.subr.bf16.mxu0 0
        %4690 = vmatpush1.bf16.xpose.msra.mxu0 0
        %4691 = vmatprep.subr.bf16.mxu0 0
        %4692 = vmatpush1.bf16.xpose.msra.mxu0 0
        %4693 = vmatprep.mubr.bf16.mxu0 0
        %4694 = vmatmul.mubr.bf16.gmra.mrb[0].mxu0 %v4656
        %v4695 = vpop.f32.mrb[0].mxu0
        %v4696 = vadd.f32 %v833, %v4695
        %v4697 = vpop.f32.mrb[0].mxu0
        %v4698 = vpop.f32.mrb[0].mxu0
        %v4699 = vadd.f32 %v834, %v4698
        %v4700 = vpop.f32.mrb[0].mxu0
        %4701 = vdwg.mxu0
        %4702 = vrot.lane.b32.xlu0 %v1554, 32
        %v4703 = vpop.permute.xlu0 %4702
        %4704 = vrot.lane.b32.xlu0 %v1562, 32
        %v4705 = vpop.permute.xlu0 %4704
        %v4707 = vsel %vm1573, %v4703, 0
        %v4710 = vsel %vm1573, %v4705, 0
        %4712 = vmatprep.subr.bf16.mxu0 0
        %4713 = vmatpush1.bf16.xpose.msra.mxu0 %v4710
        %4714 = vmatprep.subr.bf16.mxu0 0
        %4715 = vmatpush1.bf16.xpose.msra.mxu0 0
        %4716 = vmatprep.subr.bf16.mxu0 0
        %4717 = vmatpush1.bf16.xpose.msra.mxu0 0
        %4718 = vmatprep.subr.bf16.mxu0 0
        %4719 = vmatpush1.bf16.xpose.msra.mxu0 0
        %4720 = vmatprep.subr.bf16.mxu0 0
        %4721 = vmatpush1.bf16.xpose.msra.mxu0 0
        %4722 = vmatprep.subr.bf16.mxu0 0
        %4723 = vmatpush1.bf16.xpose.msra.mxu0 0
        %4724 = vmatprep.subr.bf16.mxu0 0
        %4725 = vmatpush1.bf16.xpose.msra.mxu0 0
        %4726 = vmatprep.subr.bf16.mxu0 0
        %4727 = vmatpush1.bf16.xpose.msra.mxu0 0
        %4728 = vmatprep.subr.bf16.mxu0 0
        %4729 = vmatpush1.bf16.xpose.msra.mxu0 0
        %4730 = vmatprep.subr.bf16.mxu0 0
        %4731 = vmatpush1.bf16.xpose.msra.mxu0 0
        %4732 = vmatprep.subr.bf16.mxu0 0
        %4733 = vmatpush1.bf16.xpose.msra.mxu0 0
        %4734 = vmatprep.subr.bf16.mxu0 0
        %4735 = vmatpush1.bf16.xpose.msra.mxu0 0
        %4736 = vmatprep.subr.bf16.mxu0 0
        %4737 = vmatpush1.bf16.xpose.msra.mxu0 0
        %4738 = vmatprep.subr.bf16.mxu0 0
        %4739 = vmatpush1.bf16.xpose.msra.mxu0 0
        %4740 = vmatprep.subr.bf16.mxu0 0
        %4741 = vmatpush1.bf16.xpose.msra.mxu0 0
        %4742 = vmatprep.subr.bf16.mxu0 0
        %4743 = vmatpush1.bf16.xpose.msra.mxu0 0
        %4744 = vmatprep.mubr.bf16.mxu0 0
        %4745 = vmatmul.mubr.bf16.gmra.mrb[0].mxu0 %v4707
        %v4746 = vpop.f32.mrb[0].mxu0
        %v4747 = vadd.f32 %v835, %v4746
        %v4748 = vpop.f32.mrb[0].mxu0
        %v4749 = vpop.f32.mrb[0].mxu0
        %v4750 = vadd.f32 %v836, %v4749
        %v4751 = vpop.f32.mrb[0].mxu0
        %4752 = vdwg.mxu0
        %4753 = vrot.lane.b32.xlu0 %v1555, 32
        %v4754 = vpop.permute.xlu0 %4753
        %4755 = vrot.lane.b32.xlu0 %v1563, 32
        %v4756 = vpop.permute.xlu0 %4755
        %v4758 = vsel %vm1573, %v4754, 0
        %v4761 = vsel %vm1573, %v4756, 0
        %4763 = vmatprep.subr.bf16.mxu0 0
        %4764 = vmatpush1.bf16.xpose.msra.mxu0 %v4761
        %4765 = vmatprep.subr.bf16.mxu0 0
        %4766 = vmatpush1.bf16.xpose.msra.mxu0 0
        %4767 = vmatprep.subr.bf16.mxu0 0
        %4768 = vmatpush1.bf16.xpose.msra.mxu0 0
        %4769 = vmatprep.subr.bf16.mxu0 0
        %4770 = vmatpush1.bf16.xpose.msra.mxu0 0
        %4771 = vmatprep.subr.bf16.mxu0 0
        %4772 = vmatpush1.bf16.xpose.msra.mxu0 0
        %4773 = vmatprep.subr.bf16.mxu0 0
        %4774 = vmatpush1.bf16.xpose.msra.mxu0 0
        %4775 = vmatprep.subr.bf16.mxu0 0
        %4776 = vmatpush1.bf16.xpose.msra.mxu0 0
        %4777 = vmatprep.subr.bf16.mxu0 0
        %4778 = vmatpush1.bf16.xpose.msra.mxu0 0
        %4779 = vmatprep.subr.bf16.mxu0 0
        %4780 = vmatpush1.bf16.xpose.msra.mxu0 0
        %4781 = vmatprep.subr.bf16.mxu0 0
        %4782 = vmatpush1.bf16.xpose.msra.mxu0 0
        %4783 = vmatprep.subr.bf16.mxu0 0
        %4784 = vmatpush1.bf16.xpose.msra.mxu0 0
        %4785 = vmatprep.subr.bf16.mxu0 0
        %4786 = vmatpush1.bf16.xpose.msra.mxu0 0
        %4787 = vmatprep.subr.bf16.mxu0 0
        %4788 = vmatpush1.bf16.xpose.msra.mxu0 0
        %4789 = vmatprep.subr.bf16.mxu0 0
        %4790 = vmatpush1.bf16.xpose.msra.mxu0 0
        %4791 = vmatprep.subr.bf16.mxu0 0
        %4792 = vmatpush1.bf16.xpose.msra.mxu0 0
        %4793 = vmatprep.subr.bf16.mxu0 0
        %4794 = vmatpush1.bf16.xpose.msra.mxu0 0
        %4795 = vmatprep.mubr.bf16.mxu0 0
        %4796 = vmatmul.mubr.bf16.gmra.mrb[0].mxu0 %v4758
        %v4797 = vpop.f32.mrb[0].mxu0
        %v4798 = vadd.f32 %v837, %v4797
        %v4799 = vpop.f32.mrb[0].mxu0
        %v4800 = vpop.f32.mrb[0].mxu0
        %v4801 = vadd.f32 %v838, %v4800
        %v4802 = vpop.f32.mrb[0].mxu0
        %4803 = vdwg.mxu0
        %4804 = vrot.lane.b32.xlu0 %v1556, 32
        %v4805 = vpop.permute.xlu0 %4804
        %4806 = vrot.lane.b32.xlu0 %v1564, 32
        %v4807 = vpop.permute.xlu0 %4806
        %v4809 = vsel %vm1573, %v4805, 0
        %v4812 = vsel %vm1573, %v4807, 0
        %4814 = vmatprep.subr.bf16.mxu0 0
        %4815 = vmatpush1.bf16.xpose.msra.mxu0 %v4812
        %4816 = vmatprep.subr.bf16.mxu0 0
        %4817 = vmatpush1.bf16.xpose.msra.mxu0 0
        %4818 = vmatprep.subr.bf16.mxu0 0
        %4819 = vmatpush1.bf16.xpose.msra.mxu0 0
        %4820 = vmatprep.subr.bf16.mxu0 0
        %4821 = vmatpush1.bf16.xpose.msra.mxu0 0
        %4822 = vmatprep.subr.bf16.mxu0 0
        %4823 = vmatpush1.bf16.xpose.msra.mxu0 0
        %4824 = vmatprep.subr.bf16.mxu0 0
        %4825 = vmatpush1.bf16.xpose.msra.mxu0 0
        %4826 = vmatprep.subr.bf16.mxu0 0
        %4827 = vmatpush1.bf16.xpose.msra.mxu0 0
        %4828 = vmatprep.subr.bf16.mxu0 0
        %4829 = vmatpush1.bf16.xpose.msra.mxu0 0
        %4830 = vmatprep.subr.bf16.mxu0 0
        %4831 = vmatpush1.bf16.xpose.msra.mxu0 0
        %4832 = vmatprep.subr.bf16.mxu0 0
        %4833 = vmatpush1.bf16.xpose.msra.mxu0 0
        %4834 = vmatprep.subr.bf16.mxu0 0
        %4835 = vmatpush1.bf16.xpose.msra.mxu0 0
        %4836 = vmatprep.subr.bf16.mxu0 0
        %4837 = vmatpush1.bf16.xpose.msra.mxu0 0
        %4838 = vmatprep.subr.bf16.mxu0 0
        %4839 = vmatpush1.bf16.xpose.msra.mxu0 0
        %4840 = vmatprep.subr.bf16.mxu0 0
        %4841 = vmatpush1.bf16.xpose.msra.mxu0 0
        %4842 = vmatprep.subr.bf16.mxu0 0
        %4843 = vmatpush1.bf16.xpose.msra.mxu0 0
        %4844 = vmatprep.subr.bf16.mxu0 0
        %4845 = vmatpush1.bf16.xpose.msra.mxu0 0
        %4846 = vmatprep.mubr.bf16.mxu0 0
        %4847 = vmatmul.mubr.bf16.gmra.mrb[0].mxu0 %v4809
        %v4848 = vpop.f32.mrb[0].mxu0
        %v4849 = vadd.f32 %v839, %v4848
        %v4850 = vpop.f32.mrb[0].mxu0
        %v4851 = vpop.f32.mrb[0].mxu0
        %v4852 = vadd.f32 %v840, %v4851
        %v4853 = vpop.f32.mrb[0].mxu0
        %4854 = vdwg.mxu0
        %v4855 = vsel %vm1950, %v4492, -inf
        %4856 = vmax.xlane.f32.xlu0 %v4855
        %v4857 = vpop.xlane.xlu0 %4856
        %v4858 = vsel %vm1950, %v4495, -inf
        %4859 = vmax.xlane.f32.xlu0 %v4858
        %v4860 = vpop.xlane.xlu0 %4859
        %v4861 = vsel %vm1950, %v4543, -inf
        %4862 = vmax.xlane.f32.xlu0 %v4861
        %v4863 = vpop.xlane.xlu0 %4862
        %v4864 = vsel %vm1950, %v4546, -inf
        %4865 = vmax.xlane.f32.xlu0 %v4864
        %v4866 = vpop.xlane.xlu0 %4865
        %v4867 = vsel %vm1950, %v4594, -inf
        %4868 = vmax.xlane.f32.xlu0 %v4867
        %v4869 = vpop.xlane.xlu0 %4868
        %v4870 = vsel %vm1950, %v4597, -inf
        %4871 = vmax.xlane.f32.xlu0 %v4870
        %v4872 = vpop.xlane.xlu0 %4871
        %v4873 = vsel %vm1950, %v4645, -inf
        %4874 = vmax.xlane.f32.xlu0 %v4873
        %v4875 = vpop.xlane.xlu0 %4874
        %v4876 = vsel %vm1950, %v4648, -inf
        %4877 = vmax.xlane.f32.xlu0 %v4876
        %v4878 = vpop.xlane.xlu0 %4877
        %v4879 = vsel %vm1950, %v4696, -inf
        %4880 = vmax.xlane.f32.xlu0 %v4879
        %v4881 = vpop.xlane.xlu0 %4880
        %v4882 = vsel %vm1950, %v4699, -inf
        %4883 = vmax.xlane.f32.xlu0 %v4882
        %v4884 = vpop.xlane.xlu0 %4883
        %v4885 = vsel %vm1950, %v4747, -inf
        %4886 = vmax.xlane.f32.xlu0 %v4885
        %v4887 = vpop.xlane.xlu0 %4886
        %v4888 = vsel %vm1950, %v4750, -inf
        %4889 = vmax.xlane.f32.xlu0 %v4888
        %v4890 = vpop.xlane.xlu0 %4889
        %v4891 = vsel %vm1950, %v4798, -inf
        %4892 = vmax.xlane.f32.xlu0 %v4891
        %v4893 = vpop.xlane.xlu0 %4892
        %v4894 = vsel %vm1950, %v4801, -inf
        %4895 = vmax.xlane.f32.xlu0 %v4894
        %v4896 = vpop.xlane.xlu0 %4895
        %v4897 = vsel %vm1950, %v4849, -inf
        %4898 = vmax.xlane.f32.xlu0 %v4897
        %v4899 = vpop.xlane.xlu0 %4898
        %v4900 = vsel %vm1950, %v4852, -inf
        %4901 = vmax.xlane.f32.xlu0 %v4900
        %v4902 = vpop.xlane.xlu0 %4901
        %v4903 = vsub.f32 %v4492, %v4857
        %v4904 = vsub.f32 %v4495, %v4860
        %v4905 = vsub.f32 %v4543, %v4863
        %v4906 = vsub.f32 %v4546, %v4866
        %v4907 = vsub.f32 %v4594, %v4869
        %v4908 = vsub.f32 %v4597, %v4872
        %v4909 = vsub.f32 %v4645, %v4875
        %v4910 = vsub.f32 %v4648, %v4878
        %v4911 = vsub.f32 %v4696, %v4881
        %v4912 = vsub.f32 %v4699, %v4884
        %v4913 = vsub.f32 %v4747, %v4887
        %v4914 = vsub.f32 %v4750, %v4890
        %v4915 = vsub.f32 %v4798, %v4893
        %v4916 = vsub.f32 %v4801, %v4896
        %v4917 = vsub.f32 %v4849, %v4899
        %v4918 = vsub.f32 %v4852, %v4902
        %v4919 = vmul.f32 %v4903, 1.442695
        %v4920 = vpow.pop %v4919
        %v4921 = vmul.f32 %v4904, 1.442695
        %v4922 = vpow.pop %v4921
        %v4923 = vmul.f32 %v4905, 1.442695
        %v4924 = vpow.pop %v4923
        %v4925 = vmul.f32 %v4906, 1.442695
        %v4926 = vpow.pop %v4925
        %v4927 = vmul.f32 %v4907, 1.442695
        %v4928 = vpow.pop %v4927
        %v4929 = vmul.f32 %v4908, 1.442695
        %v4930 = vpow.pop %v4929
        %v4931 = vmul.f32 %v4909, 1.442695
        %v4932 = vpow.pop %v4931
        %v4933 = vmul.f32 %v4910, 1.442695
        %v4934 = vpow.pop %v4933
        %v4935 = vmul.f32 %v4911, 1.442695
        %v4936 = vpow.pop %v4935
        %v4937 = vmul.f32 %v4912, 1.442695
        %v4938 = vpow.pop %v4937
        %v4939 = vmul.f32 %v4913, 1.442695
        %v4940 = vpow.pop %v4939
        %v4941 = vmul.f32 %v4914, 1.442695
        %v4942 = vpow.pop %v4941
        %v4943 = vmul.f32 %v4915, 1.442695
        %v4944 = vpow.pop %v4943
        %v4945 = vmul.f32 %v4916, 1.442695
        %v4946 = vpow.pop %v4945
        %v4947 = vmul.f32 %v4917, 1.442695
        %v4948 = vpow.pop %v4947
        %v4949 = vmul.f32 %v4918, 1.442695
        %v4950 = vpow.pop %v4949
        %v4951 = vsel %vm1950, %v4920, 0.0
        %4952 = vadd.xlane.f32.xlu0 %v4951
        %v4953 = vpop.xlane.xlu0 %4952
        %v4954 = vsel %vm1950, %v4922, 0.0
        %4955 = vadd.xlane.f32.xlu0 %v4954
        %v4956 = vpop.xlane.xlu0 %4955
        %v4957 = vsel %vm1950, %v4924, 0.0
        %4958 = vadd.xlane.f32.xlu0 %v4957
        %v4959 = vpop.xlane.xlu0 %4958
        %v4960 = vsel %vm1950, %v4926, 0.0
        %4961 = vadd.xlane.f32.xlu0 %v4960
        %v4962 = vpop.xlane.xlu0 %4961
        %v4963 = vsel %vm1950, %v4928, 0.0
        %4964 = vadd.xlane.f32.xlu0 %v4963
        %v4965 = vpop.xlane.xlu0 %4964
        %v4966 = vsel %vm1950, %v4930, 0.0
        %4967 = vadd.xlane.f32.xlu0 %v4966
        %v4968 = vpop.xlane.xlu0 %4967
        %v4969 = vsel %vm1950, %v4932, 0.0
        %4970 = vadd.xlane.f32.xlu0 %v4969
        %v4971 = vpop.xlane.xlu0 %4970
        %v4972 = vsel %vm1950, %v4934, 0.0
        %4973 = vadd.xlane.f32.xlu0 %v4972
        %v4974 = vpop.xlane.xlu0 %4973
        %v4975 = vsel %vm1950, %v4936, 0.0
        %4976 = vadd.xlane.f32.xlu0 %v4975
        %v4977 = vpop.xlane.xlu0 %4976
        %v4978 = vsel %vm1950, %v4938, 0.0
        %4979 = vadd.xlane.f32.xlu0 %v4978
        %v4980 = vpop.xlane.xlu0 %4979
        %v4981 = vsel %vm1950, %v4940, 0.0
        %4982 = vadd.xlane.f32.xlu0 %v4981
        %v4983 = vpop.xlane.xlu0 %4982
        %v4984 = vsel %vm1950, %v4942, 0.0
        %4985 = vadd.xlane.f32.xlu0 %v4984
        %v4986 = vpop.xlane.xlu0 %4985
        %v4987 = vsel %vm1950, %v4944, 0.0
        %4988 = vadd.xlane.f32.xlu0 %v4987
        %v4989 = vpop.xlane.xlu0 %4988
        %v4990 = vsel %vm1950, %v4946, 0.0
        %4991 = vadd.xlane.f32.xlu0 %v4990
        %v4992 = vpop.xlane.xlu0 %4991
        %v4993 = vsel %vm1950, %v4948, 0.0
        %4994 = vadd.xlane.f32.xlu0 %v4993
        %v4995 = vpop.xlane.xlu0 %4994
        %v4996 = vsel %vm1950, %v4950, 0.0
        %4997 = vadd.xlane.f32.xlu0 %v4996
        %v4998 = vpop.xlane.xlu0 %4997
        %v4999 = vrcp.pop %v4953
        %v5000 = vrcp.pop %v4956
        %v5001 = vrcp.pop %v4959
        %v5002 = vrcp.pop %v4962
        %v5003 = vrcp.pop %v4965
        %v5004 = vrcp.pop %v4968
        %v5005 = vrcp.pop %v4971
        %v5006 = vrcp.pop %v4974
        %v5007 = vrcp.pop %v4977
        %v5008 = vrcp.pop %v4980
        %v5009 = vrcp.pop %v4983
        %v5010 = vrcp.pop %v4986
        %v5011 = vrcp.pop %v4989
        %v5012 = vrcp.pop %v4992
        %v5013 = vrcp.pop %v4995
        %v5014 = vrcp.pop %v4998
        %v5015 = vmul.f32 %v4920, %v4999
        %v5016 = vmul.f32 %v4922, %v5000
        %v5017 = vmul.f32 %v4924, %v5001
        %v5018 = vmul.f32 %v4926, %v5002
        %v5019 = vmul.f32 %v4928, %v5003
        %v5020 = vmul.f32 %v4930, %v5004
        %v5021 = vmul.f32 %v4932, %v5005
        %v5022 = vmul.f32 %v4934, %v5006
        %v5023 = vmul.f32 %v4936, %v5007
        %v5024 = vmul.f32 %v4938, %v5008
        %v5025 = vmul.f32 %v4940, %v5009
        %v5026 = vmul.f32 %v4942, %v5010
        %v5027 = vmul.f32 %v4944, %v5011
        %v5028 = vmul.f32 %v4946, %v5012
        %v5029 = vmul.f32 %v4948, %v5013
        %v5030 = vmul.f32 %v4950, %v5014
        %v5031 = vpack.c.bf16 %v5016, %v5015
        %v5032 = vpack.c.bf16 %v5018, %v5017
        %v5033 = vpack.c.bf16 %v5020, %v5019
        %v5034 = vpack.c.bf16 %v5022, %v5021
        %v5035 = vpack.c.bf16 %v5024, %v5023
        %v5036 = vpack.c.bf16 %v5026, %v5025
        %v5037 = vpack.c.bf16 %v5028, %v5027
        %v5038 = vpack.c.bf16 %v5030, %v5029
        %5039 = vrot.lane.b32.xlu0 %v1565, 32
        %v5040 = vpop.permute.xlu0 %5039
        %v5043 = vsel %vm1950, %v5031, 0
        %5045 = vmatprep.subr.bf16.mxu0 0
        %5046 = vmatpush1.bf16.msra.mxu0 %v5040
        %5047 = vmatprep.subr.bf16.mxu0 0
        %5048 = vmatpush1.bf16.msra.mxu0 0
        %5049 = vmatprep.subr.bf16.mxu0 0
        %5050 = vmatpush1.bf16.msra.mxu0 0
        %5051 = vmatprep.subr.bf16.mxu0 0
        %5052 = vmatpush1.bf16.msra.mxu0 0
        %5053 = vmatprep.subr.bf16.mxu0 0
        %5054 = vmatpush1.bf16.msra.mxu0 0
        %5055 = vmatprep.subr.bf16.mxu0 0
        %5056 = vmatpush1.bf16.msra.mxu0 0
        %5057 = vmatprep.subr.bf16.mxu0 0
        %5058 = vmatpush1.bf16.msra.mxu0 0
        %5059 = vmatprep.subr.bf16.mxu0 0
        %5060 = vmatpush1.bf16.msra.mxu0 0
        %5061 = vmatprep.subr.bf16.mxu0 0
        %5062 = vmatpush1.bf16.msra.mxu0 0
        %5063 = vmatprep.subr.bf16.mxu0 0
        %5064 = vmatpush1.bf16.msra.mxu0 0
        %5065 = vmatprep.subr.bf16.mxu0 0
        %5066 = vmatpush1.bf16.msra.mxu0 0
        %5067 = vmatprep.subr.bf16.mxu0 0
        %5068 = vmatpush1.bf16.msra.mxu0 0
        %5069 = vmatprep.subr.bf16.mxu0 0
        %5070 = vmatpush1.bf16.msra.mxu0 0
        %5071 = vmatprep.subr.bf16.mxu0 0
        %5072 = vmatpush1.bf16.msra.mxu0 0
        %5073 = vmatprep.subr.bf16.mxu0 0
        %5074 = vmatpush1.bf16.msra.mxu0 0
        %5075 = vmatprep.subr.bf16.mxu0 0
        %5076 = vmatpush1.bf16.msra.mxu0 0
        %5077 = vmatprep.mubr.bf16.mxu0 0
        %5078 = vmatmul.mubr.bf16.gmra.mrb[0].mxu0 %v5043
        %v5079 = vpop.f32.mrb[0].mxu0
        %v5080 = vadd.f32 0.0, %v5079
        %v5081 = vpop.f32.mrb[0].mxu0
        %v5082 = vpop.f32.mrb[0].mxu0
        %v5083 = vadd.f32 0.0, %v5082
        %v5084 = vpop.f32.mrb[0].mxu0
        %5085 = vdwg.mxu0
        %5086 = vrot.lane.b32.xlu0 %v1566, 32
        %v5087 = vpop.permute.xlu0 %5086
        %v5090 = vsel %vm1950, %v5032, 0
        %5092 = vmatprep.subr.bf16.mxu0 0
        %5093 = vmatpush1.bf16.msra.mxu0 %v5087
        %5094 = vmatprep.subr.bf16.mxu0 0
        %5095 = vmatpush1.bf16.msra.mxu0 0
        %5096 = vmatprep.subr.bf16.mxu0 0
        %5097 = vmatpush1.bf16.msra.mxu0 0
        %5098 = vmatprep.subr.bf16.mxu0 0
        %5099 = vmatpush1.bf16.msra.mxu0 0
        %5100 = vmatprep.subr.bf16.mxu0 0
        %5101 = vmatpush1.bf16.msra.mxu0 0
        %5102 = vmatprep.subr.bf16.mxu0 0
        %5103 = vmatpush1.bf16.msra.mxu0 0
        %5104 = vmatprep.subr.bf16.mxu0 0
        %5105 = vmatpush1.bf16.msra.mxu0 0
        %5106 = vmatprep.subr.bf16.mxu0 0
        %5107 = vmatpush1.bf16.msra.mxu0 0
        %5108 = vmatprep.subr.bf16.mxu0 0
        %5109 = vmatpush1.bf16.msra.mxu0 0
        %5110 = vmatprep.subr.bf16.mxu0 0
        %5111 = vmatpush1.bf16.msra.mxu0 0
        %5112 = vmatprep.subr.bf16.mxu0 0
        %5113 = vmatpush1.bf16.msra.mxu0 0
        %5114 = vmatprep.subr.bf16.mxu0 0
        %5115 = vmatpush1.bf16.msra.mxu0 0
        %5116 = vmatprep.subr.bf16.mxu0 0
        %5117 = vmatpush1.bf16.msra.mxu0 0
        %5118 = vmatprep.subr.bf16.mxu0 0
        %5119 = vmatpush1.bf16.msra.mxu0 0
        %5120 = vmatprep.subr.bf16.mxu0 0
        %5121 = vmatpush1.bf16.msra.mxu0 0
        %5122 = vmatprep.subr.bf16.mxu0 0
        %5123 = vmatpush1.bf16.msra.mxu0 0
        %5124 = vmatprep.mubr.bf16.mxu0 0
        %5125 = vmatmul.mubr.bf16.gmra.mrb[0].mxu0 %v5090
        %v5126 = vpop.f32.mrb[0].mxu0
        %v5127 = vadd.f32 0.0, %v5126
        %v5128 = vpop.f32.mrb[0].mxu0
        %v5129 = vpop.f32.mrb[0].mxu0
        %v5130 = vadd.f32 0.0, %v5129
        %v5131 = vpop.f32.mrb[0].mxu0
        %5132 = vdwg.mxu0
        %5133 = vrot.lane.b32.xlu0 %v1567, 32
        %v5134 = vpop.permute.xlu0 %5133
        %v5137 = vsel %vm1950, %v5033, 0
        %5139 = vmatprep.subr.bf16.mxu0 0
        %5140 = vmatpush1.bf16.msra.mxu0 %v5134
        %5141 = vmatprep.subr.bf16.mxu0 0
        %5142 = vmatpush1.bf16.msra.mxu0 0
        %5143 = vmatprep.subr.bf16.mxu0 0
        %5144 = vmatpush1.bf16.msra.mxu0 0
        %5145 = vmatprep.subr.bf16.mxu0 0
        %5146 = vmatpush1.bf16.msra.mxu0 0
        %5147 = vmatprep.subr.bf16.mxu0 0
        %5148 = vmatpush1.bf16.msra.mxu0 0
        %5149 = vmatprep.subr.bf16.mxu0 0
        %5150 = vmatpush1.bf16.msra.mxu0 0
        %5151 = vmatprep.subr.bf16.mxu0 0
        %5152 = vmatpush1.bf16.msra.mxu0 0
        %5153 = vmatprep.subr.bf16.mxu0 0
        %5154 = vmatpush1.bf16.msra.mxu0 0
        %5155 = vmatprep.subr.bf16.mxu0 0
        %5156 = vmatpush1.bf16.msra.mxu0 0
        %5157 = vmatprep.subr.bf16.mxu0 0
        %5158 = vmatpush1.bf16.msra.mxu0 0
        %5159 = vmatprep.subr.bf16.mxu0 0
        %5160 = vmatpush1.bf16.msra.mxu0 0
        %5161 = vmatprep.subr.bf16.mxu0 0
        %5162 = vmatpush1.bf16.msra.mxu0 0
        %5163 = vmatprep.subr.bf16.mxu0 0
        %5164 = vmatpush1.bf16.msra.mxu0 0
        %5165 = vmatprep.subr.bf16.mxu0 0
        %5166 = vmatpush1.bf16.msra.mxu0 0
        %5167 = vmatprep.subr.bf16.mxu0 0
        %5168 = vmatpush1.bf16.msra.mxu0 0
        %5169 = vmatprep.subr.bf16.mxu0 0
        %5170 = vmatpush1.bf16.msra.mxu0 0
        %5171 = vmatprep.mubr.bf16.mxu0 0
        %5172 = vmatmul.mubr.bf16.gmra.mrb[0].mxu0 %v5137
        %v5173 = vpop.f32.mrb[0].mxu0
        %v5174 = vadd.f32 0.0, %v5173
        %v5175 = vpop.f32.mrb[0].mxu0
        %v5176 = vpop.f32.mrb[0].mxu0
        %v5177 = vadd.f32 0.0, %v5176
        %v5178 = vpop.f32.mrb[0].mxu0
        %5179 = vdwg.mxu0
        %5180 = vrot.lane.b32.xlu0 %v1568, 32
        %v5181 = vpop.permute.xlu0 %5180
        %v5184 = vsel %vm1950, %v5034, 0
        %5186 = vmatprep.subr.bf16.mxu0 0
        %5187 = vmatpush1.bf16.msra.mxu0 %v5181
        %5188 = vmatprep.subr.bf16.mxu0 0
        %5189 = vmatpush1.bf16.msra.mxu0 0
        %5190 = vmatprep.subr.bf16.mxu0 0
        %5191 = vmatpush1.bf16.msra.mxu0 0
        %5192 = vmatprep.subr.bf16.mxu0 0
        %5193 = vmatpush1.bf16.msra.mxu0 0
        %5194 = vmatprep.subr.bf16.mxu0 0
        %5195 = vmatpush1.bf16.msra.mxu0 0
        %5196 = vmatprep.subr.bf16.mxu0 0
        %5197 = vmatpush1.bf16.msra.mxu0 0
        %5198 = vmatprep.subr.bf16.mxu0 0
        %5199 = vmatpush1.bf16.msra.mxu0 0
        %5200 = vmatprep.subr.bf16.mxu0 0
        %5201 = vmatpush1.bf16.msra.mxu0 0
        %5202 = vmatprep.subr.bf16.mxu0 0
        %5203 = vmatpush1.bf16.msra.mxu0 0
        %5204 = vmatprep.subr.bf16.mxu0 0
        %5205 = vmatpush1.bf16.msra.mxu0 0
        %5206 = vmatprep.subr.bf16.mxu0 0
        %5207 = vmatpush1.bf16.msra.mxu0 0
        %5208 = vmatprep.subr.bf16.mxu0 0
        %5209 = vmatpush1.bf16.msra.mxu0 0
        %5210 = vmatprep.subr.bf16.mxu0 0
        %5211 = vmatpush1.bf16.msra.mxu0 0
        %5212 = vmatprep.subr.bf16.mxu0 0
        %5213 = vmatpush1.bf16.msra.mxu0 0
        %5214 = vmatprep.subr.bf16.mxu0 0
        %5215 = vmatpush1.bf16.msra.mxu0 0
        %5216 = vmatprep.subr.bf16.mxu0 0
        %5217 = vmatpush1.bf16.msra.mxu0 0
        %5218 = vmatprep.mubr.bf16.mxu0 0
        %5219 = vmatmul.mubr.bf16.gmra.mrb[0].mxu0 %v5184
        %v5220 = vpop.f32.mrb[0].mxu0
        %v5221 = vadd.f32 0.0, %v5220
        %v5222 = vpop.f32.mrb[0].mxu0
        %v5223 = vpop.f32.mrb[0].mxu0
        %v5224 = vadd.f32 0.0, %v5223
        %v5225 = vpop.f32.mrb[0].mxu0
        %5226 = vdwg.mxu0
        %5227 = vrot.lane.b32.xlu0 %v1569, 32
        %v5228 = vpop.permute.xlu0 %5227
        %v5231 = vsel %vm1950, %v5035, 0
        %5233 = vmatprep.subr.bf16.mxu0 0
        %5234 = vmatpush1.bf16.msra.mxu0 %v5228
        %5235 = vmatprep.subr.bf16.mxu0 0
        %5236 = vmatpush1.bf16.msra.mxu0 0
        %5237 = vmatprep.subr.bf16.mxu0 0
        %5238 = vmatpush1.bf16.msra.mxu0 0
        %5239 = vmatprep.subr.bf16.mxu0 0
        %5240 = vmatpush1.bf16.msra.mxu0 0
        %5241 = vmatprep.subr.bf16.mxu0 0
        %5242 = vmatpush1.bf16.msra.mxu0 0
        %5243 = vmatprep.subr.bf16.mxu0 0
        %5244 = vmatpush1.bf16.msra.mxu0 0
        %5245 = vmatprep.subr.bf16.mxu0 0
        %5246 = vmatpush1.bf16.msra.mxu0 0
        %5247 = vmatprep.subr.bf16.mxu0 0
        %5248 = vmatpush1.bf16.msra.mxu0 0
        %5249 = vmatprep.subr.bf16.mxu0 0
        %5250 = vmatpush1.bf16.msra.mxu0 0
        %5251 = vmatprep.subr.bf16.mxu0 0
        %5252 = vmatpush1.bf16.msra.mxu0 0
        %5253 = vmatprep.subr.bf16.mxu0 0
        %5254 = vmatpush1.bf16.msra.mxu0 0
        %5255 = vmatprep.subr.bf16.mxu0 0
        %5256 = vmatpush1.bf16.msra.mxu0 0
        %5257 = vmatprep.subr.bf16.mxu0 0
        %5258 = vmatpush1.bf16.msra.mxu0 0
        %5259 = vmatprep.subr.bf16.mxu0 0
        %5260 = vmatpush1.bf16.msra.mxu0 0
        %5261 = vmatprep.subr.bf16.mxu0 0
        %5262 = vmatpush1.bf16.msra.mxu0 0
        %5263 = vmatprep.subr.bf16.mxu0 0
        %5264 = vmatpush1.bf16.msra.mxu0 0
        %5265 = vmatprep.mubr.bf16.mxu0 0
        %5266 = vmatmul.mubr.bf16.gmra.mrb[0].mxu0 %v5231
        %v5267 = vpop.f32.mrb[0].mxu0
        %v5268 = vadd.f32 0.0, %v5267
        %v5269 = vpop.f32.mrb[0].mxu0
        %v5270 = vpop.f32.mrb[0].mxu0
        %v5271 = vadd.f32 0.0, %v5270
        %v5272 = vpop.f32.mrb[0].mxu0
        %5273 = vdwg.mxu0
        %5274 = vrot.lane.b32.xlu0 %v1570, 32
        %v5275 = vpop.permute.xlu0 %5274
        %v5278 = vsel %vm1950, %v5036, 0
        %5280 = vmatprep.subr.bf16.mxu0 0
        %5281 = vmatpush1.bf16.msra.mxu0 %v5275
        %5282 = vmatprep.subr.bf16.mxu0 0
        %5283 = vmatpush1.bf16.msra.mxu0 0
        %5284 = vmatprep.subr.bf16.mxu0 0
        %5285 = vmatpush1.bf16.msra.mxu0 0
        %5286 = vmatprep.subr.bf16.mxu0 0
        %5287 = vmatpush1.bf16.msra.mxu0 0
        %5288 = vmatprep.subr.bf16.mxu0 0
        %5289 = vmatpush1.bf16.msra.mxu0 0
        %5290 = vmatprep.subr.bf16.mxu0 0
        %5291 = vmatpush1.bf16.msra.mxu0 0
        %5292 = vmatprep.subr.bf16.mxu0 0
        %5293 = vmatpush1.bf16.msra.mxu0 0
        %5294 = vmatprep.subr.bf16.mxu0 0
        %5295 = vmatpush1.bf16.msra.mxu0 0
        %5296 = vmatprep.subr.bf16.mxu0 0
        %5297 = vmatpush1.bf16.msra.mxu0 0
        %5298 = vmatprep.subr.bf16.mxu0 0
        %5299 = vmatpush1.bf16.msra.mxu0 0
        %5300 = vmatprep.subr.bf16.mxu0 0
        %5301 = vmatpush1.bf16.msra.mxu0 0
        %5302 = vmatprep.subr.bf16.mxu0 0
        %5303 = vmatpush1.bf16.msra.mxu0 0
        %5304 = vmatprep.subr.bf16.mxu0 0
        %5305 = vmatpush1.bf16.msra.mxu0 0
        %5306 = vmatprep.subr.bf16.mxu0 0
        %5307 = vmatpush1.bf16.msra.mxu0 0
        %5308 = vmatprep.subr.bf16.mxu0 0
        %5309 = vmatpush1.bf16.msra.mxu0 0
        %5310 = vmatprep.subr.bf16.mxu0 0
        %5311 = vmatpush1.bf16.msra.mxu0 0
        %5312 = vmatprep.mubr.bf16.mxu0 0
        %5313 = vmatmul.mubr.bf16.gmra.mrb[0].mxu0 %v5278
        %v5314 = vpop.f32.mrb[0].mxu0
        %v5315 = vadd.f32 0.0, %v5314
        %v5316 = vpop.f32.mrb[0].mxu0
        %v5317 = vpop.f32.mrb[0].mxu0
        %v5318 = vadd.f32 0.0, %v5317
        %v5319 = vpop.f32.mrb[0].mxu0
        %5320 = vdwg.mxu0
        %5321 = vrot.lane.b32.xlu0 %v1571, 32
        %v5322 = vpop.permute.xlu0 %5321
        %v5325 = vsel %vm1950, %v5037, 0
        %5327 = vmatprep.subr.bf16.mxu0 0
        %5328 = vmatpush1.bf16.msra.mxu0 %v5322
        %5329 = vmatprep.subr.bf16.mxu0 0
        %5330 = vmatpush1.bf16.msra.mxu0 0
        %5331 = vmatprep.subr.bf16.mxu0 0
        %5332 = vmatpush1.bf16.msra.mxu0 0
        %5333 = vmatprep.subr.bf16.mxu0 0
        %5334 = vmatpush1.bf16.msra.mxu0 0
        %5335 = vmatprep.subr.bf16.mxu0 0
        %5336 = vmatpush1.bf16.msra.mxu0 0
        %5337 = vmatprep.subr.bf16.mxu0 0
        %5338 = vmatpush1.bf16.msra.mxu0 0
        %5339 = vmatprep.subr.bf16.mxu0 0
        %5340 = vmatpush1.bf16.msra.mxu0 0
        %5341 = vmatprep.subr.bf16.mxu0 0
        %5342 = vmatpush1.bf16.msra.mxu0 0
        %5343 = vmatprep.subr.bf16.mxu0 0
        %5344 = vmatpush1.bf16.msra.mxu0 0
        %5345 = vmatprep.subr.bf16.mxu0 0
        %5346 = vmatpush1.bf16.msra.mxu0 0
        %5347 = vmatprep.subr.bf16.mxu0 0
        %5348 = vmatpush1.bf16.msra.mxu0 0
        %5349 = vmatprep.subr.bf16.mxu0 0
        %5350 = vmatpush1.bf16.msra.mxu0 0
        %5351 = vmatprep.subr.bf16.mxu0 0
        %5352 = vmatpush1.bf16.msra.mxu0 0
        %5353 = vmatprep.subr.bf16.mxu0 0
        %5354 = vmatpush1.bf16.msra.mxu0 0
        %5355 = vmatprep.subr.bf16.mxu0 0
        %5356 = vmatpush1.bf16.msra.mxu0 0
        %5357 = vmatprep.subr.bf16.mxu0 0
        %5358 = vmatpush1.bf16.msra.mxu0 0
        %5359 = vmatprep.mubr.bf16.mxu0 0
        %5360 = vmatmul.mubr.bf16.gmra.mrb[0].mxu0 %v5325
        %v5361 = vpop.f32.mrb[0].mxu0
        %v5362 = vadd.f32 0.0, %v5361
        %v5363 = vpop.f32.mrb[0].mxu0
        %v5364 = vpop.f32.mrb[0].mxu0
        %v5365 = vadd.f32 0.0, %v5364
        %v5366 = vpop.f32.mrb[0].mxu0
        %5367 = vdwg.mxu0
        %5368 = vrot.lane.b32.xlu0 %v1572, 32
        %v5369 = vpop.permute.xlu0 %5368
        %v5372 = vsel %vm1950, %v5038, 0
        %5374 = vmatprep.subr.bf16.mxu0 0
        %5375 = vmatpush1.bf16.msra.mxu0 %v5369
        %5376 = vmatprep.subr.bf16.mxu0 0
        %5377 = vmatpush1.bf16.msra.mxu0 0
        %5378 = vmatprep.subr.bf16.mxu0 0
        %5379 = vmatpush1.bf16.msra.mxu0 0
        %5380 = vmatprep.subr.bf16.mxu0 0
        %5381 = vmatpush1.bf16.msra.mxu0 0
        %5382 = vmatprep.subr.bf16.mxu0 0
        %5383 = vmatpush1.bf16.msra.mxu0 0
        %5384 = vmatprep.subr.bf16.mxu0 0
        %5385 = vmatpush1.bf16.msra.mxu0 0
        %5386 = vmatprep.subr.bf16.mxu0 0
        %5387 = vmatpush1.bf16.msra.mxu0 0
        %5388 = vmatprep.subr.bf16.mxu0 0
        %5389 = vmatpush1.bf16.msra.mxu0 0
        %5390 = vmatprep.subr.bf16.mxu0 0
        %5391 = vmatpush1.bf16.msra.mxu0 0
        %5392 = vmatprep.subr.bf16.mxu0 0
        %5393 = vmatpush1.bf16.msra.mxu0 0
        %5394 = vmatprep.subr.bf16.mxu0 0
        %5395 = vmatpush1.bf16.msra.mxu0 0
        %5396 = vmatprep.subr.bf16.mxu0 0
        %5397 = vmatpush1.bf16.msra.mxu0 0
        %5398 = vmatprep.subr.bf16.mxu0 0
        %5399 = vmatpush1.bf16.msra.mxu0 0
        %5400 = vmatprep.subr.bf16.mxu0 0
        %5401 = vmatpush1.bf16.msra.mxu0 0
        %5402 = vmatprep.subr.bf16.mxu0 0
        %5403 = vmatpush1.bf16.msra.mxu0 0
        %5404 = vmatprep.subr.bf16.mxu0 0
        %5405 = vmatpush1.bf16.msra.mxu0 0
        %5406 = vmatprep.mubr.bf16.mxu0 0
        %5407 = vmatmul.mubr.bf16.gmra.mrb[0].mxu0 %v5372
        %v5408 = vpop.f32.mrb[0].mxu0
        %v5409 = vadd.f32 0.0, %v5408
        %v5410 = vpop.f32.mrb[0].mxu0
        %v5411 = vpop.f32.mrb[0].mxu0
        %v5412 = vadd.f32 0.0, %v5411
        %v5413 = vpop.f32.mrb[0].mxu0
        %5414 = vdwg.mxu0
        %5431 = vrot.lane.b32.xlu0 %v3137, 32
        %v5432 = vpop.permute.xlu0 %5431
        %5433 = vrot.lane.b32.xlu0 %v3140, 32
        %v5434 = vpop.permute.xlu0 %5433
        %5435 = vrot.lane.b32.xlu0 %v3185, 32
        %v5436 = vpop.permute.xlu0 %5435
        %5437 = vrot.lane.b32.xlu0 %v3188, 32
        %v5438 = vpop.permute.xlu0 %5437
        %5439 = vrot.lane.b32.xlu0 %v3233, 32
        %v5440 = vpop.permute.xlu0 %5439
        %5441 = vrot.lane.b32.xlu0 %v3236, 32
        %v5442 = vpop.permute.xlu0 %5441
        %5443 = vrot.lane.b32.xlu0 %v3281, 32
        %v5444 = vpop.permute.xlu0 %5443
        %5445 = vrot.lane.b32.xlu0 %v3284, 32
        %v5446 = vpop.permute.xlu0 %5445
        %5447 = vrot.lane.b32.xlu0 %v3329, 32
        %v5448 = vpop.permute.xlu0 %5447
        %5449 = vrot.lane.b32.xlu0 %v3332, 32
        %v5450 = vpop.permute.xlu0 %5449
        %5451 = vrot.lane.b32.xlu0 %v3377, 32
        %v5452 = vpop.permute.xlu0 %5451
        %5453 = vrot.lane.b32.xlu0 %v3380, 32
        %v5454 = vpop.permute.xlu0 %5453
        %5455 = vrot.lane.b32.xlu0 %v3425, 32
        %v5456 = vpop.permute.xlu0 %5455
        %5457 = vrot.lane.b32.xlu0 %v3428, 32
        %v5458 = vpop.permute.xlu0 %5457
        %5459 = vrot.lane.b32.xlu0 %v3473, 32
        %v5460 = vpop.permute.xlu0 %5459
        %5461 = vrot.lane.b32.xlu0 %v3476, 32
        %v5462 = vpop.permute.xlu0 %5461
        %5495 = vrot.lane.b32.xlu0 %v4112, 64
        %v5496 = vpop.permute.xlu0 %5495
        %5497 = vrot.lane.b32.xlu0 %v4115, 64
        %v5498 = vpop.permute.xlu0 %5497
        %5499 = vrot.lane.b32.xlu0 %v4159, 64
        %v5500 = vpop.permute.xlu0 %5499
        %5501 = vrot.lane.b32.xlu0 %v4162, 64
        %v5502 = vpop.permute.xlu0 %5501
        %5503 = vrot.lane.b32.xlu0 %v4206, 64
        %v5504 = vpop.permute.xlu0 %5503
        %5505 = vrot.lane.b32.xlu0 %v4209, 64
        %v5506 = vpop.permute.xlu0 %5505
        %5507 = vrot.lane.b32.xlu0 %v4253, 64
        %v5508 = vpop.permute.xlu0 %5507
        %5509 = vrot.lane.b32.xlu0 %v4256, 64
        %v5510 = vpop.permute.xlu0 %5509
        %5511 = vrot.lane.b32.xlu0 %v4300, 64
        %v5512 = vpop.permute.xlu0 %5511
        %5513 = vrot.lane.b32.xlu0 %v4303, 64
        %v5514 = vpop.permute.xlu0 %5513
        %5515 = vrot.lane.b32.xlu0 %v4347, 64
        %v5516 = vpop.permute.xlu0 %5515
        %5517 = vrot.lane.b32.xlu0 %v4350, 64
        %v5518 = vpop.permute.xlu0 %5517
        %5519 = vrot.lane.b32.xlu0 %v4394, 64
        %v5520 = vpop.permute.xlu0 %5519
        %5521 = vrot.lane.b32.xlu0 %v4397, 64
        %v5522 = vpop.permute.xlu0 %5521
        %5523 = vrot.lane.b32.xlu0 %v4441, 64
        %v5524 = vpop.permute.xlu0 %5523
        %5525 = vrot.lane.b32.xlu0 %v4444, 64
        %v5526 = vpop.permute.xlu0 %5525
        %5559 = vrot.lane.b32.xlu0 %v5080, 96
        %v5560 = vpop.permute.xlu0 %5559
        %5561 = vrot.lane.b32.xlu0 %v5083, 96
        %v5562 = vpop.permute.xlu0 %5561
        %5563 = vrot.lane.b32.xlu0 %v5127, 96
        %v5564 = vpop.permute.xlu0 %5563
        %5565 = vrot.lane.b32.xlu0 %v5130, 96
        %v5566 = vpop.permute.xlu0 %5565
        %5567 = vrot.lane.b32.xlu0 %v5174, 96
        %v5568 = vpop.permute.xlu0 %5567
        %5569 = vrot.lane.b32.xlu0 %v5177, 96
        %v5570 = vpop.permute.xlu0 %5569
        %5571 = vrot.lane.b32.xlu0 %v5221, 96
        %v5572 = vpop.permute.xlu0 %5571
        %5573 = vrot.lane.b32.xlu0 %v5224, 96
        %v5574 = vpop.permute.xlu0 %5573
        %5575 = vrot.lane.b32.xlu0 %v5268, 96
        %v5576 = vpop.permute.xlu0 %5575
        %5577 = vrot.lane.b32.xlu0 %v5271, 96
        %v5578 = vpop.permute.xlu0 %5577
        %5579 = vrot.lane.b32.xlu0 %v5315, 96
        %v5580 = vpop.permute.xlu0 %5579
        %5581 = vrot.lane.b32.xlu0 %v5318, 96
        %v5582 = vpop.permute.xlu0 %5581
        %5583 = vrot.lane.b32.xlu0 %v5362, 96
        %v5584 = vpop.permute.xlu0 %5583
        %5585 = vrot.lane.b32.xlu0 %v5365, 96
        %v5586 = vpop.permute.xlu0 %5585
        %5587 = vrot.lane.b32.xlu0 %v5409, 96
        %v5588 = vpop.permute.xlu0 %5587
        %5589 = vrot.lane.b32.xlu0 %v5412, 96
        %v5590 = vpop.permute.xlu0 %5589
        %v5607 = vsel %vm1573, %v2173, %v5432
        %v5608 = vsel %vm1573, %v2176, %v5434
        %v5609 = vsel %vm1573, %v2217, %v5436
        %v5610 = vsel %vm1573, %v2220, %v5438
        %v5611 = vsel %vm1573, %v2261, %v5440
        %v5612 = vsel %vm1573, %v2264, %v5442
        %v5613 = vsel %vm1573, %v2305, %v5444
        %v5614 = vsel %vm1573, %v2308, %v5446
        %v5615 = vsel %vm1573, %v2349, %v5448
        %v5616 = vsel %vm1573, %v2352, %v5450
        %v5617 = vsel %vm1573, %v2393, %v5452
        %v5618 = vsel %vm1573, %v2396, %v5454
        %v5619 = vsel %vm1573, %v2437, %v5456
        %v5620 = vsel %vm1573, %v2440, %v5458
        %v5621 = vsel %vm1573, %v2481, %v5460
        %v5622 = vsel %vm1573, %v2484, %v5462
        %vm5623 = vcmask 523264
        %v5624 = vsel %vm5623, %v5607, %v5496
        %v5625 = vsel %vm5623, %v5608, %v5498
        %v5626 = vsel %vm5623, %v5609, %v5500
        %v5627 = vsel %vm5623, %v5610, %v5502
        %v5628 = vsel %vm5623, %v5611, %v5504
        %v5629 = vsel %vm5623, %v5612, %v5506
        %v5630 = vsel %vm5623, %v5613, %v5508
        %v5631 = vsel %vm5623, %v5614, %v5510
        %v5632 = vsel %vm5623, %v5615, %v5512
        %v5633 = vsel %vm5623, %v5616, %v5514
        %v5634 = vsel %vm5623, %v5617, %v5516
        %v5635 = vsel %vm5623, %v5618, %v5518
        %v5636 = vsel %vm5623, %v5619, %v5520
        %v5637 = vsel %vm5623, %v5620, %v5522
        %v5638 = vsel %vm5623, %v5621, %v5524
        %v5639 = vsel %vm5623, %v5622, %v5526
        %vm5640 = vcmask 785408
        %v5641 = vsel %vm5640, %v5624, %v5560
        %v5642 = vsel %vm5640, %v5625, %v5562
        %v5643 = vsel %vm5640, %v5626, %v5564
        %v5644 = vsel %vm5640, %v5627, %v5566
        %v5645 = vsel %vm5640, %v5628, %v5568
        %v5646 = vsel %vm5640, %v5629, %v5570
        %v5647 = vsel %vm5640, %v5630, %v5572
        %v5648 = vsel %vm5640, %v5631, %v5574
        %v5649 = vsel %vm5640, %v5632, %v5576
        %v5650 = vsel %vm5640, %v5633, %v5578
        %v5651 = vsel %vm5640, %v5634, %v5580
        %v5652 = vsel %vm5640, %v5635, %v5582
        %v5653 = vsel %vm5640, %v5636, %v5584
        %v5654 = vsel %vm5640, %v5637, %v5586
        %v5655 = vsel %vm5640, %v5638, %v5588
        %v5656 = vsel %vm5640, %v5639, %v5590
        %v5657 = vpack.c.bf16 %v5642, %v5641
        %v5658 = vpack.c.bf16 %v5644, %v5643
        %v5659 = vpack.c.bf16 %v5646, %v5645
        %v5660 = vpack.c.bf16 %v5648, %v5647
        %v5661 = vpack.c.bf16 %v5650, %v5649
        %v5662 = vpack.c.bf16 %v5652, %v5651
        %v5663 = vpack.c.bf16 %v5654, %v5653
        %v5664 = vpack.c.bf16 %v5656, %v5655
        %v5666 = vlaneseq
        %v5667 = vshrl.u32 %v5666, 7
        %v5668 = vsub.s32 0, %v5667
        %v5669 = vrot.slane %v903, %v5668
        %v5687 = vunpack.c.l.b16 %v886
        %v5688 = vunpack.c.l.b16 %v887
        %v5689 = vunpack.c.l.b16 %v888
        %v5690 = vunpack.c.l.b16 %v889
        %v5691 = vunpack.c.l.b16 %v890
        %v5692 = vunpack.c.l.b16 %v891
        %v5693 = vunpack.c.l.b16 %v892
        %v5694 = vunpack.c.l.b16 %v893
        %v5695 = vunpack.c.l.b16 %v894
        %v5696 = vunpack.c.l.b16 %v895
        %v5697 = vunpack.c.l.b16 %v896
        %v5698 = vunpack.c.l.b16 %v897
        %v5699 = vunpack.c.l.b16 %v898
        %v5700 = vunpack.c.l.b16 %v899
        %v5701 = vunpack.c.l.b16 %v900
        %v5702 = vunpack.c.l.b16 %v901
        %v5703 = vpack.c.b16 %v5688, %v5687
        %v5704 = vpack.c.b16 %v5690, %v5689
        %v5705 = vpack.c.b16 %v5692, %v5691
        %v5706 = vpack.c.b16 %v5694, %v5693
        %v5707 = vpack.c.b16 %v5696, %v5695
        %v5708 = vpack.c.b16 %v5698, %v5697
        %v5709 = vpack.c.b16 %v5700, %v5699
        %v5710 = vpack.c.b16 %v5702, %v5701
        %5719 = vmatprep.subr.bf16.mxu0 0
        %5720 = vmatpush1.bf16.msra.mxu0 %v5703
        %5721 = vmatprep.subr.bf16.mxu0 0
        %5722 = vmatpush1.bf16.msra.mxu0 %v5704
        %5723 = vmatprep.subr.bf16.mxu0 0
        %5724 = vmatpush1.bf16.msra.mxu0 %v5705
        %5725 = vmatprep.subr.bf16.mxu0 0
        %5726 = vmatpush1.bf16.msra.mxu0 %v5706
        %5727 = vmatprep.subr.bf16.mxu0 0
        %5728 = vmatpush1.bf16.msra.mxu0 %v5707
        %5729 = vmatprep.subr.bf16.mxu0 0
        %5730 = vmatpush1.bf16.msra.mxu0 %v5708
        %5731 = vmatprep.subr.bf16.mxu0 0
        %5732 = vmatpush1.bf16.msra.mxu0 %v5709
        %5733 = vmatprep.subr.bf16.mxu0 0
        %5734 = vmatpush1.bf16.msra.mxu0 %v5710
        %5735 = vmatprep.subr.bf16.mxu0 0
        %5736 = vmatpush1.bf16.msra.mxu0 0
        %5737 = vmatprep.subr.bf16.mxu0 0
        %5738 = vmatpush1.bf16.msra.mxu0 0
        %5739 = vmatprep.subr.bf16.mxu0 0
        %5740 = vmatpush1.bf16.msra.mxu0 0
        %5741 = vmatprep.subr.bf16.mxu0 0
        %5742 = vmatpush1.bf16.msra.mxu0 0
        %5743 = vmatprep.subr.bf16.mxu0 0
        %5744 = vmatpush1.bf16.msra.mxu0 0
        %5745 = vmatprep.subr.bf16.mxu0 0
        %5746 = vmatpush1.bf16.msra.mxu0 0
        %5747 = vmatprep.subr.bf16.mxu0 0
        %5748 = vmatpush1.bf16.msra.mxu0 0
        %5749 = vmatprep.subr.bf16.mxu0 0
        %5750 = vmatpush1.bf16.msra.mxu0 0
        %5751 = vmatprep.mubr.bf16.mxu0 0
        %5752 = vmatmul.mubr.bf16.gmra.mrb[0].mxu0 %v5657
        %v5753 = vpop.f32.mrb[0].mxu0
        %v5754 = vadd.f32 %v5669, %v5753
        %v5755 = vpop.f32.mrb[0].mxu0
        %v5756 = vpop.f32.mrb[0].mxu0
        %v5757 = vadd.f32 %v5669, %v5756
        %v5758 = vpop.f32.mrb[0].mxu0
        %5759 = vmatprep.mubr.bf16.mxu0 0
        %5760 = vmatmul.mubr.bf16.gmra.mrb[0].mxu0 %v5658
        %v5761 = vpop.f32.mrb[0].mxu0
        %v5762 = vadd.f32 %v5669, %v5761
        %v5763 = vpop.f32.mrb[0].mxu0
        %v5764 = vpop.f32.mrb[0].mxu0
        %v5765 = vadd.f32 %v5669, %v5764
        %v5766 = vpop.f32.mrb[0].mxu0
        %5767 = vmatprep.mubr.bf16.mxu0 0
        %5768 = vmatmul.mubr.bf16.gmra.mrb[0].mxu0 %v5659
        %v5769 = vpop.f32.mrb[0].mxu0
        %v5770 = vadd.f32 %v5669, %v5769
        %v5771 = vpop.f32.mrb[0].mxu0
        %v5772 = vpop.f32.mrb[0].mxu0
        %v5773 = vadd.f32 %v5669, %v5772
        %v5774 = vpop.f32.mrb[0].mxu0
        %5775 = vmatprep.mubr.bf16.mxu0 0
        %5776 = vmatmul.mubr.bf16.gmra.mrb[0].mxu0 %v5660
        %v5777 = vpop.f32.mrb[0].mxu0
        %v5778 = vadd.f32 %v5669, %v5777
        %v5779 = vpop.f32.mrb[0].mxu0
        %v5780 = vpop.f32.mrb[0].mxu0
        %v5781 = vadd.f32 %v5669, %v5780
        %v5782 = vpop.f32.mrb[0].mxu0
        %5783 = vmatprep.mubr.bf16.mxu0 0
        %5784 = vmatmul.mubr.bf16.gmra.mrb[0].mxu0 %v5661
        %v5785 = vpop.f32.mrb[0].mxu0
        %v5786 = vadd.f32 %v5669, %v5785
        %v5787 = vpop.f32.mrb[0].mxu0
        %v5788 = vpop.f32.mrb[0].mxu0
        %v5789 = vadd.f32 %v5669, %v5788
        %v5790 = vpop.f32.mrb[0].mxu0
        %5791 = vmatprep.mubr.bf16.mxu0 0
        %5792 = vmatmul.mubr.bf16.gmra.mrb[0].mxu0 %v5662
        %v5793 = vpop.f32.mrb[0].mxu0
        %v5794 = vadd.f32 %v5669, %v5793
        %v5795 = vpop.f32.mrb[0].mxu0
        %v5796 = vpop.f32.mrb[0].mxu0
        %v5797 = vadd.f32 %v5669, %v5796
        %v5798 = vpop.f32.mrb[0].mxu0
        %5799 = vmatprep.mubr.bf16.mxu0 0
        %5800 = vmatmul.mubr.bf16.gmra.mrb[0].mxu0 %v5663
        %v5801 = vpop.f32.mrb[0].mxu0
        %v5802 = vadd.f32 %v5669, %v5801
        %v5803 = vpop.f32.mrb[0].mxu0
        %v5804 = vpop.f32.mrb[0].mxu0
        %v5805 = vadd.f32 %v5669, %v5804
        %v5806 = vpop.f32.mrb[0].mxu0
        %5807 = vmatprep.mubr.bf16.mxu0 0
        %5808 = vmatmul.mubr.bf16.gmra.mrb[0].mxu0 %v5664
        %v5809 = vpop.f32.mrb[0].mxu0
        %v5810 = vadd.f32 %v5669, %v5809
        %v5811 = vpop.f32.mrb[0].mxu0
        %v5812 = vpop.f32.mrb[0].mxu0
        %v5813 = vadd.f32 %v5669, %v5812
        %v5814 = vpop.f32.mrb[0].mxu0
        %5815 = vdwg.mxu0
        %v5816 = vadd.f32 %v809, %v5754
        %v5817 = vadd.f32 %v810, %v5757
        %v5818 = vadd.f32 %v811, %v5762
        %v5819 = vadd.f32 %v812, %v5765
        %v5820 = vadd.f32 %v813, %v5770
        %v5821 = vadd.f32 %v814, %v5773
        %v5822 = vadd.f32 %v815, %v5778
        %v5823 = vadd.f32 %v816, %v5781
        %v5824 = vadd.f32 %v817, %v5786
        %v5825 = vadd.f32 %v818, %v5789
        %v5826 = vadd.f32 %v819, %v5794
        %v5827 = vadd.f32 %v820, %v5797
        %v5828 = vadd.f32 %v821, %v5802
        %v5829 = vadd.f32 %v822, %v5805
        %v5830 = vadd.f32 %v823, %v5810
        %v5831 = vadd.f32 %v824, %v5813
        %5832 = vadd.xlane.f32.xlu0 %v5816
        %v5833 = vpop.xlane.xlu0 %5832
        %5834 = vadd.xlane.f32.xlu0 %v5817
        %v5835 = vpop.xlane.xlu0 %5834
        %5836 = vadd.xlane.f32.xlu0 %v5818
        %v5837 = vpop.xlane.xlu0 %5836
        %5838 = vadd.xlane.f32.xlu0 %v5819
        %v5839 = vpop.xlane.xlu0 %5838
        %5840 = vadd.xlane.f32.xlu0 %v5820
        %v5841 = vpop.xlane.xlu0 %5840
        %5842 = vadd.xlane.f32.xlu0 %v5821
        %v5843 = vpop.xlane.xlu0 %5842
        %5844 = vadd.xlane.f32.xlu0 %v5822
        %v5845 = vpop.xlane.xlu0 %5844
        %5846 = vadd.xlane.f32.xlu0 %v5823
        %v5847 = vpop.xlane.xlu0 %5846
        %5848 = vadd.xlane.f32.xlu0 %v5824
        %v5849 = vpop.xlane.xlu0 %5848
        %5850 = vadd.xlane.f32.xlu0 %v5825
        %v5851 = vpop.xlane.xlu0 %5850
        %5852 = vadd.xlane.f32.xlu0 %v5826
        %v5853 = vpop.xlane.xlu0 %5852
        %5854 = vadd.xlane.f32.xlu0 %v5827
        %v5855 = vpop.xlane.xlu0 %5854
        %5856 = vadd.xlane.f32.xlu0 %v5828
        %v5857 = vpop.xlane.xlu0 %5856
        %5858 = vadd.xlane.f32.xlu0 %v5829
        %v5859 = vpop.xlane.xlu0 %5858
        %5860 = vadd.xlane.f32.xlu0 %v5830
        %v5861 = vpop.xlane.xlu0 %5860
        %5862 = vadd.xlane.f32.xlu0 %v5831
        %v5863 = vpop.xlane.xlu0 %5862
        %v5864 = vmul.f32 %v5833, %v998
        %v5865 = vmul.f32 %v5835, %v998
        %v5866 = vmul.f32 %v5837, %v998
        %v5867 = vmul.f32 %v5839, %v998
        %v5868 = vmul.f32 %v5841, %v998
        %v5869 = vmul.f32 %v5843, %v998
        %v5870 = vmul.f32 %v5845, %v998
        %v5871 = vmul.f32 %v5847, %v998
        %v5872 = vmul.f32 %v5849, %v998
        %v5873 = vmul.f32 %v5851, %v998
        %v5874 = vmul.f32 %v5853, %v998
        %v5875 = vmul.f32 %v5855, %v998
        %v5876 = vmul.f32 %v5857, %v998
        %v5877 = vmul.f32 %v5859, %v998
        %v5878 = vmul.f32 %v5861, %v998
        %v5879 = vmul.f32 %v5863, %v998
        %v5880 = vsub.f32 %v5816, %v5864
        %v5881 = vsub.f32 %v5817, %v5865
        %v5882 = vsub.f32 %v5818, %v5866
        %v5883 = vsub.f32 %v5819, %v5867
        %v5884 = vsub.f32 %v5820, %v5868
        %v5885 = vsub.f32 %v5821, %v5869
        %v5886 = vsub.f32 %v5822, %v5870
        %v5887 = vsub.f32 %v5823, %v5871
        %v5888 = vsub.f32 %v5824, %v5872
        %v5889 = vsub.f32 %v5825, %v5873
        %v5890 = vsub.f32 %v5826, %v5874
        %v5891 = vsub.f32 %v5827, %v5875
        %v5892 = vsub.f32 %v5828, %v5876
        %v5893 = vsub.f32 %v5829, %v5877
        %v5894 = vsub.f32 %v5830, %v5878
        %v5895 = vsub.f32 %v5831, %v5879
        %v5896 = vmul.f32 %v5880, %v5880
        %v5897 = vmul.f32 %v5881, %v5881
        %v5898 = vmul.f32 %v5882, %v5882
        %v5899 = vmul.f32 %v5883, %v5883
        %v5900 = vmul.f32 %v5884, %v5884
        %v5901 = vmul.f32 %v5885, %v5885
        %v5902 = vmul.f32 %v5886, %v5886
        %v5903 = vmul.f32 %v5887, %v5887
        %v5904 = vmul.f32 %v5888, %v5888
        %v5905 = vmul.f32 %v5889, %v5889
        %v5906 = vmul.f32 %v5890, %v5890
        %v5907 = vmul.f32 %v5891, %v5891
        %v5908 = vmul.f32 %v5892, %v5892
        %v5909 = vmul.f32 %v5893, %v5893
        %v5910 = vmul.f32 %v5894, %v5894
        %v5911 = vmul.f32 %v5895, %v5895
        %5912 = vadd.xlane.f32.xlu0 %v5896
        %v5913 = vpop.xlane.xlu0 %5912
        %5914 = vadd.xlane.f32.xlu0 %v5897
        %v5915 = vpop.xlane.xlu0 %5914
        %5916 = vadd.xlane.f32.xlu0 %v5898
        %v5917 = vpop.xlane.xlu0 %5916
        %5918 = vadd.xlane.f32.xlu0 %v5899
        %v5919 = vpop.xlane.xlu0 %5918
        %5920 = vadd.xlane.f32.xlu0 %v5900
        %v5921 = vpop.xlane.xlu0 %5920
        %5922 = vadd.xlane.f32.xlu0 %v5901
        %v5923 = vpop.xlane.xlu0 %5922
        %5924 = vadd.xlane.f32.xlu0 %v5902
        %v5925 = vpop.xlane.xlu0 %5924
        %5926 = vadd.xlane.f32.xlu0 %v5903
        %v5927 = vpop.xlane.xlu0 %5926
        %5928 = vadd.xlane.f32.xlu0 %v5904
        %v5929 = vpop.xlane.xlu0 %5928
        %5930 = vadd.xlane.f32.xlu0 %v5905
        %v5931 = vpop.xlane.xlu0 %5930
        %5932 = vadd.xlane.f32.xlu0 %v5906
        %v5933 = vpop.xlane.xlu0 %5932
        %5934 = vadd.xlane.f32.xlu0 %v5907
        %v5935 = vpop.xlane.xlu0 %5934
        %5936 = vadd.xlane.f32.xlu0 %v5908
        %v5937 = vpop.xlane.xlu0 %5936
        %5938 = vadd.xlane.f32.xlu0 %v5909
        %v5939 = vpop.xlane.xlu0 %5938
        %5940 = vadd.xlane.f32.xlu0 %v5910
        %v5941 = vpop.xlane.xlu0 %5940
        %5942 = vadd.xlane.f32.xlu0 %v5911
        %v5943 = vpop.xlane.xlu0 %5942
        %v5944 = vmul.f32 %v5913, %v998
        %v5945 = vmul.f32 %v5915, %v998
        %v5946 = vmul.f32 %v5917, %v998
        %v5947 = vmul.f32 %v5919, %v998
        %v5948 = vmul.f32 %v5921, %v998
        %v5949 = vmul.f32 %v5923, %v998
        %v5950 = vmul.f32 %v5925, %v998
        %v5951 = vmul.f32 %v5927, %v998
        %v5952 = vmul.f32 %v5929, %v998
        %v5953 = vmul.f32 %v5931, %v998
        %v5954 = vmul.f32 %v5933, %v998
        %v5955 = vmul.f32 %v5935, %v998
        %v5956 = vmul.f32 %v5937, %v998
        %v5957 = vmul.f32 %v5939, %v998
        %v5958 = vmul.f32 %v5941, %v998
        %v5959 = vmul.f32 %v5943, %v998
        %v5960 = vadd.f32 %v5944, 1e-05
        %v5961 = vadd.f32 %v5945, 1e-05
        %v5962 = vadd.f32 %v5946, 1e-05
        %v5963 = vadd.f32 %v5947, 1e-05
        %v5964 = vadd.f32 %v5948, 1e-05
        %v5965 = vadd.f32 %v5949, 1e-05
        %v5966 = vadd.f32 %v5950, 1e-05
        %v5967 = vadd.f32 %v5951, 1e-05
        %v5968 = vadd.f32 %v5952, 1e-05
        %v5969 = vadd.f32 %v5953, 1e-05
        %v5970 = vadd.f32 %v5954, 1e-05
        %v5971 = vadd.f32 %v5955, 1e-05
        %v5972 = vadd.f32 %v5956, 1e-05
        %v5973 = vadd.f32 %v5957, 1e-05
        %v5974 = vadd.f32 %v5958, 1e-05
        %v5975 = vadd.f32 %v5959, 1e-05
        %v5976 = vrsqrt.pop %v5960
        %v5977 = vrsqrt.pop %v5961
        %v5978 = vrsqrt.pop %v5962
        %v5979 = vrsqrt.pop %v5963
        %v5980 = vrsqrt.pop %v5964
        %v5981 = vrsqrt.pop %v5965
        %v5982 = vrsqrt.pop %v5966
        %v5983 = vrsqrt.pop %v5967
        %v5984 = vrsqrt.pop %v5968
        %v5985 = vrsqrt.pop %v5969
        %v5986 = vrsqrt.pop %v5970
        %v5987 = vrsqrt.pop %v5971
        %v5988 = vrsqrt.pop %v5972
        %v5989 = vrsqrt.pop %v5973
        %v5990 = vrsqrt.pop %v5974
        %v5991 = vrsqrt.pop %v5975
        %v5992 = vmul.f32 %v5880, %v5976
        %v5993 = vmul.f32 %v5881, %v5977
        %v5994 = vmul.f32 %v5882, %v5978
        %v5995 = vmul.f32 %v5883, %v5979
        %v5996 = vmul.f32 %v5884, %v5980
        %v5997 = vmul.f32 %v5885, %v5981
        %v5998 = vmul.f32 %v5886, %v5982
        %v5999 = vmul.f32 %v5887, %v5983
        %v6000 = vmul.f32 %v5888, %v5984
        %v6001 = vmul.f32 %v5889, %v5985
        %v6002 = vmul.f32 %v5890, %v5986
        %v6003 = vmul.f32 %v5891, %v5987
        %v6004 = vmul.f32 %v5892, %v5988
        %v6005 = vmul.f32 %v5893, %v5989
        %v6006 = vmul.f32 %v5894, %v5990
        %v6007 = vmul.f32 %v5895, %v5991
        %v6009 = vlaneseq
        %v6010 = vshrl.u32 %v6009, 7
        %v6011 = vsub.s32 0, %v6010
        %v6012 = vrot.slane %v905, %v6011
        %v6014 = vmul.f32 %v5992, %v6012
        %v6015 = vmul.f32 %v5993, %v6012
        %v6016 = vmul.f32 %v5994, %v6012
        %v6017 = vmul.f32 %v5995, %v6012
        %v6018 = vmul.f32 %v5996, %v6012
        %v6019 = vmul.f32 %v5997, %v6012
        %v6020 = vmul.f32 %v5998, %v6012
        %v6021 = vmul.f32 %v5999, %v6012
        %v6022 = vmul.f32 %v6000, %v6012
        %v6023 = vmul.f32 %v6001, %v6012
        %v6024 = vmul.f32 %v6002, %v6012
        %v6025 = vmul.f32 %v6003, %v6012
        %v6026 = vmul.f32 %v6004, %v6012
        %v6027 = vmul.f32 %v6005, %v6012
        %v6028 = vmul.f32 %v6006, %v6012
        %v6029 = vmul.f32 %v6007, %v6012
        %v6031 = vlaneseq
        %v6032 = vshrl.u32 %v6031, 7
        %v6033 = vsub.s32 0, %v6032
        %v6034 = vrot.slane %v907, %v6033
        %v6036 = vadd.f32 %v6014, %v6034
        %v6037 = vadd.f32 %v6015, %v6034
        %v6038 = vadd.f32 %v6016, %v6034
        %v6039 = vadd.f32 %v6017, %v6034
        %v6040 = vadd.f32 %v6018, %v6034
        %v6041 = vadd.f32 %v6019, %v6034
        %v6042 = vadd.f32 %v6020, %v6034
        %v6043 = vadd.f32 %v6021, %v6034
        %v6044 = vadd.f32 %v6022, %v6034
        %v6045 = vadd.f32 %v6023, %v6034
        %v6046 = vadd.f32 %v6024, %v6034
        %v6047 = vadd.f32 %v6025, %v6034
        %v6048 = vadd.f32 %v6026, %v6034
        %v6049 = vadd.f32 %v6027, %v6034
        %v6050 = vadd.f32 %v6028, %v6034
        %v6051 = vadd.f32 %v6029, %v6034
        %v6052 = vpack.c.bf16 %v6037, %v6036
        %v6053 = vpack.c.bf16 %v6039, %v6038
        %v6054 = vpack.c.bf16 %v6041, %v6040
        %v6055 = vpack.c.bf16 %v6043, %v6042
        %v6056 = vpack.c.bf16 %v6045, %v6044
        %v6057 = vpack.c.bf16 %v6047, %v6046
        %v6058 = vpack.c.bf16 %v6049, %v6048
        %v6059 = vpack.c.bf16 %v6051, %v6050
        %v6061 = vlaneseq
        %v6062 = vshrl.u32 %v6061, 7
        %v6063 = vsub.s32 0, %v6062
        %v6064 = vrot.slane %v929, %v6063
        %v6065 = vlaneseq
        %v6066 = vshrl.u32 %v6065, 7
        %v6067 = vsub.s32 1, %v6066
        %v6068 = vrot.slane %v929, %v6067
        %v6087 = vunpack.c.l.b16 %v911
        %v6088 = vunpack.c.h.b16 %v911
        %v6089 = vunpack.c.l.b16 %v912
        %v6090 = vunpack.c.h.b16 %v912
        %v6091 = vunpack.c.l.b16 %v913
        %v6092 = vunpack.c.h.b16 %v913
        %v6093 = vunpack.c.l.b16 %v914
        %v6094 = vunpack.c.h.b16 %v914
        %v6095 = vunpack.c.l.b16 %v915
        %v6096 = vunpack.c.h.b16 %v915
        %v6097 = vunpack.c.l.b16 %v916
        %v6098 = vunpack.c.h.b16 %v916
        %v6099 = vunpack.c.l.b16 %v917
        %v6100 = vunpack.c.h.b16 %v917
        %v6101 = vunpack.c.l.b16 %v918
        %v6102 = vunpack.c.h.b16 %v918
        %v6103 = vunpack.c.l.b16 %v919
        %v6104 = vunpack.c.h.b16 %v919
        %v6105 = vunpack.c.l.b16 %v920
        %v6106 = vunpack.c.h.b16 %v920
        %v6107 = vunpack.c.l.b16 %v921
        %v6108 = vunpack.c.h.b16 %v921
        %v6109 = vunpack.c.l.b16 %v922
        %v6110 = vunpack.c.h.b16 %v922
        %v6111 = vunpack.c.l.b16 %v923
        %v6112 = vunpack.c.h.b16 %v923
        %v6113 = vunpack.c.l.b16 %v924
        %v6114 = vunpack.c.h.b16 %v924
        %v6115 = vunpack.c.l.b16 %v925
        %v6116 = vunpack.c.h.b16 %v925
        %v6117 = vunpack.c.l.b16 %v926
        %v6118 = vunpack.c.h.b16 %v926
        %v6119 = vpack.c.b16 %v6089, %v6087
        %v6120 = vpack.c.b16 %v6090, %v6088
        %v6121 = vpack.c.b16 %v6093, %v6091
        %v6122 = vpack.c.b16 %v6094, %v6092
        %v6123 = vpack.c.b16 %v6097, %v6095
        %v6124 = vpack.c.b16 %v6098, %v6096
        %v6125 = vpack.c.b16 %v6101, %v6099
        %v6126 = vpack.c.b16 %v6102, %v6100
        %v6127 = vpack.c.b16 %v6105, %v6103
        %v6128 = vpack.c.b16 %v6106, %v6104
        %v6129 = vpack.c.b16 %v6109, %v6107
        %v6130 = vpack.c.b16 %v6110, %v6108
        %v6131 = vpack.c.b16 %v6113, %v6111
        %v6132 = vpack.c.b16 %v6114, %v6112
        %v6133 = vpack.c.b16 %v6117, %v6115
        %v6134 = vpack.c.b16 %v6118, %v6116
        %6151 = vmatprep.subr.bf16.mxu0 %v6120
        %6152 = vmatpush1.bf16.msra.mxu0 %v6119
        %6153 = vmatprep.subr.bf16.mxu0 %v6122
        %6154 = vmatpush1.bf16.msra.mxu0 %v6121
        %6155 = vmatprep.subr.bf16.mxu0 %v6124
        %6156 = vmatpush1.bf16.msra.mxu0 %v6123
        %6157 = vmatprep.subr.bf16.mxu0 %v6126
        %6158 = vmatpush1.bf16.msra.mxu0 %v6125
        %6159 = vmatprep.subr.bf16.mxu0 %v6128
        %6160 = vmatpush1.bf16.msra.mxu0 %v6127
        %6161 = vmatprep.subr.bf16.mxu0 %v6130
        %6162 = vmatpush1.bf16.msra.mxu0 %v6129
        %6163 = vmatprep.subr.bf16.mxu0 %v6132
        %6164 = vmatpush1.bf16.msra.mxu0 %v6131
        %6165 = vmatprep.subr.bf16.mxu0 %v6134
        %6166 = vmatpush1.bf16.msra.mxu0 %v6133
        %6167 = vmatprep.subr.bf16.mxu0 0
        %6168 = vmatpush1.bf16.msra.mxu0 0
        %6169 = vmatprep.subr.bf16.mxu0 0
        %6170 = vmatpush1.bf16.msra.mxu0 0
        %6171 = vmatprep.subr.bf16.mxu0 0
        %6172 = vmatpush1.bf16.msra.mxu0 0
        %6173 = vmatprep.subr.bf16.mxu0 0
        %6174 = vmatpush1.bf16.msra.mxu0 0
        %6175 = vmatprep.subr.bf16.mxu0 0
        %6176 = vmatpush1.bf16.msra.mxu0 0
        %6177 = vmatprep.subr.bf16.mxu0 0
        %6178 = vmatpush1.bf16.msra.mxu0 0
        %6179 = vmatprep.subr.bf16.mxu0 0
        %6180 = vmatpush1.bf16.msra.mxu0 0
        %6181 = vmatprep.subr.bf16.mxu0 0
        %6182 = vmatpush1.bf16.msra.mxu0 0
        %6183 = vmatprep.mubr.bf16.mxu0 0
        %6184 = vmatmul.mubr.bf16.gmra.mrb[0].mxu0 %v6052
        %v6185 = vpop.f32.mrb[0].mxu0
        %v6186 = vadd.f32 %v6064, %v6185
        %v6187 = vpop.f32.mrb[0].mxu0
        %v6188 = vadd.f32 %v6068, %v6187
        %v6189 = vpop.f32.mrb[0].mxu0
        %v6190 = vadd.f32 %v6064, %v6189
        %v6191 = vpop.f32.mrb[0].mxu0
        %v6192 = vadd.f32 %v6068, %v6191
        %6193 = vmatprep.mubr.bf16.mxu0 0
        %6194 = vmatmul.mubr.bf16.gmra.mrb[0].mxu0 %v6053
        %v6195 = vpop.f32.mrb[0].mxu0
        %v6196 = vadd.f32 %v6064, %v6195
        %v6197 = vpop.f32.mrb[0].mxu0
        %v6198 = vadd.f32 %v6068, %v6197
        %v6199 = vpop.f32.mrb[0].mxu0
        %v6200 = vadd.f32 %v6064, %v6199
        %v6201 = vpop.f32.mrb[0].mxu0
        %v6202 = vadd.f32 %v6068, %v6201
        %6203 = vmatprep.mubr.bf16.mxu0 0
        %6204 = vmatmul.mubr.bf16.gmra.mrb[0].mxu0 %v6054
        %v6205 = vpop.f32.mrb[0].mxu0
        %v6206 = vadd.f32 %v6064, %v6205
        %v6207 = vpop.f32.mrb[0].mxu0
        %v6208 = vadd.f32 %v6068, %v6207
        %v6209 = vpop.f32.mrb[0].mxu0
        %v6210 = vadd.f32 %v6064, %v6209
        %v6211 = vpop.f32.mrb[0].mxu0
        %v6212 = vadd.f32 %v6068, %v6211
        %6213 = vmatprep.mubr.bf16.mxu0 0
        %6214 = vmatmul.mubr.bf16.gmra.mrb[0].mxu0 %v6055
        %v6215 = vpop.f32.mrb[0].mxu0
        %v6216 = vadd.f32 %v6064, %v6215
        %v6217 = vpop.f32.mrb[0].mxu0
        %v6218 = vadd.f32 %v6068, %v6217
        %v6219 = vpop.f32.mrb[0].mxu0
        %v6220 = vadd.f32 %v6064, %v6219
        %v6221 = vpop.f32.mrb[0].mxu0
        %v6222 = vadd.f32 %v6068, %v6221
        %6223 = vmatprep.mubr.bf16.mxu0 0
        %6224 = vmatmul.mubr.bf16.gmra.mrb[0].mxu0 %v6056
        %v6225 = vpop.f32.mrb[0].mxu0
        %v6226 = vadd.f32 %v6064, %v6225
        %v6227 = vpop.f32.mrb[0].mxu0
        %v6228 = vadd.f32 %v6068, %v6227
        %v6229 = vpop.f32.mrb[0].mxu0
        %v6230 = vadd.f32 %v6064, %v6229
        %v6231 = vpop.f32.mrb[0].mxu0
        %v6232 = vadd.f32 %v6068, %v6231
        %6233 = vmatprep.mubr.bf16.mxu0 0
        %6234 = vmatmul.mubr.bf16.gmra.mrb[0].mxu0 %v6057
        %v6235 = vpop.f32.mrb[0].mxu0
        %v6236 = vadd.f32 %v6064, %v6235
        %v6237 = vpop.f32.mrb[0].mxu0
        %v6238 = vadd.f32 %v6068, %v6237
        %v6239 = vpop.f32.mrb[0].mxu0
        %v6240 = vadd.f32 %v6064, %v6239
        %v6241 = vpop.f32.mrb[0].mxu0
        %v6242 = vadd.f32 %v6068, %v6241
        %6243 = vmatprep.mubr.bf16.mxu0 0
        %6244 = vmatmul.mubr.bf16.gmra.mrb[0].mxu0 %v6058
        %v6245 = vpop.f32.mrb[0].mxu0
        %v6246 = vadd.f32 %v6064, %v6245
        %v6247 = vpop.f32.mrb[0].mxu0
        %v6248 = vadd.f32 %v6068, %v6247
        %v6249 = vpop.f32.mrb[0].mxu0
        %v6250 = vadd.f32 %v6064, %v6249
        %v6251 = vpop.f32.mrb[0].mxu0
        %v6252 = vadd.f32 %v6068, %v6251
        %6253 = vmatprep.mubr.bf16.mxu0 0
        %6254 = vmatmul.mubr.bf16.gmra.mrb[0].mxu0 %v6059
        %v6255 = vpop.f32.mrb[0].mxu0
        %v6256 = vadd.f32 %v6064, %v6255
        %v6257 = vpop.f32.mrb[0].mxu0
        %v6258 = vadd.f32 %v6068, %v6257
        %v6259 = vpop.f32.mrb[0].mxu0
        %v6260 = vadd.f32 %v6064, %v6259
        %v6261 = vpop.f32.mrb[0].mxu0
        %v6262 = vadd.f32 %v6068, %v6261
        %6263 = vdwg.mxu0
        %v6264 = vmul.f32 %v6186, 1.702
        %v6265 = vmul.f32 %v6188, 1.702
        %v6266 = vmul.f32 %v6190, 1.702
        %v6267 = vmul.f32 %v6192, 1.702
        %v6268 = vmul.f32 %v6196, 1.702
        %v6269 = vmul.f32 %v6198, 1.702
        %v6270 = vmul.f32 %v6200, 1.702
        %v6271 = vmul.f32 %v6202, 1.702
        %v6272 = vmul.f32 %v6206, 1.702
        %v6273 = vmul.f32 %v6208, 1.702
        %v6274 = vmul.f32 %v6210, 1.702
        %v6275 = vmul.f32 %v6212, 1.702
        %v6276 = vmul.f32 %v6216, 1.702
        %v6277 = vmul.f32 %v6218, 1.702
        %v6278 = vmul.f32 %v6220, 1.702
        %v6279 = vmul.f32 %v6222, 1.702
        %v6280 = vmul.f32 %v6226, 1.702
        %v6281 = vmul.f32 %v6228, 1.702
        %v6282 = vmul.f32 %v6230, 1.702
        %v6283 = vmul.f32 %v6232, 1.702
        %v6284 = vmul.f32 %v6236, 1.702
        %v6285 = vmul.f32 %v6238, 1.702
        %v6286 = vmul.f32 %v6240, 1.702
        %v6287 = vmul.f32 %v6242, 1.702
        %v6288 = vmul.f32 %v6246, 1.702
        %v6289 = vmul.f32 %v6248, 1.702
        %v6290 = vmul.f32 %v6250, 1.702
        %v6291 = vmul.f32 %v6252, 1.702
        %v6292 = vmul.f32 %v6256, 1.702
        %v6293 = vmul.f32 %v6258, 1.702
        %v6294 = vmul.f32 %v6260, 1.702
        %v6295 = vmul.f32 %v6262, 1.702
        %v6296 = vxor.u32 %v6264, 2147483648
        %v6297 = vxor.u32 %v6265, 2147483648
        %v6298 = vxor.u32 %v6266, 2147483648
        %v6299 = vxor.u32 %v6267, 2147483648
        %v6300 = vxor.u32 %v6268, 2147483648
        %v6301 = vxor.u32 %v6269, 2147483648
        %v6302 = vxor.u32 %v6270, 2147483648
        %v6303 = vxor.u32 %v6271, 2147483648
        %v6304 = vxor.u32 %v6272, 2147483648
        %v6305 = vxor.u32 %v6273, 2147483648
        %v6306 = vxor.u32 %v6274, 2147483648
        %v6307 = vxor.u32 %v6275, 2147483648
        %v6308 = vxor.u32 %v6276, 2147483648
        %v6309 = vxor.u32 %v6277, 2147483648
        %v6310 = vxor.u32 %v6278, 2147483648
        %v6311 = vxor.u32 %v6279, 2147483648
        %v6312 = vxor.u32 %v6280, 2147483648
        %v6313 = vxor.u32 %v6281, 2147483648
        %v6314 = vxor.u32 %v6282, 2147483648
        %v6315 = vxor.u32 %v6283, 2147483648
        %v6316 = vxor.u32 %v6284, 2147483648
        %v6317 = vxor.u32 %v6285, 2147483648
        %v6318 = vxor.u32 %v6286, 2147483648
        %v6319 = vxor.u32 %v6287, 2147483648
        %v6320 = vxor.u32 %v6288, 2147483648
        %v6321 = vxor.u32 %v6289, 2147483648
        %v6322 = vxor.u32 %v6290, 2147483648
        %v6323 = vxor.u32 %v6291, 2147483648
        %v6324 = vxor.u32 %v6292, 2147483648
        %v6325 = vxor.u32 %v6293, 2147483648
        %v6326 = vxor.u32 %v6294, 2147483648
        %v6327 = vxor.u32 %v6295, 2147483648
        %v6328 = vmul.f32 %v6296, 1.442695
        %v6329 = vpow.pop %v6328
        %v6330 = vmul.f32 %v6297, 1.442695
        %v6331 = vpow.pop %v6330
        %v6332 = vmul.f32 %v6298, 1.442695
        %v6333 = vpow.pop %v6332
        %v6334 = vmul.f32 %v6299, 1.442695
        %v6335 = vpow.pop %v6334
        %v6336 = vmul.f32 %v6300, 1.442695
        %v6337 = vpow.pop %v6336
        %v6338 = vmul.f32 %v6301, 1.442695
        %v6339 = vpow.pop %v6338
        %v6340 = vmul.f32 %v6302, 1.442695
        %v6341 = vpow.pop %v6340
        %v6342 = vmul.f32 %v6303, 1.442695
        %v6343 = vpow.pop %v6342
        %v6344 = vmul.f32 %v6304, 1.442695
        %v6345 = vpow.pop %v6344
        %v6346 = vmul.f32 %v6305, 1.442695
        %v6347 = vpow.pop %v6346
        %v6348 = vmul.f32 %v6306, 1.442695
        %v6349 = vpow.pop %v6348
        %v6350 = vmul.f32 %v6307, 1.442695
        %v6351 = vpow.pop %v6350
        %v6352 = vmul.f32 %v6308, 1.442695
        %v6353 = vpow.pop %v6352
        %v6354 = vmul.f32 %v6309, 1.442695
        %v6355 = vpow.pop %v6354
        %v6356 = vmul.f32 %v6310, 1.442695
        %v6357 = vpow.pop %v6356
        %v6358 = vmul.f32 %v6311, 1.442695
        %v6359 = vpow.pop %v6358
        %v6360 = vmul.f32 %v6312, 1.442695
        %v6361 = vpow.pop %v6360
        %v6362 = vmul.f32 %v6313, 1.442695
        %v6363 = vpow.pop %v6362
        %v6364 = vmul.f32 %v6314, 1.442695
        %v6365 = vpow.pop %v6364
        %v6366 = vmul.f32 %v6315, 1.442695
        %v6367 = vpow.pop %v6366
        %v6368 = vmul.f32 %v6316, 1.442695
        %v6369 = vpow.pop %v6368
        %v6370 = vmul.f32 %v6317, 1.442695
        %v6371 = vpow.pop %v6370
        %v6372 = vmul.f32 %v6318, 1.442695
        %v6373 = vpow.pop %v6372
        %v6374 = vmul.f32 %v6319, 1.442695
        %v6375 = vpow.pop %v6374
        %v6376 = vmul.f32 %v6320, 1.442695
        %v6377 = vpow.pop %v6376
        %v6378 = vmul.f32 %v6321, 1.442695
        %v6379 = vpow.pop %v6378
        %v6380 = vmul.f32 %v6322, 1.442695
        %v6381 = vpow.pop %v6380
        %v6382 = vmul.f32 %v6323, 1.442695
        %v6383 = vpow.pop %v6382
        %v6384 = vmul.f32 %v6324, 1.442695
        %v6385 = vpow.pop %v6384
        %v6386 = vmul.f32 %v6325, 1.442695
        %v6387 = vpow.pop %v6386
        %v6388 = vmul.f32 %v6326, 1.442695
        %v6389 = vpow.pop %v6388
        %v6390 = vmul.f32 %v6327, 1.442695
        %v6391 = vpow.pop %v6390
        %v6392 = vadd.f32 %v6329, 1.0
        %v6393 = vadd.f32 %v6331, 1.0
        %v6394 = vadd.f32 %v6333, 1.0
        %v6395 = vadd.f32 %v6335, 1.0
        %v6396 = vadd.f32 %v6337, 1.0
        %v6397 = vadd.f32 %v6339, 1.0
        %v6398 = vadd.f32 %v6341, 1.0
        %v6399 = vadd.f32 %v6343, 1.0
        %v6400 = vadd.f32 %v6345, 1.0
        %v6401 = vadd.f32 %v6347, 1.0
        %v6402 = vadd.f32 %v6349, 1.0
        %v6403 = vadd.f32 %v6351, 1.0
        %v6404 = vadd.f32 %v6353, 1.0
        %v6405 = vadd.f32 %v6355, 1.0
        %v6406 = vadd.f32 %v6357, 1.0
        %v6407 = vadd.f32 %v6359, 1.0
        %v6408 = vadd.f32 %v6361, 1.0
        %v6409 = vadd.f32 %v6363, 1.0
        %v6410 = vadd.f32 %v6365, 1.0
        %v6411 = vadd.f32 %v6367, 1.0
        %v6412 = vadd.f32 %v6369, 1.0
        %v6413 = vadd.f32 %v6371, 1.0
        %v6414 = vadd.f32 %v6373, 1.0
        %v6415 = vadd.f32 %v6375, 1.0
        %v6416 = vadd.f32 %v6377, 1.0
        %v6417 = vadd.f32 %v6379, 1.0
        %v6418 = vadd.f32 %v6381, 1.0
        %v6419 = vadd.f32 %v6383, 1.0
        %v6420 = vadd.f32 %v6385, 1.0
        %v6421 = vadd.f32 %v6387, 1.0
        %v6422 = vadd.f32 %v6389, 1.0
        %v6423 = vadd.f32 %v6391, 1.0
        %v6424 = vrcp.pop %v6392
        %v6425 = vmul.f32 1.0, %v6424
        %v6426 = vrcp.pop %v6393
        %v6427 = vmul.f32 1.0, %v6426
        %v6428 = vrcp.pop %v6394
        %v6429 = vmul.f32 1.0, %v6428
        %v6430 = vrcp.pop %v6395
        %v6431 = vmul.f32 1.0, %v6430
        %v6432 = vrcp.pop %v6396
        %v6433 = vmul.f32 1.0, %v6432
        %v6434 = vrcp.pop %v6397
        %v6435 = vmul.f32 1.0, %v6434
        %v6436 = vrcp.pop %v6398
        %v6437 = vmul.f32 1.0, %v6436
        %v6438 = vrcp.pop %v6399
        %v6439 = vmul.f32 1.0, %v6438
        %v6440 = vrcp.pop %v6400
        %v6441 = vmul.f32 1.0, %v6440
        %v6442 = vrcp.pop %v6401
        %v6443 = vmul.f32 1.0, %v6442
        %v6444 = vrcp.pop %v6402
        %v6445 = vmul.f32 1.0, %v6444
        %v6446 = vrcp.pop %v6403
        %v6447 = vmul.f32 1.0, %v6446
        %v6448 = vrcp.pop %v6404
        %v6449 = vmul.f32 1.0, %v6448
        %v6450 = vrcp.pop %v6405
        %v6451 = vmul.f32 1.0, %v6450
        %v6452 = vrcp.pop %v6406
        %v6453 = vmul.f32 1.0, %v6452
        %v6454 = vrcp.pop %v6407
        %v6455 = vmul.f32 1.0, %v6454
        %v6456 = vrcp.pop %v6408
        %v6457 = vmul.f32 1.0, %v6456
        %v6458 = vrcp.pop %v6409
        %v6459 = vmul.f32 1.0, %v6458
        %v6460 = vrcp.pop %v6410
        %v6461 = vmul.f32 1.0, %v6460
        %v6462 = vrcp.pop %v6411
        %v6463 = vmul.f32 1.0, %v6462
        %v6464 = vrcp.pop %v6412
        %v6465 = vmul.f32 1.0, %v6464
        %v6466 = vrcp.pop %v6413
        %v6467 = vmul.f32 1.0, %v6466
        %v6468 = vrcp.pop %v6414
        %v6469 = vmul.f32 1.0, %v6468
        %v6470 = vrcp.pop %v6415
        %v6471 = vmul.f32 1.0, %v6470
        %v6472 = vrcp.pop %v6416
        %v6473 = vmul.f32 1.0, %v6472
        %v6474 = vrcp.pop %v6417
        %v6475 = vmul.f32 1.0, %v6474
        %v6476 = vrcp.pop %v6418
        %v6477 = vmul.f32 1.0, %v6476
        %v6478 = vrcp.pop %v6419
        %v6479 = vmul.f32 1.0, %v6478
        %v6480 = vrcp.pop %v6420
        %v6481 = vmul.f32 1.0, %v6480
        %v6482 = vrcp.pop %v6421
        %v6483 = vmul.f32 1.0, %v6482
        %v6484 = vrcp.pop %v6422
        %v6485 = vmul.f32 1.0, %v6484
        %v6486 = vrcp.pop %v6423
        %v6487 = vmul.f32 1.0, %v6486
        %v6488 = vmul.f32 %v6186, %v6425
        %v6489 = vmul.f32 %v6188, %v6427
        %v6490 = vmul.f32 %v6190, %v6429
        %v6491 = vmul.f32 %v6192, %v6431
        %v6492 = vmul.f32 %v6196, %v6433
        %v6493 = vmul.f32 %v6198, %v6435
        %v6494 = vmul.f32 %v6200, %v6437
        %v6495 = vmul.f32 %v6202, %v6439
        %v6496 = vmul.f32 %v6206, %v6441
        %v6497 = vmul.f32 %v6208, %v6443
        %v6498 = vmul.f32 %v6210, %v6445
        %v6499 = vmul.f32 %v6212, %v6447
        %v6500 = vmul.f32 %v6216, %v6449
        %v6501 = vmul.f32 %v6218, %v6451
        %v6502 = vmul.f32 %v6220, %v6453
        %v6503 = vmul.f32 %v6222, %v6455
        %v6504 = vmul.f32 %v6226, %v6457
        %v6505 = vmul.f32 %v6228, %v6459
        %v6506 = vmul.f32 %v6230, %v6461
        %v6507 = vmul.f32 %v6232, %v6463
        %v6508 = vmul.f32 %v6236, %v6465
        %v6509 = vmul.f32 %v6238, %v6467
        %v6510 = vmul.f32 %v6240, %v6469
        %v6511 = vmul.f32 %v6242, %v6471
        %v6512 = vmul.f32 %v6246, %v6473
        %v6513 = vmul.f32 %v6248, %v6475
        %v6514 = vmul.f32 %v6250, %v6477
        %v6515 = vmul.f32 %v6252, %v6479
        %v6516 = vmul.f32 %v6256, %v6481
        %v6517 = vmul.f32 %v6258, %v6483
        %v6518 = vmul.f32 %v6260, %v6485
        %v6519 = vmul.f32 %v6262, %v6487
        %v6520 = vpack.c.bf16 %v6490, %v6488
        %v6521 = vpack.c.bf16 %v6491, %v6489
        %v6522 = vpack.c.bf16 %v6494, %v6492
        %v6523 = vpack.c.bf16 %v6495, %v6493
        %v6524 = vpack.c.bf16 %v6498, %v6496
        %v6525 = vpack.c.bf16 %v6499, %v6497
        %v6526 = vpack.c.bf16 %v6502, %v6500
        %v6527 = vpack.c.bf16 %v6503, %v6501
        %v6528 = vpack.c.bf16 %v6506, %v6504
        %v6529 = vpack.c.bf16 %v6507, %v6505
        %v6530 = vpack.c.bf16 %v6510, %v6508
        %v6531 = vpack.c.bf16 %v6511, %v6509
        %v6532 = vpack.c.bf16 %v6514, %v6512
        %v6533 = vpack.c.bf16 %v6515, %v6513
        %v6534 = vpack.c.bf16 %v6518, %v6516
        %v6535 = vpack.c.bf16 %v6519, %v6517
        %v6537 = vlaneseq
        %v6538 = vshrl.u32 %v6537, 7
        %v6539 = vsub.s32 0, %v6538
        %v6540 = vrot.slane %v965, %v6539
        %v6574 = vunpack.c.l.b16 %v932
        %v6575 = vunpack.c.l.b16 %v933
        %v6576 = vunpack.c.l.b16 %v934
        %v6577 = vunpack.c.l.b16 %v935
        %v6578 = vunpack.c.l.b16 %v936
        %v6579 = vunpack.c.l.b16 %v937
        %v6580 = vunpack.c.l.b16 %v938
        %v6581 = vunpack.c.l.b16 %v939
        %v6582 = vunpack.c.l.b16 %v940
        %v6583 = vunpack.c.l.b16 %v941
        %v6584 = vunpack.c.l.b16 %v942
        %v6585 = vunpack.c.l.b16 %v943
        %v6586 = vunpack.c.l.b16 %v944
        %v6587 = vunpack.c.l.b16 %v945
        %v6588 = vunpack.c.l.b16 %v946
        %v6589 = vunpack.c.l.b16 %v947
        %v6590 = vunpack.c.l.b16 %v948
        %v6591 = vunpack.c.l.b16 %v949
        %v6592 = vunpack.c.l.b16 %v950
        %v6593 = vunpack.c.l.b16 %v951
        %v6594 = vunpack.c.l.b16 %v952
        %v6595 = vunpack.c.l.b16 %v953
        %v6596 = vunpack.c.l.b16 %v954
        %v6597 = vunpack.c.l.b16 %v955
        %v6598 = vunpack.c.l.b16 %v956
        %v6599 = vunpack.c.l.b16 %v957
        %v6600 = vunpack.c.l.b16 %v958
        %v6601 = vunpack.c.l.b16 %v959
        %v6602 = vunpack.c.l.b16 %v960
        %v6603 = vunpack.c.l.b16 %v961
        %v6604 = vunpack.c.l.b16 %v962
        %v6605 = vunpack.c.l.b16 %v963
        %v6606 = vpack.c.b16 %v6575, %v6574
        %v6607 = vpack.c.b16 %v6577, %v6576
        %v6608 = vpack.c.b16 %v6579, %v6578
        %v6609 = vpack.c.b16 %v6581, %v6580
        %v6610 = vpack.c.b16 %v6583, %v6582
        %v6611 = vpack.c.b16 %v6585, %v6584
        %v6612 = vpack.c.b16 %v6587, %v6586
        %v6613 = vpack.c.b16 %v6589, %v6588
        %v6614 = vpack.c.b16 %v6591, %v6590
        %v6615 = vpack.c.b16 %v6593, %v6592
        %v6616 = vpack.c.b16 %v6595, %v6594
        %v6617 = vpack.c.b16 %v6597, %v6596
        %v6618 = vpack.c.b16 %v6599, %v6598
        %v6619 = vpack.c.b16 %v6601, %v6600
        %v6620 = vpack.c.b16 %v6603, %v6602
        %v6621 = vpack.c.b16 %v6605, %v6604
        %6638 = vmatprep.subr.bf16.mxu0 0
        %6639 = vmatpush1.bf16.msra.mxu0 %v6606
        %6640 = vmatprep.subr.bf16.mxu0 0
        %6641 = vmatpush1.bf16.msra.mxu0 %v6607
        %6642 = vmatprep.subr.bf16.mxu0 0
        %6643 = vmatpush1.bf16.msra.mxu0 %v6608
        %6644 = vmatprep.subr.bf16.mxu0 0
        %6645 = vmatpush1.bf16.msra.mxu0 %v6609
        %6646 = vmatprep.subr.bf16.mxu0 0
        %6647 = vmatpush1.bf16.msra.mxu0 %v6610
        %6648 = vmatprep.subr.bf16.mxu0 0
        %6649 = vmatpush1.bf16.msra.mxu0 %v6611
        %6650 = vmatprep.subr.bf16.mxu0 0
        %6651 = vmatpush1.bf16.msra.mxu0 %v6612
        %6652 = vmatprep.subr.bf16.mxu0 0
        %6653 = vmatpush1.bf16.msra.mxu0 %v6613
        %6654 = vmatprep.subr.bf16.mxu0 0
        %6655 = vmatpush1.bf16.msra.mxu0 %v6614
        %6656 = vmatprep.subr.bf16.mxu0 0
        %6657 = vmatpush1.bf16.msra.mxu0 %v6615
        %6658 = vmatprep.subr.bf16.mxu0 0
        %6659 = vmatpush1.bf16.msra.mxu0 %v6616
        %6660 = vmatprep.subr.bf16.mxu0 0
        %6661 = vmatpush1.bf16.msra.mxu0 %v6617
        %6662 = vmatprep.subr.bf16.mxu0 0
        %6663 = vmatpush1.bf16.msra.mxu0 %v6618
        %6664 = vmatprep.subr.bf16.mxu0 0
        %6665 = vmatpush1.bf16.msra.mxu0 %v6619
        %6666 = vmatprep.subr.bf16.mxu0 0
        %6667 = vmatpush1.bf16.msra.mxu0 %v6620
        %6668 = vmatprep.subr.bf16.mxu0 0
        %6669 = vmatpush1.bf16.msra.mxu0 %v6621
        %6670 = vmatprep.mubr.bf16.mxu0 %v6521
        %6671 = vmatmul.mubr.bf16.gmra.mrb[0].mxu0 %v6520
        %v6672 = vpop.f32.mrb[0].mxu0
        %v6673 = vadd.f32 %v6540, %v6672
        %v6674 = vpop.f32.mrb[0].mxu0
        %v6675 = vpop.f32.mrb[0].mxu0
        %v6676 = vadd.f32 %v6540, %v6675
        %v6677 = vpop.f32.mrb[0].mxu0
        %6678 = vmatprep.mubr.bf16.mxu0 %v6523
        %6679 = vmatmul.mubr.bf16.gmra.mrb[0].mxu0 %v6522
        %v6680 = vpop.f32.mrb[0].mxu0
        %v6681 = vadd.f32 %v6540, %v6680
        %v6682 = vpop.f32.mrb[0].mxu0
        %v6683 = vpop.f32.mrb[0].mxu0
        %v6684 = vadd.f32 %v6540, %v6683
        %v6685 = vpop.f32.mrb[0].mxu0
        %6686 = vmatprep.mubr.bf16.mxu0 %v6525
        %6687 = vmatmul.mubr.bf16.gmra.mrb[0].mxu0 %v6524
        %v6688 = vpop.f32.mrb[0].mxu0
        %v6689 = vadd.f32 %v6540, %v6688
        %v6690 = vpop.f32.mrb[0].mxu0
        %v6691 = vpop.f32.mrb[0].mxu0
        %v6692 = vadd.f32 %v6540, %v6691
        %v6693 = vpop.f32.mrb[0].mxu0
        %6694 = vmatprep.mubr.bf16.mxu0 %v6527
        %6695 = vmatmul.mubr.bf16.gmra.mrb[0].mxu0 %v6526
        %v6696 = vpop.f32.mrb[0].mxu0
        %v6697 = vadd.f32 %v6540, %v6696
        %v6698 = vpop.f32.mrb[0].mxu0
        %v6699 = vpop.f32.mrb[0].mxu0
        %v6700 = vadd.f32 %v6540, %v6699
        %v6701 = vpop.f32.mrb[0].mxu0
        %6702 = vmatprep.mubr.bf16.mxu0 %v6529
        %6703 = vmatmul.mubr.bf16.gmra.mrb[0].mxu0 %v6528
        %v6704 = vpop.f32.mrb[0].mxu0
        %v6705 = vadd.f32 %v6540, %v6704
        %v6706 = vpop.f32.mrb[0].mxu0
        %v6707 = vpop.f32.mrb[0].mxu0
        %v6708 = vadd.f32 %v6540, %v6707
        %v6709 = vpop.f32.mrb[0].mxu0
        %6710 = vmatprep.mubr.bf16.mxu0 %v6531
        %6711 = vmatmul.mubr.bf16.gmra.mrb[0].mxu0 %v6530
        %v6712 = vpop.f32.mrb[0].mxu0
        %v6713 = vadd.f32 %v6540, %v6712
        %v6714 = vpop.f32.mrb[0].mxu0
        %v6715 = vpop.f32.mrb[0].mxu0
        %v6716 = vadd.f32 %v6540, %v6715
        %v6717 = vpop.f32.mrb[0].mxu0
        %6718 = vmatprep.mubr.bf16.mxu0 %v6533
        %6719 = vmatmul.mubr.bf16.gmra.mrb[0].mxu0 %v6532
        %v6720 = vpop.f32.mrb[0].mxu0
        %v6721 = vadd.f32 %v6540, %v6720
        %v6722 = vpop.f32.mrb[0].mxu0
        %v6723 = vpop.f32.mrb[0].mxu0
        %v6724 = vadd.f32 %v6540, %v6723
        %v6725 = vpop.f32.mrb[0].mxu0
        %6726 = vmatprep.mubr.bf16.mxu0 %v6535
        %6727 = vmatmul.mubr.bf16.gmra.mrb[0].mxu0 %v6534
        %v6728 = vpop.f32.mrb[0].mxu0
        %v6729 = vadd.f32 %v6540, %v6728
        %v6730 = vpop.f32.mrb[0].mxu0
        %v6731 = vpop.f32.mrb[0].mxu0
        %v6732 = vadd.f32 %v6540, %v6731
        %v6733 = vpop.f32.mrb[0].mxu0
        %6734 = vdwg.mxu0
        %v6735 = vadd.f32 %v5816, %v6673
        %v6736 = vadd.f32 %v5817, %v6676
        %v6737 = vadd.f32 %v5818, %v6681
        %v6738 = vadd.f32 %v5819, %v6684
        %v6739 = vadd.f32 %v5820, %v6689
        %v6740 = vadd.f32 %v5821, %v6692
        %v6741 = vadd.f32 %v5822, %v6697
        %v6742 = vadd.f32 %v5823, %v6700
        %v6743 = vadd.f32 %v5824, %v6705
        %v6744 = vadd.f32 %v5825, %v6708
        %v6745 = vadd.f32 %v5826, %v6713
        %v6746 = vadd.f32 %v5827, %v6716
        %v6747 = vadd.f32 %v5828, %v6721
        %v6748 = vadd.f32 %v5829, %v6724
        %v6749 = vadd.f32 %v5830, %v6729
        %v6750 = vadd.f32 %v5831, %v6732
        %p6751 = scmp.lt.s32.totalorder %s38, 1
        // Predicated region
        $region121: #{tpu_custom_call.1} parent=83 // pred_check
          %p6752 = pneg %p6751
        $region122: #{tpu_custom_call.1} parent=83 // pred_check_branch
          %6754 = sbr.rel (%p6752) target = $region124
        $region123: #{tpu_custom_call.1} parent=83 // pred_region
          %6755 = vst [vmem:[#allocation17] sm:$0xff] %v6735
          %6756 = vst [vmem:[#allocation17 + $0x8] sm:$0xff] %v6736
          %6757 = vst [vmem:[#allocation17 + $0x10] sm:$0xff] %v6737
          %6758 = vst [vmem:[#allocation17 + $0x18] sm:$0xff] %v6738
          %6759 = vst [vmem:[#allocation17 + $0x20] sm:$0xff] %v6739
          %6760 = vst [vmem:[#allocation17 + $0x28] sm:$0xff] %v6740
          %6761 = vst [vmem:[#allocation17 + $0x30] sm:$0xff] %v6741
          %6762 = vst [vmem:[#allocation17 + $0x38] sm:$0xff] %v6742
          %6763 = vst [vmem:[#allocation17 + $0x40] sm:$0xff] %v6743
          %6764 = vst [vmem:[#allocation17 + $0x48] sm:$0xff] %v6744
          %6765 = vst [vmem:[#allocation17 + $0x50] sm:$0xff] %v6745
          %6766 = vst [vmem:[#allocation17 + $0x58] sm:$0xff] %v6746
          %6767 = vst [vmem:[#allocation17 + $0x60] sm:$0xff] %v6747
          %6768 = vst [vmem:[#allocation17 + $0x68] sm:$0xff] %v6748
          %6769 = vst [vmem:[#allocation17 + $0x70] sm:$0xff] %v6749
          %6770 = vst [vmem:[#allocation17 + $0x78] sm:$0xff] %v6750
        $region124: #{tpu_custom_call.1} parent=83 // pred_fallthru
          _
        %p6771 = scmp.eq.s32.totalorder %s38, 1
        // Predicated region
        $region125: #{tpu_custom_call.1} parent=83 // pred_check
          %p6772 = pneg %p6771
        $region126: #{tpu_custom_call.1} parent=83 // pred_check_branch
          %6774 = sbr.rel (%p6772) target = $region128
        $region127: #{tpu_custom_call.1} parent=83 // pred_region
          %v6775 = vld [vmem:[%s14] sm:$0x1]
          %v6776 = vld [vmem:[%s15] sm:$0x1]
          %6777 = vadd.xlane.f32.xlu0 %v6735
          %v6778 = vpop.xlane.xlu0 %6777
          %6779 = vadd.xlane.f32.xlu0 %v6736
          %v6780 = vpop.xlane.xlu0 %6779
          %6781 = vadd.xlane.f32.xlu0 %v6737
          %v6782 = vpop.xlane.xlu0 %6781
          %6783 = vadd.xlane.f32.xlu0 %v6738
          %v6784 = vpop.xlane.xlu0 %6783
          %6785 = vadd.xlane.f32.xlu0 %v6739
          %v6786 = vpop.xlane.xlu0 %6785
          %6787 = vadd.xlane.f32.xlu0 %v6740
          %v6788 = vpop.xlane.xlu0 %6787
          %6789 = vadd.xlane.f32.xlu0 %v6741
          %v6790 = vpop.xlane.xlu0 %6789
          %6791 = vadd.xlane.f32.xlu0 %v6742
          %v6792 = vpop.xlane.xlu0 %6791
          %6793 = vadd.xlane.f32.xlu0 %v6743
          %v6794 = vpop.xlane.xlu0 %6793
          %6795 = vadd.xlane.f32.xlu0 %v6744
          %v6796 = vpop.xlane.xlu0 %6795
          %6797 = vadd.xlane.f32.xlu0 %v6745
          %v6798 = vpop.xlane.xlu0 %6797
          %6799 = vadd.xlane.f32.xlu0 %v6746
          %v6800 = vpop.xlane.xlu0 %6799
          %6801 = vadd.xlane.f32.xlu0 %v6747
          %v6802 = vpop.xlane.xlu0 %6801
          %6803 = vadd.xlane.f32.xlu0 %v6748
          %v6804 = vpop.xlane.xlu0 %6803
          %6805 = vadd.xlane.f32.xlu0 %v6749
          %v6806 = vpop.xlane.xlu0 %6805
          %6807 = vadd.xlane.f32.xlu0 %v6750
          %v6808 = vpop.xlane.xlu0 %6807
          %v6809 = vmul.f32 %v6778, %v998
          %v6810 = vmul.f32 %v6780, %v998
          %v6811 = vmul.f32 %v6782, %v998
          %v6812 = vmul.f32 %v6784, %v998
          %v6813 = vmul.f32 %v6786, %v998
          %v6814 = vmul.f32 %v6788, %v998
          %v6815 = vmul.f32 %v6790, %v998
          %v6816 = vmul.f32 %v6792, %v998
          %v6817 = vmul.f32 %v6794, %v998
          %v6818 = vmul.f32 %v6796, %v998
          %v6819 = vmul.f32 %v6798, %v998
          %v6820 = vmul.f32 %v6800, %v998
          %v6821 = vmul.f32 %v6802, %v998
          %v6822 = vmul.f32 %v6804, %v998
          %v6823 = vmul.f32 %v6806, %v998
          %v6824 = vmul.f32 %v6808, %v998
          %v6825 = vsub.f32 %v6735, %v6809
          %v6826 = vsub.f32 %v6736, %v6810
          %v6827 = vsub.f32 %v6737, %v6811
          %v6828 = vsub.f32 %v6738, %v6812
          %v6829 = vsub.f32 %v6739, %v6813
          %v6830 = vsub.f32 %v6740, %v6814
          %v6831 = vsub.f32 %v6741, %v6815
          %v6832 = vsub.f32 %v6742, %v6816
          %v6833 = vsub.f32 %v6743, %v6817
          %v6834 = vsub.f32 %v6744, %v6818
          %v6835 = vsub.f32 %v6745, %v6819
          %v6836 = vsub.f32 %v6746, %v6820
          %v6837 = vsub.f32 %v6747, %v6821
          %v6838 = vsub.f32 %v6748, %v6822
          %v6839 = vsub.f32 %v6749, %v6823
          %v6840 = vsub.f32 %v6750, %v6824
          %v6841 = vmul.f32 %v6825, %v6825
          %v6842 = vmul.f32 %v6826, %v6826
          %v6843 = vmul.f32 %v6827, %v6827
          %v6844 = vmul.f32 %v6828, %v6828
          %v6845 = vmul.f32 %v6829, %v6829
          %v6846 = vmul.f32 %v6830, %v6830
          %v6847 = vmul.f32 %v6831, %v6831
          %v6848 = vmul.f32 %v6832, %v6832
          %v6849 = vmul.f32 %v6833, %v6833
          %v6850 = vmul.f32 %v6834, %v6834
          %v6851 = vmul.f32 %v6835, %v6835
          %v6852 = vmul.f32 %v6836, %v6836
          %v6853 = vmul.f32 %v6837, %v6837
          %v6854 = vmul.f32 %v6838, %v6838
          %v6855 = vmul.f32 %v6839, %v6839
          %v6856 = vmul.f32 %v6840, %v6840
          %6857 = vadd.xlane.f32.xlu0 %v6841
          %v6858 = vpop.xlane.xlu0 %6857
          %6859 = vadd.xlane.f32.xlu0 %v6842
          %v6860 = vpop.xlane.xlu0 %6859
          %6861 = vadd.xlane.f32.xlu0 %v6843
          %v6862 = vpop.xlane.xlu0 %6861
          %6863 = vadd.xlane.f32.xlu0 %v6844
          %v6864 = vpop.xlane.xlu0 %6863
          %6865 = vadd.xlane.f32.xlu0 %v6845
          %v6866 = vpop.xlane.xlu0 %6865
          %6867 = vadd.xlane.f32.xlu0 %v6846
          %v6868 = vpop.xlane.xlu0 %6867
          %6869 = vadd.xlane.f32.xlu0 %v6847
          %v6870 = vpop.xlane.xlu0 %6869
          %6871 = vadd.xlane.f32.xlu0 %v6848
          %v6872 = vpop.xlane.xlu0 %6871
          %6873 = vadd.xlane.f32.xlu0 %v6849
          %v6874 = vpop.xlane.xlu0 %6873
          %6875 = vadd.xlane.f32.xlu0 %v6850
          %v6876 = vpop.xlane.xlu0 %6875
          %6877 = vadd.xlane.f32.xlu0 %v6851
          %v6878 = vpop.xlane.xlu0 %6877
          %6879 = vadd.xlane.f32.xlu0 %v6852
          %v6880 = vpop.xlane.xlu0 %6879
          %6881 = vadd.xlane.f32.xlu0 %v6853
          %v6882 = vpop.xlane.xlu0 %6881
          %6883 = vadd.xlane.f32.xlu0 %v6854
          %v6884 = vpop.xlane.xlu0 %6883
          %6885 = vadd.xlane.f32.xlu0 %v6855
          %v6886 = vpop.xlane.xlu0 %6885
          %6887 = vadd.xlane.f32.xlu0 %v6856
          %v6888 = vpop.xlane.xlu0 %6887
          %v6889 = vmul.f32 %v6858, %v998
          %v6890 = vmul.f32 %v6860, %v998
          %v6891 = vmul.f32 %v6862, %v998
          %v6892 = vmul.f32 %v6864, %v998
          %v6893 = vmul.f32 %v6866, %v998
          %v6894 = vmul.f32 %v6868, %v998
          %v6895 = vmul.f32 %v6870, %v998
          %v6896 = vmul.f32 %v6872, %v998
          %v6897 = vmul.f32 %v6874, %v998
          %v6898 = vmul.f32 %v6876, %v998
          %v6899 = vmul.f32 %v6878, %v998
          %v6900 = vmul.f32 %v6880, %v998
          %v6901 = vmul.f32 %v6882, %v998
          %v6902 = vmul.f32 %v6884, %v998
          %v6903 = vmul.f32 %v6886, %v998
          %v6904 = vmul.f32 %v6888, %v998
          %v6905 = vadd.f32 %v6889, 1e-05
          %v6906 = vadd.f32 %v6890, 1e-05
          %v6907 = vadd.f32 %v6891, 1e-05
          %v6908 = vadd.f32 %v6892, 1e-05
          %v6909 = vadd.f32 %v6893, 1e-05
          %v6910 = vadd.f32 %v6894, 1e-05
          %v6911 = vadd.f32 %v6895, 1e-05
          %v6912 = vadd.f32 %v6896, 1e-05
          %v6913 = vadd.f32 %v6897, 1e-05
          %v6914 = vadd.f32 %v6898, 1e-05
          %v6915 = vadd.f32 %v6899, 1e-05
          %v6916 = vadd.f32 %v6900, 1e-05
          %v6917 = vadd.f32 %v6901, 1e-05
          %v6918 = vadd.f32 %v6902, 1e-05
          %v6919 = vadd.f32 %v6903, 1e-05
          %v6920 = vadd.f32 %v6904, 1e-05
          %v6921 = vrsqrt.pop %v6905
          %v6922 = vrsqrt.pop %v6906
          %v6923 = vrsqrt.pop %v6907
          %v6924 = vrsqrt.pop %v6908
          %v6925 = vrsqrt.pop %v6909
          %v6926 = vrsqrt.pop %v6910
          %v6927 = vrsqrt.pop %v6911
          %v6928 = vrsqrt.pop %v6912
          %v6929 = vrsqrt.pop %v6913
          %v6930 = vrsqrt.pop %v6914
          %v6931 = vrsqrt.pop %v6915
          %v6932 = vrsqrt.pop %v6916
          %v6933 = vrsqrt.pop %v6917
          %v6934 = vrsqrt.pop %v6918
          %v6935 = vrsqrt.pop %v6919
          %v6936 = vrsqrt.pop %v6920
          %v6937 = vmul.f32 %v6825, %v6921
          %v6938 = vmul.f32 %v6826, %v6922
          %v6939 = vmul.f32 %v6827, %v6923
          %v6940 = vmul.f32 %v6828, %v6924
          %v6941 = vmul.f32 %v6829, %v6925
          %v6942 = vmul.f32 %v6830, %v6926
          %v6943 = vmul.f32 %v6831, %v6927
          %v6944 = vmul.f32 %v6832, %v6928
          %v6945 = vmul.f32 %v6833, %v6929
          %v6946 = vmul.f32 %v6834, %v6930
          %v6947 = vmul.f32 %v6835, %v6931
          %v6948 = vmul.f32 %v6836, %v6932
          %v6949 = vmul.f32 %v6837, %v6933
          %v6950 = vmul.f32 %v6838, %v6934
          %v6951 = vmul.f32 %v6839, %v6935
          %v6952 = vmul.f32 %v6840, %v6936
          %v6954 = vlaneseq
          %v6955 = vshrl.u32 %v6954, 7
          %v6956 = vsub.s32 0, %v6955
          %v6957 = vrot.slane %v6775, %v6956
          %v6959 = vmul.f32 %v6937, %v6957
          %v6960 = vmul.f32 %v6938, %v6957
          %v6961 = vmul.f32 %v6939, %v6957
          %v6962 = vmul.f32 %v6940, %v6957
          %v6963 = vmul.f32 %v6941, %v6957
          %v6964 = vmul.f32 %v6942, %v6957
          %v6965 = vmul.f32 %v6943, %v6957
          %v6966 = vmul.f32 %v6944, %v6957
          %v6967 = vmul.f32 %v6945, %v6957
          %v6968 = vmul.f32 %v6946, %v6957
          %v6969 = vmul.f32 %v6947, %v6957
          %v6970 = vmul.f32 %v6948, %v6957
          %v6971 = vmul.f32 %v6949, %v6957
          %v6972 = vmul.f32 %v6950, %v6957
          %v6973 = vmul.f32 %v6951, %v6957
          %v6974 = vmul.f32 %v6952, %v6957
          %v6976 = vlaneseq
          %v6977 = vshrl.u32 %v6976, 7
          %v6978 = vsub.s32 0, %v6977
          %v6979 = vrot.slane %v6776, %v6978
          %v6981 = vadd.f32 %v6959, %v6979
          %v6982 = vadd.f32 %v6960, %v6979
          %v6983 = vadd.f32 %v6961, %v6979
          %v6984 = vadd.f32 %v6962, %v6979
          %v6985 = vadd.f32 %v6963, %v6979
          %v6986 = vadd.f32 %v6964, %v6979
          %v6987 = vadd.f32 %v6965, %v6979
          %v6988 = vadd.f32 %v6966, %v6979
          %v6989 = vadd.f32 %v6967, %v6979
          %v6990 = vadd.f32 %v6968, %v6979
          %v6991 = vadd.f32 %v6969, %v6979
          %v6992 = vadd.f32 %v6970, %v6979
          %v6993 = vadd.f32 %v6971, %v6979
          %v6994 = vadd.f32 %v6972, %v6979
          %v6995 = vadd.f32 %v6973, %v6979
          %v6996 = vadd.f32 %v6974, %v6979
          %6997 = vst [vmem:[#allocation17] sm:$0xff] %v6981
          %6998 = vst [vmem:[#allocation17 + $0x8] sm:$0xff] %v6982
          %6999 = vst [vmem:[#allocation17 + $0x10] sm:$0xff] %v6983
          %7000 = vst [vmem:[#allocation17 + $0x18] sm:$0xff] %v6984
          %7001 = vst [vmem:[#allocation17 + $0x20] sm:$0xff] %v6985
          %7002 = vst [vmem:[#allocation17 + $0x28] sm:$0xff] %v6986
          %7003 = vst [vmem:[#allocation17 + $0x30] sm:$0xff] %v6987
          %7004 = vst [vmem:[#allocation17 + $0x38] sm:$0xff] %v6988
          %7005 = vst [vmem:[#allocation17 + $0x40] sm:$0xff] %v6989
          %7006 = vst [vmem:[#allocation17 + $0x48] sm:$0xff] %v6990
          %7007 = vst [vmem:[#allocation17 + $0x50] sm:$0xff] %v6991
          %7008 = vst [vmem:[#allocation17 + $0x58] sm:$0xff] %v6992
          %7009 = vst [vmem:[#allocation17 + $0x60] sm:$0xff] %v6993
          %7010 = vst [vmem:[#allocation17 + $0x68] sm:$0xff] %v6994
          %7011 = vst [vmem:[#allocation17 + $0x70] sm:$0xff] %v6995
          %7012 = vst [vmem:[#allocation17 + $0x78] sm:$0xff] %v6996
        $region128: #{tpu_custom_call.1} parent=83 // pred_fallthru
          _
        // Predicated region
        $region129: #{tpu_custom_call.1} parent=83 // pred_check
          %p7013 = pneg %p409
        $region130: #{tpu_custom_call.1} parent=83 // pred_check_branch
          %7015 = sbr.rel (%p7013) target = $region132
        $region131: #{tpu_custom_call.1} parent=83 // pred_region
          %s7016 = smul.u32 16, %s37
          %s7018 = ssub.s32 2048, 2048
          %7019 = vsyncadd [#allocation5], %s7018
          %s7020 = smul.addr %s7016, 128
          %s7021 = scalar_lea.hbm %s16, %s7020
          %s7022 = sshll.u32 [#allocation17], 4
          %s7023 = int_to_ptr.vmem [resolvable:$true] %s7022
          %7028 = dma.vmem_to_hbm [thread:$0]  %s7023, 2048, %s7021, [#allocation5], 128, 128, 8
        $region132: #{tpu_custom_call.1} parent=83 // pred_fallthru
          _
        // Predicated region
        $region133: #{tpu_custom_call.1} parent=83 // pred_check
          %p7029 = pneg %p409
        $region134: #{tpu_custom_call.1} parent=83 // pred_check_branch
          %7031 = sbr.rel (%p7029) target = $region136
        $region135: #{tpu_custom_call.1} parent=83 // pred_region
          %7032 = dma.done [#allocation5], 2048
        $region136: #{tpu_custom_call.1} parent=83 // pred_fallthru
          _
      $region84: #{tpu_custom_call.1} parent=5 // pred_fallthru
        _
      %p7033 = scmp.le.s32.totalorder 2, %s28
      // Predicated region
      $region137: #{tpu_custom_call.1} parent=5 // pred_check
        %p7034 = pneg %p7033
      $region138: #{tpu_custom_call.1} parent=5 // pred_check_branch
        %7036 = sbr.rel (%p7034) target = $region140
      $region139: #{tpu_custom_call.1} parent=5 // pred_region
        %s7037 = ssub.s32 %s28, 2
      $region140: #{tpu_custom_call.1} parent=5 // pred_fallthru
        _
    $region6: #{tpu_custom_call.1} parent=1 // loop_footer
      %s32 = sadd.s32 1, %s28
    $region7: #{tpu_custom_call.1} parent=1 // loop_footer_branch
      %27 = sbr.rel target = $region3
    $region8: #{tpu_custom_call.1} parent=1 // loop_exit
      _
    %7038 = vsyncpa [#allocation4], 1
    %s7039 = scalar_lea.sflag [#allocation4], 1
    %7040 = vsyncpa %s7039, 1
    %7041 = vsyncpa [#allocation7], 1
    %7042 = vsyncpa [#allocation10], 1
    %7043 = vsyncpa [#allocation13], 1
    %7044 = vsyncpa [#allocation16], 1
    %7045 = vsyncpa [#allocation5], 1
    %s7046 = scalar_lea.sflag [#allocation5], 1
    %7047 = vsyncpa %s7046, 1

</llo_original>
